<compile_context>
chip_gen: v7x
topology: tpu7x:2x2x1
jax: 0.10.0
libtpu: 0.0.40
codegen_flags: <defaults>
</compile_context>

<pallas_src>
import math

import jax
import jax.numpy as jnp
from jax.experimental import pallas as pl
from jax.experimental.pallas import tpu as pltpu

# ----------------------------------------------------------------------------
# Scaled-down ViT-B/32 configuration (synthetic, deterministic init)
# ----------------------------------------------------------------------------
BATCH = 2
IMG = 64           # image spatial size (PyTorch ViT-B/32 uses 224)
PATCH = 32         # patch size of ViT-B/32
CH = 3             # RGB
D = 128            # hidden_dim (real ViT-B/32 value is 768; scaled down)
NUM_HEADS = 4
HEAD_DIM = D // NUM_HEADS
MLP_DIM = 256      # (real value 3072; scaled down)
NUM_LAYERS = 2     # (real value 12; scaled down)
GRID_HW = IMG // PATCH
NUM_PATCHES = GRID_HW * GRID_HW
SEQ = NUM_PATCHES + 1            # +1 class token
SEQ_PAD = 8                      # pad sequence length to a sublane multiple
ROWS = BATCH * SEQ_PAD           # rows of the lane-dense [ROWS, D] activation
CPP = CH * PATCH * PATCH         # unfolded patch width
LN_EPS = 1e-6
BN_EPS = 1e-5
NEG_INF = -1e30

TABULAR = 4
HIDDEN_DIMS = (512, 256, 128)
NUM_CLASSES = 15

# TODO(synk): at real ViT-B/32 scale, add a "parallel" batch/row-tile grid axis
# (v7x dual TensorCore), K-tile the MLP weights and set vmem_limit_bytes so the
# bf16 per-layer weight working set fits the 64 MiB (v7x) / 16 MiB-scoped (v5e)
# VMEM budgets; irrelevant at these toy shapes.
_CPARAMS = pltpu.CompilerParams(dimension_semantics=("arbitrary",))


def _const_spec(shape):
    """Full-array block whose index never changes (fetched once, VMEM-resident)."""
    nd = len(shape)
    return pl.BlockSpec(shape, lambda l, _nd=nd: (0,) * _nd)


def _layer_spec(shape):
    """Stacked per-layer parameter: select layer `l` along the leading axis."""
    blk = (1,) + tuple(shape[1:])
    nrest = len(shape) - 1
    return pl.BlockSpec(blk, lambda l, _n=nrest: (l,) + (0,) * _n)


# ----------------------------------------------------------------------------
# In-kernel helpers (traced inside the Pallas kernel body)
# ----------------------------------------------------------------------------
def _ln(x, g, b, eps=LN_EPS):
    mean = jnp.mean(x, axis=-1, keepdims=True)
    var = jnp.mean((x - mean) ** 2, axis=-1, keepdims=True)
    return (x - mean) * jax.lax.rsqrt(var + eps) * g + b


def _gelu(y):
    # TODO(synk): torch nn.GELU default is the exact erf GELU; using the tanh
    # approximation for TPU-friendly lowering (differs at ~1e-3 level).
    return 0.5 * y * (1.0 + jnp.tanh(0.7978845608028654 * (y + 0.044715 * y * y * y)))


# ----------------------------------------------------------------------------
# The single fused kernel: patch-embed prologue + encoder layer + classifier
# epilogue.  grid=(NUM_LAYERS,), h_ref is the VMEM-resident activation carry.
# ----------------------------------------------------------------------------
def _fused_vit_kernel(patches_ref, pw_ref, pos_ref, kbias_ref, tab_ref,
                      ln1g_ref, ln1b_ref, wqkv_ref, bqkv_ref, wo_ref, bo_ref,
                      ln2g_ref, ln2b_ref, w1_ref, b1_ref, w2_ref, b2_ref,
                      clng_ref, clnb_ref, w1i_ref, w1t_ref, b1c_ref,
                      w2c_ref, b2c_ref, w3c_ref, b3c_ref, wh_ref, bh_ref,
                      o_ref, h_ref):
    layer = pl.program_id(0)

    # --- prologue (layer 0): patch embedding + cls/pos/conv-bias assembly -----
    # patches_ref is already laid out as [ROWS, CPP] with zero rows at the cls
    # and pad positions; pos_ref already contains cls token (row 0) and the
    # conv bias folded into the patch rows, zeros in the pad rows.
    @pl.when(layer == 0)
    def _():
        tok = jnp.dot(patches_ref[...], pw_ref[...],            # bf16 x bf16
                      preferred_element_type=jnp.float32)       # -> f32 [ROWS, D]
        h_ref[...] = tok + jnp.concatenate([pos_ref[...]] * BATCH, axis=0)

    h = h_ref[...]                                              # f32 [ROWS, D]

    # --- self-attention block --------------------------------------------------
    xn = _ln(h, ln1g_ref[0], ln1b_ref[0])
    qkv = (jnp.dot(xn.astype(jnp.bfloat16), wqkv_ref[0],
                   preferred_element_type=jnp.float32) + bqkv_ref[0])   # [ROWS, 3D]
    q = qkv[:, 0 * D:1 * D]
    k = qkv[:, 1 * D:2 * D]
    v = qkv[:, 2 * D:3 * D]

    scale = 1.0 / math.sqrt(HEAD_DIM)
    kbias = kbias_ref[...]                                      # [1, S, S] key mask
    head_outs = []
    for hh in range(NUM_HEADS):                                 # 4 heads, traced once
        sl = slice(hh * HEAD_DIM, (hh + 1) * HEAD_DIM)
        qh = (q[:, sl] * scale).reshape(BATCH, SEQ_PAD, HEAD_DIM)
        kh = k[:, sl].reshape(BATCH, SEQ_PAD, HEAD_DIM)
        vh = v[:, sl].reshape(BATCH, SEQ_PAD, HEAD_DIM)
        s = jnp.einsum("bqd,bkd->bqk", qh, kh,
                       preferred_element_type=jnp.float32) + kbias
        m = jnp.max(s, axis=-1, keepdims=True)
        p = jnp.exp(s - m)
        p = p * pl.reciprocal(jnp.sum(p, axis=-1, keepdims=True), approx=True)
        oh = jnp.einsum("bqk,bkd->bqd", p, vh,
                        preferred_element_type=jnp.float32)     # [B, S, HEAD_DIM]
        head_outs.append(oh.reshape(ROWS, HEAD_DIM))
    # merge heads along lanes, then ONE output projection with K = D = 128
    attn_cat = jnp.concatenate(head_outs, axis=-1)              # [ROWS, D]
    attn = (jnp.dot(attn_cat.astype(jnp.bfloat16), wo_ref[0],
                    preferred_element_type=jnp.float32) + bo_ref[0])
    h = h + attn                                                # residual (dropout = id)

    # --- MLP block ---------------------------------------------------------------
    yn = _ln(h, ln2g_ref[0], ln2b_ref[0])
    y = (jnp.dot(yn.astype(jnp.bfloat16), w1_ref[0],
                 preferred_element_type=jnp.float32) + b1_ref[0])
    y = _gelu(y)
    y = (jnp.dot(y.astype(jnp.bfloat16), w2_ref[0],
                 preferred_element_type=jnp.float32) + b2_ref[0])
    h = h + y                                                   # residual (dropout = id)
    h_ref[...] = h                                              # carry to next layer

    # --- epilogue (last layer): final LN + multimodal classifier ---------------
    @pl.when(layer == NUM_LAYERS - 1)
    def _():
        # class-token rows (row 0 of every image)
        cls_tok = jnp.concatenate(
            [h[b * SEQ_PAD:b * SEQ_PAD + 1, :] for b in range(BATCH)], axis=0)  # [B, D]
        x = _ln(cls_tok, clng_ref[...], clnb_ref[...])
        # block 1: BatchNorm folded into the Linear; contraction split 128 + 4
        z = (jnp.dot(x.astype(jnp.bfloat16), w1i_ref[...],
                     preferred_element_type=jnp.float32)
             + jnp.dot(tab_ref[...], w1t_ref[...],
                       preferred_element_type=jnp.float32)      # tiny K=4, kept f32
             + b1c_ref[...])
        z = jnp.maximum(z, 0.0)
        z = jnp.maximum(jnp.dot(z.astype(jnp.bfloat16), w2c_ref[...],
                                preferred_element_type=jnp.float32) + b2c_ref[...], 0.0)
        z = jnp.maximum(jnp.dot(z.astype(jnp.bfloat16), w3c_ref[...],
                                preferred_element_type=jnp.float32) + b3c_ref[...], 0.0)
        o_ref[...] = (jnp.dot(z.astype(jnp.bfloat16), wh_ref[...],
                              preferred_element_type=jnp.float32) + bh_ref[...])


# ----------------------------------------------------------------------------
# Wrapper around the single pallas_call
# ----------------------------------------------------------------------------
def fused_vit_forward(patches, tabular_data, p):
    enc = p["enc"]
    ch = p["cls_head"]
    args = (
        patches, p["patch_w"], p["pos_comb"], p["key_bias"], tabular_data,
        enc["ln1_g"], enc["ln1_b"], enc["wqkv"], enc["bqkv"], enc["wo"], enc["bo"],
        enc["ln2_g"], enc["ln2_b"], enc["w1"], enc["b1"], enc["w2"], enc["b2"],
        ch["ln_g"], ch["ln_b"], ch["w1_img"], ch["w1_tab"], ch["b1"],
        ch["w2"], ch["b2"], ch["w3"], ch["b3"], ch["wh"], ch["bh"],
    )
    in_specs = ([_const_spec(a.shape) for a in args[:5]]
                + [_layer_spec(a.shape) for a in args[5:17]]
                + [_const_spec(a.shape) for a in args[17:]])
    return pl.pallas_call(
        _fused_vit_kernel,
        out_shape=jax.ShapeDtypeStruct((BATCH, NUM_CLASSES), jnp.float32),
        grid=(NUM_LAYERS,),
        in_specs=in_specs,
        out_specs=_const_spec((BATCH, NUM_CLASSES)),
        scratch_shapes=[pltpu.VMEM((ROWS, D), jnp.float32)],   # activation carry
        compiler_params=_CPARAMS,
    )(*args)


# ----------------------------------------------------------------------------
# Parameter initialization (deterministic, synthetic) + inference-time prep
# ----------------------------------------------------------------------------
def init_params(key):
    keys = iter(jax.random.split(key, 128))

    def nrm(shape, std=0.02):
        return (std * jax.random.normal(next(keys), shape)).astype(jnp.float32)

    params = {
        # conv_proj expressed as an unfold + matmul: weight [C*P*P, D]
        "patch_w": nrm((CPP, D)),
        "patch_b": jnp.zeros((1, D), jnp.float32),
        "cls": nrm((1, 1, D)),
        "pos": nrm((1, SEQ, D)),
        "ln_g": jnp.ones((1, D), jnp.float32),
        "ln_b": jnp.zeros((1, D), jnp.float32),
    }

    layers = []
    for _ in range(NUM_LAYERS):
        layers.append(dict(
            ln1_g=jnp.ones((D,), jnp.float32), ln1_b=jnp.zeros((D,), jnp.float32),
            wq=nrm((D, D)), bq=jnp.zeros((D,), jnp.float32),
            wk=nrm((D, D)), bk=jnp.zeros((D,), jnp.float32),
            wv=nrm((D, D)), bv=jnp.zeros((D,), jnp.float32),
            wo=nrm((D, D)), bo=jnp.zeros((D,), jnp.float32),
            ln2_g=jnp.ones((D,), jnp.float32), ln2_b=jnp.zeros((D,), jnp.float32),
            w1=nrm((D, MLP_DIM)), b1=jnp.zeros((MLP_DIM,), jnp.float32),
            w2=nrm((MLP_DIM, D)), b2=jnp.zeros((D,), jnp.float32),
        ))
    params["layers"] = layers

    prev = D + TABULAR
    blocks = []
    for hdim in HIDDEN_DIMS:
        blocks.append(dict(
            w=nrm((prev, hdim)), b=jnp.zeros((hdim,), jnp.float32),
            g=jnp.ones((hdim,), jnp.float32), beta=jnp.zeros((hdim,), jnp.float32),
            mean=jnp.zeros((hdim,), jnp.float32), var=jnp.ones((hdim,), jnp.float32),
        ))
        prev = hdim
    params["cls_hidden"] = blocks
    params["head_w"] = nrm((prev, NUM_CLASSES))
    params["head_b"] = jnp.zeros((1, NUM_CLASSES), jnp.float32)
    return params


def prepare_inference_params(params):
    """One-time prep: stack per-layer weights (bf16), fuse Wq/Wk/Wv, fold the
    conv bias + cls token into the padded positional rows, precompute the
    padded-key attention mask, fold eval-mode BN into the classifier Linears
    (then cast to bf16), and split the fusion weight into image/tabular parts."""
    layers = params["layers"]

    def stack(name):
        return jnp.stack([lyr[name] for lyr in layers], axis=0)

    enc = {
        "ln1_g": stack("ln1_g")[:, None, :],                        # [L, 1, D] f32
        "ln1_b": stack("ln1_b")[:, None, :],
        "wqkv": jnp.stack([jnp.concatenate([l["wq"], l["wk"], l["wv"]], axis=1)
                           for l in layers], axis=0).astype(jnp.bfloat16),   # [L, D, 3D]
        "bqkv": jnp.stack([jnp.concatenate([l["bq"], l["bk"], l["bv"]], axis=0)
                           for l in layers], axis=0)[:, None, :],   # [L, 1, 3D] f32
        "wo": stack("wo").astype(jnp.bfloat16),                     # [L, D, D]
        "bo": stack("bo")[:, None, :],
        "ln2_g": stack("ln2_g")[:, None, :],
        "ln2_b": stack("ln2_b")[:, None, :],
        "w1": stack("w1").astype(jnp.bfloat16),                     # [L, D, MLP]
        "b1": stack("b1")[:, None, :],
        "w2": stack("w2").astype(jnp.bfloat16),                     # [L, MLP, D]
        "b2": stack("b2")[:, None, :],
    }

    # positional rows padded to SEQ_PAD; row 0 also carries the cls token and
    # patch rows also carry the conv bias (so the in-kernel prologue is one dot + add)
    pos_comb = jnp.zeros((SEQ_PAD, D), jnp.float32)
    pos_comb = pos_comb.at[0, :].set(params["pos"][0, 0] + params["cls"][0, 0])
    pos_comb = pos_comb.at[1:SEQ, :].set(params["pos"][0, 1:SEQ] + params["patch_b"][0])

    # padded-key attention mask, hoisted out of the kernel (compile-time constant)
    key_ids = jnp.arange(SEQ_PAD)
    key_bias = jnp.where(key_ids < SEQ, 0.0, NEG_INF).astype(jnp.float32)
    key_bias = jnp.broadcast_to(key_bias[None, None, :], (1, SEQ_PAD, SEQ_PAD))

    # Fold eval-mode BatchNorm1d into the preceding Linear (in f32), then cast:
    #   BN(x@w + b) = x @ (w * s) + ((b - mean) * s + beta),  s = g / sqrt(var + eps)
    folded = []
    for blk in params["cls_hidden"]:
        s = blk["g"] * jax.lax.rsqrt(blk["var"] + BN_EPS)
        folded.append((blk["w"] * s[None, :],
                       ((blk["b"] - blk["mean"]) * s + blk["beta"])[None, :]))
    (w1, b1), (w2, b2), (w3, b3) = folded
    cls_head = {
        "ln_g": params["ln_g"], "ln_b": params["ln_b"],
        "w1_img": w1[:D, :].astype(jnp.bfloat16),   # 128-aligned image part
        "w1_tab": w1[D:, :],                        # tiny K=4 tabular part, f32
        "b1": b1,
        "w2": w2.astype(jnp.bfloat16), "b2": b2,
        "w3": w3.astype(jnp.bfloat16), "b3": b3,
        "wh": params["head_w"].astype(jnp.bfloat16), "bh": params["head_b"],
    }
    return {
        "patch_w": params["patch_w"].astype(jnp.bfloat16),
        "pos_comb": pos_comb,
        "key_bias": key_bias,
        "enc": enc,
        "cls_head": cls_head,
    }


# ----------------------------------------------------------------------------
# Forward pass (matches torchvision VisionTransformer + the multimodal head)
# ----------------------------------------------------------------------------
def vit_b32_multimodal_forward(p, x, tabular_data):
    B, C, H, W = x.shape
    gh, gw = H // PATCH, W // PATCH

    # conv_proj (kernel = stride = 32) == unfold into patches; the rows are laid
    # out directly at their padded sequence positions (row 0 per image is the cls
    # slot, rows SEQ..SEQ_PAD-1 are padding) so the kernel prologue is one matmul.
    patches = (x.reshape(B, C, gh, PATCH, gw, PATCH)
                 .transpose(0, 2, 4, 1, 3, 5)
                 .reshape(B, gh * gw, CPP))
    patches = jnp.pad(patches, ((0, 0), (1, SEQ_PAD - SEQ), (0, 0)))
    patches = patches.reshape(B * SEQ_PAD, CPP).astype(jnp.bfloat16)

    # whole model (patch-embed + encoder + classifier) in ONE pallas_call
    return fused_vit_forward(patches, tabular_data, p)


if __name__ == "__main__":
    key = jax.random.PRNGKey(0)
    kp, kx, kt = jax.random.split(key, 3)
    params = init_params(kp)
    inf_params = prepare_inference_params(params)   # one-time parameter prep

    x = jax.random.normal(kx, (BATCH, CH, IMG, IMG), jnp.float32)
    tabular = jax.random.normal(kt, (BATCH, TABULAR), jnp.float32)

    fwd = jax.jit(vit_b32_multimodal_forward)
    out = fwd(inf_params, x, tabular)
    jax.block_until_ready(out)
    assert out.shape == (BATCH, NUM_CLASSES), out.shape
    print("KERNEL_OK")
</pallas_src>

<mosaic_0001>
module attributes {stable_mosaic.version = 11 : i64} {
  func.func @_fused_vit_kernel(%arg0: i32, %arg1: memref<16x3072xbf16, #tpu.memory_space<vmem>>, %arg2: memref<3072x128xbf16, #tpu.memory_space<vmem>>, %arg3: memref<8x128xf32, #tpu.memory_space<vmem>>, %arg4: memref<1x8x8xf32, #tpu.memory_space<vmem>>, %arg5: memref<2x4xf32, #tpu.memory_space<vmem>>, %arg6: memref<1x1x128xf32, #tpu.memory_space<vmem>>, %arg7: memref<1x1x128xf32, #tpu.memory_space<vmem>>, %arg8: memref<1x128x384xbf16, #tpu.memory_space<vmem>>, %arg9: memref<1x1x384xf32, #tpu.memory_space<vmem>>, %arg10: memref<1x128x128xbf16, #tpu.memory_space<vmem>>, %arg11: memref<1x1x128xf32, #tpu.memory_space<vmem>>, %arg12: memref<1x1x128xf32, #tpu.memory_space<vmem>>, %arg13: memref<1x1x128xf32, #tpu.memory_space<vmem>>, %arg14: memref<1x128x256xbf16, #tpu.memory_space<vmem>>, %arg15: memref<1x1x256xf32, #tpu.memory_space<vmem>>, %arg16: memref<1x256x128xbf16, #tpu.memory_space<vmem>>, %arg17: memref<1x1x128xf32, #tpu.memory_space<vmem>>, %arg18: memref<1x128xf32, #tpu.memory_space<vmem>>, %arg19: memref<1x128xf32, #tpu.memory_space<vmem>>, %arg20: memref<128x512xbf16, #tpu.memory_space<vmem>>, %arg21: memref<4x512xf32, #tpu.memory_space<vmem>>, %arg22: memref<1x512xf32, #tpu.memory_space<vmem>>, %arg23: memref<512x256xbf16, #tpu.memory_space<vmem>>, %arg24: memref<1x256xf32, #tpu.memory_space<vmem>>, %arg25: memref<256x128xbf16, #tpu.memory_space<vmem>>, %arg26: memref<1x128xf32, #tpu.memory_space<vmem>>, %arg27: memref<128x15xbf16, #tpu.memory_space<vmem>>, %arg28: memref<1x15xf32, #tpu.memory_space<vmem>>, %arg29: memref<2x15xf32, #tpu.memory_space<vmem>>, %arg30: memref<16x128xf32, #tpu.memory_space<vmem>>) attributes {dimension_semantics = [#tpu.dimension_semantics<arbitrary>], iteration_bounds = array<i64: 2>, scalar_prefetch = 0 : i64, scratch_operands = 1 : i64, tpu.core_type = #tpu.core_type<tc>, window_params = [{pipeline_mode = #tpu.pipeline_mode<synchronous>, transform_indices = @transform_0, window_bounds = array<i64: 16, 3072>}, {pipeline_mode = #tpu.pipeline_mode<synchronous>, transform_indices = @transform_1, window_bounds = array<i64: 3072, 128>}, {pipeline_mode = #tpu.pipeline_mode<synchronous>, transform_indices = @transform_2, window_bounds = array<i64: 8, 128>}, {pipeline_mode = #tpu.pipeline_mode<synchronous>, transform_indices = @transform_3, window_bounds = array<i64: 1, 8, 8>}, {pipeline_mode = #tpu.pipeline_mode<synchronous>, transform_indices = @transform_4, window_bounds = array<i64: 2, 4>}, {transform_indices = @transform_5, window_bounds = array<i64: 1, 1, 128>}, {transform_indices = @transform_6, window_bounds = array<i64: 1, 1, 128>}, {transform_indices = @transform_7, window_bounds = array<i64: 1, 128, 384>}, {transform_indices = @transform_8, window_bounds = array<i64: 1, 1, 384>}, {transform_indices = @transform_9, window_bounds = array<i64: 1, 128, 128>}, {transform_indices = @transform_10, window_bounds = array<i64: 1, 1, 128>}, {transform_indices = @transform_11, window_bounds = array<i64: 1, 1, 128>}, {transform_indices = @transform_12, window_bounds = array<i64: 1, 1, 128>}, {transform_indices = @transform_13, window_bounds = array<i64: 1, 128, 256>}, {transform_indices = @transform_14, window_bounds = array<i64: 1, 1, 256>}, {transform_indices = @transform_15, window_bounds = array<i64: 1, 256, 128>}, {transform_indices = @transform_16, window_bounds = array<i64: 1, 1, 128>}, {pipeline_mode = #tpu.pipeline_mode<synchronous>, transform_indices = @transform_17, window_bounds = array<i64: 1, 128>}, {pipeline_mode = #tpu.pipeline_mode<synchronous>, transform_indices = @transform_18, window_bounds = array<i64: 1, 128>}, {pipeline_mode = #tpu.pipeline_mode<synchronous>, transform_indices = @transform_19, window_bounds = array<i64: 128, 512>}, {pipeline_mode = #tpu.pipeline_mode<synchronous>, transform_indices = @transform_20, window_bounds = array<i64: 4, 512>}, {pipeline_mode = #tpu.pipeline_mode<synchronous>, transform_indices = @transform_21, window_bounds = array<i64: 1, 512>}, {pipeline_mode = #tpu.pipeline_mode<synchronous>, transform_indices = @transform_22, window_bounds = array<i64: 512, 256>}, {pipeline_mode = #tpu.pipeline_mode<synchronous>, transform_indices = @transform_23, window_bounds = array<i64: 1, 256>}, {pipeline_mode = #tpu.pipeline_mode<synchronous>, transform_indices = @transform_24, window_bounds = array<i64: 256, 128>}, {pipeline_mode = #tpu.pipeline_mode<synchronous>, transform_indices = @transform_25, window_bounds = array<i64: 1, 128>}, {pipeline_mode = #tpu.pipeline_mode<synchronous>, transform_indices = @transform_26, window_bounds = array<i64: 128, 15>}, {pipeline_mode = #tpu.pipeline_mode<synchronous>, transform_indices = @transform_27, window_bounds = array<i64: 1, 15>}, {pipeline_mode = #tpu.pipeline_mode<synchronous>, transform_indices = @transform_28, window_bounds = array<i64: 2, 15>}]} {
    %c0_i32 = arith.constant 0 : i32
    %0 = arith.cmpi eq, %arg0, %c0_i32 : i32
    %1 = arith.extui %0 : i1 to i32
    %c0_i32_0 = arith.constant 0 : i32
    %2 = arith.cmpi ne, %1, %c0_i32_0 : i32
    scf.if %2 {
      %c0_81 = arith.constant 0 : index
      %c0_82 = arith.constant 0 : index
      %204 = vector.load %arg1[%c0_81, %c0_82] : memref<16x3072xbf16, #tpu.memory_space<vmem>>, vector<16x3072xbf16>
      %c0_83 = arith.constant 0 : index
      %c0_84 = arith.constant 0 : index
      %205 = vector.load %arg2[%c0_83, %c0_84] : memref<3072x128xbf16, #tpu.memory_space<vmem>>, vector<3072x128xbf16>
      %cst_85 = arith.constant dense<0.000000e+00> : vector<16x128xf32>
      %206 = tpu.matmul %204, %205, %cst_85 {dimension_numbers = #tpu.dot_dimension_numbers<[1], [0], [0], [1], [0, 0, 1, 1], [], []>} : vector<16x3072xbf16>, vector<3072x128xbf16>, vector<16x128xf32> -> vector<16x128xf32>
      %c0_86 = arith.constant 0 : index
      %c0_87 = arith.constant 0 : index
      %207 = vector.load %arg3[%c0_86, %c0_87] : memref<8x128xf32, #tpu.memory_space<vmem>>, vector<8x128xf32>
      %208 = tpu.concatenate %207, %207 in 0 : vector<8x128xf32>, vector<8x128xf32> -> vector<16x128xf32>
      %209 = arith.addf %206, %208 : vector<16x128xf32>
      %c0_88 = arith.constant 0 : index
      %c0_89 = arith.constant 0 : index
      %210 = vector.load %arg30[%c0_88, %c0_89] : memref<16x128xf32, #tpu.memory_space<vmem>>, vector<16x128xf32>
      tpu.vector_store %arg30[%c0_88, %c0_89], %209 {strides = array<i32>} : memref<16x128xf32, #tpu.memory_space<vmem>>, vector<16x128xf32>,
    } else {
    }
    %c0 = arith.constant 0 : index
    %c0_1 = arith.constant 0 : index
    %3 = vector.load %arg30[%c0, %c0_1] : memref<16x128xf32, #tpu.memory_space<vmem>>, vector<16x128xf32>
    %c0_2 = arith.constant 0 : index
    %c0_3 = arith.constant 0 : index
    %c0_4 = arith.constant 0 : index
    %4 = vector.load %arg6[%c0_2, %c0_3, %c0_4] : memref<1x1x128xf32, #tpu.memory_space<vmem>>, vector<1x1x128xf32>
    %5 = vector.shape_cast %4 : vector<1x1x128xf32> to vector<1x128xf32>
    %c0_5 = arith.constant 0 : index
    %c0_6 = arith.constant 0 : index
    %c0_7 = arith.constant 0 : index
    %6 = vector.load %arg7[%c0_5, %c0_6, %c0_7] : memref<1x1x128xf32, #tpu.memory_space<vmem>>, vector<1x1x128xf32>
    %7 = vector.shape_cast %6 : vector<1x1x128xf32> to vector<1x128xf32>
    %cst = arith.constant dense<0.000000e+00> : vector<16xf32>
    %8 = vector.multi_reduction <add>, %3, %cst [1] : vector<16x128xf32> to vector<16xf32>
    %9 = vector.shape_cast %8 : vector<16xf32> to vector<16x1xf32>
    %cst_8 = arith.constant 1.280000e+02 : f32
    %10 = vector.broadcast %cst_8 : f32 to vector<16x1xf32>
    %11 = arith.divf %9, %10 : vector<16x1xf32>
    %12 = vector.broadcast %11 : vector<16x1xf32> to vector<16x128xf32>
    %13 = arith.subf %3, %12 : vector<16x128xf32>
    %14 = arith.mulf %13, %13 : vector<16x128xf32>
    %cst_9 = arith.constant dense<0.000000e+00> : vector<16xf32>
    %15 = vector.multi_reduction <add>, %14, %cst_9 [1] : vector<16x128xf32> to vector<16xf32>
    %16 = vector.shape_cast %15 : vector<16xf32> to vector<16x1xf32>
    %cst_10 = arith.constant 1.280000e+02 : f32
    %17 = vector.broadcast %cst_10 : f32 to vector<16x1xf32>
    %18 = arith.divf %16, %17 : vector<16x1xf32>
    %19 = vector.broadcast %11 : vector<16x1xf32> to vector<16x128xf32>
    %20 = arith.subf %3, %19 : vector<16x128xf32>
    %cst_11 = arith.constant 9.99999997E-7 : f32
    %21 = vector.broadcast %cst_11 : f32 to vector<16x1xf32>
    %22 = arith.addf %18, %21 : vector<16x1xf32>
    %23 = math.rsqrt %22 : vector<16x1xf32>
    %24 = vector.broadcast %23 : vector<16x1xf32> to vector<16x128xf32>
    %25 = arith.mulf %20, %24 : vector<16x128xf32>
    %26 = vector.broadcast %5 : vector<1x128xf32> to vector<16x128xf32>
    %27 = arith.mulf %25, %26 : vector<16x128xf32>
    %28 = vector.broadcast %7 : vector<1x128xf32> to vector<16x128xf32>
    %29 = arith.addf %27, %28 : vector<16x128xf32>
    %30 = arith.truncf %29 : vector<16x128xf32> to vector<16x128xbf16>
    %c0_12 = arith.constant 0 : index
    %c0_13 = arith.constant 0 : index
    %c0_14 = arith.constant 0 : index
    %31 = vector.load %arg8[%c0_12, %c0_13, %c0_14] : memref<1x128x384xbf16, #tpu.memory_space<vmem>>, vector<1x128x384xbf16>
    %32 = vector.shape_cast %31 : vector<1x128x384xbf16> to vector<128x384xbf16>
    %cst_15 = arith.constant dense<0.000000e+00> : vector<16x384xf32>
    %33 = tpu.matmul %30, %32, %cst_15 {dimension_numbers = #tpu.dot_dimension_numbers<[1], [0], [0], [1], [0, 0, 1, 1], [], []>} : vector<16x128xbf16>, vector<128x384xbf16>, vector<16x384xf32> -> vector<16x384xf32>
    %c0_16 = arith.constant 0 : index
    %c0_17 = arith.constant 0 : index
    %c0_18 = arith.constant 0 : index
    %34 = vector.load %arg9[%c0_16, %c0_17, %c0_18] : memref<1x1x384xf32, #tpu.memory_space<vmem>>, vector<1x1x384xf32>
    %35 = vector.shape_cast %34 : vector<1x1x384xf32> to vector<1x384xf32>
    %36 = vector.broadcast %35 : vector<1x384xf32> to vector<16x384xf32>
    %37 = arith.addf %33, %36 : vector<16x384xf32>
    %38 = vector.extract_strided_slice %37 {offsets = [0, 0], sizes = [16, 128], strides = [1, 1]} : vector<16x384xf32> to vector<16x128xf32>
    %39 = vector.extract_strided_slice %37 {offsets = [0, 128], sizes = [16, 128], strides = [1, 1]} : vector<16x384xf32> to vector<16x128xf32>
    %40 = vector.extract_strided_slice %37 {offsets = [0, 256], sizes = [16, 128], strides = [1, 1]} : vector<16x384xf32> to vector<16x128xf32>
    %c0_19 = arith.constant 0 : index
    %c0_20 = arith.constant 0 : index
    %c0_21 = arith.constant 0 : index
    %41 = vector.load %arg4[%c0_19, %c0_20, %c0_21] : memref<1x8x8xf32, #tpu.memory_space<vmem>>, vector<1x8x8xf32>
    %42 = vector.extract_strided_slice %38 {offsets = [0, 0], sizes = [16, 32], strides = [1, 1]} : vector<16x128xf32> to vector<16x32xf32>
    %cst_22 = arith.constant 0.176776692 : f32
    %43 = vector.broadcast %cst_22 : f32 to vector<16x32xf32>
    %44 = arith.mulf %42, %43 : vector<16x32xf32>
    %45 = vector.shape_cast %44 : vector<16x32xf32> to vector<2x8x32xf32>
    %46 = vector.extract_strided_slice %39 {offsets = [0, 0], sizes = [16, 32], strides = [1, 1]} : vector<16x128xf32> to vector<16x32xf32>
    %47 = vector.shape_cast %46 : vector<16x32xf32> to vector<2x8x32xf32>
    %48 = vector.extract_strided_slice %40 {offsets = [0, 0], sizes = [16, 32], strides = [1, 1]} : vector<16x128xf32> to vector<16x32xf32>
    %49 = vector.shape_cast %48 : vector<16x32xf32> to vector<2x8x32xf32>
    "tpu.trace_start"() <{level = 10 : i32, message = "bqd,bkd->bqk"}> : () -> ()
    %cst_23 = arith.constant dense<0.000000e+00> : vector<2x8x8xf32>
    %50 = tpu.matmul %45, %47, %cst_23 {dimension_numbers = #tpu.dot_dimension_numbers<[2], [2], [1], [1], [0, 0, 0, 1, 1, 1], [0], [0]>} : vector<2x8x32xf32>, vector<2x8x32xf32>, vector<2x8x8xf32> -> vector<2x8x8xf32>
    "tpu.trace_stop"() : () -> ()
    %51 = vector.broadcast %41 : vector<1x8x8xf32> to vector<2x8x8xf32>
    %52 = arith.addf %50, %51 : vector<2x8x8xf32>
    %cst_24 = arith.constant dense<0xFF800000> : vector<2x8xf32>
    %53 = vector.multi_reduction <maximumf>, %52, %cst_24 [2] : vector<2x8x8xf32> to vector<2x8xf32>
    %54 = vector.shape_cast %53 : vector<2x8xf32> to vector<2x8x1xf32>
    %55 = vector.broadcast %54 : vector<2x8x1xf32> to vector<2x8x8xf32>
    %56 = arith.subf %52, %55 : vector<2x8x8xf32>
    %57 = math.exp %56 : vector<2x8x8xf32>
    %cst_25 = arith.constant dense<0.000000e+00> : vector<2x8xf32>
    %58 = vector.multi_reduction <add>, %57, %cst_25 [2] : vector<2x8x8xf32> to vector<2x8xf32>
    %59 = vector.shape_cast %58 : vector<2x8xf32> to vector<2x8x1xf32>
    %60 = tpu.reciprocal %59 {approx = true} : vector<2x8x1xf32> -> vector<2x8x1xf32>
    %61 = vector.broadcast %60 : vector<2x8x1xf32> to vector<2x8x8xf32>
    %62 = arith.mulf %57, %61 : vector<2x8x8xf32>
    "tpu.trace_start"() <{level = 10 : i32, message = "bqk,bkd->bqd"}> : () -> ()
    %cst_26 = arith.constant dense<0.000000e+00> : vector<2x8x32xf32>
    %63 = tpu.matmul %62, %49, %cst_26 {dimension_numbers = #tpu.dot_dimension_numbers<[2], [1], [1], [2], [0, 0, 0, 1, 1, 2], [0], [0]>} : vector<2x8x8xf32>, vector<2x8x32xf32>, vector<2x8x32xf32> -> vector<2x8x32xf32>
    "tpu.trace_stop"() : () -> ()
    %64 = vector.shape_cast %63 : vector<2x8x32xf32> to vector<16x32xf32>
    %65 = vector.extract_strided_slice %38 {offsets = [0, 32], sizes = [16, 32], strides = [1, 1]} : vector<16x128xf32> to vector<16x32xf32>
    %cst_27 = arith.constant 0.176776692 : f32
    %66 = vector.broadcast %cst_27 : f32 to vector<16x32xf32>
    %67 = arith.mulf %65, %66 : vector<16x32xf32>
    %68 = vector.shape_cast %67 : vector<16x32xf32> to vector<2x8x32xf32>
    %69 = vector.extract_strided_slice %39 {offsets = [0, 32], sizes = [16, 32], strides = [1, 1]} : vector<16x128xf32> to vector<16x32xf32>
    %70 = vector.shape_cast %69 : vector<16x32xf32> to vector<2x8x32xf32>
    %71 = vector.extract_strided_slice %40 {offsets = [0, 32], sizes = [16, 32], strides = [1, 1]} : vector<16x128xf32> to vector<16x32xf32>
    %72 = vector.shape_cast %71 : vector<16x32xf32> to vector<2x8x32xf32>
    "tpu.trace_start"() <{level = 10 : i32, message = "bqd,bkd->bqk"}> : () -> ()
    %cst_28 = arith.constant dense<0.000000e+00> : vector<2x8x8xf32>
    %73 = tpu.matmul %68, %70, %cst_28 {dimension_numbers = #tpu.dot_dimension_numbers<[2], [2], [1], [1], [0, 0, 0, 1, 1, 1], [0], [0]>} : vector<2x8x32xf32>, vector<2x8x32xf32>, vector<2x8x8xf32> -> vector<2x8x8xf32>
    "tpu.trace_stop"() : () -> ()
    %74 = vector.broadcast %41 : vector<1x8x8xf32> to vector<2x8x8xf32>
    %75 = arith.addf %73, %74 : vector<2x8x8xf32>
    %cst_29 = arith.constant dense<0xFF800000> : vector<2x8xf32>
    %76 = vector.multi_reduction <maximumf>, %75, %cst_29 [2] : vector<2x8x8xf32> to vector<2x8xf32>
    %77 = vector.shape_cast %76 : vector<2x8xf32> to vector<2x8x1xf32>
    %78 = vector.broadcast %77 : vector<2x8x1xf32> to vector<2x8x8xf32>
    %79 = arith.subf %75, %78 : vector<2x8x8xf32>
    %80 = math.exp %79 : vector<2x8x8xf32>
    %cst_30 = arith.constant dense<0.000000e+00> : vector<2x8xf32>
    %81 = vector.multi_reduction <add>, %80, %cst_30 [2] : vector<2x8x8xf32> to vector<2x8xf32>
    %82 = vector.shape_cast %81 : vector<2x8xf32> to vector<2x8x1xf32>
    %83 = tpu.reciprocal %82 {approx = true} : vector<2x8x1xf32> -> vector<2x8x1xf32>
    %84 = vector.broadcast %83 : vector<2x8x1xf32> to vector<2x8x8xf32>
    %85 = arith.mulf %80, %84 : vector<2x8x8xf32>
    "tpu.trace_start"() <{level = 10 : i32, message = "bqk,bkd->bqd"}> : () -> ()
    %cst_31 = arith.constant dense<0.000000e+00> : vector<2x8x32xf32>
    %86 = tpu.matmul %85, %72, %cst_31 {dimension_numbers = #tpu.dot_dimension_numbers<[2], [1], [1], [2], [0, 0, 0, 1, 1, 2], [0], [0]>} : vector<2x8x8xf32>, vector<2x8x32xf32>, vector<2x8x32xf32> -> vector<2x8x32xf32>
    "tpu.trace_stop"() : () -> ()
    %87 = vector.shape_cast %86 : vector<2x8x32xf32> to vector<16x32xf32>
    %88 = vector.extract_strided_slice %38 {offsets = [0, 64], sizes = [16, 32], strides = [1, 1]} : vector<16x128xf32> to vector<16x32xf32>
    %cst_32 = arith.constant 0.176776692 : f32
    %89 = vector.broadcast %cst_32 : f32 to vector<16x32xf32>
    %90 = arith.mulf %88, %89 : vector<16x32xf32>
    %91 = vector.shape_cast %90 : vector<16x32xf32> to vector<2x8x32xf32>
    %92 = vector.extract_strided_slice %39 {offsets = [0, 64], sizes = [16, 32], strides = [1, 1]} : vector<16x128xf32> to vector<16x32xf32>
    %93 = vector.shape_cast %92 : vector<16x32xf32> to vector<2x8x32xf32>
    %94 = vector.extract_strided_slice %40 {offsets = [0, 64], sizes = [16, 32], strides = [1, 1]} : vector<16x128xf32> to vector<16x32xf32>
    %95 = vector.shape_cast %94 : vector<16x32xf32> to vector<2x8x32xf32>
    "tpu.trace_start"() <{level = 10 : i32, message = "bqd,bkd->bqk"}> : () -> ()
    %cst_33 = arith.constant dense<0.000000e+00> : vector<2x8x8xf32>
    %96 = tpu.matmul %91, %93, %cst_33 {dimension_numbers = #tpu.dot_dimension_numbers<[2], [2], [1], [1], [0, 0, 0, 1, 1, 1], [0], [0]>} : vector<2x8x32xf32>, vector<2x8x32xf32>, vector<2x8x8xf32> -> vector<2x8x8xf32>
    "tpu.trace_stop"() : () -> ()
    %97 = vector.broadcast %41 : vector<1x8x8xf32> to vector<2x8x8xf32>
    %98 = arith.addf %96, %97 : vector<2x8x8xf32>
    %cst_34 = arith.constant dense<0xFF800000> : vector<2x8xf32>
    %99 = vector.multi_reduction <maximumf>, %98, %cst_34 [2] : vector<2x8x8xf32> to vector<2x8xf32>
    %100 = vector.shape_cast %99 : vector<2x8xf32> to vector<2x8x1xf32>
    %101 = vector.broadcast %100 : vector<2x8x1xf32> to vector<2x8x8xf32>
    %102 = arith.subf %98, %101 : vector<2x8x8xf32>
    %103 = math.exp %102 : vector<2x8x8xf32>
    %cst_35 = arith.constant dense<0.000000e+00> : vector<2x8xf32>
    %104 = vector.multi_reduction <add>, %103, %cst_35 [2] : vector<2x8x8xf32> to vector<2x8xf32>
    %105 = vector.shape_cast %104 : vector<2x8xf32> to vector<2x8x1xf32>
    %106 = tpu.reciprocal %105 {approx = true} : vector<2x8x1xf32> -> vector<2x8x1xf32>
    %107 = vector.broadcast %106 : vector<2x8x1xf32> to vector<2x8x8xf32>
    %108 = arith.mulf %103, %107 : vector<2x8x8xf32>
    "tpu.trace_start"() <{level = 10 : i32, message = "bqk,bkd->bqd"}> : () -> ()
    %cst_36 = arith.constant dense<0.000000e+00> : vector<2x8x32xf32>
    %109 = tpu.matmul %108, %95, %cst_36 {dimension_numbers = #tpu.dot_dimension_numbers<[2], [1], [1], [2], [0, 0, 0, 1, 1, 2], [0], [0]>} : vector<2x8x8xf32>, vector<2x8x32xf32>, vector<2x8x32xf32> -> vector<2x8x32xf32>
    "tpu.trace_stop"() : () -> ()
    %110 = vector.shape_cast %109 : vector<2x8x32xf32> to vector<16x32xf32>
    %111 = vector.extract_strided_slice %38 {offsets = [0, 96], sizes = [16, 32], strides = [1, 1]} : vector<16x128xf32> to vector<16x32xf32>
    %cst_37 = arith.constant 0.176776692 : f32
    %112 = vector.broadcast %cst_37 : f32 to vector<16x32xf32>
    %113 = arith.mulf %111, %112 : vector<16x32xf32>
    %114 = vector.shape_cast %113 : vector<16x32xf32> to vector<2x8x32xf32>
    %115 = vector.extract_strided_slice %39 {offsets = [0, 96], sizes = [16, 32], strides = [1, 1]} : vector<16x128xf32> to vector<16x32xf32>
    %116 = vector.shape_cast %115 : vector<16x32xf32> to vector<2x8x32xf32>
    %117 = vector.extract_strided_slice %40 {offsets = [0, 96], sizes = [16, 32], strides = [1, 1]} : vector<16x128xf32> to vector<16x32xf32>
    %118 = vector.shape_cast %117 : vector<16x32xf32> to vector<2x8x32xf32>
    "tpu.trace_start"() <{level = 10 : i32, message = "bqd,bkd->bqk"}> : () -> ()
    %cst_38 = arith.constant dense<0.000000e+00> : vector<2x8x8xf32>
    %119 = tpu.matmul %114, %116, %cst_38 {dimension_numbers = #tpu.dot_dimension_numbers<[2], [2], [1], [1], [0, 0, 0, 1, 1, 1], [0], [0]>} : vector<2x8x32xf32>, vector<2x8x32xf32>, vector<2x8x8xf32> -> vector<2x8x8xf32>
    "tpu.trace_stop"() : () -> ()
    %120 = vector.broadcast %41 : vector<1x8x8xf32> to vector<2x8x8xf32>
    %121 = arith.addf %119, %120 : vector<2x8x8xf32>
    %cst_39 = arith.constant dense<0xFF800000> : vector<2x8xf32>
    %122 = vector.multi_reduction <maximumf>, %121, %cst_39 [2] : vector<2x8x8xf32> to vector<2x8xf32>
    %123 = vector.shape_cast %122 : vector<2x8xf32> to vector<2x8x1xf32>
    %124 = vector.broadcast %123 : vector<2x8x1xf32> to vector<2x8x8xf32>
    %125 = arith.subf %121, %124 : vector<2x8x8xf32>
    %126 = math.exp %125 : vector<2x8x8xf32>
    %cst_40 = arith.constant dense<0.000000e+00> : vector<2x8xf32>
    %127 = vector.multi_reduction <add>, %126, %cst_40 [2] : vector<2x8x8xf32> to vector<2x8xf32>
    %128 = vector.shape_cast %127 : vector<2x8xf32> to vector<2x8x1xf32>
    %129 = tpu.reciprocal %128 {approx = true} : vector<2x8x1xf32> -> vector<2x8x1xf32>
    %130 = vector.broadcast %129 : vector<2x8x1xf32> to vector<2x8x8xf32>
    %131 = arith.mulf %126, %130 : vector<2x8x8xf32>
    "tpu.trace_start"() <{level = 10 : i32, message = "bqk,bkd->bqd"}> : () -> ()
    %cst_41 = arith.constant dense<0.000000e+00> : vector<2x8x32xf32>
    %132 = tpu.matmul %131, %118, %cst_41 {dimension_numbers = #tpu.dot_dimension_numbers<[2], [1], [1], [2], [0, 0, 0, 1, 1, 2], [0], [0]>} : vector<2x8x8xf32>, vector<2x8x32xf32>, vector<2x8x32xf32> -> vector<2x8x32xf32>
    "tpu.trace_stop"() : () -> ()
    %133 = vector.shape_cast %132 : vector<2x8x32xf32> to vector<16x32xf32>
    %134 = tpu.concatenate %64, %87, %110, %133 in 1 : vector<16x32xf32>, vector<16x32xf32>, vector<16x32xf32>, vector<16x32xf32> -> vector<16x128xf32>
    %135 = arith.truncf %134 : vector<16x128xf32> to vector<16x128xbf16>
    %c0_42 = arith.constant 0 : index
    %c0_43 = arith.constant 0 : index
    %c0_44 = arith.constant 0 : index
    %136 = vector.load %arg10[%c0_42, %c0_43, %c0_44] : memref<1x128x128xbf16, #tpu.memory_space<vmem>>, vector<1x128x128xbf16>
    %137 = vector.shape_cast %136 : vector<1x128x128xbf16> to vector<128x128xbf16>
    %cst_45 = arith.constant dense<0.000000e+00> : vector<16x128xf32>
    %138 = tpu.matmul %135, %137, %cst_45 {dimension_numbers = #tpu.dot_dimension_numbers<[1], [0], [0], [1], [0, 0, 1, 1], [], []>} : vector<16x128xbf16>, vector<128x128xbf16>, vector<16x128xf32> -> vector<16x128xf32>
    %c0_46 = arith.constant 0 : index
    %c0_47 = arith.constant 0 : index
    %c0_48 = arith.constant 0 : index
    %139 = vector.load %arg11[%c0_46, %c0_47, %c0_48] : memref<1x1x128xf32, #tpu.memory_space<vmem>>, vector<1x1x128xf32>
    %140 = vector.shape_cast %139 : vector<1x1x128xf32> to vector<1x128xf32>
    %141 = vector.broadcast %140 : vector<1x128xf32> to vector<16x128xf32>
    %142 = arith.addf %138, %141 : vector<16x128xf32>
    %143 = arith.addf %3, %142 : vector<16x128xf32>
    %c0_49 = arith.constant 0 : index
    %c0_50 = arith.constant 0 : index
    %c0_51 = arith.constant 0 : index
    %144 = vector.load %arg12[%c0_49, %c0_50, %c0_51] : memref<1x1x128xf32, #tpu.memory_space<vmem>>, vector<1x1x128xf32>
    %145 = vector.shape_cast %144 : vector<1x1x128xf32> to vector<1x128xf32>
    %c0_52 = arith.constant 0 : index
    %c0_53 = arith.constant 0 : index
    %c0_54 = arith.constant 0 : index
    %146 = vector.load %arg13[%c0_52, %c0_53, %c0_54] : memref<1x1x128xf32, #tpu.memory_space<vmem>>, vector<1x1x128xf32>
    %147 = vector.shape_cast %146 : vector<1x1x128xf32> to vector<1x128xf32>
    %cst_55 = arith.constant dense<0.000000e+00> : vector<16xf32>
    %148 = vector.multi_reduction <add>, %143, %cst_55 [1] : vector<16x128xf32> to vector<16xf32>
    %149 = vector.shape_cast %148 : vector<16xf32> to vector<16x1xf32>
    %cst_56 = arith.constant 1.280000e+02 : f32
    %150 = vector.broadcast %cst_56 : f32 to vector<16x1xf32>
    %151 = arith.divf %149, %150 : vector<16x1xf32>
    %152 = vector.broadcast %151 : vector<16x1xf32> to vector<16x128xf32>
    %153 = arith.subf %143, %152 : vector<16x128xf32>
    %154 = arith.mulf %153, %153 : vector<16x128xf32>
    %cst_57 = arith.constant dense<0.000000e+00> : vector<16xf32>
    %155 = vector.multi_reduction <add>, %154, %cst_57 [1] : vector<16x128xf32> to vector<16xf32>
    %156 = vector.shape_cast %155 : vector<16xf32> to vector<16x1xf32>
    %cst_58 = arith.constant 1.280000e+02 : f32
    %157 = vector.broadcast %cst_58 : f32 to vector<16x1xf32>
    %158 = arith.divf %156, %157 : vector<16x1xf32>
    %159 = vector.broadcast %151 : vector<16x1xf32> to vector<16x128xf32>
    %160 = arith.subf %143, %159 : vector<16x128xf32>
    %cst_59 = arith.constant 9.99999997E-7 : f32
    %161 = vector.broadcast %cst_59 : f32 to vector<16x1xf32>
    %162 = arith.addf %158, %161 : vector<16x1xf32>
    %163 = math.rsqrt %162 : vector<16x1xf32>
    %164 = vector.broadcast %163 : vector<16x1xf32> to vector<16x128xf32>
    %165 = arith.mulf %160, %164 : vector<16x128xf32>
    %166 = vector.broadcast %145 : vector<1x128xf32> to vector<16x128xf32>
    %167 = arith.mulf %165, %166 : vector<16x128xf32>
    %168 = vector.broadcast %147 : vector<1x128xf32> to vector<16x128xf32>
    %169 = arith.addf %167, %168 : vector<16x128xf32>
    %170 = arith.truncf %169 : vector<16x128xf32> to vector<16x128xbf16>
    %c0_60 = arith.constant 0 : index
    %c0_61 = arith.constant 0 : index
    %c0_62 = arith.constant 0 : index
    %171 = vector.load %arg14[%c0_60, %c0_61, %c0_62] : memref<1x128x256xbf16, #tpu.memory_space<vmem>>, vector<1x128x256xbf16>
    %172 = vector.shape_cast %171 : vector<1x128x256xbf16> to vector<128x256xbf16>
    %cst_63 = arith.constant dense<0.000000e+00> : vector<16x256xf32>
    %173 = tpu.matmul %170, %172, %cst_63 {dimension_numbers = #tpu.dot_dimension_numbers<[1], [0], [0], [1], [0, 0, 1, 1], [], []>} : vector<16x128xbf16>, vector<128x256xbf16>, vector<16x256xf32> -> vector<16x256xf32>
    %c0_64 = arith.constant 0 : index
    %c0_65 = arith.constant 0 : index
    %c0_66 = arith.constant 0 : index
    %174 = vector.load %arg15[%c0_64, %c0_65, %c0_66] : memref<1x1x256xf32, #tpu.memory_space<vmem>>, vector<1x1x256xf32>
    %175 = vector.shape_cast %174 : vector<1x1x256xf32> to vector<1x256xf32>
    %176 = vector.broadcast %175 : vector<1x256xf32> to vector<16x256xf32>
    %177 = arith.addf %173, %176 : vector<16x256xf32>
    %cst_67 = arith.constant 5.000000e-01 : f32
    %178 = vector.broadcast %cst_67 : f32 to vector<16x256xf32>
    %179 = arith.mulf %178, %177 : vector<16x256xf32>
    %cst_68 = arith.constant 4.471500e-02 : f32
    %180 = vector.broadcast %cst_68 : f32 to vector<16x256xf32>
    %181 = arith.mulf %180, %177 : vector<16x256xf32>
    %182 = arith.mulf %181, %177 : vector<16x256xf32>
    %183 = arith.mulf %182, %177 : vector<16x256xf32>
    %184 = arith.addf %177, %183 : vector<16x256xf32>
    %cst_69 = arith.constant 0.797884583 : f32
    %185 = vector.broadcast %cst_69 : f32 to vector<16x256xf32>
    %186 = arith.mulf %185, %184 : vector<16x256xf32>
    %187 = math.tanh %186 : vector<16x256xf32>
    %cst_70 = arith.constant 1.000000e+00 : f32
    %188 = vector.broadcast %cst_70 : f32 to vector<16x256xf32>
    %189 = arith.addf %188, %187 : vector<16x256xf32>
    %190 = arith.mulf %179, %189 : vector<16x256xf32>
    %191 = arith.truncf %190 : vector<16x256xf32> to vector<16x256xbf16>
    %c0_71 = arith.constant 0 : index
    %c0_72 = arith.constant 0 : index
    %c0_73 = arith.constant 0 : index
    %192 = vector.load %arg16[%c0_71, %c0_72, %c0_73] : memref<1x256x128xbf16, #tpu.memory_space<vmem>>, vector<1x256x128xbf16>
    %193 = vector.shape_cast %192 : vector<1x256x128xbf16> to vector<256x128xbf16>
    %cst_74 = arith.constant dense<0.000000e+00> : vector<16x128xf32>
    %194 = tpu.matmul %191, %193, %cst_74 {dimension_numbers = #tpu.dot_dimension_numbers<[1], [0], [0], [1], [0, 0, 1, 1], [], []>} : vector<16x256xbf16>, vector<256x128xbf16>, vector<16x128xf32> -> vector<16x128xf32>
    %c0_75 = arith.constant 0 : index
    %c0_76 = arith.constant 0 : index
    %c0_77 = arith.constant 0 : index
    %195 = vector.load %arg17[%c0_75, %c0_76, %c0_77] : memref<1x1x128xf32, #tpu.memory_space<vmem>>, vector<1x1x128xf32>
    %196 = vector.shape_cast %195 : vector<1x1x128xf32> to vector<1x128xf32>
    %197 = vector.broadcast %196 : vector<1x128xf32> to vector<16x128xf32>
    %198 = arith.addf %194, %197 : vector<16x128xf32>
    %199 = arith.addf %143, %198 : vector<16x128xf32>
    %c0_78 = arith.constant 0 : index
    %c0_79 = arith.constant 0 : index
    %200 = vector.load %arg30[%c0_78, %c0_79] : memref<16x128xf32, #tpu.memory_space<vmem>>, vector<16x128xf32>
    tpu.vector_store %arg30[%c0_78, %c0_79], %199 {strides = array<i32>} : memref<16x128xf32, #tpu.memory_space<vmem>>, vector<16x128xf32>,
    %c1_i32 = arith.constant 1 : i32
    %201 = arith.cmpi eq, %arg0, %c1_i32 : i32
    %202 = arith.extui %201 : i1 to i32
    %c0_i32_80 = arith.constant 0 : i32
    %203 = arith.cmpi ne, %202, %c0_i32_80 : i32
    scf.if %203 {
      %204 = vector.extract_strided_slice %199 {offsets = [0, 0], sizes = [1, 128], strides = [1, 1]} : vector<16x128xf32> to vector<1x128xf32>
      %205 = vector.extract_strided_slice %199 {offsets = [8, 0], sizes = [1, 128], strides = [1, 1]} : vector<16x128xf32> to vector<1x128xf32>
      %206 = tpu.concatenate %204, %205 in 0 : vector<1x128xf32>, vector<1x128xf32> -> vector<2x128xf32>
      %c0_81 = arith.constant 0 : index
      %c0_82 = arith.constant 0 : index
      %207 = vector.load %arg18[%c0_81, %c0_82] : memref<1x128xf32, #tpu.memory_space<vmem>>, vector<1x128xf32>
      %c0_83 = arith.constant 0 : index
      %c0_84 = arith.constant 0 : index
      %208 = vector.load %arg19[%c0_83, %c0_84] : memref<1x128xf32, #tpu.memory_space<vmem>>, vector<1x128xf32>
      %cst_85 = arith.constant dense<0.000000e+00> : vector<2xf32>
      %209 = vector.multi_reduction <add>, %206, %cst_85 [1] : vector<2x128xf32> to vector<2xf32>
      %210 = vector.shape_cast %209 : vector<2xf32> to vector<2x1xf32>
      %cst_86 = arith.constant 1.280000e+02 : f32
      %211 = vector.broadcast %cst_86 : f32 to vector<2x1xf32>
      %212 = arith.divf %210, %211 : vector<2x1xf32>
      %213 = vector.broadcast %212 : vector<2x1xf32> to vector<2x128xf32>
      %214 = arith.subf %206, %213 : vector<2x128xf32>
      %215 = arith.mulf %214, %214 : vector<2x128xf32>
      %cst_87 = arith.constant dense<0.000000e+00> : vector<2xf32>
      %216 = vector.multi_reduction <add>, %215, %cst_87 [1] : vector<2x128xf32> to vector<2xf32>
      %217 = vector.shape_cast %216 : vector<2xf32> to vector<2x1xf32>
      %cst_88 = arith.constant 1.280000e+02 : f32
      %218 = vector.broadcast %cst_88 : f32 to vector<2x1xf32>
      %219 = arith.divf %217, %218 : vector<2x1xf32>
      %220 = vector.broadcast %212 : vector<2x1xf32> to vector<2x128xf32>
      %221 = arith.subf %206, %220 : vector<2x128xf32>
      %cst_89 = arith.constant 9.99999997E-7 : f32
      %222 = vector.broadcast %cst_89 : f32 to vector<2x1xf32>
      %223 = arith.addf %219, %222 : vector<2x1xf32>
      %224 = math.rsqrt %223 : vector<2x1xf32>
      %225 = vector.broadcast %224 : vector<2x1xf32> to vector<2x128xf32>
      %226 = arith.mulf %221, %225 : vector<2x128xf32>
      %227 = vector.broadcast %207 : vector<1x128xf32> to vector<2x128xf32>
      %228 = arith.mulf %226, %227 : vector<2x128xf32>
      %229 = vector.broadcast %208 : vector<1x128xf32> to vector<2x128xf32>
      %230 = arith.addf %228, %229 : vector<2x128xf32>
      %231 = arith.truncf %230 : vector<2x128xf32> to vector<2x128xbf16>
      %c0_90 = arith.constant 0 : index
      %c0_91 = arith.constant 0 : index
      %232 = vector.load %arg20[%c0_90, %c0_91] : memref<128x512xbf16, #tpu.memory_space<vmem>>, vector<128x512xbf16>
      %cst_92 = arith.constant dense<0.000000e+00> : vector<2x512xf32>
      %233 = tpu.matmul %231, %232, %cst_92 {dimension_numbers = #tpu.dot_dimension_numbers<[1], [0], [0], [1], [0, 0, 1, 1], [], []>} : vector<2x128xbf16>, vector<128x512xbf16>, vector<2x512xf32> -> vector<2x512xf32>
      %c0_93 = arith.constant 0 : index
      %c0_94 = arith.constant 0 : index
      %234 = vector.load %arg5[%c0_93, %c0_94] : memref<2x4xf32, #tpu.memory_space<vmem>>, vector<2x4xf32>
      %c0_95 = arith.constant 0 : index
      %c0_96 = arith.constant 0 : index
      %235 = vector.load %arg21[%c0_95, %c0_96] : memref<4x512xf32, #tpu.memory_space<vmem>>, vector<4x512xf32>
      %cst_97 = arith.constant dense<0.000000e+00> : vector<2x512xf32>
      %236 = tpu.matmul %234, %235, %cst_97 {dimension_numbers = #tpu.dot_dimension_numbers<[1], [0], [0], [1], [0, 0, 1, 1], [], []>} : vector<2x4xf32>, vector<4x512xf32>, vector<2x512xf32> -> vector<2x512xf32>
      %237 = arith.addf %233, %236 : vector<2x512xf32>
      %c0_98 = arith.constant 0 : index
      %c0_99 = arith.constant 0 : index
      %238 = vector.load %arg22[%c0_98, %c0_99] : memref<1x512xf32, #tpu.memory_space<vmem>>, vector<1x512xf32>
      %239 = vector.broadcast %238 : vector<1x512xf32> to vector<2x512xf32>
      %240 = arith.addf %237, %239 : vector<2x512xf32>
      %cst_100 = arith.constant 0.000000e+00 : f32
      %241 = vector.broadcast %cst_100 : f32 to vector<2x512xf32>
      %242 = arith.maximumf %240, %241 : vector<2x512xf32>
      %243 = arith.truncf %242 : vector<2x512xf32> to vector<2x512xbf16>
      %c0_101 = arith.constant 0 : index
      %c0_102 = arith.constant 0 : index
      %244 = vector.load %arg23[%c0_101, %c0_102] : memref<512x256xbf16, #tpu.memory_space<vmem>>, vector<512x256xbf16>
      %cst_103 = arith.constant dense<0.000000e+00> : vector<2x256xf32>
      %245 = tpu.matmul %243, %244, %cst_103 {dimension_numbers = #tpu.dot_dimension_numbers<[1], [0], [0], [1], [0, 0, 1, 1], [], []>} : vector<2x512xbf16>, vector<512x256xbf16>, vector<2x256xf32> -> vector<2x256xf32>
      %c0_104 = arith.constant 0 : index
      %c0_105 = arith.constant 0 : index
      %246 = vector.load %arg24[%c0_104, %c0_105] : memref<1x256xf32, #tpu.memory_space<vmem>>, vector<1x256xf32>
      %247 = vector.broadcast %246 : vector<1x256xf32> to vector<2x256xf32>
      %248 = arith.addf %245, %247 : vector<2x256xf32>
      %cst_106 = arith.constant 0.000000e+00 : f32
      %249 = vector.broadcast %cst_106 : f32 to vector<2x256xf32>
      %250 = arith.maximumf %248, %249 : vector<2x256xf32>
      %251 = arith.truncf %250 : vector<2x256xf32> to vector<2x256xbf16>
      %c0_107 = arith.constant 0 : index
      %c0_108 = arith.constant 0 : index
      %252 = vector.load %arg25[%c0_107, %c0_108] : memref<256x128xbf16, #tpu.memory_space<vmem>>, vector<256x128xbf16>
      %cst_109 = arith.constant dense<0.000000e+00> : vector<2x128xf32>
      %253 = tpu.matmul %251, %252, %cst_109 {dimension_numbers = #tpu.dot_dimension_numbers<[1], [0], [0], [1], [0, 0, 1, 1], [], []>} : vector<2x256xbf16>, vector<256x128xbf16>, vector<2x128xf32> -> vector<2x128xf32>
      %c0_110 = arith.constant 0 : index
      %c0_111 = arith.constant 0 : index
      %254 = vector.load %arg26[%c0_110, %c0_111] : memref<1x128xf32, #tpu.memory_space<vmem>>, vector<1x128xf32>
      %255 = vector.broadcast %254 : vector<1x128xf32> to vector<2x128xf32>
      %256 = arith.addf %253, %255 : vector<2x128xf32>
      %cst_112 = arith.constant 0.000000e+00 : f32
      %257 = vector.broadcast %cst_112 : f32 to vector<2x128xf32>
      %258 = arith.maximumf %256, %257 : vector<2x128xf32>
      %259 = arith.truncf %258 : vector<2x128xf32> to vector<2x128xbf16>
      %c0_113 = arith.constant 0 : index
      %c0_114 = arith.constant 0 : index
      %260 = vector.load %arg27[%c0_113, %c0_114] : memref<128x15xbf16, #tpu.memory_space<vmem>>, vector<128x15xbf16>
      %cst_115 = arith.constant dense<0.000000e+00> : vector<2x15xf32>
      %261 = tpu.matmul %259, %260, %cst_115 {dimension_numbers = #tpu.dot_dimension_numbers<[1], [0], [0], [1], [0, 0, 1, 1], [], []>} : vector<2x128xbf16>, vector<128x15xbf16>, vector<2x15xf32> -> vector<2x15xf32>
      %c0_116 = arith.constant 0 : index
      %c0_117 = arith.constant 0 : index
      %262 = vector.load %arg28[%c0_116, %c0_117] : memref<1x15xf32, #tpu.memory_space<vmem>>, vector<1x15xf32>
      %263 = vector.broadcast %262 : vector<1x15xf32> to vector<2x15xf32>
      %264 = arith.addf %261, %263 : vector<2x15xf32>
      %c0_118 = arith.constant 0 : index
      %c0_119 = arith.constant 0 : index
      %265 = vector.load %arg29[%c0_118, %c0_119] : memref<2x15xf32, #tpu.memory_space<vmem>>, vector<2x15xf32>
      tpu.vector_store %arg29[%c0_118, %c0_119], %264 {strides = array<i32>} : memref<2x15xf32, #tpu.memory_space<vmem>>, vector<2x15xf32>,
    } else {
    }
    return
  }
  func.func @transform_0(%arg0: i32) -> (i32, i32) {
    %c0_i32 = arith.constant 0 : i32
    %c0_i32_0 = arith.constant 0 : i32
    %c0_i32_1 = arith.constant 0 : i32
    return %c0_i32, %c0_i32_0 : i32, i32
  }
  func.func @transform_1(%arg0: i32) -> (i32, i32) {
    %c0_i32 = arith.constant 0 : i32
    %c0_i32_0 = arith.constant 0 : i32
    %c0_i32_1 = arith.constant 0 : i32
    return %c0_i32, %c0_i32_0 : i32, i32
  }
  func.func @transform_2(%arg0: i32) -> (i32, i32) {
    %c0_i32 = arith.constant 0 : i32
    %c0_i32_0 = arith.constant 0 : i32
    %c0_i32_1 = arith.constant 0 : i32
    return %c0_i32, %c0_i32_0 : i32, i32
  }
  func.func @transform_3(%arg0: i32) -> (i32, i32, i32) {
    %c0_i32 = arith.constant 0 : i32
    %c0_i32_0 = arith.constant 0 : i32
    %c0_i32_1 = arith.constant 0 : i32
    %c0_i32_2 = arith.constant 0 : i32
    return %c0_i32, %c0_i32_0, %c0_i32_1 : i32, i32, i32
  }
  func.func @transform_4(%arg0: i32) -> (i32, i32) {
    %c0_i32 = arith.constant 0 : i32
    %c0_i32_0 = arith.constant 0 : i32
    %c0_i32_1 = arith.constant 0 : i32
    return %c0_i32, %c0_i32_0 : i32, i32
  }
  func.func @transform_5(%arg0: i32) -> (i32, i32, i32) {
    %c0_i32 = arith.constant 0 : i32
    %c0_i32_0 = arith.constant 0 : i32
    %c0_i32_1 = arith.constant 0 : i32
    return %arg0, %c0_i32, %c0_i32_0 : i32, i32, i32
  }
  func.func @transform_6(%arg0: i32) -> (i32, i32, i32) {
    %c0_i32 = arith.constant 0 : i32
    %c0_i32_0 = arith.constant 0 : i32
    %c0_i32_1 = arith.constant 0 : i32
    return %arg0, %c0_i32, %c0_i32_0 : i32, i32, i32
  }
  func.func @transform_7(%arg0: i32) -> (i32, i32, i32) {
    %c0_i32 = arith.constant 0 : i32
    %c0_i32_0 = arith.constant 0 : i32
    %c0_i32_1 = arith.constant 0 : i32
    return %arg0, %c0_i32, %c0_i32_0 : i32, i32, i32
  }
  func.func @transform_8(%arg0: i32) -> (i32, i32, i32) {
    %c0_i32 = arith.constant 0 : i32
    %c0_i32_0 = arith.constant 0 : i32
    %c0_i32_1 = arith.constant 0 : i32
    return %arg0, %c0_i32, %c0_i32_0 : i32, i32, i32
  }
  func.func @transform_9(%arg0: i32) -> (i32, i32, i32) {
    %c0_i32 = arith.constant 0 : i32
    %c0_i32_0 = arith.constant 0 : i32
    %c0_i32_1 = arith.constant 0 : i32
    return %arg0, %c0_i32, %c0_i32_0 : i32, i32, i32
  }
  func.func @transform_10(%arg0: i32) -> (i32, i32, i32) {
    %c0_i32 = arith.constant 0 : i32
    %c0_i32_0 = arith.constant 0 : i32
    %c0_i32_1 = arith.constant 0 : i32
    return %arg0, %c0_i32, %c0_i32_0 : i32, i32, i32
  }
  func.func @transform_11(%arg0: i32) -> (i32, i32, i32) {
    %c0_i32 = arith.constant 0 : i32
    %c0_i32_0 = arith.constant 0 : i32
    %c0_i32_1 = arith.constant 0 : i32
    return %arg0, %c0_i32, %c0_i32_0 : i32, i32, i32
  }
  func.func @transform_12(%arg0: i32) -> (i32, i32, i32) {
    %c0_i32 = arith.constant 0 : i32
    %c0_i32_0 = arith.constant 0 : i32
    %c0_i32_1 = arith.constant 0 : i32
    return %arg0, %c0_i32, %c0_i32_0 : i32, i32, i32
  }
  func.func @transform_13(%arg0: i32) -> (i32, i32, i32) {
    %c0_i32 = arith.constant 0 : i32
    %c0_i32_0 = arith.constant 0 : i32
    %c0_i32_1 = arith.constant 0 : i32
    return %arg0, %c0_i32, %c0_i32_0 : i32, i32, i32
  }
  func.func @transform_14(%arg0: i32) -> (i32, i32, i32) {
    %c0_i32 = arith.constant 0 : i32
    %c0_i32_0 = arith.constant 0 : i32
    %c0_i32_1 = arith.constant 0 : i32
    return %arg0, %c0_i32, %c0_i32_0 : i32, i32, i32
  }
  func.func @transform_15(%arg0: i32) -> (i32, i32, i32) {
    %c0_i32 = arith.constant 0 : i32
    %c0_i32_0 = arith.constant 0 : i32
    %c0_i32_1 = arith.constant 0 : i32
    return %arg0, %c0_i32, %c0_i32_0 : i32, i32, i32
  }
  func.func @transform_16(%arg0: i32) -> (i32, i32, i32) {
    %c0_i32 = arith.constant 0 : i32
    %c0_i32_0 = arith.constant 0 : i32
    %c0_i32_1 = arith.constant 0 : i32
    return %arg0, %c0_i32, %c0_i32_0 : i32, i32, i32
  }
  func.func @transform_17(%arg0: i32) -> (i32, i32) {
    %c0_i32 = arith.constant 0 : i32
    %c0_i32_0 = arith.constant 0 : i32
    %c0_i32_1 = arith.constant 0 : i32
    return %c0_i32, %c0_i32_0 : i32, i32
  }
  func.func @transform_18(%arg0: i32) -> (i32, i32) {
    %c0_i32 = arith.constant 0 : i32
    %c0_i32_0 = arith.constant 0 : i32
    %c0_i32_1 = arith.constant 0 : i32
    return %c0_i32, %c0_i32_0 : i32, i32
  }
  func.func @transform_19(%arg0: i32) -> (i32, i32) {
    %c0_i32 = arith.constant 0 : i32
    %c0_i32_0 = arith.constant 0 : i32
    %c0_i32_1 = arith.constant 0 : i32
    return %c0_i32, %c0_i32_0 : i32, i32
  }
  func.func @transform_20(%arg0: i32) -> (i32, i32) {
    %c0_i32 = arith.constant 0 : i32
    %c0_i32_0 = arith.constant 0 : i32
    %c0_i32_1 = arith.constant 0 : i32
    return %c0_i32, %c0_i32_0 : i32, i32
  }
  func.func @transform_21(%arg0: i32) -> (i32, i32) {
    %c0_i32 = arith.constant 0 : i32
    %c0_i32_0 = arith.constant 0 : i32
    %c0_i32_1 = arith.constant 0 : i32
    return %c0_i32, %c0_i32_0 : i32, i32
  }
  func.func @transform_22(%arg0: i32) -> (i32, i32) {
    %c0_i32 = arith.constant 0 : i32
    %c0_i32_0 = arith.constant 0 : i32
    %c0_i32_1 = arith.constant 0 : i32
    return %c0_i32, %c0_i32_0 : i32, i32
  }
  func.func @transform_23(%arg0: i32) -> (i32, i32) {
    %c0_i32 = arith.constant 0 : i32
    %c0_i32_0 = arith.constant 0 : i32
    %c0_i32_1 = arith.constant 0 : i32
    return %c0_i32, %c0_i32_0 : i32, i32
  }
  func.func @transform_24(%arg0: i32) -> (i32, i32) {
    %c0_i32 = arith.constant 0 : i32
    %c0_i32_0 = arith.constant 0 : i32
    %c0_i32_1 = arith.constant 0 : i32
    return %c0_i32, %c0_i32_0 : i32, i32
  }
  func.func @transform_25(%arg0: i32) -> (i32, i32) {
    %c0_i32 = arith.constant 0 : i32
    %c0_i32_0 = arith.constant 0 : i32
    %c0_i32_1 = arith.constant 0 : i32
    return %c0_i32, %c0_i32_0 : i32, i32
  }
  func.func @transform_26(%arg0: i32) -> (i32, i32) {
    %c0_i32 = arith.constant 0 : i32
    %c0_i32_0 = arith.constant 0 : i32
    %c0_i32_1 = arith.constant 0 : i32
    return %c0_i32, %c0_i32_0 : i32, i32
  }
  func.func @transform_27(%arg0: i32) -> (i32, i32) {
    %c0_i32 = arith.constant 0 : i32
    %c0_i32_0 = arith.constant 0 : i32
    %c0_i32_1 = arith.constant 0 : i32
    return %c0_i32, %c0_i32_0 : i32, i32
  }
  func.func @transform_28(%arg0: i32) -> (i32, i32) {
    %c0_i32 = arith.constant 0 : i32
    %c0_i32_0 = arith.constant 0 : i32
    %c0_i32_1 = arith.constant 0 : i32
    return %c0_i32, %c0_i32_0 : i32, i32
  }
}

</mosaic_0001>

<llo_original>
// kernel: vit_b32_multimodal_forward.1
$region0: #{vit_b32_multimodal_forward.1}
  #allocation0 [shape = 'u32[]', space=smem, size = 0x4, offset = 0x4, fixed_abs, tag = 'smem constant byte address 0x4 - core index']
  #allocation1 [shape = 'u32[144,128]{1,0:T(1,128)}', space=vmem, size = 0x12000, scoped, tag = 'internal scratch']
  #allocation2 [shape = 'f32[16,128]{1,0:T(8,128)}', space=vmem, size = 0x2000, scoped, tag = 'scratch operand']
  %s0 = inlined_call_operand.vmem [shape: bf16[16,3072], index: 0, kind: input, shape index: {}]
  %s1 = inlined_call_operand.vmem [shape: bf16[3072,128], index: 1, kind: input, shape index: {}]
  %s2 = inlined_call_operand.vmem [shape: f32[8,128], index: 2, kind: input, shape index: {}]
  %s3 = inlined_call_operand.hbm [shape: f32[1,8,8], index: 3, kind: input, shape index: {}]
  %s4 = inlined_call_operand.hbm [shape: f32[2,4], index: 4, kind: input, shape index: {}]
  %s5 = inlined_call_operand.hbm [shape: f32[2,1,128], index: 5, kind: input, shape index: {}]
  %s6 = inlined_call_operand.hbm [shape: f32[2,1,128], index: 6, kind: input, shape index: {}]
  %s7 = inlined_call_operand.vmem [shape: bf16[2,128,384], index: 7, kind: input, shape index: {}]
  %s8 = inlined_call_operand.hbm [shape: f32[2,1,384], index: 8, kind: input, shape index: {}]
  %s9 = inlined_call_operand.hbm [shape: bf16[2,128,128], index: 9, kind: input, shape index: {}]
  %s10 = inlined_call_operand.hbm [shape: f32[2,1,128], index: 10, kind: input, shape index: {}]
  %s11 = inlined_call_operand.hbm [shape: f32[2,1,128], index: 11, kind: input, shape index: {}]
  %s12 = inlined_call_operand.hbm [shape: f32[2,1,128], index: 12, kind: input, shape index: {}]
  %s13 = inlined_call_operand.vmem [shape: bf16[2,128,256], index: 13, kind: input, shape index: {}]
  %s14 = inlined_call_operand.hbm [shape: f32[2,1,256], index: 14, kind: input, shape index: {}]
  %s15 = inlined_call_operand.hbm [shape: bf16[2,256,128], index: 15, kind: input, shape index: {}]
  %s16 = inlined_call_operand.hbm [shape: f32[2,1,128], index: 16, kind: input, shape index: {}]
  %s17 = inlined_call_operand.hbm [shape: f32[1,128], index: 17, kind: input, shape index: {}]
  %s18 = inlined_call_operand.hbm [shape: f32[1,128], index: 18, kind: input, shape index: {}]
  %s19 = inlined_call_operand.hbm [shape: bf16[128,512], index: 19, kind: input, shape index: {}]
  %s20 = inlined_call_operand.hbm [shape: f32[4,512], index: 20, kind: input, shape index: {}]
  %s21 = inlined_call_operand.vmem [shape: f32[1,512], index: 21, kind: input, shape index: {}]
  %s22 = inlined_call_operand.vmem [shape: bf16[512,256], index: 22, kind: input, shape index: {}]
  %s23 = inlined_call_operand.vmem [shape: f32[1,256], index: 23, kind: input, shape index: {}]
  %s24 = inlined_call_operand.vmem [shape: bf16[256,128], index: 24, kind: input, shape index: {}]
  %s25 = inlined_call_operand.hbm [shape: f32[1,128], index: 25, kind: input, shape index: {}]
  %s26 = inlined_call_operand.vmem [shape: bf16[128,15], index: 26, kind: input, shape index: {}]
  %s27 = inlined_call_operand.hbm [shape: f32[1,15], index: 27, kind: input, shape index: {}]
  %s28 = inlined_call_operand.hbm [shape: f32[2,15], index: 28, kind: output, shape index: {}]
  %s29 = sld [smem:[#allocation0]]
  $region225: #{vit_b32_multimodal_forward.1} parent=0
    _
  %s31 = ssub.s32 1, %s29
  %s32 = scalar_select 0, %s31, %s29
  $region1: #{vit_b32_multimodal_forward.1} parent=0
    #allocation3 [shape = 'u8[4096]{0}', space=vmem, size = 0x1000, scoped, tag = 'input window, operand 3, single buffered']
    #allocation4 [shape = 's32[2]{0}', space=sflag, size = 0x8, scoped, tag = 'scoped memory for vit_b32_multimodal_forward.1']
    #allocation5 [shape = 's32[2]{0}', space=sflag, size = 0x8, scoped, tag = 'scoped memory for vit_b32_multimodal_forward.1']
    #allocation6 [shape = 'u8[1024]{0}', space=vmem, size = 0x400, scoped, tag = 'input window, operand 4, single buffered']
    #allocation7 [shape = 's32[1]{0}', space=sflag, size = 0x4, scoped, tag = 'scoped memory for vit_b32_multimodal_forward.1']
    #allocation8 [shape = 'u8[1024]{0}', space=vmem, size = 0x400, scoped, tag = 'input window, operand 5']
    #allocation9 [shape = 'u8[1024]{0}', space=vmem, size = 0x400, scoped, tag = 'input window, operand 6']
    #allocation10 [shape = 'u8[3072]{0}', space=vmem, size = 0xc00, scoped, tag = 'input window, operand 8']
    #allocation11 [shape = 'u8[65536]{0}', space=vmem, size = 0x10000, scoped, tag = 'input window, operand 9']
    #allocation12 [shape = 'u8[1024]{0}', space=vmem, size = 0x400, scoped, tag = 'input window, operand 10']
    #allocation13 [shape = 'u8[1024]{0}', space=vmem, size = 0x400, scoped, tag = 'input window, operand 11']
    #allocation14 [shape = 'u8[1024]{0}', space=vmem, size = 0x400, scoped, tag = 'input window, operand 12']
    #allocation15 [shape = 'u8[2048]{0}', space=vmem, size = 0x800, scoped, tag = 'input window, operand 14']
    #allocation16 [shape = 'u8[131072]{0}', space=vmem, size = 0x20000, scoped, tag = 'input window, operand 15']
    #allocation17 [shape = 'u8[1024]{0}', space=vmem, size = 0x400, scoped, tag = 'input window, operand 16']
    #allocation18 [shape = 'u8[512]{0}', space=vmem, size = 0x400, scoped, tag = 'input window, operand 17, single buffered']
    #allocation19 [shape = 'u8[512]{0}', space=vmem, size = 0x400, scoped, tag = 'input window, operand 18, single buffered']
    #allocation20 [shape = 's32[1]{0}', space=sflag, size = 0x4, scoped, tag = 'scoped memory for vit_b32_multimodal_forward.1']
    #allocation21 [shape = 'u8[131072]{0}', space=vmem, size = 0x20000, scoped, tag = 'input window, operand 19, single buffered']
    #allocation22 [shape = 'u8[8192]{0}', space=vmem, size = 0x2000, scoped, tag = 'input window, operand 20, single buffered']
    #allocation23 [shape = 's32[1]{0}', space=sflag, size = 0x4, scoped, tag = 'scoped memory for vit_b32_multimodal_forward.1']
    #allocation24 [shape = 'u8[512]{0}', space=vmem, size = 0x400, scoped, tag = 'input window, operand 25, single buffered']
    #allocation25 [shape = 'u8[512]{0}', space=vmem, size = 0x400, scoped, tag = 'input window, operand 27, single buffered']
    #allocation26 [shape = 's32[1]{0}', space=sflag, size = 0x4, scoped, tag = 'scoped memory for vit_b32_multimodal_forward.1']
    #allocation27 [shape = 'u8[1024]{0}', space=vmem, size = 0x400, scoped, tag = 'output window, operand 0, single buffered']
    %33 = vsyncpa [#allocation4], 0
    %34 = vsyncpa [#allocation7], 0
    %35 = vsyncpa [#allocation20], 0
    %36 = vsyncpa [#allocation23], 0
    %37 = vsyncpa [#allocation26], 0
    %38 = vsyncpa [#allocation5], 0
    loop: start=0, step=1, limit=4
    $region2: #{vit_b32_multimodal_forward.1} parent=1 // loop_pre_header
      _
    $region3: #{vit_b32_multimodal_forward.1} parent=1 // loop_header
      %s40 = sphi 0, %s44
      %p41 = scmp.ge.s32.totalorder %s40, 4
      %s48 = sphi 0, %s48
      %s50 = sphi 0, %s48
      %s51 = sphi 0, %s50
      %s65 = sphi 0, %s51
      %s69 = sphi 0, %s69
      %s71 = sphi 0, %s69
      %s72 = sphi 0, %s71
      %s86 = sphi 0, %s72
      %s90 = sphi 0, %s90
      %s92 = sphi 0, %s90
      %s93 = sphi 0, %s92
      %s107 = sphi 0, %s93
      %s111 = sphi 0, %s111
      %s113 = sphi 0, %s111
      %s114 = sphi 0, %s113
      %s128 = sphi 0, %s114
      %s132 = sphi 0, %s132
      %s134 = sphi 0, %s132
      %s135 = sphi 0, %s134
      %s149 = sphi 0, %s135
      %s155 = sphi 0, %s157
      %s158 = sphi 0, %s155
      %s159 = sphi 0, %s158
      %s175 = sphi 0, %s159
      %s181 = sphi 0, %s183
      %s184 = sphi 0, %s181
      %s185 = sphi 0, %s184
      %s201 = sphi 0, %s185
      %s207 = sphi 0, %s209
      %s210 = sphi 0, %s207
      %s211 = sphi 0, %s210
      %s227 = sphi 0, %s211
      %s233 = sphi 0, %s235
      %s236 = sphi 0, %s233
      %s237 = sphi 0, %s236
      %s253 = sphi 0, %s237
      %s259 = sphi 0, %s261
      %s262 = sphi 0, %s259
      %s263 = sphi 0, %s262
      %s279 = sphi 0, %s263
      %s285 = sphi 0, %s287
      %s288 = sphi 0, %s285
      %s289 = sphi 0, %s288
      %s305 = sphi 0, %s289
      %s311 = sphi 0, %s313
      %s314 = sphi 0, %s311
      %s315 = sphi 0, %s314
      %s331 = sphi 0, %s315
      %s337 = sphi 0, %s339
      %s340 = sphi 0, %s337
      %s341 = sphi 0, %s340
      %s357 = sphi 0, %s341
      %s363 = sphi 0, %s365
      %s366 = sphi 0, %s363
      %s367 = sphi 0, %s366
      %s383 = sphi 0, %s367
      %s389 = sphi 0, %s391
      %s392 = sphi 0, %s389
      %s393 = sphi 0, %s392
      %s409 = sphi 0, %s393
      %s415 = sphi 0, %s417
      %s418 = sphi 0, %s415
      %s419 = sphi 0, %s418
      %s435 = sphi 0, %s419
      %s441 = sphi 0, %s443
      %s444 = sphi 0, %s441
      %s445 = sphi 0, %s444
      %s461 = sphi 0, %s445
      %s465 = sphi 0, %s465
      %s467 = sphi 0, %s465
      %s468 = sphi 0, %s467
      %s482 = sphi 0, %s468
      %s486 = sphi 0, %s486
      %s488 = sphi 0, %s486
      %s489 = sphi 0, %s488
      %s503 = sphi 0, %s489
      %s507 = sphi 0, %s507
      %s509 = sphi 0, %s507
      %s510 = sphi 0, %s509
      %s524 = sphi 0, %s510
      %s528 = sphi 0, %s528
      %s530 = sphi 0, %s528
      %s531 = sphi 0, %s530
      %s545 = sphi 0, %s531
      %s549 = sphi 0, %s549
      %s551 = sphi 0, %s549
      %s552 = sphi 0, %s551
      %s566 = sphi 0, %s552
      %s570 = sphi 0, %s570
      %s572 = sphi 0, %s570
      %s573 = sphi 0, %s572
      %s587 = sphi 0, %s573
      %s591 = sphi 0, %s591
      %s593 = sphi 0, %s591
      %s594 = sphi 0, %s593
      %s608 = sphi 0, %s594
      %s612 = sphi 0, %s612
      %s614 = sphi 0, %s612
      %s615 = sphi 0, %s614
      %s629 = sphi 0, %s615
      %s633 = sphi 0, %s633
      %s635 = sphi 0, %s633
      %s636 = sphi 0, %s635
      %s650 = sphi 0, %s636
      %s654 = sphi 0, %s654
      %s656 = sphi 0, %s654
      %s657 = sphi 0, %s656
      %s671 = sphi 0, %s657
      %s675 = sphi 0, %s675
      %s677 = sphi 0, %s675
      %s678 = sphi 0, %s677
      %s692 = sphi 0, %s678
      %s696 = sphi 0, %s696
      %s698 = sphi 0, %s696
      %s699 = sphi 0, %s698
      %s713 = sphi 0, %s699
    $region4: #{vit_b32_multimodal_forward.1} parent=1 // loop_header_branch
      %43 = sbr.rel (%p41) target = $region8
    $region5: #{vit_b32_multimodal_forward.1} parent=1 // loop_body
      %s45 = ssub.s32 %s40, 1
      %s46 = ssub.s32 %s40, 2
      %s47 = sadd.s32 %s40, 1
      %s49 = sadd.s32 %s48, 1
      %p52 = scmp.eq.s32.totalorder %s40, 1
      %p53 = scmp.ne.s32.totalorder %s48, %s50
      %p54 = scmp.eq.s32.totalorder %s40, 0
      %p55 = por %p53, %p54
      %p56 = scmp.ne.s32.totalorder %s48, %s50
      %p57 = scmp.eq.s32.totalorder %s45, 1
      %p58 = por %p56, %p57
      %p59 = scmp.ne.s32.totalorder %s50, %s51
      %p60 = scmp.eq.s32.totalorder %s45, 0
      %p61 = por %p59, %p60
      %p62 = scmp.ne.s32.totalorder %s50, %s51
      %p63 = scmp.eq.s32.totalorder %s46, 1
      %p64 = por %p62, %p63
      %p66 = scmp.ne.s32.totalorder %s51, %s65
      %p67 = scmp.eq.s32.totalorder %s46, 0
      %p68 = por %p66, %p67
      %s70 = sadd.s32 %s69, 1
      %p73 = scmp.eq.s32.totalorder %s40, 1
      %p74 = scmp.ne.s32.totalorder %s69, %s71
      %p75 = scmp.eq.s32.totalorder %s40, 0
      %p76 = por %p74, %p75
      %p77 = scmp.ne.s32.totalorder %s69, %s71
      %p78 = scmp.eq.s32.totalorder %s45, 1
      %p79 = por %p77, %p78
      %p80 = scmp.ne.s32.totalorder %s71, %s72
      %p81 = scmp.eq.s32.totalorder %s45, 0
      %p82 = por %p80, %p81
      %p83 = scmp.ne.s32.totalorder %s71, %s72
      %p84 = scmp.eq.s32.totalorder %s46, 1
      %p85 = por %p83, %p84
      %p87 = scmp.ne.s32.totalorder %s72, %s86
      %p88 = scmp.eq.s32.totalorder %s46, 0
      %p89 = por %p87, %p88
      %s91 = sadd.s32 %s90, 1
      %p94 = scmp.eq.s32.totalorder %s40, 1
      %p95 = scmp.ne.s32.totalorder %s90, %s92
      %p96 = scmp.eq.s32.totalorder %s40, 0
      %p97 = por %p95, %p96
      %p98 = scmp.ne.s32.totalorder %s90, %s92
      %p99 = scmp.eq.s32.totalorder %s45, 1
      %p100 = por %p98, %p99
      %p101 = scmp.ne.s32.totalorder %s92, %s93
      %p102 = scmp.eq.s32.totalorder %s45, 0
      %p103 = por %p101, %p102
      %p104 = scmp.ne.s32.totalorder %s92, %s93
      %p105 = scmp.eq.s32.totalorder %s46, 1
      %p106 = por %p104, %p105
      %p108 = scmp.ne.s32.totalorder %s93, %s107
      %p109 = scmp.eq.s32.totalorder %s46, 0
      %p110 = por %p108, %p109
      %s112 = sadd.s32 %s111, 1
      %p115 = scmp.eq.s32.totalorder %s40, 1
      %p116 = scmp.ne.s32.totalorder %s111, %s113
      %p117 = scmp.eq.s32.totalorder %s40, 0
      %p118 = por %p116, %p117
      %p119 = scmp.ne.s32.totalorder %s111, %s113
      %p120 = scmp.eq.s32.totalorder %s45, 1
      %p121 = por %p119, %p120
      %p122 = scmp.ne.s32.totalorder %s113, %s114
      %p123 = scmp.eq.s32.totalorder %s45, 0
      %p124 = por %p122, %p123
      %p125 = scmp.ne.s32.totalorder %s113, %s114
      %p126 = scmp.eq.s32.totalorder %s46, 1
      %p127 = por %p125, %p126
      %p129 = scmp.ne.s32.totalorder %s114, %s128
      %p130 = scmp.eq.s32.totalorder %s46, 0
      %p131 = por %p129, %p130
      %s133 = sadd.s32 %s132, 1
      %p136 = scmp.eq.s32.totalorder %s40, 1
      %p137 = scmp.ne.s32.totalorder %s132, %s134
      %p138 = scmp.eq.s32.totalorder %s40, 0
      %p139 = por %p137, %p138
      %p140 = scmp.ne.s32.totalorder %s132, %s134
      %p141 = scmp.eq.s32.totalorder %s45, 1
      %p142 = por %p140, %p141
      %p143 = scmp.ne.s32.totalorder %s134, %s135
      %p144 = scmp.eq.s32.totalorder %s45, 0
      %p145 = por %p143, %p144
      %p146 = scmp.ne.s32.totalorder %s134, %s135
      %p147 = scmp.eq.s32.totalorder %s46, 1
      %p148 = por %p146, %p147
      %p150 = scmp.ne.s32.totalorder %s135, %s149
      %p151 = scmp.eq.s32.totalorder %s46, 0
      %p152 = por %p150, %p151
      %s153 = ssub.s32 %s40, %s47
      %p154 = scmp.eq.s32.totalorder %s153, 0
      %s156 = sadd.s32 %s155, 1
      %s157 = scalar_select %p154, %s155, %s156
      %p160 = pneg %p154
      %p161 = scmp.eq.s32.totalorder %s40, 1
      %p162 = por %p160, %p161
      %p163 = scmp.ne.s32.totalorder %s155, %s158
      %p164 = scmp.eq.s32.totalorder %s40, 0
      %p165 = por %p163, %p164
      %p166 = scmp.ne.s32.totalorder %s155, %s158
      %p167 = scmp.eq.s32.totalorder %s45, 1
      %p168 = por %p166, %p167
      %p169 = scmp.ne.s32.totalorder %s158, %s159
      %p170 = scmp.eq.s32.totalorder %s45, 0
      %p171 = por %p169, %p170
      %p172 = scmp.ne.s32.totalorder %s158, %s159
      %p173 = scmp.eq.s32.totalorder %s46, 1
      %p174 = por %p172, %p173
      %p176 = scmp.ne.s32.totalorder %s159, %s175
      %p177 = scmp.eq.s32.totalorder %s46, 0
      %p178 = por %p176, %p177
      %s179 = ssub.s32 %s40, %s47
      %p180 = scmp.eq.s32.totalorder %s179, 0
      %s182 = sadd.s32 %s181, 1
      %s183 = scalar_select %p180, %s181, %s182
      %p186 = pneg %p180
      %p187 = scmp.eq.s32.totalorder %s40, 1
      %p188 = por %p186, %p187
      %p189 = scmp.ne.s32.totalorder %s181, %s184
      %p190 = scmp.eq.s32.totalorder %s40, 0
      %p191 = por %p189, %p190
      %p192 = scmp.ne.s32.totalorder %s181, %s184
      %p193 = scmp.eq.s32.totalorder %s45, 1
      %p194 = por %p192, %p193
      %p195 = scmp.ne.s32.totalorder %s184, %s185
      %p196 = scmp.eq.s32.totalorder %s45, 0
      %p197 = por %p195, %p196
      %p198 = scmp.ne.s32.totalorder %s184, %s185
      %p199 = scmp.eq.s32.totalorder %s46, 1
      %p200 = por %p198, %p199
      %p202 = scmp.ne.s32.totalorder %s185, %s201
      %p203 = scmp.eq.s32.totalorder %s46, 0
      %p204 = por %p202, %p203
      %s205 = ssub.s32 %s40, %s47
      %p206 = scmp.eq.s32.totalorder %s205, 0
      %s208 = sadd.s32 %s207, 1
      %s209 = scalar_select %p206, %s207, %s208
      %p212 = pneg %p206
      %p213 = scmp.eq.s32.totalorder %s40, 1
      %p214 = por %p212, %p213
      %p215 = scmp.ne.s32.totalorder %s207, %s210
      %p216 = scmp.eq.s32.totalorder %s40, 0
      %p217 = por %p215, %p216
      %p218 = scmp.ne.s32.totalorder %s207, %s210
      %p219 = scmp.eq.s32.totalorder %s45, 1
      %p220 = por %p218, %p219
      %p221 = scmp.ne.s32.totalorder %s210, %s211
      %p222 = scmp.eq.s32.totalorder %s45, 0
      %p223 = por %p221, %p222
      %p224 = scmp.ne.s32.totalorder %s210, %s211
      %p225 = scmp.eq.s32.totalorder %s46, 1
      %p226 = por %p224, %p225
      %p228 = scmp.ne.s32.totalorder %s211, %s227
      %p229 = scmp.eq.s32.totalorder %s46, 0
      %p230 = por %p228, %p229
      %s231 = ssub.s32 %s40, %s47
      %p232 = scmp.eq.s32.totalorder %s231, 0
      %s234 = sadd.s32 %s233, 1
      %s235 = scalar_select %p232, %s233, %s234
      %p238 = pneg %p232
      %p239 = scmp.eq.s32.totalorder %s40, 1
      %p240 = por %p238, %p239
      %p241 = scmp.ne.s32.totalorder %s233, %s236
      %p242 = scmp.eq.s32.totalorder %s40, 0
      %p243 = por %p241, %p242
      %p244 = scmp.ne.s32.totalorder %s233, %s236
      %p245 = scmp.eq.s32.totalorder %s45, 1
      %p246 = por %p244, %p245
      %p247 = scmp.ne.s32.totalorder %s236, %s237
      %p248 = scmp.eq.s32.totalorder %s45, 0
      %p249 = por %p247, %p248
      %p250 = scmp.ne.s32.totalorder %s236, %s237
      %p251 = scmp.eq.s32.totalorder %s46, 1
      %p252 = por %p250, %p251
      %p254 = scmp.ne.s32.totalorder %s237, %s253
      %p255 = scmp.eq.s32.totalorder %s46, 0
      %p256 = por %p254, %p255
      %s257 = ssub.s32 %s40, %s47
      %p258 = scmp.eq.s32.totalorder %s257, 0
      %s260 = sadd.s32 %s259, 1
      %s261 = scalar_select %p258, %s259, %s260
      %p264 = pneg %p258
      %p265 = scmp.eq.s32.totalorder %s40, 1
      %p266 = por %p264, %p265
      %p267 = scmp.ne.s32.totalorder %s259, %s262
      %p268 = scmp.eq.s32.totalorder %s40, 0
      %p269 = por %p267, %p268
      %p270 = scmp.ne.s32.totalorder %s259, %s262
      %p271 = scmp.eq.s32.totalorder %s45, 1
      %p272 = por %p270, %p271
      %p273 = scmp.ne.s32.totalorder %s262, %s263
      %p274 = scmp.eq.s32.totalorder %s45, 0
      %p275 = por %p273, %p274
      %p276 = scmp.ne.s32.totalorder %s262, %s263
      %p277 = scmp.eq.s32.totalorder %s46, 1
      %p278 = por %p276, %p277
      %p280 = scmp.ne.s32.totalorder %s263, %s279
      %p281 = scmp.eq.s32.totalorder %s46, 0
      %p282 = por %p280, %p281
      %s283 = ssub.s32 %s40, %s47
      %p284 = scmp.eq.s32.totalorder %s283, 0
      %s286 = sadd.s32 %s285, 1
      %s287 = scalar_select %p284, %s285, %s286
      %p290 = pneg %p284
      %p291 = scmp.eq.s32.totalorder %s40, 1
      %p292 = por %p290, %p291
      %p293 = scmp.ne.s32.totalorder %s285, %s288
      %p294 = scmp.eq.s32.totalorder %s40, 0
      %p295 = por %p293, %p294
      %p296 = scmp.ne.s32.totalorder %s285, %s288
      %p297 = scmp.eq.s32.totalorder %s45, 1
      %p298 = por %p296, %p297
      %p299 = scmp.ne.s32.totalorder %s288, %s289
      %p300 = scmp.eq.s32.totalorder %s45, 0
      %p301 = por %p299, %p300
      %p302 = scmp.ne.s32.totalorder %s288, %s289
      %p303 = scmp.eq.s32.totalorder %s46, 1
      %p304 = por %p302, %p303
      %p306 = scmp.ne.s32.totalorder %s289, %s305
      %p307 = scmp.eq.s32.totalorder %s46, 0
      %p308 = por %p306, %p307
      %s309 = ssub.s32 %s40, %s47
      %p310 = scmp.eq.s32.totalorder %s309, 0
      %s312 = sadd.s32 %s311, 1
      %s313 = scalar_select %p310, %s311, %s312
      %p316 = pneg %p310
      %p317 = scmp.eq.s32.totalorder %s40, 1
      %p318 = por %p316, %p317
      %p319 = scmp.ne.s32.totalorder %s311, %s314
      %p320 = scmp.eq.s32.totalorder %s40, 0
      %p321 = por %p319, %p320
      %p322 = scmp.ne.s32.totalorder %s311, %s314
      %p323 = scmp.eq.s32.totalorder %s45, 1
      %p324 = por %p322, %p323
      %p325 = scmp.ne.s32.totalorder %s314, %s315
      %p326 = scmp.eq.s32.totalorder %s45, 0
      %p327 = por %p325, %p326
      %p328 = scmp.ne.s32.totalorder %s314, %s315
      %p329 = scmp.eq.s32.totalorder %s46, 1
      %p330 = por %p328, %p329
      %p332 = scmp.ne.s32.totalorder %s315, %s331
      %p333 = scmp.eq.s32.totalorder %s46, 0
      %p334 = por %p332, %p333
      %s335 = ssub.s32 %s40, %s47
      %p336 = scmp.eq.s32.totalorder %s335, 0
      %s338 = sadd.s32 %s337, 1
      %s339 = scalar_select %p336, %s337, %s338
      %p342 = pneg %p336
      %p343 = scmp.eq.s32.totalorder %s40, 1
      %p344 = por %p342, %p343
      %p345 = scmp.ne.s32.totalorder %s337, %s340
      %p346 = scmp.eq.s32.totalorder %s40, 0
      %p347 = por %p345, %p346
      %p348 = scmp.ne.s32.totalorder %s337, %s340
      %p349 = scmp.eq.s32.totalorder %s45, 1
      %p350 = por %p348, %p349
      %p351 = scmp.ne.s32.totalorder %s340, %s341
      %p352 = scmp.eq.s32.totalorder %s45, 0
      %p353 = por %p351, %p352
      %p354 = scmp.ne.s32.totalorder %s340, %s341
      %p355 = scmp.eq.s32.totalorder %s46, 1
      %p356 = por %p354, %p355
      %p358 = scmp.ne.s32.totalorder %s341, %s357
      %p359 = scmp.eq.s32.totalorder %s46, 0
      %p360 = por %p358, %p359
      %s361 = ssub.s32 %s40, %s47
      %p362 = scmp.eq.s32.totalorder %s361, 0
      %s364 = sadd.s32 %s363, 1
      %s365 = scalar_select %p362, %s363, %s364
      %p368 = pneg %p362
      %p369 = scmp.eq.s32.totalorder %s40, 1
      %p370 = por %p368, %p369
      %p371 = scmp.ne.s32.totalorder %s363, %s366
      %p372 = scmp.eq.s32.totalorder %s40, 0
      %p373 = por %p371, %p372
      %p374 = scmp.ne.s32.totalorder %s363, %s366
      %p375 = scmp.eq.s32.totalorder %s45, 1
      %p376 = por %p374, %p375
      %p377 = scmp.ne.s32.totalorder %s366, %s367
      %p378 = scmp.eq.s32.totalorder %s45, 0
      %p379 = por %p377, %p378
      %p380 = scmp.ne.s32.totalorder %s366, %s367
      %p381 = scmp.eq.s32.totalorder %s46, 1
      %p382 = por %p380, %p381
      %p384 = scmp.ne.s32.totalorder %s367, %s383
      %p385 = scmp.eq.s32.totalorder %s46, 0
      %p386 = por %p384, %p385
      %s387 = ssub.s32 %s40, %s47
      %p388 = scmp.eq.s32.totalorder %s387, 0
      %s390 = sadd.s32 %s389, 1
      %s391 = scalar_select %p388, %s389, %s390
      %p394 = pneg %p388
      %p395 = scmp.eq.s32.totalorder %s40, 1
      %p396 = por %p394, %p395
      %p397 = scmp.ne.s32.totalorder %s389, %s392
      %p398 = scmp.eq.s32.totalorder %s40, 0
      %p399 = por %p397, %p398
      %p400 = scmp.ne.s32.totalorder %s389, %s392
      %p401 = scmp.eq.s32.totalorder %s45, 1
      %p402 = por %p400, %p401
      %p403 = scmp.ne.s32.totalorder %s392, %s393
      %p404 = scmp.eq.s32.totalorder %s45, 0
      %p405 = por %p403, %p404
      %p406 = scmp.ne.s32.totalorder %s392, %s393
      %p407 = scmp.eq.s32.totalorder %s46, 1
      %p408 = por %p406, %p407
      %p410 = scmp.ne.s32.totalorder %s393, %s409
      %p411 = scmp.eq.s32.totalorder %s46, 0
      %p412 = por %p410, %p411
      %s413 = ssub.s32 %s40, %s47
      %p414 = scmp.eq.s32.totalorder %s413, 0
      %s416 = sadd.s32 %s415, 1
      %s417 = scalar_select %p414, %s415, %s416
      %p420 = pneg %p414
      %p421 = scmp.eq.s32.totalorder %s40, 1
      %p422 = por %p420, %p421
      %p423 = scmp.ne.s32.totalorder %s415, %s418
      %p424 = scmp.eq.s32.totalorder %s40, 0
      %p425 = por %p423, %p424
      %p426 = scmp.ne.s32.totalorder %s415, %s418
      %p427 = scmp.eq.s32.totalorder %s45, 1
      %p428 = por %p426, %p427
      %p429 = scmp.ne.s32.totalorder %s418, %s419
      %p430 = scmp.eq.s32.totalorder %s45, 0
      %p431 = por %p429, %p430
      %p432 = scmp.ne.s32.totalorder %s418, %s419
      %p433 = scmp.eq.s32.totalorder %s46, 1
      %p434 = por %p432, %p433
      %p436 = scmp.ne.s32.totalorder %s419, %s435
      %p437 = scmp.eq.s32.totalorder %s46, 0
      %p438 = por %p436, %p437
      %s439 = ssub.s32 %s40, %s47
      %p440 = scmp.eq.s32.totalorder %s439, 0
      %s442 = sadd.s32 %s441, 1
      %s443 = scalar_select %p440, %s441, %s442
      %p446 = pneg %p440
      %p447 = scmp.eq.s32.totalorder %s40, 1
      %p448 = por %p446, %p447
      %p449 = scmp.ne.s32.totalorder %s441, %s444
      %p450 = scmp.eq.s32.totalorder %s40, 0
      %p451 = por %p449, %p450
      %p452 = scmp.ne.s32.totalorder %s441, %s444
      %p453 = scmp.eq.s32.totalorder %s45, 1
      %p454 = por %p452, %p453
      %p455 = scmp.ne.s32.totalorder %s444, %s445
      %p456 = scmp.eq.s32.totalorder %s45, 0
      %p457 = por %p455, %p456
      %p458 = scmp.ne.s32.totalorder %s444, %s445
      %p459 = scmp.eq.s32.totalorder %s46, 1
      %p460 = por %p458, %p459
      %p462 = scmp.ne.s32.totalorder %s445, %s461
      %p463 = scmp.eq.s32.totalorder %s46, 0
      %p464 = por %p462, %p463
      %s466 = sadd.s32 %s465, 1
      %p469 = scmp.eq.s32.totalorder %s40, 1
      %p470 = scmp.ne.s32.totalorder %s465, %s467
      %p471 = scmp.eq.s32.totalorder %s40, 0
      %p472 = por %p470, %p471
      %p473 = scmp.ne.s32.totalorder %s465, %s467
      %p474 = scmp.eq.s32.totalorder %s45, 1
      %p475 = por %p473, %p474
      %p476 = scmp.ne.s32.totalorder %s467, %s468
      %p477 = scmp.eq.s32.totalorder %s45, 0
      %p478 = por %p476, %p477
      %p479 = scmp.ne.s32.totalorder %s467, %s468
      %p480 = scmp.eq.s32.totalorder %s46, 1
      %p481 = por %p479, %p480
      %p483 = scmp.ne.s32.totalorder %s468, %s482
      %p484 = scmp.eq.s32.totalorder %s46, 0
      %p485 = por %p483, %p484
      %s487 = sadd.s32 %s486, 1
      %p490 = scmp.eq.s32.totalorder %s40, 1
      %p491 = scmp.ne.s32.totalorder %s486, %s488
      %p492 = scmp.eq.s32.totalorder %s40, 0
      %p493 = por %p491, %p492
      %p494 = scmp.ne.s32.totalorder %s486, %s488
      %p495 = scmp.eq.s32.totalorder %s45, 1
      %p496 = por %p494, %p495
      %p497 = scmp.ne.s32.totalorder %s488, %s489
      %p498 = scmp.eq.s32.totalorder %s45, 0
      %p499 = por %p497, %p498
      %p500 = scmp.ne.s32.totalorder %s488, %s489
      %p501 = scmp.eq.s32.totalorder %s46, 1
      %p502 = por %p500, %p501
      %p504 = scmp.ne.s32.totalorder %s489, %s503
      %p505 = scmp.eq.s32.totalorder %s46, 0
      %p506 = por %p504, %p505
      %s508 = sadd.s32 %s507, 1
      %p511 = scmp.eq.s32.totalorder %s40, 1
      %p512 = scmp.ne.s32.totalorder %s507, %s509
      %p513 = scmp.eq.s32.totalorder %s40, 0
      %p514 = por %p512, %p513
      %p515 = scmp.ne.s32.totalorder %s507, %s509
      %p516 = scmp.eq.s32.totalorder %s45, 1
      %p517 = por %p515, %p516
      %p518 = scmp.ne.s32.totalorder %s509, %s510
      %p519 = scmp.eq.s32.totalorder %s45, 0
      %p520 = por %p518, %p519
      %p521 = scmp.ne.s32.totalorder %s509, %s510
      %p522 = scmp.eq.s32.totalorder %s46, 1
      %p523 = por %p521, %p522
      %p525 = scmp.ne.s32.totalorder %s510, %s524
      %p526 = scmp.eq.s32.totalorder %s46, 0
      %p527 = por %p525, %p526
      %s529 = sadd.s32 %s528, 1
      %p532 = scmp.eq.s32.totalorder %s40, 1
      %p533 = scmp.ne.s32.totalorder %s528, %s530
      %p534 = scmp.eq.s32.totalorder %s40, 0
      %p535 = por %p533, %p534
      %p536 = scmp.ne.s32.totalorder %s528, %s530
      %p537 = scmp.eq.s32.totalorder %s45, 1
      %p538 = por %p536, %p537
      %p539 = scmp.ne.s32.totalorder %s530, %s531
      %p540 = scmp.eq.s32.totalorder %s45, 0
      %p541 = por %p539, %p540
      %p542 = scmp.ne.s32.totalorder %s530, %s531
      %p543 = scmp.eq.s32.totalorder %s46, 1
      %p544 = por %p542, %p543
      %p546 = scmp.ne.s32.totalorder %s531, %s545
      %p547 = scmp.eq.s32.totalorder %s46, 0
      %p548 = por %p546, %p547
      %s550 = sadd.s32 %s549, 1
      %p553 = scmp.eq.s32.totalorder %s40, 1
      %p554 = scmp.ne.s32.totalorder %s549, %s551
      %p555 = scmp.eq.s32.totalorder %s40, 0
      %p556 = por %p554, %p555
      %p557 = scmp.ne.s32.totalorder %s549, %s551
      %p558 = scmp.eq.s32.totalorder %s45, 1
      %p559 = por %p557, %p558
      %p560 = scmp.ne.s32.totalorder %s551, %s552
      %p561 = scmp.eq.s32.totalorder %s45, 0
      %p562 = por %p560, %p561
      %p563 = scmp.ne.s32.totalorder %s551, %s552
      %p564 = scmp.eq.s32.totalorder %s46, 1
      %p565 = por %p563, %p564
      %p567 = scmp.ne.s32.totalorder %s552, %s566
      %p568 = scmp.eq.s32.totalorder %s46, 0
      %p569 = por %p567, %p568
      %s571 = sadd.s32 %s570, 1
      %p574 = scmp.eq.s32.totalorder %s40, 1
      %p575 = scmp.ne.s32.totalorder %s570, %s572
      %p576 = scmp.eq.s32.totalorder %s40, 0
      %p577 = por %p575, %p576
      %p578 = scmp.ne.s32.totalorder %s570, %s572
      %p579 = scmp.eq.s32.totalorder %s45, 1
      %p580 = por %p578, %p579
      %p581 = scmp.ne.s32.totalorder %s572, %s573
      %p582 = scmp.eq.s32.totalorder %s45, 0
      %p583 = por %p581, %p582
      %p584 = scmp.ne.s32.totalorder %s572, %s573
      %p585 = scmp.eq.s32.totalorder %s46, 1
      %p586 = por %p584, %p585
      %p588 = scmp.ne.s32.totalorder %s573, %s587
      %p589 = scmp.eq.s32.totalorder %s46, 0
      %p590 = por %p588, %p589
      %s592 = sadd.s32 %s591, 1
      %p595 = scmp.eq.s32.totalorder %s40, 1
      %p596 = scmp.ne.s32.totalorder %s591, %s593
      %p597 = scmp.eq.s32.totalorder %s40, 0
      %p598 = por %p596, %p597
      %p599 = scmp.ne.s32.totalorder %s591, %s593
      %p600 = scmp.eq.s32.totalorder %s45, 1
      %p601 = por %p599, %p600
      %p602 = scmp.ne.s32.totalorder %s593, %s594
      %p603 = scmp.eq.s32.totalorder %s45, 0
      %p604 = por %p602, %p603
      %p605 = scmp.ne.s32.totalorder %s593, %s594
      %p606 = scmp.eq.s32.totalorder %s46, 1
      %p607 = por %p605, %p606
      %p609 = scmp.ne.s32.totalorder %s594, %s608
      %p610 = scmp.eq.s32.totalorder %s46, 0
      %p611 = por %p609, %p610
      %s613 = sadd.s32 %s612, 1
      %p616 = scmp.eq.s32.totalorder %s40, 1
      %p617 = scmp.ne.s32.totalorder %s612, %s614
      %p618 = scmp.eq.s32.totalorder %s40, 0
      %p619 = por %p617, %p618
      %p620 = scmp.ne.s32.totalorder %s612, %s614
      %p621 = scmp.eq.s32.totalorder %s45, 1
      %p622 = por %p620, %p621
      %p623 = scmp.ne.s32.totalorder %s614, %s615
      %p624 = scmp.eq.s32.totalorder %s45, 0
      %p625 = por %p623, %p624
      %p626 = scmp.ne.s32.totalorder %s614, %s615
      %p627 = scmp.eq.s32.totalorder %s46, 1
      %p628 = por %p626, %p627
      %p630 = scmp.ne.s32.totalorder %s615, %s629
      %p631 = scmp.eq.s32.totalorder %s46, 0
      %p632 = por %p630, %p631
      %s634 = sadd.s32 %s633, 1
      %p637 = scmp.eq.s32.totalorder %s40, 1
      %p638 = scmp.ne.s32.totalorder %s633, %s635
      %p639 = scmp.eq.s32.totalorder %s40, 0
      %p640 = por %p638, %p639
      %p641 = scmp.ne.s32.totalorder %s633, %s635
      %p642 = scmp.eq.s32.totalorder %s45, 1
      %p643 = por %p641, %p642
      %p644 = scmp.ne.s32.totalorder %s635, %s636
      %p645 = scmp.eq.s32.totalorder %s45, 0
      %p646 = por %p644, %p645
      %p647 = scmp.ne.s32.totalorder %s635, %s636
      %p648 = scmp.eq.s32.totalorder %s46, 1
      %p649 = por %p647, %p648
      %p651 = scmp.ne.s32.totalorder %s636, %s650
      %p652 = scmp.eq.s32.totalorder %s46, 0
      %p653 = por %p651, %p652
      %s655 = sadd.s32 %s654, 1
      %p658 = scmp.eq.s32.totalorder %s40, 1
      %p659 = scmp.ne.s32.totalorder %s654, %s656
      %p660 = scmp.eq.s32.totalorder %s40, 0
      %p661 = por %p659, %p660
      %p662 = scmp.ne.s32.totalorder %s654, %s656
      %p663 = scmp.eq.s32.totalorder %s45, 1
      %p664 = por %p662, %p663
      %p665 = scmp.ne.s32.totalorder %s656, %s657
      %p666 = scmp.eq.s32.totalorder %s45, 0
      %p667 = por %p665, %p666
      %p668 = scmp.ne.s32.totalorder %s656, %s657
      %p669 = scmp.eq.s32.totalorder %s46, 1
      %p670 = por %p668, %p669
      %p672 = scmp.ne.s32.totalorder %s657, %s671
      %p673 = scmp.eq.s32.totalorder %s46, 0
      %p674 = por %p672, %p673
      %s676 = sadd.s32 %s675, 1
      %p679 = scmp.eq.s32.totalorder %s40, 1
      %p680 = scmp.ne.s32.totalorder %s675, %s677
      %p681 = scmp.eq.s32.totalorder %s40, 0
      %p682 = por %p680, %p681
      %p683 = scmp.ne.s32.totalorder %s675, %s677
      %p684 = scmp.eq.s32.totalorder %s45, 1
      %p685 = por %p683, %p684
      %p686 = scmp.ne.s32.totalorder %s677, %s678
      %p687 = scmp.eq.s32.totalorder %s45, 0
      %p688 = por %p686, %p687
      %p689 = scmp.ne.s32.totalorder %s677, %s678
      %p690 = scmp.eq.s32.totalorder %s46, 1
      %p691 = por %p689, %p690
      %p693 = scmp.ne.s32.totalorder %s678, %s692
      %p694 = scmp.eq.s32.totalorder %s46, 0
      %p695 = por %p693, %p694
      %s697 = sadd.s32 %s696, 1
      %p700 = scmp.eq.s32.totalorder %s40, 1
      %p701 = scmp.ne.s32.totalorder %s696, %s698
      %p702 = scmp.eq.s32.totalorder %s40, 0
      %p703 = por %p701, %p702
      %p704 = scmp.ne.s32.totalorder %s696, %s698
      %p705 = scmp.eq.s32.totalorder %s45, 1
      %p706 = por %p704, %p705
      %p707 = scmp.ne.s32.totalorder %s698, %s699
      %p708 = scmp.eq.s32.totalorder %s45, 0
      %p709 = por %p707, %p708
      %p710 = scmp.ne.s32.totalorder %s698, %s699
      %p711 = scmp.eq.s32.totalorder %s46, 1
      %p712 = por %p710, %p711
      %p714 = scmp.ne.s32.totalorder %s699, %s713
      %p715 = scmp.eq.s32.totalorder %s46, 0
      %p716 = por %p714, %p715
      %p717 = scmp.le.s32.totalorder 1, %s40
      %p718 = scmp.lt.s32.totalorder %s40, 3
      %p719 = pnand %p717, %p718
      %p720 = pneg %p719
      // Predicated region
      $region9: #{vit_b32_multimodal_forward.1} parent=5 // pred_check
        _
      $region10: #{vit_b32_multimodal_forward.1} parent=5 // pred_check_branch
        %722 = sbr.rel (%p719) target = $region12
      $region11: #{vit_b32_multimodal_forward.1} parent=5 // pred_region
        %s723 = ssub.s32 %s40, 1
        // Predicated region
        $region13: #{vit_b32_multimodal_forward.1} parent=11 // pred_check
          %p724 = pneg %p61
        $region14: #{vit_b32_multimodal_forward.1} parent=11 // pred_check_branch
          %726 = sbr.rel (%p724) target = $region16
        $region15: #{vit_b32_multimodal_forward.1} parent=11 // pred_region
          _
        $region16: #{vit_b32_multimodal_forward.1} parent=11 // pred_fallthru
          _
        // Predicated region
        $region17: #{vit_b32_multimodal_forward.1} parent=11 // pred_check
          %p727 = pneg %p82
        $region18: #{vit_b32_multimodal_forward.1} parent=11 // pred_check_branch
          %729 = sbr.rel (%p727) target = $region20
        $region19: #{vit_b32_multimodal_forward.1} parent=11 // pred_region
          _
        $region20: #{vit_b32_multimodal_forward.1} parent=11 // pred_fallthru
          _
        // Predicated region
        $region21: #{vit_b32_multimodal_forward.1} parent=11 // pred_check
          %p730 = pneg %p103
        $region22: #{vit_b32_multimodal_forward.1} parent=11 // pred_check_branch
          %732 = sbr.rel (%p730) target = $region24
        $region23: #{vit_b32_multimodal_forward.1} parent=11 // pred_region
          _
        $region24: #{vit_b32_multimodal_forward.1} parent=11 // pred_fallthru
          _
        // Predicated region
        $region25: #{vit_b32_multimodal_forward.1} parent=11 // pred_check
          %p733 = pneg %p124
        $region26: #{vit_b32_multimodal_forward.1} parent=11 // pred_check_branch
          %735 = sbr.rel (%p733) target = $region28
        $region27: #{vit_b32_multimodal_forward.1} parent=11 // pred_region
          %s737 = ssub.s32 128, 128
          %738 = vsyncadd [#allocation4], %s737
          %s740 = sshll.u32 [#allocation3], 4
          %s741 = int_to_ptr.vmem [resolvable:$true] %s740
          %743 = dma.hbm_to_vmem [thread:$0]  %s3, 128, %s741, [#allocation4]
        $region28: #{vit_b32_multimodal_forward.1} parent=11 // pred_fallthru
          _
        // Predicated region
        $region29: #{vit_b32_multimodal_forward.1} parent=11 // pred_check
          %p744 = pneg %p145
        $region30: #{vit_b32_multimodal_forward.1} parent=11 // pred_check_branch
          %746 = sbr.rel (%p744) target = $region32
        $region31: #{vit_b32_multimodal_forward.1} parent=11 // pred_region
          %s748 = ssub.s32 32, 32
          %749 = vsyncadd [#allocation7], %s748
          %s751 = sshll.u32 [#allocation6], 4
          %s752 = int_to_ptr.vmem [resolvable:$true] %s751
          %754 = dma.hbm_to_vmem [thread:$0]  %s4, 32, %s752, [#allocation7]
        $region32: #{vit_b32_multimodal_forward.1} parent=11 // pred_fallthru
          _
        // Predicated region
        $region33: #{vit_b32_multimodal_forward.1} parent=11 // pred_check
          %p755 = pneg %p478
        $region34: #{vit_b32_multimodal_forward.1} parent=11 // pred_check_branch
          %757 = sbr.rel (%p755) target = $region36
        $region35: #{vit_b32_multimodal_forward.1} parent=11 // pred_region
          %s759 = ssub.s32 16, 16
          %760 = vsyncadd [#allocation7], %s759
          %s762 = sshll.u32 [#allocation18], 4
          %s763 = int_to_ptr.vmem [resolvable:$true] %s762
          %765 = dma.hbm_to_vmem [thread:$0]  %s17, 16, %s763, [#allocation7]
        $region36: #{vit_b32_multimodal_forward.1} parent=11 // pred_fallthru
          _
        // Predicated region
        $region37: #{vit_b32_multimodal_forward.1} parent=11 // pred_check
          %p766 = pneg %p499
        $region38: #{vit_b32_multimodal_forward.1} parent=11 // pred_check_branch
          %768 = sbr.rel (%p766) target = $region40
        $region39: #{vit_b32_multimodal_forward.1} parent=11 // pred_region
          %s770 = ssub.s32 16, 16
          %771 = vsyncadd [#allocation20], %s770
          %s773 = sshll.u32 [#allocation19], 4
          %s774 = int_to_ptr.vmem [resolvable:$true] %s773
          %776 = dma.hbm_to_vmem [thread:$0]  %s18, 16, %s774, [#allocation20]
        $region40: #{vit_b32_multimodal_forward.1} parent=11 // pred_fallthru
          _
        // Predicated region
        $region41: #{vit_b32_multimodal_forward.1} parent=11 // pred_check
          %p777 = pneg %p520
        $region42: #{vit_b32_multimodal_forward.1} parent=11 // pred_check_branch
          %779 = sbr.rel (%p777) target = $region44
        $region43: #{vit_b32_multimodal_forward.1} parent=11 // pred_region
          %s781 = ssub.s32 4096, 4096
          %782 = vsyncadd [#allocation20], %s781
          %s783 = sshll.u32 [#allocation21], 4
          %s784 = int_to_ptr.vmem [resolvable:$true] %s783
          %789 = dma.hbm_to_vmem [thread:$0]  %s19, 4096, %s784, [#allocation20], 256, 256, 16
        $region44: #{vit_b32_multimodal_forward.1} parent=11 // pred_fallthru
          _
        // Predicated region
        $region45: #{vit_b32_multimodal_forward.1} parent=11 // pred_check
          %p790 = pneg %p541
        $region46: #{vit_b32_multimodal_forward.1} parent=11 // pred_check_branch
          %792 = sbr.rel (%p790) target = $region48
        $region47: #{vit_b32_multimodal_forward.1} parent=11 // pred_region
          %s794 = ssub.s32 256, 256
          %795 = vsyncadd [#allocation23], %s794
          %s797 = sshll.u32 [#allocation22], 4
          %s798 = int_to_ptr.vmem [resolvable:$true] %s797
          %800 = dma.hbm_to_vmem [thread:$0]  %s20, 256, %s798, [#allocation23]
        $region48: #{vit_b32_multimodal_forward.1} parent=11 // pred_fallthru
          _
        // Predicated region
        $region49: #{vit_b32_multimodal_forward.1} parent=11 // pred_check
          %p801 = pneg %p562
        $region50: #{vit_b32_multimodal_forward.1} parent=11 // pred_check_branch
          %803 = sbr.rel (%p801) target = $region52
        $region51: #{vit_b32_multimodal_forward.1} parent=11 // pred_region
          _
        $region52: #{vit_b32_multimodal_forward.1} parent=11 // pred_fallthru
          _
        // Predicated region
        $region53: #{vit_b32_multimodal_forward.1} parent=11 // pred_check
          %p804 = pneg %p583
        $region54: #{vit_b32_multimodal_forward.1} parent=11 // pred_check_branch
          %806 = sbr.rel (%p804) target = $region56
        $region55: #{vit_b32_multimodal_forward.1} parent=11 // pred_region
          _
        $region56: #{vit_b32_multimodal_forward.1} parent=11 // pred_fallthru
          _
        // Predicated region
        $region57: #{vit_b32_multimodal_forward.1} parent=11 // pred_check
          %p807 = pneg %p604
        $region58: #{vit_b32_multimodal_forward.1} parent=11 // pred_check_branch
          %809 = sbr.rel (%p807) target = $region60
        $region59: #{vit_b32_multimodal_forward.1} parent=11 // pred_region
          _
        $region60: #{vit_b32_multimodal_forward.1} parent=11 // pred_fallthru
          _
        // Predicated region
        $region61: #{vit_b32_multimodal_forward.1} parent=11 // pred_check
          %p810 = pneg %p625
        $region62: #{vit_b32_multimodal_forward.1} parent=11 // pred_check_branch
          %812 = sbr.rel (%p810) target = $region64
        $region63: #{vit_b32_multimodal_forward.1} parent=11 // pred_region
          _
        $region64: #{vit_b32_multimodal_forward.1} parent=11 // pred_fallthru
          _
        // Predicated region
        $region65: #{vit_b32_multimodal_forward.1} parent=11 // pred_check
          %p813 = pneg %p646
        $region66: #{vit_b32_multimodal_forward.1} parent=11 // pred_check_branch
          %815 = sbr.rel (%p813) target = $region68
        $region67: #{vit_b32_multimodal_forward.1} parent=11 // pred_region
          %s817 = ssub.s32 16, 16
          %818 = vsyncadd [#allocation23], %s817
          %s820 = sshll.u32 [#allocation24], 4
          %s821 = int_to_ptr.vmem [resolvable:$true] %s820
          %823 = dma.hbm_to_vmem [thread:$0]  %s25, 16, %s821, [#allocation23]
        $region68: #{vit_b32_multimodal_forward.1} parent=11 // pred_fallthru
          _
        // Predicated region
        $region69: #{vit_b32_multimodal_forward.1} parent=11 // pred_check
          %p824 = pneg %p667
        $region70: #{vit_b32_multimodal_forward.1} parent=11 // pred_check_branch
          %826 = sbr.rel (%p824) target = $region72
        $region71: #{vit_b32_multimodal_forward.1} parent=11 // pred_region
          _
        $region72: #{vit_b32_multimodal_forward.1} parent=11 // pred_fallthru
          _
        // Predicated region
        $region73: #{vit_b32_multimodal_forward.1} parent=11 // pred_check
          %p827 = pneg %p688
        $region74: #{vit_b32_multimodal_forward.1} parent=11 // pred_check_branch
          %829 = sbr.rel (%p827) target = $region76
        $region75: #{vit_b32_multimodal_forward.1} parent=11 // pred_region
          %s831 = ssub.s32 16, 16
          %832 = vsyncadd [#allocation26], %s831
          %s834 = sshll.u32 [#allocation25], 4
          %s835 = int_to_ptr.vmem [resolvable:$true] %s834
          %837 = dma.hbm_to_vmem [thread:$0]  %s27, 16, %s835, [#allocation26]
        $region76: #{vit_b32_multimodal_forward.1} parent=11 // pred_fallthru
          _
      $region12: #{vit_b32_multimodal_forward.1} parent=5 // pred_fallthru
        _
      %p838 = scmp.lt.s32.totalorder %s40, 2
      // Predicated region
      $region77: #{vit_b32_multimodal_forward.1} parent=5 // pred_check
        %p839 = pneg %p838
      $region78: #{vit_b32_multimodal_forward.1} parent=5 // pred_check_branch
        %841 = sbr.rel (%p839) target = $region80
      $region79: #{vit_b32_multimodal_forward.1} parent=5 // pred_region
        // Predicated region
        $region81: #{vit_b32_multimodal_forward.1} parent=79 // pred_check
          %p842 = pneg %p165
        $region82: #{vit_b32_multimodal_forward.1} parent=79 // pred_check_branch
          %844 = sbr.rel (%p842) target = $region84
        $region83: #{vit_b32_multimodal_forward.1} parent=79 // pred_region
          %s845 = sand.u32 %s40, 1
          %s846 = scalar_lea.sflag [#allocation4], %s845
          %s847 = sand.u32 %s155, 1
          %s848 = scalar_lea.vmem [#allocation8], %s847
          %s850 = ssub.s32 16, 16
          %851 = vsyncadd %s846, %s850
          %s852 = smul.addr %s40, 16
          %s853 = scalar_lea.hbm %s5, %s852
          %s855 = sshll.u32 %s848, 4
          %s856 = int_to_ptr.vmem [resolvable:$true] %s855
          %858 = dma.hbm_to_vmem [thread:$0]  %s853, 16, %s856, %s846
        $region84: #{vit_b32_multimodal_forward.1} parent=79 // pred_fallthru
          _
        // Predicated region
        $region85: #{vit_b32_multimodal_forward.1} parent=79 // pred_check
          %p859 = pneg %p191
        $region86: #{vit_b32_multimodal_forward.1} parent=79 // pred_check_branch
          %861 = sbr.rel (%p859) target = $region88
        $region87: #{vit_b32_multimodal_forward.1} parent=79 // pred_region
          %s862 = sand.u32 %s40, 1
          %s863 = scalar_lea.sflag [#allocation4], %s862
          %s864 = sand.u32 %s181, 1
          %s865 = scalar_lea.vmem [#allocation9], %s864
          %s867 = ssub.s32 16, 16
          %868 = vsyncadd %s863, %s867
          %s869 = smul.addr %s40, 16
          %s870 = scalar_lea.hbm %s6, %s869
          %s872 = sshll.u32 %s865, 4
          %s873 = int_to_ptr.vmem [resolvable:$true] %s872
          %875 = dma.hbm_to_vmem [thread:$0]  %s870, 16, %s873, %s863
        $region88: #{vit_b32_multimodal_forward.1} parent=79 // pred_fallthru
          _
        // Predicated region
        $region89: #{vit_b32_multimodal_forward.1} parent=79 // pred_check
          %p876 = pneg %p217
        $region90: #{vit_b32_multimodal_forward.1} parent=79 // pred_check_branch
          %878 = sbr.rel (%p876) target = $region92
        $region91: #{vit_b32_multimodal_forward.1} parent=79 // pred_region
          %p879 = scmp.lt.s32.totalorder %s40, 1
          %s880 = scalar_select %p879, %s40, 1
          %s881 = smul.addr %s880, 48
          %s882 = smul.addr %s881, 4
          %s883 = scalar_lea.vmem %s7, %s882
        $region92: #{vit_b32_multimodal_forward.1} parent=79 // pred_fallthru
          _
        // Predicated region
        $region93: #{vit_b32_multimodal_forward.1} parent=79 // pred_check
          %p884 = pneg %p243
        $region94: #{vit_b32_multimodal_forward.1} parent=79 // pred_check_branch
          %886 = sbr.rel (%p884) target = $region96
        $region95: #{vit_b32_multimodal_forward.1} parent=79 // pred_region
          %s887 = sand.u32 %s40, 1
          %s888 = scalar_lea.sflag [#allocation4], %s887
          %s889 = sand.u32 %s233, 1
          %s890 = smul.addr %s889, 3
          %s891 = scalar_lea.vmem [#allocation10], %s890
          %s893 = ssub.s32 48, 48
          %894 = vsyncadd %s888, %s893
          %s895 = smul.addr %s40, 3
          %s896 = smul.addr %s895, 16
          %s897 = scalar_lea.hbm %s8, %s896
          %s899 = sshll.u32 %s891, 4
          %s900 = int_to_ptr.vmem [resolvable:$true] %s899
          %902 = dma.hbm_to_vmem [thread:$0]  %s897, 48, %s900, %s888
        $region96: #{vit_b32_multimodal_forward.1} parent=79 // pred_fallthru
          _
        // Predicated region
        $region97: #{vit_b32_multimodal_forward.1} parent=79 // pred_check
          %p903 = pneg %p269
        $region98: #{vit_b32_multimodal_forward.1} parent=79 // pred_check_branch
          %905 = sbr.rel (%p903) target = $region100
        $region99: #{vit_b32_multimodal_forward.1} parent=79 // pred_region
          %s906 = sand.u32 %s40, 1
          %s907 = scalar_lea.sflag [#allocation4], %s906
          %s908 = sand.u32 %s259, 1
          %s909 = smul.addr %s908, 64
          %s910 = scalar_lea.vmem [#allocation11], %s909
          %s912 = ssub.s32 1024, 1024
          %913 = vsyncadd %s907, %s912
          %s914 = smul.addr %s40, 16
          %s915 = smul.addr %s914, 64
          %s916 = scalar_lea.hbm %s9, %s915
          %s917 = sshll.u32 %s910, 4
          %s918 = int_to_ptr.vmem [resolvable:$true] %s917
          %923 = dma.hbm_to_vmem [thread:$0]  %s916, 1024, %s918, %s907, 64, 64, 4
        $region100: #{vit_b32_multimodal_forward.1} parent=79 // pred_fallthru
          _
        // Predicated region
        $region101: #{vit_b32_multimodal_forward.1} parent=79 // pred_check
          %p924 = pneg %p295
        $region102: #{vit_b32_multimodal_forward.1} parent=79 // pred_check_branch
          %926 = sbr.rel (%p924) target = $region104
        $region103: #{vit_b32_multimodal_forward.1} parent=79 // pred_region
          %s927 = sand.u32 %s40, 1
          %s928 = scalar_lea.sflag [#allocation4], %s927
          %s929 = sand.u32 %s285, 1
          %s930 = scalar_lea.vmem [#allocation12], %s929
          %s932 = ssub.s32 16, 16
          %933 = vsyncadd %s928, %s932
          %s934 = smul.addr %s40, 16
          %s935 = scalar_lea.hbm %s10, %s934
          %s937 = sshll.u32 %s930, 4
          %s938 = int_to_ptr.vmem [resolvable:$true] %s937
          %940 = dma.hbm_to_vmem [thread:$0]  %s935, 16, %s938, %s928
        $region104: #{vit_b32_multimodal_forward.1} parent=79 // pred_fallthru
          _
        // Predicated region
        $region105: #{vit_b32_multimodal_forward.1} parent=79 // pred_check
          %p941 = pneg %p321
        $region106: #{vit_b32_multimodal_forward.1} parent=79 // pred_check_branch
          %943 = sbr.rel (%p941) target = $region108
        $region107: #{vit_b32_multimodal_forward.1} parent=79 // pred_region
          %s944 = sand.u32 %s40, 1
          %s945 = scalar_lea.sflag [#allocation4], %s944
          %s946 = sand.u32 %s311, 1
          %s947 = scalar_lea.vmem [#allocation13], %s946
          %s949 = ssub.s32 16, 16
          %950 = vsyncadd %s945, %s949
          %s951 = smul.addr %s40, 16
          %s952 = scalar_lea.hbm %s11, %s951
          %s954 = sshll.u32 %s947, 4
          %s955 = int_to_ptr.vmem [resolvable:$true] %s954
          %957 = dma.hbm_to_vmem [thread:$0]  %s952, 16, %s955, %s945
        $region108: #{vit_b32_multimodal_forward.1} parent=79 // pred_fallthru
          _
        // Predicated region
        $region109: #{vit_b32_multimodal_forward.1} parent=79 // pred_check
          %p958 = pneg %p347
        $region110: #{vit_b32_multimodal_forward.1} parent=79 // pred_check_branch
          %960 = sbr.rel (%p958) target = $region112
        $region111: #{vit_b32_multimodal_forward.1} parent=79 // pred_region
          %s961 = sand.u32 %s40, 1
          %s962 = scalar_lea.sflag [#allocation4], %s961
          %s963 = sand.u32 %s337, 1
          %s964 = scalar_lea.vmem [#allocation14], %s963
          %s966 = ssub.s32 16, 16
          %967 = vsyncadd %s962, %s966
          %s968 = smul.addr %s40, 16
          %s969 = scalar_lea.hbm %s12, %s968
          %s971 = sshll.u32 %s964, 4
          %s972 = int_to_ptr.vmem [resolvable:$true] %s971
          %974 = dma.hbm_to_vmem [thread:$0]  %s969, 16, %s972, %s962
        $region112: #{vit_b32_multimodal_forward.1} parent=79 // pred_fallthru
          _
        // Predicated region
        $region113: #{vit_b32_multimodal_forward.1} parent=79 // pred_check
          %p975 = pneg %p373
        $region114: #{vit_b32_multimodal_forward.1} parent=79 // pred_check_branch
          %977 = sbr.rel (%p975) target = $region116
        $region115: #{vit_b32_multimodal_forward.1} parent=79 // pred_region
          %p978 = scmp.lt.s32.totalorder %s40, 1
          %s979 = scalar_select %p978, %s40, 1
          %s980 = smul.addr %s979, 32
          %s981 = smul.addr %s980, 4
          %s982 = scalar_lea.vmem %s13, %s981
        $region116: #{vit_b32_multimodal_forward.1} parent=79 // pred_fallthru
          _
        // Predicated region
        $region117: #{vit_b32_multimodal_forward.1} parent=79 // pred_check
          %p983 = pneg %p399
        $region118: #{vit_b32_multimodal_forward.1} parent=79 // pred_check_branch
          %985 = sbr.rel (%p983) target = $region120
        $region119: #{vit_b32_multimodal_forward.1} parent=79 // pred_region
          %s986 = sand.u32 %s40, 1
          %s987 = scalar_lea.sflag [#allocation4], %s986
          %s988 = sand.u32 %s389, 1
          %s989 = smul.addr %s988, 2
          %s990 = scalar_lea.vmem [#allocation15], %s989
          %s992 = ssub.s32 32, 32
          %993 = vsyncadd %s987, %s992
          %s994 = smul.addr %s40, 2
          %s995 = smul.addr %s994, 16
          %s996 = scalar_lea.hbm %s14, %s995
          %s998 = sshll.u32 %s990, 4
          %s999 = int_to_ptr.vmem [resolvable:$true] %s998
          %1001 = dma.hbm_to_vmem [thread:$0]  %s996, 32, %s999, %s987
        $region120: #{vit_b32_multimodal_forward.1} parent=79 // pred_fallthru
          _
        // Predicated region
        $region121: #{vit_b32_multimodal_forward.1} parent=79 // pred_check
          %p1002 = pneg %p425
        $region122: #{vit_b32_multimodal_forward.1} parent=79 // pred_check_branch
          %1004 = sbr.rel (%p1002) target = $region124
        $region123: #{vit_b32_multimodal_forward.1} parent=79 // pred_region
          %s1005 = sand.u32 %s40, 1
          %s1006 = scalar_lea.sflag [#allocation4], %s1005
          %s1007 = sand.u32 %s415, 1
          %s1008 = smul.addr %s1007, 128
          %s1009 = scalar_lea.vmem [#allocation16], %s1008
          %s1011 = ssub.s32 2048, 2048
          %1012 = vsyncadd %s1006, %s1011
          %s1013 = smul.addr %s40, 32
          %s1014 = smul.addr %s1013, 64
          %s1015 = scalar_lea.hbm %s15, %s1014
          %s1016 = sshll.u32 %s1009, 4
          %s1017 = int_to_ptr.vmem [resolvable:$true] %s1016
          %1022 = dma.hbm_to_vmem [thread:$0]  %s1015, 2048, %s1017, %s1006, 64, 64, 4
        $region124: #{vit_b32_multimodal_forward.1} parent=79 // pred_fallthru
          _
        // Predicated region
        $region125: #{vit_b32_multimodal_forward.1} parent=79 // pred_check
          %p1023 = pneg %p451
        $region126: #{vit_b32_multimodal_forward.1} parent=79 // pred_check_branch
          %1025 = sbr.rel (%p1023) target = $region128
        $region127: #{vit_b32_multimodal_forward.1} parent=79 // pred_region
          %s1026 = sand.u32 %s40, 1
          %s1027 = scalar_lea.sflag [#allocation4], %s1026
          %s1028 = sand.u32 %s441, 1
          %s1029 = scalar_lea.vmem [#allocation17], %s1028
          %s1031 = ssub.s32 16, 16
          %1032 = vsyncadd %s1027, %s1031
          %s1033 = smul.addr %s40, 16
          %s1034 = scalar_lea.hbm %s16, %s1033
          %s1036 = sshll.u32 %s1029, 4
          %s1037 = int_to_ptr.vmem [resolvable:$true] %s1036
          %1039 = dma.hbm_to_vmem [thread:$0]  %s1034, 16, %s1037, %s1027
        $region128: #{vit_b32_multimodal_forward.1} parent=79 // pred_fallthru
          _
      $region80: #{vit_b32_multimodal_forward.1} parent=5 // pred_fallthru
        _
      %p1040 = scmp.le.s32.totalorder 1, %s40
      %p1041 = scmp.lt.s32.totalorder %s40, 3
      %p1042 = pnand %p1040, %p1041
      %p1043 = pneg %p1042
      // Predicated region
      $region129: #{vit_b32_multimodal_forward.1} parent=5 // pred_check
        _
      $region130: #{vit_b32_multimodal_forward.1} parent=5 // pred_check_branch
        %1045 = sbr.rel (%p1042) target = $region132
      $region131: #{vit_b32_multimodal_forward.1} parent=5 // pred_region
        %s1046 = ssub.s32 %s40, 1
        // Predicated region
        $region133: #{vit_b32_multimodal_forward.1} parent=131 // pred_check
          %p1047 = pneg %p124
        $region134: #{vit_b32_multimodal_forward.1} parent=131 // pred_check_branch
          %1049 = sbr.rel (%p1047) target = $region136
        $region135: #{vit_b32_multimodal_forward.1} parent=131 // pred_region
          %1050 = dma.done [#allocation4], 128
        $region136: #{vit_b32_multimodal_forward.1} parent=131 // pred_fallthru
          _
        // Predicated region
        $region137: #{vit_b32_multimodal_forward.1} parent=131 // pred_check
          %p1051 = pneg %p145
        $region138: #{vit_b32_multimodal_forward.1} parent=131 // pred_check_branch
          %1053 = sbr.rel (%p1051) target = $region140
        $region139: #{vit_b32_multimodal_forward.1} parent=131 // pred_region
          %1054 = dma.done [#allocation7], 32
        $region140: #{vit_b32_multimodal_forward.1} parent=131 // pred_fallthru
          _
        %s1055 = sand.u32 %s45, 1
        %s1056 = scalar_lea.sflag [#allocation4], %s1055
        %s1057 = sand.u32 %s158, 1
        %s1058 = scalar_lea.vmem [#allocation8], %s1057
        // Predicated region
        $region141: #{vit_b32_multimodal_forward.1} parent=131 // pred_check
          %p1059 = pneg %p171
        $region142: #{vit_b32_multimodal_forward.1} parent=131 // pred_check_branch
          %1061 = sbr.rel (%p1059) target = $region144
        $region143: #{vit_b32_multimodal_forward.1} parent=131 // pred_region
          %1062 = dma.done %s1056, 16
        $region144: #{vit_b32_multimodal_forward.1} parent=131 // pred_fallthru
          _
        %s1063 = sand.u32 %s45, 1
        %s1064 = scalar_lea.sflag [#allocation4], %s1063
        %s1065 = sand.u32 %s184, 1
        %s1066 = scalar_lea.vmem [#allocation9], %s1065
        // Predicated region
        $region145: #{vit_b32_multimodal_forward.1} parent=131 // pred_check
          %p1067 = pneg %p197
        $region146: #{vit_b32_multimodal_forward.1} parent=131 // pred_check_branch
          %1069 = sbr.rel (%p1067) target = $region148
        $region147: #{vit_b32_multimodal_forward.1} parent=131 // pred_region
          %1070 = dma.done %s1064, 16
        $region148: #{vit_b32_multimodal_forward.1} parent=131 // pred_fallthru
          _
        %s1071 = sand.u32 %s45, 1
        %s1072 = scalar_lea.sflag [#allocation4], %s1071
        %s1073 = sand.u32 %s236, 1
        %s1074 = smul.addr %s1073, 3
        %s1075 = scalar_lea.vmem [#allocation10], %s1074
        // Predicated region
        $region149: #{vit_b32_multimodal_forward.1} parent=131 // pred_check
          %p1076 = pneg %p249
        $region150: #{vit_b32_multimodal_forward.1} parent=131 // pred_check_branch
          %1078 = sbr.rel (%p1076) target = $region152
        $region151: #{vit_b32_multimodal_forward.1} parent=131 // pred_region
          %1079 = dma.done %s1072, 48
        $region152: #{vit_b32_multimodal_forward.1} parent=131 // pred_fallthru
          _
        %s1080 = sand.u32 %s45, 1
        %s1081 = scalar_lea.sflag [#allocation4], %s1080
        %s1082 = sand.u32 %s262, 1
        %s1083 = smul.addr %s1082, 64
        %s1084 = scalar_lea.vmem [#allocation11], %s1083
        // Predicated region
        $region153: #{vit_b32_multimodal_forward.1} parent=131 // pred_check
          %p1085 = pneg %p275
        $region154: #{vit_b32_multimodal_forward.1} parent=131 // pred_check_branch
          %1087 = sbr.rel (%p1085) target = $region156
        $region155: #{vit_b32_multimodal_forward.1} parent=131 // pred_region
          %1088 = dma.done %s1081, 1024
        $region156: #{vit_b32_multimodal_forward.1} parent=131 // pred_fallthru
          _
        %s1089 = sand.u32 %s45, 1
        %s1090 = scalar_lea.sflag [#allocation4], %s1089
        %s1091 = sand.u32 %s288, 1
        %s1092 = scalar_lea.vmem [#allocation12], %s1091
        // Predicated region
        $region157: #{vit_b32_multimodal_forward.1} parent=131 // pred_check
          %p1093 = pneg %p301
        $region158: #{vit_b32_multimodal_forward.1} parent=131 // pred_check_branch
          %1095 = sbr.rel (%p1093) target = $region160
        $region159: #{vit_b32_multimodal_forward.1} parent=131 // pred_region
          %1096 = dma.done %s1090, 16
        $region160: #{vit_b32_multimodal_forward.1} parent=131 // pred_fallthru
          _
        %s1097 = sand.u32 %s45, 1
        %s1098 = scalar_lea.sflag [#allocation4], %s1097
        %s1099 = sand.u32 %s314, 1
        %s1100 = scalar_lea.vmem [#allocation13], %s1099
        // Predicated region
        $region161: #{vit_b32_multimodal_forward.1} parent=131 // pred_check
          %p1101 = pneg %p327
        $region162: #{vit_b32_multimodal_forward.1} parent=131 // pred_check_branch
          %1103 = sbr.rel (%p1101) target = $region164
        $region163: #{vit_b32_multimodal_forward.1} parent=131 // pred_region
          %1104 = dma.done %s1098, 16
        $region164: #{vit_b32_multimodal_forward.1} parent=131 // pred_fallthru
          _
        %s1105 = sand.u32 %s45, 1
        %s1106 = scalar_lea.sflag [#allocation4], %s1105
        %s1107 = sand.u32 %s340, 1
        %s1108 = scalar_lea.vmem [#allocation14], %s1107
        // Predicated region
        $region165: #{vit_b32_multimodal_forward.1} parent=131 // pred_check
          %p1109 = pneg %p353
        $region166: #{vit_b32_multimodal_forward.1} parent=131 // pred_check_branch
          %1111 = sbr.rel (%p1109) target = $region168
        $region167: #{vit_b32_multimodal_forward.1} parent=131 // pred_region
          %1112 = dma.done %s1106, 16
        $region168: #{vit_b32_multimodal_forward.1} parent=131 // pred_fallthru
          _
        %s1113 = sand.u32 %s45, 1
        %s1114 = scalar_lea.sflag [#allocation4], %s1113
        %s1115 = sand.u32 %s392, 1
        %s1116 = smul.addr %s1115, 2
        %s1117 = scalar_lea.vmem [#allocation15], %s1116
        // Predicated region
        $region169: #{vit_b32_multimodal_forward.1} parent=131 // pred_check
          %p1118 = pneg %p405
        $region170: #{vit_b32_multimodal_forward.1} parent=131 // pred_check_branch
          %1120 = sbr.rel (%p1118) target = $region172
        $region171: #{vit_b32_multimodal_forward.1} parent=131 // pred_region
          %1121 = dma.done %s1114, 32
        $region172: #{vit_b32_multimodal_forward.1} parent=131 // pred_fallthru
          _
        %s1122 = sand.u32 %s45, 1
        %s1123 = scalar_lea.sflag [#allocation4], %s1122
        %s1124 = sand.u32 %s418, 1
        %s1125 = smul.addr %s1124, 128
        %s1126 = scalar_lea.vmem [#allocation16], %s1125
        // Predicated region
        $region173: #{vit_b32_multimodal_forward.1} parent=131 // pred_check
          %p1127 = pneg %p431
        $region174: #{vit_b32_multimodal_forward.1} parent=131 // pred_check_branch
          %1129 = sbr.rel (%p1127) target = $region176
        $region175: #{vit_b32_multimodal_forward.1} parent=131 // pred_region
          %1130 = dma.done %s1123, 2048
        $region176: #{vit_b32_multimodal_forward.1} parent=131 // pred_fallthru
          _
        %s1131 = sand.u32 %s45, 1
        %s1132 = scalar_lea.sflag [#allocation4], %s1131
        %s1133 = sand.u32 %s444, 1
        %s1134 = scalar_lea.vmem [#allocation17], %s1133
        // Predicated region
        $region177: #{vit_b32_multimodal_forward.1} parent=131 // pred_check
          %p1135 = pneg %p457
        $region178: #{vit_b32_multimodal_forward.1} parent=131 // pred_check_branch
          %1137 = sbr.rel (%p1135) target = $region180
        $region179: #{vit_b32_multimodal_forward.1} parent=131 // pred_region
          %1138 = dma.done %s1132, 16
        $region180: #{vit_b32_multimodal_forward.1} parent=131 // pred_fallthru
          _
        // Predicated region
        $region181: #{vit_b32_multimodal_forward.1} parent=131 // pred_check
          %p1139 = pneg %p478
        $region182: #{vit_b32_multimodal_forward.1} parent=131 // pred_check_branch
          %1141 = sbr.rel (%p1139) target = $region184
        $region183: #{vit_b32_multimodal_forward.1} parent=131 // pred_region
          %1142 = dma.done [#allocation7], 16
        $region184: #{vit_b32_multimodal_forward.1} parent=131 // pred_fallthru
          _
        // Predicated region
        $region185: #{vit_b32_multimodal_forward.1} parent=131 // pred_check
          %p1143 = pneg %p499
        $region186: #{vit_b32_multimodal_forward.1} parent=131 // pred_check_branch
          %1145 = sbr.rel (%p1143) target = $region188
        $region187: #{vit_b32_multimodal_forward.1} parent=131 // pred_region
          %1146 = dma.done [#allocation20], 16
        $region188: #{vit_b32_multimodal_forward.1} parent=131 // pred_fallthru
          _
        // Predicated region
        $region189: #{vit_b32_multimodal_forward.1} parent=131 // pred_check
          %p1147 = pneg %p520
        $region190: #{vit_b32_multimodal_forward.1} parent=131 // pred_check_branch
          %1149 = sbr.rel (%p1147) target = $region192
        $region191: #{vit_b32_multimodal_forward.1} parent=131 // pred_region
          %1150 = dma.done [#allocation20], 4096
        $region192: #{vit_b32_multimodal_forward.1} parent=131 // pred_fallthru
          _
        // Predicated region
        $region193: #{vit_b32_multimodal_forward.1} parent=131 // pred_check
          %p1151 = pneg %p541
        $region194: #{vit_b32_multimodal_forward.1} parent=131 // pred_check_branch
          %1153 = sbr.rel (%p1151) target = $region196
        $region195: #{vit_b32_multimodal_forward.1} parent=131 // pred_region
          %1154 = dma.done [#allocation23], 256
        $region196: #{vit_b32_multimodal_forward.1} parent=131 // pred_fallthru
          _
        // Predicated region
        $region197: #{vit_b32_multimodal_forward.1} parent=131 // pred_check
          %p1155 = pneg %p646
        $region198: #{vit_b32_multimodal_forward.1} parent=131 // pred_check_branch
          %1157 = sbr.rel (%p1155) target = $region200
        $region199: #{vit_b32_multimodal_forward.1} parent=131 // pred_region
          %1158 = dma.done [#allocation23], 16
        $region200: #{vit_b32_multimodal_forward.1} parent=131 // pred_fallthru
          _
        // Predicated region
        $region201: #{vit_b32_multimodal_forward.1} parent=131 // pred_check
          %p1159 = pneg %p688
        $region202: #{vit_b32_multimodal_forward.1} parent=131 // pred_check_branch
          %1161 = sbr.rel (%p1159) target = $region204
        $region203: #{vit_b32_multimodal_forward.1} parent=131 // pred_region
          %1162 = dma.done [#allocation26], 16
        $region204: #{vit_b32_multimodal_forward.1} parent=131 // pred_fallthru
          _
        %p1163 = pneg %p61
        %p1164 = pneg %p58
        %p1165 = pneg %p82
        %p1166 = pneg %p79
        %p1167 = pneg %p103
        %p1168 = pneg %p100
        %p1169 = pneg %p124
        %p1170 = pneg %p121
        %p1171 = pneg %p145
        %p1172 = pneg %p142
        %s1173 = sand.u32 %s45, 1
        %s1174 = scalar_lea.sflag [#allocation4], %s1173
        %s1175 = sand.u32 %s158, 1
        %s1176 = scalar_lea.vmem [#allocation8], %s1175
        %p1177 = pneg %p171
        %p1178 = pneg %p168
        %s1179 = sand.u32 %s45, 1
        %s1180 = scalar_lea.sflag [#allocation4], %s1179
        %s1181 = sand.u32 %s184, 1
        %s1182 = scalar_lea.vmem [#allocation9], %s1181
        %p1183 = pneg %p197
        %p1184 = pneg %p194
        %p1185 = scmp.lt.s32.totalorder %s45, 1
        %s1186 = scalar_select %p1185, %s45, 1
        %s1187 = smul.addr %s1186, 48
        %s1188 = smul.addr %s1187, 4
        %s1189 = scalar_lea.vmem %s7, %s1188
        %p1190 = pneg %p223
        %p1191 = pneg %p220
        %s1192 = sand.u32 %s45, 1
        %s1193 = scalar_lea.sflag [#allocation4], %s1192
        %s1194 = sand.u32 %s236, 1
        %s1195 = smul.addr %s1194, 3
        %s1196 = scalar_lea.vmem [#allocation10], %s1195
        %p1197 = pneg %p249
        %p1198 = pneg %p246
        %s1199 = sand.u32 %s45, 1
        %s1200 = scalar_lea.sflag [#allocation4], %s1199
        %s1201 = sand.u32 %s262, 1
        %s1202 = smul.addr %s1201, 64
        %s1203 = scalar_lea.vmem [#allocation11], %s1202
        %p1204 = pneg %p275
        %p1205 = pneg %p272
        %s1206 = sand.u32 %s45, 1
        %s1207 = scalar_lea.sflag [#allocation4], %s1206
        %s1208 = sand.u32 %s288, 1
        %s1209 = scalar_lea.vmem [#allocation12], %s1208
        %p1210 = pneg %p301
        %p1211 = pneg %p298
        %s1212 = sand.u32 %s45, 1
        %s1213 = scalar_lea.sflag [#allocation4], %s1212
        %s1214 = sand.u32 %s314, 1
        %s1215 = scalar_lea.vmem [#allocation13], %s1214
        %p1216 = pneg %p327
        %p1217 = pneg %p324
        %s1218 = sand.u32 %s45, 1
        %s1219 = scalar_lea.sflag [#allocation4], %s1218
        %s1220 = sand.u32 %s340, 1
        %s1221 = scalar_lea.vmem [#allocation14], %s1220
        %p1222 = pneg %p353
        %p1223 = pneg %p350
        %p1224 = scmp.lt.s32.totalorder %s45, 1
        %s1225 = scalar_select %p1224, %s45, 1
        %s1226 = smul.addr %s1225, 32
        %s1227 = smul.addr %s1226, 4
        %s1228 = scalar_lea.vmem %s13, %s1227
        %p1229 = pneg %p379
        %p1230 = pneg %p376
        %s1231 = sand.u32 %s45, 1
        %s1232 = scalar_lea.sflag [#allocation4], %s1231
        %s1233 = sand.u32 %s392, 1
        %s1234 = smul.addr %s1233, 2
        %s1235 = scalar_lea.vmem [#allocation15], %s1234
        %p1236 = pneg %p405
        %p1237 = pneg %p402
        %s1238 = sand.u32 %s45, 1
        %s1239 = scalar_lea.sflag [#allocation4], %s1238
        %s1240 = sand.u32 %s418, 1
        %s1241 = smul.addr %s1240, 128
        %s1242 = scalar_lea.vmem [#allocation16], %s1241
        %p1243 = pneg %p431
        %p1244 = pneg %p428
        %s1245 = sand.u32 %s45, 1
        %s1246 = scalar_lea.sflag [#allocation4], %s1245
        %s1247 = sand.u32 %s444, 1
        %s1248 = scalar_lea.vmem [#allocation17], %s1247
        %p1249 = pneg %p457
        %p1250 = pneg %p454
        %p1251 = pneg %p478
        %p1252 = pneg %p475
        %p1253 = pneg %p499
        %p1254 = pneg %p496
        %p1255 = pneg %p520
        %p1256 = pneg %p517
        %p1257 = pneg %p541
        %p1258 = pneg %p538
        %p1259 = pneg %p562
        %p1260 = pneg %p559
        %p1261 = pneg %p583
        %p1262 = pneg %p580
        %p1263 = pneg %p604
        %p1264 = pneg %p601
        %p1265 = pneg %p625
        %p1266 = pneg %p622
        %p1267 = pneg %p646
        %p1268 = pneg %p643
        %p1269 = pneg %p667
        %p1270 = pneg %p664
        %p1271 = pneg %p688
        %p1272 = pneg %p685
        %p1273 = pneg %p709
        %p1274 = pneg %p706
        %p1275 = scmp.lt.s32.totalorder %s45, 1
        %s1276 = scalar_select %p1275, %s45, 1
        %s1277 = smul.addr %s1276, 48
        %s1278 = smul.addr %s1277, 4
        %s1279 = scalar_lea.vmem %s7, %s1278
        %p1280 = scmp.lt.s32.totalorder %s45, 1
        %s1281 = scalar_select %p1280, %s45, 1
        %s1282 = smul.addr %s1281, 32
        %s1283 = smul.addr %s1282, 4
        %s1284 = scalar_lea.vmem %s13, %s1283
        %p1286 = scmp.eq.s32.totalorder %s45, 0
        // Predicated region
        $region205: #{vit_b32_multimodal_forward.1} parent=131 // pred_check
          %p1287 = pneg %p1286
        $region206: #{vit_b32_multimodal_forward.1} parent=131 // pred_check_branch
          %1289 = sbr.rel (%p1287) target = $region208
        $region207: #{vit_b32_multimodal_forward.1} parent=131 // pred_region
          %v1290 = vld [vmem:[%s0] sm:$0xff]
          %v1291 = vld [vmem:[%s0 + $0x8] sm:$0xff]
          %v1292 = vld [vmem:[%s0 + $0x10] sm:$0xff]
          %v1293 = vld [vmem:[%s0 + $0x18] sm:$0xff]
          %v1294 = vld [vmem:[%s0 + $0x20] sm:$0xff]
          %v1295 = vld [vmem:[%s0 + $0x28] sm:$0xff]
          %v1296 = vld [vmem:[%s0 + $0x30] sm:$0xff]
          %v1297 = vld [vmem:[%s0 + $0x38] sm:$0xff]
          %v1298 = vld [vmem:[%s0 + $0x40] sm:$0xff]
          %v1299 = vld [vmem:[%s0 + $0x48] sm:$0xff]
          %v1300 = vld [vmem:[%s0 + $0x50] sm:$0xff]
          %v1301 = vld [vmem:[%s0 + $0x58] sm:$0xff]
          %v1302 = vld [vmem:[%s0 + $0x60] sm:$0xff]
          %v1303 = vld [vmem:[%s0 + $0x68] sm:$0xff]
          %v1304 = vld [vmem:[%s0 + $0x70] sm:$0xff]
          %v1305 = vld [vmem:[%s0 + $0x78] sm:$0xff]
          %v1306 = vld [vmem:[%s0 + $0x80] sm:$0xff]
          %v1307 = vld [vmem:[%s0 + $0x88] sm:$0xff]
          %v1308 = vld [vmem:[%s0 + $0x90] sm:$0xff]
          %v1309 = vld [vmem:[%s0 + $0x98] sm:$0xff]
          %v1310 = vld [vmem:[%s0 + $0xa0] sm:$0xff]
          %v1311 = vld [vmem:[%s0 + $0xa8] sm:$0xff]
          %v1312 = vld [vmem:[%s0 + $0xb0] sm:$0xff]
          %v1313 = vld [vmem:[%s0 + $0xb8] sm:$0xff]
          %v1314 = vld [vmem:[%s1] sm:$0xf]
          %v1315 = vld [vmem:[%s1 + $0x4] sm:$0xf]
          %v1316 = vld [vmem:[%s1 + $0x8] sm:$0xf]
          %v1317 = vld [vmem:[%s1 + $0xc] sm:$0xf]
          %v1318 = vld [vmem:[%s1 + $0x10] sm:$0xf]
          %v1319 = vld [vmem:[%s1 + $0x14] sm:$0xf]
          %v1320 = vld [vmem:[%s1 + $0x18] sm:$0xf]
          %v1321 = vld [vmem:[%s1 + $0x1c] sm:$0xf]
          %v1322 = vld [vmem:[%s1 + $0x20] sm:$0xf]
          %v1323 = vld [vmem:[%s1 + $0x24] sm:$0xf]
          %v1324 = vld [vmem:[%s1 + $0x28] sm:$0xf]
          %v1325 = vld [vmem:[%s1 + $0x2c] sm:$0xf]
          %v1326 = vld [vmem:[%s1 + $0x30] sm:$0xf]
          %v1327 = vld [vmem:[%s1 + $0x34] sm:$0xf]
          %v1328 = vld [vmem:[%s1 + $0x38] sm:$0xf]
          %v1329 = vld [vmem:[%s1 + $0x3c] sm:$0xf]
          %v1330 = vld [vmem:[%s1 + $0x40] sm:$0xf]
          %v1331 = vld [vmem:[%s1 + $0x44] sm:$0xf]
          %v1332 = vld [vmem:[%s1 + $0x48] sm:$0xf]
          %v1333 = vld [vmem:[%s1 + $0x4c] sm:$0xf]
          %v1334 = vld [vmem:[%s1 + $0x50] sm:$0xf]
          %v1335 = vld [vmem:[%s1 + $0x54] sm:$0xf]
          %v1336 = vld [vmem:[%s1 + $0x58] sm:$0xf]
          %v1337 = vld [vmem:[%s1 + $0x5c] sm:$0xf]
          %v1338 = vld [vmem:[%s1 + $0x60] sm:$0xf]
          %v1339 = vld [vmem:[%s1 + $0x64] sm:$0xf]
          %v1340 = vld [vmem:[%s1 + $0x68] sm:$0xf]
          %v1341 = vld [vmem:[%s1 + $0x6c] sm:$0xf]
          %v1342 = vld [vmem:[%s1 + $0x70] sm:$0xf]
          %v1343 = vld [vmem:[%s1 + $0x74] sm:$0xf]
          %v1344 = vld [vmem:[%s1 + $0x78] sm:$0xf]
          %v1345 = vld [vmem:[%s1 + $0x7c] sm:$0xf]
          %v1346 = vld [vmem:[%s1 + $0x80] sm:$0xf]
          %v1347 = vld [vmem:[%s1 + $0x84] sm:$0xf]
          %v1348 = vld [vmem:[%s1 + $0x88] sm:$0xf]
          %v1349 = vld [vmem:[%s1 + $0x8c] sm:$0xf]
          %v1350 = vld [vmem:[%s1 + $0x90] sm:$0xf]
          %v1351 = vld [vmem:[%s1 + $0x94] sm:$0xf]
          %v1352 = vld [vmem:[%s1 + $0x98] sm:$0xf]
          %v1353 = vld [vmem:[%s1 + $0x9c] sm:$0xf]
          %v1354 = vld [vmem:[%s1 + $0xa0] sm:$0xf]
          %v1355 = vld [vmem:[%s1 + $0xa4] sm:$0xf]
          %v1356 = vld [vmem:[%s1 + $0xa8] sm:$0xf]
          %v1357 = vld [vmem:[%s1 + $0xac] sm:$0xf]
          %v1358 = vld [vmem:[%s1 + $0xb0] sm:$0xf]
          %v1359 = vld [vmem:[%s1 + $0xb4] sm:$0xf]
          %v1360 = vld [vmem:[%s1 + $0xb8] sm:$0xf]
          %v1361 = vld [vmem:[%s1 + $0xbc] sm:$0xf]
          %v1362 = vld [vmem:[%s1 + $0xc0] sm:$0xf]
          %v1363 = vld [vmem:[%s1 + $0xc4] sm:$0xf]
          %v1364 = vld [vmem:[%s1 + $0xc8] sm:$0xf]
          %v1365 = vld [vmem:[%s1 + $0xcc] sm:$0xf]
          %v1366 = vld [vmem:[%s1 + $0xd0] sm:$0xf]
          %v1367 = vld [vmem:[%s1 + $0xd4] sm:$0xf]
          %v1368 = vld [vmem:[%s1 + $0xd8] sm:$0xf]
          %v1369 = vld [vmem:[%s1 + $0xdc] sm:$0xf]
          %v1370 = vld [vmem:[%s1 + $0xe0] sm:$0xf]
          %v1371 = vld [vmem:[%s1 + $0xe4] sm:$0xf]
          %v1372 = vld [vmem:[%s1 + $0xe8] sm:$0xf]
          %v1373 = vld [vmem:[%s1 + $0xec] sm:$0xf]
          %v1374 = vld [vmem:[%s1 + $0xf0] sm:$0xf]
          %v1375 = vld [vmem:[%s1 + $0xf4] sm:$0xf]
          %v1376 = vld [vmem:[%s1 + $0xf8] sm:$0xf]
          %v1377 = vld [vmem:[%s1 + $0xfc] sm:$0xf]
          %v1378 = vld [vmem:[%s1 + $0x100] sm:$0xf]
          %v1379 = vld [vmem:[%s1 + $0x104] sm:$0xf]
          %v1380 = vld [vmem:[%s1 + $0x108] sm:$0xf]
          %v1381 = vld [vmem:[%s1 + $0x10c] sm:$0xf]
          %v1382 = vld [vmem:[%s1 + $0x110] sm:$0xf]
          %v1383 = vld [vmem:[%s1 + $0x114] sm:$0xf]
          %v1384 = vld [vmem:[%s1 + $0x118] sm:$0xf]
          %v1385 = vld [vmem:[%s1 + $0x11c] sm:$0xf]
          %v1386 = vld [vmem:[%s1 + $0x120] sm:$0xf]
          %v1387 = vld [vmem:[%s1 + $0x124] sm:$0xf]
          %v1388 = vld [vmem:[%s1 + $0x128] sm:$0xf]
          %v1389 = vld [vmem:[%s1 + $0x12c] sm:$0xf]
          %v1390 = vld [vmem:[%s1 + $0x130] sm:$0xf]
          %v1391 = vld [vmem:[%s1 + $0x134] sm:$0xf]
          %v1392 = vld [vmem:[%s1 + $0x138] sm:$0xf]
          %v1393 = vld [vmem:[%s1 + $0x13c] sm:$0xf]
          %v1394 = vld [vmem:[%s1 + $0x140] sm:$0xf]
          %v1395 = vld [vmem:[%s1 + $0x144] sm:$0xf]
          %v1396 = vld [vmem:[%s1 + $0x148] sm:$0xf]
          %v1397 = vld [vmem:[%s1 + $0x14c] sm:$0xf]
          %v1398 = vld [vmem:[%s1 + $0x150] sm:$0xf]
          %v1399 = vld [vmem:[%s1 + $0x154] sm:$0xf]
          %v1400 = vld [vmem:[%s1 + $0x158] sm:$0xf]
          %v1401 = vld [vmem:[%s1 + $0x15c] sm:$0xf]
          %v1402 = vld [vmem:[%s1 + $0x160] sm:$0xf]
          %v1403 = vld [vmem:[%s1 + $0x164] sm:$0xf]
          %v1404 = vld [vmem:[%s1 + $0x168] sm:$0xf]
          %v1405 = vld [vmem:[%s1 + $0x16c] sm:$0xf]
          %v1406 = vld [vmem:[%s1 + $0x170] sm:$0xf]
          %v1407 = vld [vmem:[%s1 + $0x174] sm:$0xf]
          %v1408 = vld [vmem:[%s1 + $0x178] sm:$0xf]
          %v1409 = vld [vmem:[%s1 + $0x17c] sm:$0xf]
          %v1410 = vld [vmem:[%s1 + $0x180] sm:$0xf]
          %v1411 = vld [vmem:[%s1 + $0x184] sm:$0xf]
          %v1412 = vld [vmem:[%s1 + $0x188] sm:$0xf]
          %v1413 = vld [vmem:[%s1 + $0x18c] sm:$0xf]
          %v1414 = vld [vmem:[%s1 + $0x190] sm:$0xf]
          %v1415 = vld [vmem:[%s1 + $0x194] sm:$0xf]
          %v1416 = vld [vmem:[%s1 + $0x198] sm:$0xf]
          %v1417 = vld [vmem:[%s1 + $0x19c] sm:$0xf]
          %v1418 = vld [vmem:[%s1 + $0x1a0] sm:$0xf]
          %v1419 = vld [vmem:[%s1 + $0x1a4] sm:$0xf]
          %v1420 = vld [vmem:[%s1 + $0x1a8] sm:$0xf]
          %v1421 = vld [vmem:[%s1 + $0x1ac] sm:$0xf]
          %v1422 = vld [vmem:[%s1 + $0x1b0] sm:$0xf]
          %v1423 = vld [vmem:[%s1 + $0x1b4] sm:$0xf]
          %v1424 = vld [vmem:[%s1 + $0x1b8] sm:$0xf]
          %v1425 = vld [vmem:[%s1 + $0x1bc] sm:$0xf]
          %v1426 = vld [vmem:[%s1 + $0x1c0] sm:$0xf]
          %v1427 = vld [vmem:[%s1 + $0x1c4] sm:$0xf]
          %v1428 = vld [vmem:[%s1 + $0x1c8] sm:$0xf]
          %v1429 = vld [vmem:[%s1 + $0x1cc] sm:$0xf]
          %v1430 = vld [vmem:[%s1 + $0x1d0] sm:$0xf]
          %v1431 = vld [vmem:[%s1 + $0x1d4] sm:$0xf]
          %v1432 = vld [vmem:[%s1 + $0x1d8] sm:$0xf]
          %v1433 = vld [vmem:[%s1 + $0x1dc] sm:$0xf]
          %v1434 = vld [vmem:[%s1 + $0x1e0] sm:$0xf]
          %v1435 = vld [vmem:[%s1 + $0x1e4] sm:$0xf]
          %v1436 = vld [vmem:[%s1 + $0x1e8] sm:$0xf]
          %v1437 = vld [vmem:[%s1 + $0x1ec] sm:$0xf]
          %v1438 = vld [vmem:[%s1 + $0x1f0] sm:$0xf]
          %v1439 = vld [vmem:[%s1 + $0x1f4] sm:$0xf]
          %v1440 = vld [vmem:[%s1 + $0x1f8] sm:$0xf]
          %v1441 = vld [vmem:[%s1 + $0x1fc] sm:$0xf]
          %v1442 = vld [vmem:[%s1 + $0x200] sm:$0xf]
          %v1443 = vld [vmem:[%s1 + $0x204] sm:$0xf]
          %v1444 = vld [vmem:[%s1 + $0x208] sm:$0xf]
          %v1445 = vld [vmem:[%s1 + $0x20c] sm:$0xf]
          %v1446 = vld [vmem:[%s1 + $0x210] sm:$0xf]
          %v1447 = vld [vmem:[%s1 + $0x214] sm:$0xf]
          %v1448 = vld [vmem:[%s1 + $0x218] sm:$0xf]
          %v1449 = vld [vmem:[%s1 + $0x21c] sm:$0xf]
          %v1450 = vld [vmem:[%s1 + $0x220] sm:$0xf]
          %v1451 = vld [vmem:[%s1 + $0x224] sm:$0xf]
          %v1452 = vld [vmem:[%s1 + $0x228] sm:$0xf]
          %v1453 = vld [vmem:[%s1 + $0x22c] sm:$0xf]
          %v1454 = vld [vmem:[%s1 + $0x230] sm:$0xf]
          %v1455 = vld [vmem:[%s1 + $0x234] sm:$0xf]
          %v1456 = vld [vmem:[%s1 + $0x238] sm:$0xf]
          %v1457 = vld [vmem:[%s1 + $0x23c] sm:$0xf]
          %v1458 = vld [vmem:[%s1 + $0x240] sm:$0xf]
          %v1459 = vld [vmem:[%s1 + $0x244] sm:$0xf]
          %v1460 = vld [vmem:[%s1 + $0x248] sm:$0xf]
          %v1461 = vld [vmem:[%s1 + $0x24c] sm:$0xf]
          %v1462 = vld [vmem:[%s1 + $0x250] sm:$0xf]
          %v1463 = vld [vmem:[%s1 + $0x254] sm:$0xf]
          %v1464 = vld [vmem:[%s1 + $0x258] sm:$0xf]
          %v1465 = vld [vmem:[%s1 + $0x25c] sm:$0xf]
          %v1466 = vld [vmem:[%s1 + $0x260] sm:$0xf]
          %v1467 = vld [vmem:[%s1 + $0x264] sm:$0xf]
          %v1468 = vld [vmem:[%s1 + $0x268] sm:$0xf]
          %v1469 = vld [vmem:[%s1 + $0x26c] sm:$0xf]
          %v1470 = vld [vmem:[%s1 + $0x270] sm:$0xf]
          %v1471 = vld [vmem:[%s1 + $0x274] sm:$0xf]
          %v1472 = vld [vmem:[%s1 + $0x278] sm:$0xf]
          %v1473 = vld [vmem:[%s1 + $0x27c] sm:$0xf]
          %v1474 = vld [vmem:[%s1 + $0x280] sm:$0xf]
          %v1475 = vld [vmem:[%s1 + $0x284] sm:$0xf]
          %v1476 = vld [vmem:[%s1 + $0x288] sm:$0xf]
          %v1477 = vld [vmem:[%s1 + $0x28c] sm:$0xf]
          %v1478 = vld [vmem:[%s1 + $0x290] sm:$0xf]
          %v1479 = vld [vmem:[%s1 + $0x294] sm:$0xf]
          %v1480 = vld [vmem:[%s1 + $0x298] sm:$0xf]
          %v1481 = vld [vmem:[%s1 + $0x29c] sm:$0xf]
          %v1482 = vld [vmem:[%s1 + $0x2a0] sm:$0xf]
          %v1483 = vld [vmem:[%s1 + $0x2a4] sm:$0xf]
          %v1484 = vld [vmem:[%s1 + $0x2a8] sm:$0xf]
          %v1485 = vld [vmem:[%s1 + $0x2ac] sm:$0xf]
          %v1486 = vld [vmem:[%s1 + $0x2b0] sm:$0xf]
          %v1487 = vld [vmem:[%s1 + $0x2b4] sm:$0xf]
          %v1488 = vld [vmem:[%s1 + $0x2b8] sm:$0xf]
          %v1489 = vld [vmem:[%s1 + $0x2bc] sm:$0xf]
          %v1490 = vld [vmem:[%s1 + $0x2c0] sm:$0xf]
          %v1491 = vld [vmem:[%s1 + $0x2c4] sm:$0xf]
          %v1492 = vld [vmem:[%s1 + $0x2c8] sm:$0xf]
          %v1493 = vld [vmem:[%s1 + $0x2cc] sm:$0xf]
          %v1494 = vld [vmem:[%s1 + $0x2d0] sm:$0xf]
          %v1495 = vld [vmem:[%s1 + $0x2d4] sm:$0xf]
          %v1496 = vld [vmem:[%s1 + $0x2d8] sm:$0xf]
          %v1497 = vld [vmem:[%s1 + $0x2dc] sm:$0xf]
          %v1498 = vld [vmem:[%s1 + $0x2e0] sm:$0xf]
          %v1499 = vld [vmem:[%s1 + $0x2e4] sm:$0xf]
          %v1500 = vld [vmem:[%s1 + $0x2e8] sm:$0xf]
          %v1501 = vld [vmem:[%s1 + $0x2ec] sm:$0xf]
          %v1502 = vld [vmem:[%s1 + $0x2f0] sm:$0xf]
          %v1503 = vld [vmem:[%s1 + $0x2f4] sm:$0xf]
          %v1504 = vld [vmem:[%s1 + $0x2f8] sm:$0xf]
          %v1505 = vld [vmem:[%s1 + $0x2fc] sm:$0xf]
          %v1506 = vld [vmem:[%s1 + $0x300] sm:$0xf]
          %v1507 = vld [vmem:[%s1 + $0x304] sm:$0xf]
          %v1508 = vld [vmem:[%s1 + $0x308] sm:$0xf]
          %v1509 = vld [vmem:[%s1 + $0x30c] sm:$0xf]
          %v1510 = vld [vmem:[%s1 + $0x310] sm:$0xf]
          %v1511 = vld [vmem:[%s1 + $0x314] sm:$0xf]
          %v1512 = vld [vmem:[%s1 + $0x318] sm:$0xf]
          %v1513 = vld [vmem:[%s1 + $0x31c] sm:$0xf]
          %v1514 = vld [vmem:[%s1 + $0x320] sm:$0xf]
          %v1515 = vld [vmem:[%s1 + $0x324] sm:$0xf]
          %v1516 = vld [vmem:[%s1 + $0x328] sm:$0xf]
          %v1517 = vld [vmem:[%s1 + $0x32c] sm:$0xf]
          %v1518 = vld [vmem:[%s1 + $0x330] sm:$0xf]
          %v1519 = vld [vmem:[%s1 + $0x334] sm:$0xf]
          %v1520 = vld [vmem:[%s1 + $0x338] sm:$0xf]
          %v1521 = vld [vmem:[%s1 + $0x33c] sm:$0xf]
          %v1522 = vld [vmem:[%s1 + $0x340] sm:$0xf]
          %v1523 = vld [vmem:[%s1 + $0x344] sm:$0xf]
          %v1524 = vld [vmem:[%s1 + $0x348] sm:$0xf]
          %v1525 = vld [vmem:[%s1 + $0x34c] sm:$0xf]
          %v1526 = vld [vmem:[%s1 + $0x350] sm:$0xf]
          %v1527 = vld [vmem:[%s1 + $0x354] sm:$0xf]
          %v1528 = vld [vmem:[%s1 + $0x358] sm:$0xf]
          %v1529 = vld [vmem:[%s1 + $0x35c] sm:$0xf]
          %v1530 = vld [vmem:[%s1 + $0x360] sm:$0xf]
          %v1531 = vld [vmem:[%s1 + $0x364] sm:$0xf]
          %v1532 = vld [vmem:[%s1 + $0x368] sm:$0xf]
          %v1533 = vld [vmem:[%s1 + $0x36c] sm:$0xf]
          %v1534 = vld [vmem:[%s1 + $0x370] sm:$0xf]
          %v1535 = vld [vmem:[%s1 + $0x374] sm:$0xf]
          %v1536 = vld [vmem:[%s1 + $0x378] sm:$0xf]
          %v1537 = vld [vmem:[%s1 + $0x37c] sm:$0xf]
          %v1538 = vld [vmem:[%s1 + $0x380] sm:$0xf]
          %v1539 = vld [vmem:[%s1 + $0x384] sm:$0xf]
          %v1540 = vld [vmem:[%s1 + $0x388] sm:$0xf]
          %v1541 = vld [vmem:[%s1 + $0x38c] sm:$0xf]
          %v1542 = vld [vmem:[%s1 + $0x390] sm:$0xf]
          %v1543 = vld [vmem:[%s1 + $0x394] sm:$0xf]
          %v1544 = vld [vmem:[%s1 + $0x398] sm:$0xf]
          %v1545 = vld [vmem:[%s1 + $0x39c] sm:$0xf]
          %v1546 = vld [vmem:[%s1 + $0x3a0] sm:$0xf]
          %v1547 = vld [vmem:[%s1 + $0x3a4] sm:$0xf]
          %v1548 = vld [vmem:[%s1 + $0x3a8] sm:$0xf]
          %v1549 = vld [vmem:[%s1 + $0x3ac] sm:$0xf]
          %v1550 = vld [vmem:[%s1 + $0x3b0] sm:$0xf]
          %v1551 = vld [vmem:[%s1 + $0x3b4] sm:$0xf]
          %v1552 = vld [vmem:[%s1 + $0x3b8] sm:$0xf]
          %v1553 = vld [vmem:[%s1 + $0x3bc] sm:$0xf]
          %v1554 = vld [vmem:[%s1 + $0x3c0] sm:$0xf]
          %v1555 = vld [vmem:[%s1 + $0x3c4] sm:$0xf]
          %v1556 = vld [vmem:[%s1 + $0x3c8] sm:$0xf]
          %v1557 = vld [vmem:[%s1 + $0x3cc] sm:$0xf]
          %v1558 = vld [vmem:[%s1 + $0x3d0] sm:$0xf]
          %v1559 = vld [vmem:[%s1 + $0x3d4] sm:$0xf]
          %v1560 = vld [vmem:[%s1 + $0x3d8] sm:$0xf]
          %v1561 = vld [vmem:[%s1 + $0x3dc] sm:$0xf]
          %v1562 = vld [vmem:[%s1 + $0x3e0] sm:$0xf]
          %v1563 = vld [vmem:[%s1 + $0x3e4] sm:$0xf]
          %v1564 = vld [vmem:[%s1 + $0x3e8] sm:$0xf]
          %v1565 = vld [vmem:[%s1 + $0x3ec] sm:$0xf]
          %v1566 = vld [vmem:[%s1 + $0x3f0] sm:$0xf]
          %v1567 = vld [vmem:[%s1 + $0x3f4] sm:$0xf]
          %v1568 = vld [vmem:[%s1 + $0x3f8] sm:$0xf]
          %v1569 = vld [vmem:[%s1 + $0x3fc] sm:$0xf]
          %v1570 = vld [vmem:[%s1 + $0x400] sm:$0xf]
          %v1571 = vld [vmem:[%s1 + $0x404] sm:$0xf]
          %v1572 = vld [vmem:[%s1 + $0x408] sm:$0xf]
          %v1573 = vld [vmem:[%s1 + $0x40c] sm:$0xf]
          %v1574 = vld [vmem:[%s1 + $0x410] sm:$0xf]
          %v1575 = vld [vmem:[%s1 + $0x414] sm:$0xf]
          %v1576 = vld [vmem:[%s1 + $0x418] sm:$0xf]
          %v1577 = vld [vmem:[%s1 + $0x41c] sm:$0xf]
          %v1578 = vld [vmem:[%s1 + $0x420] sm:$0xf]
          %v1579 = vld [vmem:[%s1 + $0x424] sm:$0xf]
          %v1580 = vld [vmem:[%s1 + $0x428] sm:$0xf]
          %v1581 = vld [vmem:[%s1 + $0x42c] sm:$0xf]
          %v1582 = vld [vmem:[%s1 + $0x430] sm:$0xf]
          %v1583 = vld [vmem:[%s1 + $0x434] sm:$0xf]
          %v1584 = vld [vmem:[%s1 + $0x438] sm:$0xf]
          %v1585 = vld [vmem:[%s1 + $0x43c] sm:$0xf]
          %v1586 = vld [vmem:[%s1 + $0x440] sm:$0xf]
          %v1587 = vld [vmem:[%s1 + $0x444] sm:$0xf]
          %v1588 = vld [vmem:[%s1 + $0x448] sm:$0xf]
          %v1589 = vld [vmem:[%s1 + $0x44c] sm:$0xf]
          %v1590 = vld [vmem:[%s1 + $0x450] sm:$0xf]
          %v1591 = vld [vmem:[%s1 + $0x454] sm:$0xf]
          %v1592 = vld [vmem:[%s1 + $0x458] sm:$0xf]
          %v1593 = vld [vmem:[%s1 + $0x45c] sm:$0xf]
          %v1594 = vld [vmem:[%s1 + $0x460] sm:$0xf]
          %v1595 = vld [vmem:[%s1 + $0x464] sm:$0xf]
          %v1596 = vld [vmem:[%s1 + $0x468] sm:$0xf]
          %v1597 = vld [vmem:[%s1 + $0x46c] sm:$0xf]
          %v1598 = vld [vmem:[%s1 + $0x470] sm:$0xf]
          %v1599 = vld [vmem:[%s1 + $0x474] sm:$0xf]
          %v1600 = vld [vmem:[%s1 + $0x478] sm:$0xf]
          %v1601 = vld [vmem:[%s1 + $0x47c] sm:$0xf]
          %v1602 = vld [vmem:[%s1 + $0x480] sm:$0xf]
          %v1603 = vld [vmem:[%s1 + $0x484] sm:$0xf]
          %v1604 = vld [vmem:[%s1 + $0x488] sm:$0xf]
          %v1605 = vld [vmem:[%s1 + $0x48c] sm:$0xf]
          %v1606 = vld [vmem:[%s1 + $0x490] sm:$0xf]
          %v1607 = vld [vmem:[%s1 + $0x494] sm:$0xf]
          %v1608 = vld [vmem:[%s1 + $0x498] sm:$0xf]
          %v1609 = vld [vmem:[%s1 + $0x49c] sm:$0xf]
          %v1610 = vld [vmem:[%s1 + $0x4a0] sm:$0xf]
          %v1611 = vld [vmem:[%s1 + $0x4a4] sm:$0xf]
          %v1612 = vld [vmem:[%s1 + $0x4a8] sm:$0xf]
          %v1613 = vld [vmem:[%s1 + $0x4ac] sm:$0xf]
          %v1614 = vld [vmem:[%s1 + $0x4b0] sm:$0xf]
          %v1615 = vld [vmem:[%s1 + $0x4b4] sm:$0xf]
          %v1616 = vld [vmem:[%s1 + $0x4b8] sm:$0xf]
          %v1617 = vld [vmem:[%s1 + $0x4bc] sm:$0xf]
          %v1618 = vld [vmem:[%s1 + $0x4c0] sm:$0xf]
          %v1619 = vld [vmem:[%s1 + $0x4c4] sm:$0xf]
          %v1620 = vld [vmem:[%s1 + $0x4c8] sm:$0xf]
          %v1621 = vld [vmem:[%s1 + $0x4cc] sm:$0xf]
          %v1622 = vld [vmem:[%s1 + $0x4d0] sm:$0xf]
          %v1623 = vld [vmem:[%s1 + $0x4d4] sm:$0xf]
          %v1624 = vld [vmem:[%s1 + $0x4d8] sm:$0xf]
          %v1625 = vld [vmem:[%s1 + $0x4dc] sm:$0xf]
          %v1626 = vld [vmem:[%s1 + $0x4e0] sm:$0xf]
          %v1627 = vld [vmem:[%s1 + $0x4e4] sm:$0xf]
          %v1628 = vld [vmem:[%s1 + $0x4e8] sm:$0xf]
          %v1629 = vld [vmem:[%s1 + $0x4ec] sm:$0xf]
          %v1630 = vld [vmem:[%s1 + $0x4f0] sm:$0xf]
          %v1631 = vld [vmem:[%s1 + $0x4f4] sm:$0xf]
          %v1632 = vld [vmem:[%s1 + $0x4f8] sm:$0xf]
          %v1633 = vld [vmem:[%s1 + $0x4fc] sm:$0xf]
          %v1634 = vld [vmem:[%s1 + $0x500] sm:$0xf]
          %v1635 = vld [vmem:[%s1 + $0x504] sm:$0xf]
          %v1636 = vld [vmem:[%s1 + $0x508] sm:$0xf]
          %v1637 = vld [vmem:[%s1 + $0x50c] sm:$0xf]
          %v1638 = vld [vmem:[%s1 + $0x510] sm:$0xf]
          %v1639 = vld [vmem:[%s1 + $0x514] sm:$0xf]
          %v1640 = vld [vmem:[%s1 + $0x518] sm:$0xf]
          %v1641 = vld [vmem:[%s1 + $0x51c] sm:$0xf]
          %v1642 = vld [vmem:[%s1 + $0x520] sm:$0xf]
          %v1643 = vld [vmem:[%s1 + $0x524] sm:$0xf]
          %v1644 = vld [vmem:[%s1 + $0x528] sm:$0xf]
          %v1645 = vld [vmem:[%s1 + $0x52c] sm:$0xf]
          %v1646 = vld [vmem:[%s1 + $0x530] sm:$0xf]
          %v1647 = vld [vmem:[%s1 + $0x534] sm:$0xf]
          %v1648 = vld [vmem:[%s1 + $0x538] sm:$0xf]
          %v1649 = vld [vmem:[%s1 + $0x53c] sm:$0xf]
          %v1650 = vld [vmem:[%s1 + $0x540] sm:$0xf]
          %v1651 = vld [vmem:[%s1 + $0x544] sm:$0xf]
          %v1652 = vld [vmem:[%s1 + $0x548] sm:$0xf]
          %v1653 = vld [vmem:[%s1 + $0x54c] sm:$0xf]
          %v1654 = vld [vmem:[%s1 + $0x550] sm:$0xf]
          %v1655 = vld [vmem:[%s1 + $0x554] sm:$0xf]
          %v1656 = vld [vmem:[%s1 + $0x558] sm:$0xf]
          %v1657 = vld [vmem:[%s1 + $0x55c] sm:$0xf]
          %v1658 = vld [vmem:[%s1 + $0x560] sm:$0xf]
          %v1659 = vld [vmem:[%s1 + $0x564] sm:$0xf]
          %v1660 = vld [vmem:[%s1 + $0x568] sm:$0xf]
          %v1661 = vld [vmem:[%s1 + $0x56c] sm:$0xf]
          %v1662 = vld [vmem:[%s1 + $0x570] sm:$0xf]
          %v1663 = vld [vmem:[%s1 + $0x574] sm:$0xf]
          %v1664 = vld [vmem:[%s1 + $0x578] sm:$0xf]
          %v1665 = vld [vmem:[%s1 + $0x57c] sm:$0xf]
          %v1666 = vld [vmem:[%s1 + $0x580] sm:$0xf]
          %v1667 = vld [vmem:[%s1 + $0x584] sm:$0xf]
          %v1668 = vld [vmem:[%s1 + $0x588] sm:$0xf]
          %v1669 = vld [vmem:[%s1 + $0x58c] sm:$0xf]
          %v1670 = vld [vmem:[%s1 + $0x590] sm:$0xf]
          %v1671 = vld [vmem:[%s1 + $0x594] sm:$0xf]
          %v1672 = vld [vmem:[%s1 + $0x598] sm:$0xf]
          %v1673 = vld [vmem:[%s1 + $0x59c] sm:$0xf]
          %v1674 = vld [vmem:[%s1 + $0x5a0] sm:$0xf]
          %v1675 = vld [vmem:[%s1 + $0x5a4] sm:$0xf]
          %v1676 = vld [vmem:[%s1 + $0x5a8] sm:$0xf]
          %v1677 = vld [vmem:[%s1 + $0x5ac] sm:$0xf]
          %v1678 = vld [vmem:[%s1 + $0x5b0] sm:$0xf]
          %v1679 = vld [vmem:[%s1 + $0x5b4] sm:$0xf]
          %v1680 = vld [vmem:[%s1 + $0x5b8] sm:$0xf]
          %v1681 = vld [vmem:[%s1 + $0x5bc] sm:$0xf]
          %v1682 = vld [vmem:[%s1 + $0x5c0] sm:$0xf]
          %v1683 = vld [vmem:[%s1 + $0x5c4] sm:$0xf]
          %v1684 = vld [vmem:[%s1 + $0x5c8] sm:$0xf]
          %v1685 = vld [vmem:[%s1 + $0x5cc] sm:$0xf]
          %v1686 = vld [vmem:[%s1 + $0x5d0] sm:$0xf]
          %v1687 = vld [vmem:[%s1 + $0x5d4] sm:$0xf]
          %v1688 = vld [vmem:[%s1 + $0x5d8] sm:$0xf]
          %v1689 = vld [vmem:[%s1 + $0x5dc] sm:$0xf]
          %v1690 = vld [vmem:[%s1 + $0x5e0] sm:$0xf]
          %v1691 = vld [vmem:[%s1 + $0x5e4] sm:$0xf]
          %v1692 = vld [vmem:[%s1 + $0x5e8] sm:$0xf]
          %v1693 = vld [vmem:[%s1 + $0x5ec] sm:$0xf]
          %v1694 = vld [vmem:[%s1 + $0x5f0] sm:$0xf]
          %v1695 = vld [vmem:[%s1 + $0x5f4] sm:$0xf]
          %v1696 = vld [vmem:[%s1 + $0x5f8] sm:$0xf]
          %v1697 = vld [vmem:[%s1 + $0x5fc] sm:$0xf]
          %v1698 = vld [vmem:[%s2] sm:$0xff]
          %v1723 = vunpack.c.l.b16 %v1290
          %v1724 = vunpack.c.h.b16 %v1290
          %v1725 = vunpack.c.l.b16 %v1291
          %v1726 = vunpack.c.h.b16 %v1291
          %v1727 = vunpack.c.l.b16 %v1292
          %v1728 = vunpack.c.h.b16 %v1292
          %v1729 = vunpack.c.l.b16 %v1293
          %v1730 = vunpack.c.h.b16 %v1293
          %v1731 = vunpack.c.l.b16 %v1294
          %v1732 = vunpack.c.h.b16 %v1294
          %v1733 = vunpack.c.l.b16 %v1295
          %v1734 = vunpack.c.h.b16 %v1295
          %v1735 = vunpack.c.l.b16 %v1296
          %v1736 = vunpack.c.h.b16 %v1296
          %v1737 = vunpack.c.l.b16 %v1297
          %v1738 = vunpack.c.h.b16 %v1297
          %v1739 = vunpack.c.l.b16 %v1298
          %v1740 = vunpack.c.h.b16 %v1298
          %v1741 = vunpack.c.l.b16 %v1299
          %v1742 = vunpack.c.h.b16 %v1299
          %v1743 = vunpack.c.l.b16 %v1300
          %v1744 = vunpack.c.h.b16 %v1300
          %v1745 = vunpack.c.l.b16 %v1301
          %v1746 = vunpack.c.h.b16 %v1301
          %v1747 = vunpack.c.l.b16 %v1302
          %v1748 = vunpack.c.h.b16 %v1302
          %v1749 = vunpack.c.l.b16 %v1303
          %v1750 = vunpack.c.h.b16 %v1303
          %v1751 = vunpack.c.l.b16 %v1304
          %v1752 = vunpack.c.h.b16 %v1304
          %v1753 = vunpack.c.l.b16 %v1305
          %v1754 = vunpack.c.h.b16 %v1305
          %v1755 = vunpack.c.l.b16 %v1306
          %v1756 = vunpack.c.h.b16 %v1306
          %v1757 = vunpack.c.l.b16 %v1307
          %v1758 = vunpack.c.h.b16 %v1307
          %v1759 = vunpack.c.l.b16 %v1308
          %v1760 = vunpack.c.h.b16 %v1308
          %v1761 = vunpack.c.l.b16 %v1309
          %v1762 = vunpack.c.h.b16 %v1309
          %v1763 = vunpack.c.l.b16 %v1310
          %v1764 = vunpack.c.h.b16 %v1310
          %v1765 = vunpack.c.l.b16 %v1311
          %v1766 = vunpack.c.h.b16 %v1311
          %v1767 = vunpack.c.l.b16 %v1312
          %v1768 = vunpack.c.h.b16 %v1312
          %v1769 = vunpack.c.l.b16 %v1313
          %v1770 = vunpack.c.h.b16 %v1313
          %v1771 = vpack.c.b16 %v1747, %v1723
          %v1772 = vpack.c.b16 %v1748, %v1724
          %v1773 = vpack.c.b16 %v1749, %v1725
          %v1774 = vpack.c.b16 %v1750, %v1726
          %v1775 = vpack.c.b16 %v1751, %v1727
          %v1776 = vpack.c.b16 %v1752, %v1728
          %v1777 = vpack.c.b16 %v1753, %v1729
          %v1778 = vpack.c.b16 %v1754, %v1730
          %v1779 = vpack.c.b16 %v1755, %v1731
          %v1780 = vpack.c.b16 %v1756, %v1732
          %v1781 = vpack.c.b16 %v1757, %v1733
          %v1782 = vpack.c.b16 %v1758, %v1734
          %v1783 = vpack.c.b16 %v1759, %v1735
          %v1784 = vpack.c.b16 %v1760, %v1736
          %v1785 = vpack.c.b16 %v1761, %v1737
          %v1786 = vpack.c.b16 %v1762, %v1738
          %v1787 = vpack.c.b16 %v1763, %v1739
          %v1788 = vpack.c.b16 %v1764, %v1740
          %v1789 = vpack.c.b16 %v1765, %v1741
          %v1790 = vpack.c.b16 %v1766, %v1742
          %v1791 = vpack.c.b16 %v1767, %v1743
          %v1792 = vpack.c.b16 %v1768, %v1744
          %v1793 = vpack.c.b16 %v1769, %v1745
          %v1794 = vpack.c.b16 %v1770, %v1746
          %v2203 = vunpack.c.l.b16 %v1314
          %v2204 = vunpack.c.l.b16 %v1315
          %v2205 = vunpack.c.l.b16 %v1316
          %v2206 = vunpack.c.l.b16 %v1317
          %v2207 = vunpack.c.l.b16 %v1318
          %v2208 = vunpack.c.l.b16 %v1319
          %v2209 = vunpack.c.l.b16 %v1320
          %v2210 = vunpack.c.l.b16 %v1321
          %v2211 = vunpack.c.l.b16 %v1322
          %v2212 = vunpack.c.l.b16 %v1323
          %v2213 = vunpack.c.l.b16 %v1324
          %v2214 = vunpack.c.l.b16 %v1325
          %v2215 = vunpack.c.l.b16 %v1326
          %v2216 = vunpack.c.l.b16 %v1327
          %v2217 = vunpack.c.l.b16 %v1328
          %v2218 = vunpack.c.l.b16 %v1329
          %v2219 = vunpack.c.l.b16 %v1330
          %v2220 = vunpack.c.l.b16 %v1331
          %v2221 = vunpack.c.l.b16 %v1332
          %v2222 = vunpack.c.l.b16 %v1333
          %v2223 = vunpack.c.l.b16 %v1334
          %v2224 = vunpack.c.l.b16 %v1335
          %v2225 = vunpack.c.l.b16 %v1336
          %v2226 = vunpack.c.l.b16 %v1337
          %v2227 = vunpack.c.l.b16 %v1338
          %v2228 = vunpack.c.l.b16 %v1339
          %v2229 = vunpack.c.l.b16 %v1340
          %v2230 = vunpack.c.l.b16 %v1341
          %v2231 = vunpack.c.l.b16 %v1342
          %v2232 = vunpack.c.l.b16 %v1343
          %v2233 = vunpack.c.l.b16 %v1344
          %v2234 = vunpack.c.l.b16 %v1345
          %v2235 = vunpack.c.l.b16 %v1346
          %v2236 = vunpack.c.l.b16 %v1347
          %v2237 = vunpack.c.l.b16 %v1348
          %v2238 = vunpack.c.l.b16 %v1349
          %v2239 = vunpack.c.l.b16 %v1350
          %v2240 = vunpack.c.l.b16 %v1351
          %v2241 = vunpack.c.l.b16 %v1352
          %v2242 = vunpack.c.l.b16 %v1353
          %v2243 = vunpack.c.l.b16 %v1354
          %v2244 = vunpack.c.l.b16 %v1355
          %v2245 = vunpack.c.l.b16 %v1356
          %v2246 = vunpack.c.l.b16 %v1357
          %v2247 = vunpack.c.l.b16 %v1358
          %v2248 = vunpack.c.l.b16 %v1359
          %v2249 = vunpack.c.l.b16 %v1360
          %v2250 = vunpack.c.l.b16 %v1361
          %v2251 = vunpack.c.l.b16 %v1362
          %v2252 = vunpack.c.l.b16 %v1363
          %v2253 = vunpack.c.l.b16 %v1364
          %v2254 = vunpack.c.l.b16 %v1365
          %v2255 = vunpack.c.l.b16 %v1366
          %v2256 = vunpack.c.l.b16 %v1367
          %v2257 = vunpack.c.l.b16 %v1368
          %v2258 = vunpack.c.l.b16 %v1369
          %v2259 = vunpack.c.l.b16 %v1370
          %v2260 = vunpack.c.l.b16 %v1371
          %v2261 = vunpack.c.l.b16 %v1372
          %v2262 = vunpack.c.l.b16 %v1373
          %v2263 = vunpack.c.l.b16 %v1374
          %v2264 = vunpack.c.l.b16 %v1375
          %v2265 = vunpack.c.l.b16 %v1376
          %v2266 = vunpack.c.l.b16 %v1377
          %v2267 = vunpack.c.l.b16 %v1378
          %v2268 = vunpack.c.l.b16 %v1379
          %v2269 = vunpack.c.l.b16 %v1380
          %v2270 = vunpack.c.l.b16 %v1381
          %v2271 = vunpack.c.l.b16 %v1382
          %v2272 = vunpack.c.l.b16 %v1383
          %v2273 = vunpack.c.l.b16 %v1384
          %v2274 = vunpack.c.l.b16 %v1385
          %v2275 = vunpack.c.l.b16 %v1386
          %v2276 = vunpack.c.l.b16 %v1387
          %v2277 = vunpack.c.l.b16 %v1388
          %v2278 = vunpack.c.l.b16 %v1389
          %v2279 = vunpack.c.l.b16 %v1390
          %v2280 = vunpack.c.l.b16 %v1391
          %v2281 = vunpack.c.l.b16 %v1392
          %v2282 = vunpack.c.l.b16 %v1393
          %v2283 = vunpack.c.l.b16 %v1394
          %v2284 = vunpack.c.l.b16 %v1395
          %v2285 = vunpack.c.l.b16 %v1396
          %v2286 = vunpack.c.l.b16 %v1397
          %v2287 = vunpack.c.l.b16 %v1398
          %v2288 = vunpack.c.l.b16 %v1399
          %v2289 = vunpack.c.l.b16 %v1400
          %v2290 = vunpack.c.l.b16 %v1401
          %v2291 = vunpack.c.l.b16 %v1402
          %v2292 = vunpack.c.l.b16 %v1403
          %v2293 = vunpack.c.l.b16 %v1404
          %v2294 = vunpack.c.l.b16 %v1405
          %v2295 = vunpack.c.l.b16 %v1406
          %v2296 = vunpack.c.l.b16 %v1407
          %v2297 = vunpack.c.l.b16 %v1408
          %v2298 = vunpack.c.l.b16 %v1409
          %v2299 = vunpack.c.l.b16 %v1410
          %v2300 = vunpack.c.l.b16 %v1411
          %v2301 = vunpack.c.l.b16 %v1412
          %v2302 = vunpack.c.l.b16 %v1413
          %v2303 = vunpack.c.l.b16 %v1414
          %v2304 = vunpack.c.l.b16 %v1415
          %v2305 = vunpack.c.l.b16 %v1416
          %v2306 = vunpack.c.l.b16 %v1417
          %v2307 = vunpack.c.l.b16 %v1418
          %v2308 = vunpack.c.l.b16 %v1419
          %v2309 = vunpack.c.l.b16 %v1420
          %v2310 = vunpack.c.l.b16 %v1421
          %v2311 = vunpack.c.l.b16 %v1422
          %v2312 = vunpack.c.l.b16 %v1423
          %v2313 = vunpack.c.l.b16 %v1424
          %v2314 = vunpack.c.l.b16 %v1425
          %v2315 = vunpack.c.l.b16 %v1426
          %v2316 = vunpack.c.l.b16 %v1427
          %v2317 = vunpack.c.l.b16 %v1428
          %v2318 = vunpack.c.l.b16 %v1429
          %v2319 = vunpack.c.l.b16 %v1430
          %v2320 = vunpack.c.l.b16 %v1431
          %v2321 = vunpack.c.l.b16 %v1432
          %v2322 = vunpack.c.l.b16 %v1433
          %v2323 = vunpack.c.l.b16 %v1434
          %v2324 = vunpack.c.l.b16 %v1435
          %v2325 = vunpack.c.l.b16 %v1436
          %v2326 = vunpack.c.l.b16 %v1437
          %v2327 = vunpack.c.l.b16 %v1438
          %v2328 = vunpack.c.l.b16 %v1439
          %v2329 = vunpack.c.l.b16 %v1440
          %v2330 = vunpack.c.l.b16 %v1441
          %v2331 = vunpack.c.l.b16 %v1442
          %v2332 = vunpack.c.l.b16 %v1443
          %v2333 = vunpack.c.l.b16 %v1444
          %v2334 = vunpack.c.l.b16 %v1445
          %v2335 = vunpack.c.l.b16 %v1446
          %v2336 = vunpack.c.l.b16 %v1447
          %v2337 = vunpack.c.l.b16 %v1448
          %v2338 = vunpack.c.l.b16 %v1449
          %v2339 = vunpack.c.l.b16 %v1450
          %v2340 = vunpack.c.l.b16 %v1451
          %v2341 = vunpack.c.l.b16 %v1452
          %v2342 = vunpack.c.l.b16 %v1453
          %v2343 = vunpack.c.l.b16 %v1454
          %v2344 = vunpack.c.l.b16 %v1455
          %v2345 = vunpack.c.l.b16 %v1456
          %v2346 = vunpack.c.l.b16 %v1457
          %v2347 = vunpack.c.l.b16 %v1458
          %v2348 = vunpack.c.l.b16 %v1459
          %v2349 = vunpack.c.l.b16 %v1460
          %v2350 = vunpack.c.l.b16 %v1461
          %v2351 = vunpack.c.l.b16 %v1462
          %v2352 = vunpack.c.l.b16 %v1463
          %v2353 = vunpack.c.l.b16 %v1464
          %v2354 = vunpack.c.l.b16 %v1465
          %v2355 = vunpack.c.l.b16 %v1466
          %v2356 = vunpack.c.l.b16 %v1467
          %v2357 = vunpack.c.l.b16 %v1468
          %v2358 = vunpack.c.l.b16 %v1469
          %v2359 = vunpack.c.l.b16 %v1470
          %v2360 = vunpack.c.l.b16 %v1471
          %v2361 = vunpack.c.l.b16 %v1472
          %v2362 = vunpack.c.l.b16 %v1473
          %v2363 = vunpack.c.l.b16 %v1474
          %v2364 = vunpack.c.l.b16 %v1475
          %v2365 = vunpack.c.l.b16 %v1476
          %v2366 = vunpack.c.l.b16 %v1477
          %v2367 = vunpack.c.l.b16 %v1478
          %v2368 = vunpack.c.l.b16 %v1479
          %v2369 = vunpack.c.l.b16 %v1480
          %v2370 = vunpack.c.l.b16 %v1481
          %v2371 = vunpack.c.l.b16 %v1482
          %v2372 = vunpack.c.l.b16 %v1483
          %v2373 = vunpack.c.l.b16 %v1484
          %v2374 = vunpack.c.l.b16 %v1485
          %v2375 = vunpack.c.l.b16 %v1486
          %v2376 = vunpack.c.l.b16 %v1487
          %v2377 = vunpack.c.l.b16 %v1488
          %v2378 = vunpack.c.l.b16 %v1489
          %v2379 = vunpack.c.l.b16 %v1490
          %v2380 = vunpack.c.l.b16 %v1491
          %v2381 = vunpack.c.l.b16 %v1492
          %v2382 = vunpack.c.l.b16 %v1493
          %v2383 = vunpack.c.l.b16 %v1494
          %v2384 = vunpack.c.l.b16 %v1495
          %v2385 = vunpack.c.l.b16 %v1496
          %v2386 = vunpack.c.l.b16 %v1497
          %v2387 = vunpack.c.l.b16 %v1498
          %v2388 = vunpack.c.l.b16 %v1499
          %v2389 = vunpack.c.l.b16 %v1500
          %v2390 = vunpack.c.l.b16 %v1501
          %v2391 = vunpack.c.l.b16 %v1502
          %v2392 = vunpack.c.l.b16 %v1503
          %v2393 = vunpack.c.l.b16 %v1504
          %v2394 = vunpack.c.l.b16 %v1505
          %v2395 = vunpack.c.l.b16 %v1506
          %v2396 = vunpack.c.l.b16 %v1507
          %v2397 = vunpack.c.l.b16 %v1508
          %v2398 = vunpack.c.l.b16 %v1509
          %v2399 = vunpack.c.l.b16 %v1510
          %v2400 = vunpack.c.l.b16 %v1511
          %v2401 = vunpack.c.l.b16 %v1512
          %v2402 = vunpack.c.l.b16 %v1513
          %v2403 = vunpack.c.l.b16 %v1514
          %v2404 = vunpack.c.l.b16 %v1515
          %v2405 = vunpack.c.l.b16 %v1516
          %v2406 = vunpack.c.l.b16 %v1517
          %v2407 = vunpack.c.l.b16 %v1518
          %v2408 = vunpack.c.l.b16 %v1519
          %v2409 = vunpack.c.l.b16 %v1520
          %v2410 = vunpack.c.l.b16 %v1521
          %v2411 = vunpack.c.l.b16 %v1522
          %v2412 = vunpack.c.l.b16 %v1523
          %v2413 = vunpack.c.l.b16 %v1524
          %v2414 = vunpack.c.l.b16 %v1525
          %v2415 = vunpack.c.l.b16 %v1526
          %v2416 = vunpack.c.l.b16 %v1527
          %v2417 = vunpack.c.l.b16 %v1528
          %v2418 = vunpack.c.l.b16 %v1529
          %v2419 = vunpack.c.l.b16 %v1530
          %v2420 = vunpack.c.l.b16 %v1531
          %v2421 = vunpack.c.l.b16 %v1532
          %v2422 = vunpack.c.l.b16 %v1533
          %v2423 = vunpack.c.l.b16 %v1534
          %v2424 = vunpack.c.l.b16 %v1535
          %v2425 = vunpack.c.l.b16 %v1536
          %v2426 = vunpack.c.l.b16 %v1537
          %v2427 = vunpack.c.l.b16 %v1538
          %v2428 = vunpack.c.l.b16 %v1539
          %v2429 = vunpack.c.l.b16 %v1540
          %v2430 = vunpack.c.l.b16 %v1541
          %v2431 = vunpack.c.l.b16 %v1542
          %v2432 = vunpack.c.l.b16 %v1543
          %v2433 = vunpack.c.l.b16 %v1544
          %v2434 = vunpack.c.l.b16 %v1545
          %v2435 = vunpack.c.l.b16 %v1546
          %v2436 = vunpack.c.l.b16 %v1547
          %v2437 = vunpack.c.l.b16 %v1548
          %v2438 = vunpack.c.l.b16 %v1549
          %v2439 = vunpack.c.l.b16 %v1550
          %v2440 = vunpack.c.l.b16 %v1551
          %v2441 = vunpack.c.l.b16 %v1552
          %v2442 = vunpack.c.l.b16 %v1553
          %v2443 = vunpack.c.l.b16 %v1554
          %v2444 = vunpack.c.l.b16 %v1555
          %v2445 = vunpack.c.l.b16 %v1556
          %v2446 = vunpack.c.l.b16 %v1557
          %v2447 = vunpack.c.l.b16 %v1558
          %v2448 = vunpack.c.l.b16 %v1559
          %v2449 = vunpack.c.l.b16 %v1560
          %v2450 = vunpack.c.l.b16 %v1561
          %v2451 = vunpack.c.l.b16 %v1562
          %v2452 = vunpack.c.l.b16 %v1563
          %v2453 = vunpack.c.l.b16 %v1564
          %v2454 = vunpack.c.l.b16 %v1565
          %v2455 = vunpack.c.l.b16 %v1566
          %v2456 = vunpack.c.l.b16 %v1567
          %v2457 = vunpack.c.l.b16 %v1568
          %v2458 = vunpack.c.l.b16 %v1569
          %v2459 = vunpack.c.l.b16 %v1570
          %v2460 = vunpack.c.l.b16 %v1571
          %v2461 = vunpack.c.l.b16 %v1572
          %v2462 = vunpack.c.l.b16 %v1573
          %v2463 = vunpack.c.l.b16 %v1574
          %v2464 = vunpack.c.l.b16 %v1575
          %v2465 = vunpack.c.l.b16 %v1576
          %v2466 = vunpack.c.l.b16 %v1577
          %v2467 = vunpack.c.l.b16 %v1578
          %v2468 = vunpack.c.l.b16 %v1579
          %v2469 = vunpack.c.l.b16 %v1580
          %v2470 = vunpack.c.l.b16 %v1581
          %v2471 = vunpack.c.l.b16 %v1582
          %v2472 = vunpack.c.l.b16 %v1583
          %v2473 = vunpack.c.l.b16 %v1584
          %v2474 = vunpack.c.l.b16 %v1585
          %v2475 = vunpack.c.l.b16 %v1586
          %v2476 = vunpack.c.l.b16 %v1587
          %v2477 = vunpack.c.l.b16 %v1588
          %v2478 = vunpack.c.l.b16 %v1589
          %v2479 = vunpack.c.l.b16 %v1590
          %v2480 = vunpack.c.l.b16 %v1591
          %v2481 = vunpack.c.l.b16 %v1592
          %v2482 = vunpack.c.l.b16 %v1593
          %v2483 = vunpack.c.l.b16 %v1594
          %v2484 = vunpack.c.l.b16 %v1595
          %v2485 = vunpack.c.l.b16 %v1596
          %v2486 = vunpack.c.l.b16 %v1597
          %v2487 = vunpack.c.l.b16 %v1598
          %v2488 = vunpack.c.l.b16 %v1599
          %v2489 = vunpack.c.l.b16 %v1600
          %v2490 = vunpack.c.l.b16 %v1601
          %v2491 = vunpack.c.l.b16 %v1602
          %v2492 = vunpack.c.l.b16 %v1603
          %v2493 = vunpack.c.l.b16 %v1604
          %v2494 = vunpack.c.l.b16 %v1605
          %v2495 = vunpack.c.l.b16 %v1606
          %v2496 = vunpack.c.l.b16 %v1607
          %v2497 = vunpack.c.l.b16 %v1608
          %v2498 = vunpack.c.l.b16 %v1609
          %v2499 = vunpack.c.l.b16 %v1610
          %v2500 = vunpack.c.l.b16 %v1611
          %v2501 = vunpack.c.l.b16 %v1612
          %v2502 = vunpack.c.l.b16 %v1613
          %v2503 = vunpack.c.l.b16 %v1614
          %v2504 = vunpack.c.l.b16 %v1615
          %v2505 = vunpack.c.l.b16 %v1616
          %v2506 = vunpack.c.l.b16 %v1617
          %v2507 = vunpack.c.l.b16 %v1618
          %v2508 = vunpack.c.l.b16 %v1619
          %v2509 = vunpack.c.l.b16 %v1620
          %v2510 = vunpack.c.l.b16 %v1621
          %v2511 = vunpack.c.l.b16 %v1622
          %v2512 = vunpack.c.l.b16 %v1623
          %v2513 = vunpack.c.l.b16 %v1624
          %v2514 = vunpack.c.l.b16 %v1625
          %v2515 = vunpack.c.l.b16 %v1626
          %v2516 = vunpack.c.l.b16 %v1627
          %v2517 = vunpack.c.l.b16 %v1628
          %v2518 = vunpack.c.l.b16 %v1629
          %v2519 = vunpack.c.l.b16 %v1630
          %v2520 = vunpack.c.l.b16 %v1631
          %v2521 = vunpack.c.l.b16 %v1632
          %v2522 = vunpack.c.l.b16 %v1633
          %v2523 = vunpack.c.l.b16 %v1634
          %v2524 = vunpack.c.l.b16 %v1635
          %v2525 = vunpack.c.l.b16 %v1636
          %v2526 = vunpack.c.l.b16 %v1637
          %v2527 = vunpack.c.l.b16 %v1638
          %v2528 = vunpack.c.l.b16 %v1639
          %v2529 = vunpack.c.l.b16 %v1640
          %v2530 = vunpack.c.l.b16 %v1641
          %v2531 = vunpack.c.l.b16 %v1642
          %v2532 = vunpack.c.l.b16 %v1643
          %v2533 = vunpack.c.l.b16 %v1644
          %v2534 = vunpack.c.l.b16 %v1645
          %v2535 = vunpack.c.l.b16 %v1646
          %v2536 = vunpack.c.l.b16 %v1647
          %v2537 = vunpack.c.l.b16 %v1648
          %v2538 = vunpack.c.l.b16 %v1649
          %v2539 = vunpack.c.l.b16 %v1650
          %v2540 = vunpack.c.l.b16 %v1651
          %v2541 = vunpack.c.l.b16 %v1652
          %v2542 = vunpack.c.l.b16 %v1653
          %v2543 = vunpack.c.l.b16 %v1654
          %v2544 = vunpack.c.l.b16 %v1655
          %v2545 = vunpack.c.l.b16 %v1656
          %v2546 = vunpack.c.l.b16 %v1657
          %v2547 = vunpack.c.l.b16 %v1658
          %v2548 = vunpack.c.l.b16 %v1659
          %v2549 = vunpack.c.l.b16 %v1660
          %v2550 = vunpack.c.l.b16 %v1661
          %v2551 = vunpack.c.l.b16 %v1662
          %v2552 = vunpack.c.l.b16 %v1663
          %v2553 = vunpack.c.l.b16 %v1664
          %v2554 = vunpack.c.l.b16 %v1665
          %v2555 = vunpack.c.l.b16 %v1666
          %v2556 = vunpack.c.l.b16 %v1667
          %v2557 = vunpack.c.l.b16 %v1668
          %v2558 = vunpack.c.l.b16 %v1669
          %v2559 = vunpack.c.l.b16 %v1670
          %v2560 = vunpack.c.l.b16 %v1671
          %v2561 = vunpack.c.l.b16 %v1672
          %v2562 = vunpack.c.l.b16 %v1673
          %v2563 = vunpack.c.l.b16 %v1674
          %v2564 = vunpack.c.l.b16 %v1675
          %v2565 = vunpack.c.l.b16 %v1676
          %v2566 = vunpack.c.l.b16 %v1677
          %v2567 = vunpack.c.l.b16 %v1678
          %v2568 = vunpack.c.l.b16 %v1679
          %v2569 = vunpack.c.l.b16 %v1680
          %v2570 = vunpack.c.l.b16 %v1681
          %v2571 = vunpack.c.l.b16 %v1682
          %v2572 = vunpack.c.l.b16 %v1683
          %v2573 = vunpack.c.l.b16 %v1684
          %v2574 = vunpack.c.l.b16 %v1685
          %v2575 = vunpack.c.l.b16 %v1686
          %v2576 = vunpack.c.l.b16 %v1687
          %v2577 = vunpack.c.l.b16 %v1688
          %v2578 = vunpack.c.l.b16 %v1689
          %v2579 = vunpack.c.l.b16 %v1690
          %v2580 = vunpack.c.l.b16 %v1691
          %v2581 = vunpack.c.l.b16 %v1692
          %v2582 = vunpack.c.l.b16 %v1693
          %v2583 = vunpack.c.l.b16 %v1694
          %v2584 = vunpack.c.l.b16 %v1695
          %v2585 = vunpack.c.l.b16 %v1696
          %v2586 = vunpack.c.l.b16 %v1697
          %v2587 = vpack.c.b16 %v2204, %v2203
          %v2588 = vpack.c.b16 %v2206, %v2205
          %v2589 = vpack.c.b16 %v2208, %v2207
          %v2590 = vpack.c.b16 %v2210, %v2209
          %v2591 = vpack.c.b16 %v2212, %v2211
          %v2592 = vpack.c.b16 %v2214, %v2213
          %v2593 = vpack.c.b16 %v2216, %v2215
          %v2594 = vpack.c.b16 %v2218, %v2217
          %v2595 = vpack.c.b16 %v2220, %v2219
          %v2596 = vpack.c.b16 %v2222, %v2221
          %v2597 = vpack.c.b16 %v2224, %v2223
          %v2598 = vpack.c.b16 %v2226, %v2225
          %v2599 = vpack.c.b16 %v2228, %v2227
          %v2600 = vpack.c.b16 %v2230, %v2229
          %v2601 = vpack.c.b16 %v2232, %v2231
          %v2602 = vpack.c.b16 %v2234, %v2233
          %v2603 = vpack.c.b16 %v2236, %v2235
          %v2604 = vpack.c.b16 %v2238, %v2237
          %v2605 = vpack.c.b16 %v2240, %v2239
          %v2606 = vpack.c.b16 %v2242, %v2241
          %v2607 = vpack.c.b16 %v2244, %v2243
          %v2608 = vpack.c.b16 %v2246, %v2245
          %v2609 = vpack.c.b16 %v2248, %v2247
          %v2610 = vpack.c.b16 %v2250, %v2249
          %v2611 = vpack.c.b16 %v2252, %v2251
          %v2612 = vpack.c.b16 %v2254, %v2253
          %v2613 = vpack.c.b16 %v2256, %v2255
          %v2614 = vpack.c.b16 %v2258, %v2257
          %v2615 = vpack.c.b16 %v2260, %v2259
          %v2616 = vpack.c.b16 %v2262, %v2261
          %v2617 = vpack.c.b16 %v2264, %v2263
          %v2618 = vpack.c.b16 %v2266, %v2265
          %v2619 = vpack.c.b16 %v2268, %v2267
          %v2620 = vpack.c.b16 %v2270, %v2269
          %v2621 = vpack.c.b16 %v2272, %v2271
          %v2622 = vpack.c.b16 %v2274, %v2273
          %v2623 = vpack.c.b16 %v2276, %v2275
          %v2624 = vpack.c.b16 %v2278, %v2277
          %v2625 = vpack.c.b16 %v2280, %v2279
          %v2626 = vpack.c.b16 %v2282, %v2281
          %v2627 = vpack.c.b16 %v2284, %v2283
          %v2628 = vpack.c.b16 %v2286, %v2285
          %v2629 = vpack.c.b16 %v2288, %v2287
          %v2630 = vpack.c.b16 %v2290, %v2289
          %v2631 = vpack.c.b16 %v2292, %v2291
          %v2632 = vpack.c.b16 %v2294, %v2293
          %v2633 = vpack.c.b16 %v2296, %v2295
          %v2634 = vpack.c.b16 %v2298, %v2297
          %v2635 = vpack.c.b16 %v2300, %v2299
          %v2636 = vpack.c.b16 %v2302, %v2301
          %v2637 = vpack.c.b16 %v2304, %v2303
          %v2638 = vpack.c.b16 %v2306, %v2305
          %v2639 = vpack.c.b16 %v2308, %v2307
          %v2640 = vpack.c.b16 %v2310, %v2309
          %v2641 = vpack.c.b16 %v2312, %v2311
          %v2642 = vpack.c.b16 %v2314, %v2313
          %v2643 = vpack.c.b16 %v2316, %v2315
          %v2644 = vpack.c.b16 %v2318, %v2317
          %v2645 = vpack.c.b16 %v2320, %v2319
          %v2646 = vpack.c.b16 %v2322, %v2321
          %v2647 = vpack.c.b16 %v2324, %v2323
          %v2648 = vpack.c.b16 %v2326, %v2325
          %v2649 = vpack.c.b16 %v2328, %v2327
          %v2650 = vpack.c.b16 %v2330, %v2329
          %v2651 = vpack.c.b16 %v2332, %v2331
          %v2652 = vpack.c.b16 %v2334, %v2333
          %v2653 = vpack.c.b16 %v2336, %v2335
          %v2654 = vpack.c.b16 %v2338, %v2337
          %v2655 = vpack.c.b16 %v2340, %v2339
          %v2656 = vpack.c.b16 %v2342, %v2341
          %v2657 = vpack.c.b16 %v2344, %v2343
          %v2658 = vpack.c.b16 %v2346, %v2345
          %v2659 = vpack.c.b16 %v2348, %v2347
          %v2660 = vpack.c.b16 %v2350, %v2349
          %v2661 = vpack.c.b16 %v2352, %v2351
          %v2662 = vpack.c.b16 %v2354, %v2353
          %v2663 = vpack.c.b16 %v2356, %v2355
          %v2664 = vpack.c.b16 %v2358, %v2357
          %v2665 = vpack.c.b16 %v2360, %v2359
          %v2666 = vpack.c.b16 %v2362, %v2361
          %v2667 = vpack.c.b16 %v2364, %v2363
          %v2668 = vpack.c.b16 %v2366, %v2365
          %v2669 = vpack.c.b16 %v2368, %v2367
          %v2670 = vpack.c.b16 %v2370, %v2369
          %v2671 = vpack.c.b16 %v2372, %v2371
          %v2672 = vpack.c.b16 %v2374, %v2373
          %v2673 = vpack.c.b16 %v2376, %v2375
          %v2674 = vpack.c.b16 %v2378, %v2377
          %v2675 = vpack.c.b16 %v2380, %v2379
          %v2676 = vpack.c.b16 %v2382, %v2381
          %v2677 = vpack.c.b16 %v2384, %v2383
          %v2678 = vpack.c.b16 %v2386, %v2385
          %v2679 = vpack.c.b16 %v2388, %v2387
          %v2680 = vpack.c.b16 %v2390, %v2389
          %v2681 = vpack.c.b16 %v2392, %v2391
          %v2682 = vpack.c.b16 %v2394, %v2393
          %v2683 = vpack.c.b16 %v2396, %v2395
          %v2684 = vpack.c.b16 %v2398, %v2397
          %v2685 = vpack.c.b16 %v2400, %v2399
          %v2686 = vpack.c.b16 %v2402, %v2401
          %v2687 = vpack.c.b16 %v2404, %v2403
          %v2688 = vpack.c.b16 %v2406, %v2405
          %v2689 = vpack.c.b16 %v2408, %v2407
          %v2690 = vpack.c.b16 %v2410, %v2409
          %v2691 = vpack.c.b16 %v2412, %v2411
          %v2692 = vpack.c.b16 %v2414, %v2413
          %v2693 = vpack.c.b16 %v2416, %v2415
          %v2694 = vpack.c.b16 %v2418, %v2417
          %v2695 = vpack.c.b16 %v2420, %v2419
          %v2696 = vpack.c.b16 %v2422, %v2421
          %v2697 = vpack.c.b16 %v2424, %v2423
          %v2698 = vpack.c.b16 %v2426, %v2425
          %v2699 = vpack.c.b16 %v2428, %v2427
          %v2700 = vpack.c.b16 %v2430, %v2429
          %v2701 = vpack.c.b16 %v2432, %v2431
          %v2702 = vpack.c.b16 %v2434, %v2433
          %v2703 = vpack.c.b16 %v2436, %v2435
          %v2704 = vpack.c.b16 %v2438, %v2437
          %v2705 = vpack.c.b16 %v2440, %v2439
          %v2706 = vpack.c.b16 %v2442, %v2441
          %v2707 = vpack.c.b16 %v2444, %v2443
          %v2708 = vpack.c.b16 %v2446, %v2445
          %v2709 = vpack.c.b16 %v2448, %v2447
          %v2710 = vpack.c.b16 %v2450, %v2449
          %v2711 = vpack.c.b16 %v2452, %v2451
          %v2712 = vpack.c.b16 %v2454, %v2453
          %v2713 = vpack.c.b16 %v2456, %v2455
          %v2714 = vpack.c.b16 %v2458, %v2457
          %v2715 = vpack.c.b16 %v2460, %v2459
          %v2716 = vpack.c.b16 %v2462, %v2461
          %v2717 = vpack.c.b16 %v2464, %v2463
          %v2718 = vpack.c.b16 %v2466, %v2465
          %v2719 = vpack.c.b16 %v2468, %v2467
          %v2720 = vpack.c.b16 %v2470, %v2469
          %v2721 = vpack.c.b16 %v2472, %v2471
          %v2722 = vpack.c.b16 %v2474, %v2473
          %v2723 = vpack.c.b16 %v2476, %v2475
          %v2724 = vpack.c.b16 %v2478, %v2477
          %v2725 = vpack.c.b16 %v2480, %v2479
          %v2726 = vpack.c.b16 %v2482, %v2481
          %v2727 = vpack.c.b16 %v2484, %v2483
          %v2728 = vpack.c.b16 %v2486, %v2485
          %v2729 = vpack.c.b16 %v2488, %v2487
          %v2730 = vpack.c.b16 %v2490, %v2489
          %v2731 = vpack.c.b16 %v2492, %v2491
          %v2732 = vpack.c.b16 %v2494, %v2493
          %v2733 = vpack.c.b16 %v2496, %v2495
          %v2734 = vpack.c.b16 %v2498, %v2497
          %v2735 = vpack.c.b16 %v2500, %v2499
          %v2736 = vpack.c.b16 %v2502, %v2501
          %v2737 = vpack.c.b16 %v2504, %v2503
          %v2738 = vpack.c.b16 %v2506, %v2505
          %v2739 = vpack.c.b16 %v2508, %v2507
          %v2740 = vpack.c.b16 %v2510, %v2509
          %v2741 = vpack.c.b16 %v2512, %v2511
          %v2742 = vpack.c.b16 %v2514, %v2513
          %v2743 = vpack.c.b16 %v2516, %v2515
          %v2744 = vpack.c.b16 %v2518, %v2517
          %v2745 = vpack.c.b16 %v2520, %v2519
          %v2746 = vpack.c.b16 %v2522, %v2521
          %v2747 = vpack.c.b16 %v2524, %v2523
          %v2748 = vpack.c.b16 %v2526, %v2525
          %v2749 = vpack.c.b16 %v2528, %v2527
          %v2750 = vpack.c.b16 %v2530, %v2529
          %v2751 = vpack.c.b16 %v2532, %v2531
          %v2752 = vpack.c.b16 %v2534, %v2533
          %v2753 = vpack.c.b16 %v2536, %v2535
          %v2754 = vpack.c.b16 %v2538, %v2537
          %v2755 = vpack.c.b16 %v2540, %v2539
          %v2756 = vpack.c.b16 %v2542, %v2541
          %v2757 = vpack.c.b16 %v2544, %v2543
          %v2758 = vpack.c.b16 %v2546, %v2545
          %v2759 = vpack.c.b16 %v2548, %v2547
          %v2760 = vpack.c.b16 %v2550, %v2549
          %v2761 = vpack.c.b16 %v2552, %v2551
          %v2762 = vpack.c.b16 %v2554, %v2553
          %v2763 = vpack.c.b16 %v2556, %v2555
          %v2764 = vpack.c.b16 %v2558, %v2557
          %v2765 = vpack.c.b16 %v2560, %v2559
          %v2766 = vpack.c.b16 %v2562, %v2561
          %v2767 = vpack.c.b16 %v2564, %v2563
          %v2768 = vpack.c.b16 %v2566, %v2565
          %v2769 = vpack.c.b16 %v2568, %v2567
          %v2770 = vpack.c.b16 %v2570, %v2569
          %v2771 = vpack.c.b16 %v2572, %v2571
          %v2772 = vpack.c.b16 %v2574, %v2573
          %v2773 = vpack.c.b16 %v2576, %v2575
          %v2774 = vpack.c.b16 %v2578, %v2577
          %v2775 = vpack.c.b16 %v2580, %v2579
          %v2776 = vpack.c.b16 %v2582, %v2581
          %v2777 = vpack.c.b16 %v2584, %v2583
          %v2778 = vpack.c.b16 %v2586, %v2585
          %2971 = vmatprep.subr.bf16.mxu0 0
          %2972 = vmatpush1.bf16.msra.mxu0 %v2587
          %2973 = vmatprep.subr.bf16.mxu0 0
          %2974 = vmatpush1.bf16.msra.mxu0 %v2588
          %2975 = vmatprep.subr.bf16.mxu0 0
          %2976 = vmatpush1.bf16.msra.mxu0 %v2589
          %2977 = vmatprep.subr.bf16.mxu0 0
          %2978 = vmatpush1.bf16.msra.mxu0 %v2590
          %2979 = vmatprep.subr.bf16.mxu0 0
          %2980 = vmatpush1.bf16.msra.mxu0 %v2591
          %2981 = vmatprep.subr.bf16.mxu0 0
          %2982 = vmatpush1.bf16.msra.mxu0 %v2592
          %2983 = vmatprep.subr.bf16.mxu0 0
          %2984 = vmatpush1.bf16.msra.mxu0 %v2593
          %2985 = vmatprep.subr.bf16.mxu0 0
          %2986 = vmatpush1.bf16.msra.mxu0 %v2594
          %2987 = vmatprep.subr.bf16.mxu0 0
          %2988 = vmatpush1.bf16.msra.mxu0 %v2595
          %2989 = vmatprep.subr.bf16.mxu0 0
          %2990 = vmatpush1.bf16.msra.mxu0 %v2596
          %2991 = vmatprep.subr.bf16.mxu0 0
          %2992 = vmatpush1.bf16.msra.mxu0 %v2597
          %2993 = vmatprep.subr.bf16.mxu0 0
          %2994 = vmatpush1.bf16.msra.mxu0 %v2598
          %2995 = vmatprep.subr.bf16.mxu0 0
          %2996 = vmatpush1.bf16.msra.mxu0 %v2599
          %2997 = vmatprep.subr.bf16.mxu0 0
          %2998 = vmatpush1.bf16.msra.mxu0 %v2600
          %2999 = vmatprep.subr.bf16.mxu0 0
          %3000 = vmatpush1.bf16.msra.mxu0 %v2601
          %3001 = vmatprep.subr.bf16.mxu0 0
          %3002 = vmatpush1.bf16.msra.mxu0 %v2602
          %3003 = vmatprep.mubr.bf16.mxu0 %v1772
          %3004 = vmatmul.mubr.bf16.gmra.mrb[0].mxu0 %v1771
          %v3005 = vpop.f32.mrb[0].mxu0
          %v3006 = vadd.f32 %v1698, %v3005
          %v3007 = vpop.f32.mrb[0].mxu0
          %v3008 = vpop.f32.mrb[0].mxu0
          %v3009 = vadd.f32 %v1698, %v3008
          %v3010 = vpop.f32.mrb[0].mxu0
          %3011 = vdwg.mxu0
          %3012 = vmatprep.subr.bf16.mxu0 0
          %3013 = vmatpush1.bf16.msra.mxu0 %v2603
          %3014 = vmatprep.subr.bf16.mxu0 0
          %3015 = vmatpush1.bf16.msra.mxu0 %v2604
          %3016 = vmatprep.subr.bf16.mxu0 0
          %3017 = vmatpush1.bf16.msra.mxu0 %v2605
          %3018 = vmatprep.subr.bf16.mxu0 0
          %3019 = vmatpush1.bf16.msra.mxu0 %v2606
          %3020 = vmatprep.subr.bf16.mxu0 0
          %3021 = vmatpush1.bf16.msra.mxu0 %v2607
          %3022 = vmatprep.subr.bf16.mxu0 0
          %3023 = vmatpush1.bf16.msra.mxu0 %v2608
          %3024 = vmatprep.subr.bf16.mxu0 0
          %3025 = vmatpush1.bf16.msra.mxu0 %v2609
          %3026 = vmatprep.subr.bf16.mxu0 0
          %3027 = vmatpush1.bf16.msra.mxu0 %v2610
          %3028 = vmatprep.subr.bf16.mxu0 0
          %3029 = vmatpush1.bf16.msra.mxu0 %v2611
          %3030 = vmatprep.subr.bf16.mxu0 0
          %3031 = vmatpush1.bf16.msra.mxu0 %v2612
          %3032 = vmatprep.subr.bf16.mxu0 0
          %3033 = vmatpush1.bf16.msra.mxu0 %v2613
          %3034 = vmatprep.subr.bf16.mxu0 0
          %3035 = vmatpush1.bf16.msra.mxu0 %v2614
          %3036 = vmatprep.subr.bf16.mxu0 0
          %3037 = vmatpush1.bf16.msra.mxu0 %v2615
          %3038 = vmatprep.subr.bf16.mxu0 0
          %3039 = vmatpush1.bf16.msra.mxu0 %v2616
          %3040 = vmatprep.subr.bf16.mxu0 0
          %3041 = vmatpush1.bf16.msra.mxu0 %v2617
          %3042 = vmatprep.subr.bf16.mxu0 0
          %3043 = vmatpush1.bf16.msra.mxu0 %v2618
          %3044 = vmatprep.mubr.bf16.mxu0 %v1774
          %3045 = vmatmul.mubr.bf16.gmra.mrb[0].mxu0 %v1773
          %v3046 = vpop.f32.mrb[0].mxu0
          %v3047 = vadd.f32 %v3006, %v3046
          %v3048 = vpop.f32.mrb[0].mxu0
          %v3049 = vpop.f32.mrb[0].mxu0
          %v3050 = vadd.f32 %v3009, %v3049
          %v3051 = vpop.f32.mrb[0].mxu0
          %3052 = vdwg.mxu0
          %3053 = vmatprep.subr.bf16.mxu0 0
          %3054 = vmatpush1.bf16.msra.mxu0 %v2619
          %3055 = vmatprep.subr.bf16.mxu0 0
          %3056 = vmatpush1.bf16.msra.mxu0 %v2620
          %3057 = vmatprep.subr.bf16.mxu0 0
          %3058 = vmatpush1.bf16.msra.mxu0 %v2621
          %3059 = vmatprep.subr.bf16.mxu0 0
          %3060 = vmatpush1.bf16.msra.mxu0 %v2622
          %3061 = vmatprep.subr.bf16.mxu0 0
          %3062 = vmatpush1.bf16.msra.mxu0 %v2623
          %3063 = vmatprep.subr.bf16.mxu0 0
          %3064 = vmatpush1.bf16.msra.mxu0 %v2624
          %3065 = vmatprep.subr.bf16.mxu0 0
          %3066 = vmatpush1.bf16.msra.mxu0 %v2625
          %3067 = vmatprep.subr.bf16.mxu0 0
          %3068 = vmatpush1.bf16.msra.mxu0 %v2626
          %3069 = vmatprep.subr.bf16.mxu0 0
          %3070 = vmatpush1.bf16.msra.mxu0 %v2627
          %3071 = vmatprep.subr.bf16.mxu0 0
          %3072 = vmatpush1.bf16.msra.mxu0 %v2628
          %3073 = vmatprep.subr.bf16.mxu0 0
          %3074 = vmatpush1.bf16.msra.mxu0 %v2629
          %3075 = vmatprep.subr.bf16.mxu0 0
          %3076 = vmatpush1.bf16.msra.mxu0 %v2630
          %3077 = vmatprep.subr.bf16.mxu0 0
          %3078 = vmatpush1.bf16.msra.mxu0 %v2631
          %3079 = vmatprep.subr.bf16.mxu0 0
          %3080 = vmatpush1.bf16.msra.mxu0 %v2632
          %3081 = vmatprep.subr.bf16.mxu0 0
          %3082 = vmatpush1.bf16.msra.mxu0 %v2633
          %3083 = vmatprep.subr.bf16.mxu0 0
          %3084 = vmatpush1.bf16.msra.mxu0 %v2634
          %3085 = vmatprep.mubr.bf16.mxu0 %v1776
          %3086 = vmatmul.mubr.bf16.gmra.mrb[0].mxu0 %v1775
          %v3087 = vpop.f32.mrb[0].mxu0
          %v3088 = vadd.f32 %v3047, %v3087
          %v3089 = vpop.f32.mrb[0].mxu0
          %v3090 = vpop.f32.mrb[0].mxu0
          %v3091 = vadd.f32 %v3050, %v3090
          %v3092 = vpop.f32.mrb[0].mxu0
          %3093 = vdwg.mxu0
          %3094 = vmatprep.subr.bf16.mxu0 0
          %3095 = vmatpush1.bf16.msra.mxu0 %v2635
          %3096 = vmatprep.subr.bf16.mxu0 0
          %3097 = vmatpush1.bf16.msra.mxu0 %v2636
          %3098 = vmatprep.subr.bf16.mxu0 0
          %3099 = vmatpush1.bf16.msra.mxu0 %v2637
          %3100 = vmatprep.subr.bf16.mxu0 0
          %3101 = vmatpush1.bf16.msra.mxu0 %v2638
          %3102 = vmatprep.subr.bf16.mxu0 0
          %3103 = vmatpush1.bf16.msra.mxu0 %v2639
          %3104 = vmatprep.subr.bf16.mxu0 0
          %3105 = vmatpush1.bf16.msra.mxu0 %v2640
          %3106 = vmatprep.subr.bf16.mxu0 0
          %3107 = vmatpush1.bf16.msra.mxu0 %v2641
          %3108 = vmatprep.subr.bf16.mxu0 0
          %3109 = vmatpush1.bf16.msra.mxu0 %v2642
          %3110 = vmatprep.subr.bf16.mxu0 0
          %3111 = vmatpush1.bf16.msra.mxu0 %v2643
          %3112 = vmatprep.subr.bf16.mxu0 0
          %3113 = vmatpush1.bf16.msra.mxu0 %v2644
          %3114 = vmatprep.subr.bf16.mxu0 0
          %3115 = vmatpush1.bf16.msra.mxu0 %v2645
          %3116 = vmatprep.subr.bf16.mxu0 0
          %3117 = vmatpush1.bf16.msra.mxu0 %v2646
          %3118 = vmatprep.subr.bf16.mxu0 0
          %3119 = vmatpush1.bf16.msra.mxu0 %v2647
          %3120 = vmatprep.subr.bf16.mxu0 0
          %3121 = vmatpush1.bf16.msra.mxu0 %v2648
          %3122 = vmatprep.subr.bf16.mxu0 0
          %3123 = vmatpush1.bf16.msra.mxu0 %v2649
          %3124 = vmatprep.subr.bf16.mxu0 0
          %3125 = vmatpush1.bf16.msra.mxu0 %v2650
          %3126 = vmatprep.mubr.bf16.mxu0 %v1778
          %3127 = vmatmul.mubr.bf16.gmra.mrb[0].mxu0 %v1777
          %v3128 = vpop.f32.mrb[0].mxu0
          %v3129 = vadd.f32 %v3088, %v3128
          %v3130 = vpop.f32.mrb[0].mxu0
          %v3131 = vpop.f32.mrb[0].mxu0
          %v3132 = vadd.f32 %v3091, %v3131
          %v3133 = vpop.f32.mrb[0].mxu0
          %3134 = vdwg.mxu0
          %3135 = vmatprep.subr.bf16.mxu0 0
          %3136 = vmatpush1.bf16.msra.mxu0 %v2651
          %3137 = vmatprep.subr.bf16.mxu0 0
          %3138 = vmatpush1.bf16.msra.mxu0 %v2652
          %3139 = vmatprep.subr.bf16.mxu0 0
          %3140 = vmatpush1.bf16.msra.mxu0 %v2653
          %3141 = vmatprep.subr.bf16.mxu0 0
          %3142 = vmatpush1.bf16.msra.mxu0 %v2654
          %3143 = vmatprep.subr.bf16.mxu0 0
          %3144 = vmatpush1.bf16.msra.mxu0 %v2655
          %3145 = vmatprep.subr.bf16.mxu0 0
          %3146 = vmatpush1.bf16.msra.mxu0 %v2656
          %3147 = vmatprep.subr.bf16.mxu0 0
          %3148 = vmatpush1.bf16.msra.mxu0 %v2657
          %3149 = vmatprep.subr.bf16.mxu0 0
          %3150 = vmatpush1.bf16.msra.mxu0 %v2658
          %3151 = vmatprep.subr.bf16.mxu0 0
          %3152 = vmatpush1.bf16.msra.mxu0 %v2659
          %3153 = vmatprep.subr.bf16.mxu0 0
          %3154 = vmatpush1.bf16.msra.mxu0 %v2660
          %3155 = vmatprep.subr.bf16.mxu0 0
          %3156 = vmatpush1.bf16.msra.mxu0 %v2661
          %3157 = vmatprep.subr.bf16.mxu0 0
          %3158 = vmatpush1.bf16.msra.mxu0 %v2662
          %3159 = vmatprep.subr.bf16.mxu0 0
          %3160 = vmatpush1.bf16.msra.mxu0 %v2663
          %3161 = vmatprep.subr.bf16.mxu0 0
          %3162 = vmatpush1.bf16.msra.mxu0 %v2664
          %3163 = vmatprep.subr.bf16.mxu0 0
          %3164 = vmatpush1.bf16.msra.mxu0 %v2665
          %3165 = vmatprep.subr.bf16.mxu0 0
          %3166 = vmatpush1.bf16.msra.mxu0 %v2666
          %3167 = vmatprep.mubr.bf16.mxu0 %v1780
          %3168 = vmatmul.mubr.bf16.gmra.mrb[0].mxu0 %v1779
          %v3169 = vpop.f32.mrb[0].mxu0
          %v3170 = vadd.f32 %v3129, %v3169
          %v3171 = vpop.f32.mrb[0].mxu0
          %v3172 = vpop.f32.mrb[0].mxu0
          %v3173 = vadd.f32 %v3132, %v3172
          %v3174 = vpop.f32.mrb[0].mxu0
          %3175 = vdwg.mxu0
          %3176 = vmatprep.subr.bf16.mxu0 0
          %3177 = vmatpush1.bf16.msra.mxu0 %v2667
          %3178 = vmatprep.subr.bf16.mxu0 0
          %3179 = vmatpush1.bf16.msra.mxu0 %v2668
          %3180 = vmatprep.subr.bf16.mxu0 0
          %3181 = vmatpush1.bf16.msra.mxu0 %v2669
          %3182 = vmatprep.subr.bf16.mxu0 0
          %3183 = vmatpush1.bf16.msra.mxu0 %v2670
          %3184 = vmatprep.subr.bf16.mxu0 0
          %3185 = vmatpush1.bf16.msra.mxu0 %v2671
          %3186 = vmatprep.subr.bf16.mxu0 0
          %3187 = vmatpush1.bf16.msra.mxu0 %v2672
          %3188 = vmatprep.subr.bf16.mxu0 0
          %3189 = vmatpush1.bf16.msra.mxu0 %v2673
          %3190 = vmatprep.subr.bf16.mxu0 0
          %3191 = vmatpush1.bf16.msra.mxu0 %v2674
          %3192 = vmatprep.subr.bf16.mxu0 0
          %3193 = vmatpush1.bf16.msra.mxu0 %v2675
          %3194 = vmatprep.subr.bf16.mxu0 0
          %3195 = vmatpush1.bf16.msra.mxu0 %v2676
          %3196 = vmatprep.subr.bf16.mxu0 0
          %3197 = vmatpush1.bf16.msra.mxu0 %v2677
          %3198 = vmatprep.subr.bf16.mxu0 0
          %3199 = vmatpush1.bf16.msra.mxu0 %v2678
          %3200 = vmatprep.subr.bf16.mxu0 0
          %3201 = vmatpush1.bf16.msra.mxu0 %v2679
          %3202 = vmatprep.subr.bf16.mxu0 0
          %3203 = vmatpush1.bf16.msra.mxu0 %v2680
          %3204 = vmatprep.subr.bf16.mxu0 0
          %3205 = vmatpush1.bf16.msra.mxu0 %v2681
          %3206 = vmatprep.subr.bf16.mxu0 0
          %3207 = vmatpush1.bf16.msra.mxu0 %v2682
          %3208 = vmatprep.mubr.bf16.mxu0 %v1782
          %3209 = vmatmul.mubr.bf16.gmra.mrb[0].mxu0 %v1781
          %v3210 = vpop.f32.mrb[0].mxu0
          %v3211 = vadd.f32 %v3170, %v3210
          %v3212 = vpop.f32.mrb[0].mxu0
          %v3213 = vpop.f32.mrb[0].mxu0
          %v3214 = vadd.f32 %v3173, %v3213
          %v3215 = vpop.f32.mrb[0].mxu0
          %3216 = vdwg.mxu0
          %3217 = vmatprep.subr.bf16.mxu0 0
          %3218 = vmatpush1.bf16.msra.mxu0 %v2683
          %3219 = vmatprep.subr.bf16.mxu0 0
          %3220 = vmatpush1.bf16.msra.mxu0 %v2684
          %3221 = vmatprep.subr.bf16.mxu0 0
          %3222 = vmatpush1.bf16.msra.mxu0 %v2685
          %3223 = vmatprep.subr.bf16.mxu0 0
          %3224 = vmatpush1.bf16.msra.mxu0 %v2686
          %3225 = vmatprep.subr.bf16.mxu0 0
          %3226 = vmatpush1.bf16.msra.mxu0 %v2687
          %3227 = vmatprep.subr.bf16.mxu0 0
          %3228 = vmatpush1.bf16.msra.mxu0 %v2688
          %3229 = vmatprep.subr.bf16.mxu0 0
          %3230 = vmatpush1.bf16.msra.mxu0 %v2689
          %3231 = vmatprep.subr.bf16.mxu0 0
          %3232 = vmatpush1.bf16.msra.mxu0 %v2690
          %3233 = vmatprep.subr.bf16.mxu0 0
          %3234 = vmatpush1.bf16.msra.mxu0 %v2691
          %3235 = vmatprep.subr.bf16.mxu0 0
          %3236 = vmatpush1.bf16.msra.mxu0 %v2692
          %3237 = vmatprep.subr.bf16.mxu0 0
          %3238 = vmatpush1.bf16.msra.mxu0 %v2693
          %3239 = vmatprep.subr.bf16.mxu0 0
          %3240 = vmatpush1.bf16.msra.mxu0 %v2694
          %3241 = vmatprep.subr.bf16.mxu0 0
          %3242 = vmatpush1.bf16.msra.mxu0 %v2695
          %3243 = vmatprep.subr.bf16.mxu0 0
          %3244 = vmatpush1.bf16.msra.mxu0 %v2696
          %3245 = vmatprep.subr.bf16.mxu0 0
          %3246 = vmatpush1.bf16.msra.mxu0 %v2697
          %3247 = vmatprep.subr.bf16.mxu0 0
          %3248 = vmatpush1.bf16.msra.mxu0 %v2698
          %3249 = vmatprep.mubr.bf16.mxu0 %v1784
          %3250 = vmatmul.mubr.bf16.gmra.mrb[0].mxu0 %v1783
          %v3251 = vpop.f32.mrb[0].mxu0
          %v3252 = vadd.f32 %v3211, %v3251
          %v3253 = vpop.f32.mrb[0].mxu0
          %v3254 = vpop.f32.mrb[0].mxu0
          %v3255 = vadd.f32 %v3214, %v3254
          %v3256 = vpop.f32.mrb[0].mxu0
          %3257 = vdwg.mxu0
          %3258 = vmatprep.subr.bf16.mxu0 0
          %3259 = vmatpush1.bf16.msra.mxu0 %v2699
          %3260 = vmatprep.subr.bf16.mxu0 0
          %3261 = vmatpush1.bf16.msra.mxu0 %v2700
          %3262 = vmatprep.subr.bf16.mxu0 0
          %3263 = vmatpush1.bf16.msra.mxu0 %v2701
          %3264 = vmatprep.subr.bf16.mxu0 0
          %3265 = vmatpush1.bf16.msra.mxu0 %v2702
          %3266 = vmatprep.subr.bf16.mxu0 0
          %3267 = vmatpush1.bf16.msra.mxu0 %v2703
          %3268 = vmatprep.subr.bf16.mxu0 0
          %3269 = vmatpush1.bf16.msra.mxu0 %v2704
          %3270 = vmatprep.subr.bf16.mxu0 0
          %3271 = vmatpush1.bf16.msra.mxu0 %v2705
          %3272 = vmatprep.subr.bf16.mxu0 0
          %3273 = vmatpush1.bf16.msra.mxu0 %v2706
          %3274 = vmatprep.subr.bf16.mxu0 0
          %3275 = vmatpush1.bf16.msra.mxu0 %v2707
          %3276 = vmatprep.subr.bf16.mxu0 0
          %3277 = vmatpush1.bf16.msra.mxu0 %v2708
          %3278 = vmatprep.subr.bf16.mxu0 0
          %3279 = vmatpush1.bf16.msra.mxu0 %v2709
          %3280 = vmatprep.subr.bf16.mxu0 0
          %3281 = vmatpush1.bf16.msra.mxu0 %v2710
          %3282 = vmatprep.subr.bf16.mxu0 0
          %3283 = vmatpush1.bf16.msra.mxu0 %v2711
          %3284 = vmatprep.subr.bf16.mxu0 0
          %3285 = vmatpush1.bf16.msra.mxu0 %v2712
          %3286 = vmatprep.subr.bf16.mxu0 0
          %3287 = vmatpush1.bf16.msra.mxu0 %v2713
          %3288 = vmatprep.subr.bf16.mxu0 0
          %3289 = vmatpush1.bf16.msra.mxu0 %v2714
          %3290 = vmatprep.mubr.bf16.mxu0 %v1786
          %3291 = vmatmul.mubr.bf16.gmra.mrb[0].mxu0 %v1785
          %v3292 = vpop.f32.mrb[0].mxu0
          %v3293 = vadd.f32 %v3252, %v3292
          %v3294 = vpop.f32.mrb[0].mxu0
          %v3295 = vpop.f32.mrb[0].mxu0
          %v3296 = vadd.f32 %v3255, %v3295
          %v3297 = vpop.f32.mrb[0].mxu0
          %3298 = vdwg.mxu0
          %3299 = vmatprep.subr.bf16.mxu0 0
          %3300 = vmatpush1.bf16.msra.mxu0 %v2715
          %3301 = vmatprep.subr.bf16.mxu0 0
          %3302 = vmatpush1.bf16.msra.mxu0 %v2716
          %3303 = vmatprep.subr.bf16.mxu0 0
          %3304 = vmatpush1.bf16.msra.mxu0 %v2717
          %3305 = vmatprep.subr.bf16.mxu0 0
          %3306 = vmatpush1.bf16.msra.mxu0 %v2718
          %3307 = vmatprep.subr.bf16.mxu0 0
          %3308 = vmatpush1.bf16.msra.mxu0 %v2719
          %3309 = vmatprep.subr.bf16.mxu0 0
          %3310 = vmatpush1.bf16.msra.mxu0 %v2720
          %3311 = vmatprep.subr.bf16.mxu0 0
          %3312 = vmatpush1.bf16.msra.mxu0 %v2721
          %3313 = vmatprep.subr.bf16.mxu0 0
          %3314 = vmatpush1.bf16.msra.mxu0 %v2722
          %3315 = vmatprep.subr.bf16.mxu0 0
          %3316 = vmatpush1.bf16.msra.mxu0 %v2723
          %3317 = vmatprep.subr.bf16.mxu0 0
          %3318 = vmatpush1.bf16.msra.mxu0 %v2724
          %3319 = vmatprep.subr.bf16.mxu0 0
          %3320 = vmatpush1.bf16.msra.mxu0 %v2725
          %3321 = vmatprep.subr.bf16.mxu0 0
          %3322 = vmatpush1.bf16.msra.mxu0 %v2726
          %3323 = vmatprep.subr.bf16.mxu0 0
          %3324 = vmatpush1.bf16.msra.mxu0 %v2727
          %3325 = vmatprep.subr.bf16.mxu0 0
          %3326 = vmatpush1.bf16.msra.mxu0 %v2728
          %3327 = vmatprep.subr.bf16.mxu0 0
          %3328 = vmatpush1.bf16.msra.mxu0 %v2729
          %3329 = vmatprep.subr.bf16.mxu0 0
          %3330 = vmatpush1.bf16.msra.mxu0 %v2730
          %3331 = vmatprep.mubr.bf16.mxu0 %v1788
          %3332 = vmatmul.mubr.bf16.gmra.mrb[0].mxu0 %v1787
          %v3333 = vpop.f32.mrb[0].mxu0
          %v3334 = vadd.f32 %v3293, %v3333
          %v3335 = vpop.f32.mrb[0].mxu0
          %v3336 = vpop.f32.mrb[0].mxu0
          %v3337 = vadd.f32 %v3296, %v3336
          %v3338 = vpop.f32.mrb[0].mxu0
          %3339 = vdwg.mxu0
          %3340 = vmatprep.subr.bf16.mxu0 0
          %3341 = vmatpush1.bf16.msra.mxu0 %v2731
          %3342 = vmatprep.subr.bf16.mxu0 0
          %3343 = vmatpush1.bf16.msra.mxu0 %v2732
          %3344 = vmatprep.subr.bf16.mxu0 0
          %3345 = vmatpush1.bf16.msra.mxu0 %v2733
          %3346 = vmatprep.subr.bf16.mxu0 0
          %3347 = vmatpush1.bf16.msra.mxu0 %v2734
          %3348 = vmatprep.subr.bf16.mxu0 0
          %3349 = vmatpush1.bf16.msra.mxu0 %v2735
          %3350 = vmatprep.subr.bf16.mxu0 0
          %3351 = vmatpush1.bf16.msra.mxu0 %v2736
          %3352 = vmatprep.subr.bf16.mxu0 0
          %3353 = vmatpush1.bf16.msra.mxu0 %v2737
          %3354 = vmatprep.subr.bf16.mxu0 0
          %3355 = vmatpush1.bf16.msra.mxu0 %v2738
          %3356 = vmatprep.subr.bf16.mxu0 0
          %3357 = vmatpush1.bf16.msra.mxu0 %v2739
          %3358 = vmatprep.subr.bf16.mxu0 0
          %3359 = vmatpush1.bf16.msra.mxu0 %v2740
          %3360 = vmatprep.subr.bf16.mxu0 0
          %3361 = vmatpush1.bf16.msra.mxu0 %v2741
          %3362 = vmatprep.subr.bf16.mxu0 0
          %3363 = vmatpush1.bf16.msra.mxu0 %v2742
          %3364 = vmatprep.subr.bf16.mxu0 0
          %3365 = vmatpush1.bf16.msra.mxu0 %v2743
          %3366 = vmatprep.subr.bf16.mxu0 0
          %3367 = vmatpush1.bf16.msra.mxu0 %v2744
          %3368 = vmatprep.subr.bf16.mxu0 0
          %3369 = vmatpush1.bf16.msra.mxu0 %v2745
          %3370 = vmatprep.subr.bf16.mxu0 0
          %3371 = vmatpush1.bf16.msra.mxu0 %v2746
          %3372 = vmatprep.mubr.bf16.mxu0 %v1790
          %3373 = vmatmul.mubr.bf16.gmra.mrb[0].mxu0 %v1789
          %v3374 = vpop.f32.mrb[0].mxu0
          %v3375 = vadd.f32 %v3334, %v3374
          %v3376 = vpop.f32.mrb[0].mxu0
          %v3377 = vpop.f32.mrb[0].mxu0
          %v3378 = vadd.f32 %v3337, %v3377
          %v3379 = vpop.f32.mrb[0].mxu0
          %3380 = vdwg.mxu0
          %3381 = vmatprep.subr.bf16.mxu0 0
          %3382 = vmatpush1.bf16.msra.mxu0 %v2747
          %3383 = vmatprep.subr.bf16.mxu0 0
          %3384 = vmatpush1.bf16.msra.mxu0 %v2748
          %3385 = vmatprep.subr.bf16.mxu0 0
          %3386 = vmatpush1.bf16.msra.mxu0 %v2749
          %3387 = vmatprep.subr.bf16.mxu0 0
          %3388 = vmatpush1.bf16.msra.mxu0 %v2750
          %3389 = vmatprep.subr.bf16.mxu0 0
          %3390 = vmatpush1.bf16.msra.mxu0 %v2751
          %3391 = vmatprep.subr.bf16.mxu0 0
          %3392 = vmatpush1.bf16.msra.mxu0 %v2752
          %3393 = vmatprep.subr.bf16.mxu0 0
          %3394 = vmatpush1.bf16.msra.mxu0 %v2753
          %3395 = vmatprep.subr.bf16.mxu0 0
          %3396 = vmatpush1.bf16.msra.mxu0 %v2754
          %3397 = vmatprep.subr.bf16.mxu0 0
          %3398 = vmatpush1.bf16.msra.mxu0 %v2755
          %3399 = vmatprep.subr.bf16.mxu0 0
          %3400 = vmatpush1.bf16.msra.mxu0 %v2756
          %3401 = vmatprep.subr.bf16.mxu0 0
          %3402 = vmatpush1.bf16.msra.mxu0 %v2757
          %3403 = vmatprep.subr.bf16.mxu0 0
          %3404 = vmatpush1.bf16.msra.mxu0 %v2758
          %3405 = vmatprep.subr.bf16.mxu0 0
          %3406 = vmatpush1.bf16.msra.mxu0 %v2759
          %3407 = vmatprep.subr.bf16.mxu0 0
          %3408 = vmatpush1.bf16.msra.mxu0 %v2760
          %3409 = vmatprep.subr.bf16.mxu0 0
          %3410 = vmatpush1.bf16.msra.mxu0 %v2761
          %3411 = vmatprep.subr.bf16.mxu0 0
          %3412 = vmatpush1.bf16.msra.mxu0 %v2762
          %3413 = vmatprep.mubr.bf16.mxu0 %v1792
          %3414 = vmatmul.mubr.bf16.gmra.mrb[0].mxu0 %v1791
          %v3415 = vpop.f32.mrb[0].mxu0
          %v3416 = vadd.f32 %v3375, %v3415
          %v3417 = vpop.f32.mrb[0].mxu0
          %v3418 = vpop.f32.mrb[0].mxu0
          %v3419 = vadd.f32 %v3378, %v3418
          %v3420 = vpop.f32.mrb[0].mxu0
          %3421 = vdwg.mxu0
          %3422 = vmatprep.subr.bf16.mxu0 0
          %3423 = vmatpush1.bf16.msra.mxu0 %v2763
          %3424 = vmatprep.subr.bf16.mxu0 0
          %3425 = vmatpush1.bf16.msra.mxu0 %v2764
          %3426 = vmatprep.subr.bf16.mxu0 0
          %3427 = vmatpush1.bf16.msra.mxu0 %v2765
          %3428 = vmatprep.subr.bf16.mxu0 0
          %3429 = vmatpush1.bf16.msra.mxu0 %v2766
          %3430 = vmatprep.subr.bf16.mxu0 0
          %3431 = vmatpush1.bf16.msra.mxu0 %v2767
          %3432 = vmatprep.subr.bf16.mxu0 0
          %3433 = vmatpush1.bf16.msra.mxu0 %v2768
          %3434 = vmatprep.subr.bf16.mxu0 0
          %3435 = vmatpush1.bf16.msra.mxu0 %v2769
          %3436 = vmatprep.subr.bf16.mxu0 0
          %3437 = vmatpush1.bf16.msra.mxu0 %v2770
          %3438 = vmatprep.subr.bf16.mxu0 0
          %3439 = vmatpush1.bf16.msra.mxu0 %v2771
          %3440 = vmatprep.subr.bf16.mxu0 0
          %3441 = vmatpush1.bf16.msra.mxu0 %v2772
          %3442 = vmatprep.subr.bf16.mxu0 0
          %3443 = vmatpush1.bf16.msra.mxu0 %v2773
          %3444 = vmatprep.subr.bf16.mxu0 0
          %3445 = vmatpush1.bf16.msra.mxu0 %v2774
          %3446 = vmatprep.subr.bf16.mxu0 0
          %3447 = vmatpush1.bf16.msra.mxu0 %v2775
          %3448 = vmatprep.subr.bf16.mxu0 0
          %3449 = vmatpush1.bf16.msra.mxu0 %v2776
          %3450 = vmatprep.subr.bf16.mxu0 0
          %3451 = vmatpush1.bf16.msra.mxu0 %v2777
          %3452 = vmatprep.subr.bf16.mxu0 0
          %3453 = vmatpush1.bf16.msra.mxu0 %v2778
          %3454 = vmatprep.mubr.bf16.mxu0 %v1794
          %3455 = vmatmul.mubr.bf16.gmra.mrb[0].mxu0 %v1793
          %v3456 = vpop.f32.mrb[0].mxu0
          %v3457 = vadd.f32 %v3416, %v3456
          %v3458 = vpop.f32.mrb[0].mxu0
          %v3459 = vpop.f32.mrb[0].mxu0
          %v3460 = vadd.f32 %v3419, %v3459
          %v3461 = vpop.f32.mrb[0].mxu0
          %3462 = vdwg.mxu0
          %3463 = vst [vmem:[#allocation2] sm:$0xff] %v3457
          %3464 = vst [vmem:[#allocation2 + $0x8] sm:$0xff] %v3460
        $region208: #{vit_b32_multimodal_forward.1} parent=131 // pred_fallthru
          _
        %v3465 = vld [vmem:[#allocation2] sm:$0xff]
        %v3466 = vld [vmem:[#allocation2 + $0x8] sm:$0xff]
        %v3467 = vld [vmem:[%s1058] sm:$0x1]
        %v3468 = vld [vmem:[%s1066] sm:$0x1]
        %3469 = vadd.xlane.f32.xlu0 %v3465
        %v3470 = vpop.xlane.xlu0 %3469
        %3471 = vadd.xlane.f32.xlu0 %v3466
        %v3472 = vpop.xlane.xlu0 %3471
        %v3473 = vrcp.pop 128.0
        %v3474 = vmul.f32 %v3470, %v3473
        %v3475 = vmul.f32 %v3472, %v3473
        %v3476 = vsub.f32 %v3465, %v3474
        %v3477 = vsub.f32 %v3466, %v3475
        %v3478 = vmul.f32 %v3476, %v3476
        %v3479 = vmul.f32 %v3477, %v3477
        %3480 = vadd.xlane.f32.xlu0 %v3478
        %v3481 = vpop.xlane.xlu0 %3480
        %3482 = vadd.xlane.f32.xlu0 %v3479
        %v3483 = vpop.xlane.xlu0 %3482
        %v3484 = vmul.f32 %v3481, %v3473
        %v3485 = vmul.f32 %v3483, %v3473
        %v3486 = vadd.f32 %v3484, 1e-06
        %v3487 = vadd.f32 %v3485, 1e-06
        %v3488 = vrsqrt.pop %v3486
        %v3489 = vrsqrt.pop %v3487
        %v3490 = vmul.f32 %v3476, %v3488
        %v3491 = vmul.f32 %v3477, %v3489
        %v3493 = vlaneseq
        %v3494 = vshrl.u32 %v3493, 7
        %v3495 = vsub.s32 0, %v3494
        %v3496 = vrot.slane %v3467, %v3495
        %v3498 = vmul.f32 %v3490, %v3496
        %v3499 = vmul.f32 %v3491, %v3496
        %v3501 = vlaneseq
        %v3502 = vshrl.u32 %v3501, 7
        %v3503 = vsub.s32 0, %v3502
        %v3504 = vrot.slane %v3468, %v3503
        %v3506 = vadd.f32 %v3498, %v3504
        %v3507 = vadd.f32 %v3499, %v3504
        %v3508 = vpack.c.bf16 %v3507, %v3506
        %v3509 = vld [vmem:[%s1279] sm:$0xff]
        %v3510 = vld [vmem:[%s1279 + $0x8] sm:$0xf]
        %v3511 = vld [vmem:[%s1279 + $0xc] sm:$0xff]
        %v3512 = vld [vmem:[%s1279 + $0x14] sm:$0xf]
        %v3513 = vld [vmem:[%s1279 + $0x18] sm:$0xff]
        %v3514 = vld [vmem:[%s1279 + $0x20] sm:$0xf]
        %v3515 = vld [vmem:[%s1279 + $0x24] sm:$0xff]
        %v3516 = vld [vmem:[%s1279 + $0x2c] sm:$0xf]
        %v3517 = vld [vmem:[%s1279 + $0x30] sm:$0xff]
        %v3518 = vld [vmem:[%s1279 + $0x38] sm:$0xf]
        %v3519 = vld [vmem:[%s1279 + $0x3c] sm:$0xff]
        %v3520 = vld [vmem:[%s1279 + $0x44] sm:$0xf]
        %v3521 = vld [vmem:[%s1279 + $0x48] sm:$0xff]
        %v3522 = vld [vmem:[%s1279 + $0x50] sm:$0xf]
        %v3523 = vld [vmem:[%s1279 + $0x54] sm:$0xff]
        %v3524 = vld [vmem:[%s1279 + $0x5c] sm:$0xf]
        %v3525 = vld [vmem:[%s1279 + $0x60] sm:$0xff]
        %v3526 = vld [vmem:[%s1279 + $0x68] sm:$0xf]
        %v3527 = vld [vmem:[%s1279 + $0x6c] sm:$0xff]
        %v3528 = vld [vmem:[%s1279 + $0x74] sm:$0xf]
        %v3529 = vld [vmem:[%s1279 + $0x78] sm:$0xff]
        %v3530 = vld [vmem:[%s1279 + $0x80] sm:$0xf]
        %v3531 = vld [vmem:[%s1279 + $0x84] sm:$0xff]
        %v3532 = vld [vmem:[%s1279 + $0x8c] sm:$0xf]
        %v3533 = vld [vmem:[%s1279 + $0x90] sm:$0xff]
        %v3534 = vld [vmem:[%s1279 + $0x98] sm:$0xf]
        %v3535 = vld [vmem:[%s1279 + $0x9c] sm:$0xff]
        %v3536 = vld [vmem:[%s1279 + $0xa4] sm:$0xf]
        %v3537 = vld [vmem:[%s1279 + $0xa8] sm:$0xff]
        %v3538 = vld [vmem:[%s1279 + $0xb0] sm:$0xf]
        %v3539 = vld [vmem:[%s1279 + $0xb4] sm:$0xff]
        %v3540 = vld [vmem:[%s1279 + $0xbc] sm:$0xf]
        %v3541 = vld [vmem:[%s1075] sm:$0x7]
        %v3543 = vlaneseq
        %v3544 = vshrl.u32 %v3543, 7
        %v3545 = vsub.s32 0, %v3544
        %v3546 = vrot.slane %v3541, %v3545
        %v3547 = vlaneseq
        %v3548 = vshrl.u32 %v3547, 7
        %v3549 = vsub.s32 1, %v3548
        %v3550 = vrot.slane %v3541, %v3549
        %v3551 = vlaneseq
        %v3552 = vshrl.u32 %v3551, 7
        %v3553 = vsub.s32 2, %v3552
        %v3554 = vrot.slane %v3541, %v3553
        %v3590 = vunpack.c.l.b16 %v3509
        %v3591 = vunpack.c.h.b16 %v3509
        %v3592 = vunpack.c.l.b16 %v3510
        %v3593 = vunpack.c.l.b16 %v3511
        %v3594 = vunpack.c.h.b16 %v3511
        %v3595 = vunpack.c.l.b16 %v3512
        %v3596 = vunpack.c.l.b16 %v3513
        %v3597 = vunpack.c.h.b16 %v3513
        %v3598 = vunpack.c.l.b16 %v3514
        %v3599 = vunpack.c.l.b16 %v3515
        %v3600 = vunpack.c.h.b16 %v3515
        %v3601 = vunpack.c.l.b16 %v3516
        %v3602 = vunpack.c.l.b16 %v3517
        %v3603 = vunpack.c.h.b16 %v3517
        %v3604 = vunpack.c.l.b16 %v3518
        %v3605 = vunpack.c.l.b16 %v3519
        %v3606 = vunpack.c.h.b16 %v3519
        %v3607 = vunpack.c.l.b16 %v3520
        %v3608 = vunpack.c.l.b16 %v3521
        %v3609 = vunpack.c.h.b16 %v3521
        %v3610 = vunpack.c.l.b16 %v3522
        %v3611 = vunpack.c.l.b16 %v3523
        %v3612 = vunpack.c.h.b16 %v3523
        %v3613 = vunpack.c.l.b16 %v3524
        %v3614 = vunpack.c.l.b16 %v3525
        %v3615 = vunpack.c.h.b16 %v3525
        %v3616 = vunpack.c.l.b16 %v3526
        %v3617 = vunpack.c.l.b16 %v3527
        %v3618 = vunpack.c.h.b16 %v3527
        %v3619 = vunpack.c.l.b16 %v3528
        %v3620 = vunpack.c.l.b16 %v3529
        %v3621 = vunpack.c.h.b16 %v3529
        %v3622 = vunpack.c.l.b16 %v3530
        %v3623 = vunpack.c.l.b16 %v3531
        %v3624 = vunpack.c.h.b16 %v3531
        %v3625 = vunpack.c.l.b16 %v3532
        %v3626 = vunpack.c.l.b16 %v3533
        %v3627 = vunpack.c.h.b16 %v3533
        %v3628 = vunpack.c.l.b16 %v3534
        %v3629 = vunpack.c.l.b16 %v3535
        %v3630 = vunpack.c.h.b16 %v3535
        %v3631 = vunpack.c.l.b16 %v3536
        %v3632 = vunpack.c.l.b16 %v3537
        %v3633 = vunpack.c.h.b16 %v3537
        %v3634 = vunpack.c.l.b16 %v3538
        %v3635 = vunpack.c.l.b16 %v3539
        %v3636 = vunpack.c.h.b16 %v3539
        %v3637 = vunpack.c.l.b16 %v3540
        %v3638 = vpack.c.b16 %v3593, %v3590
        %v3639 = vpack.c.b16 %v3594, %v3591
        %v3640 = vpack.c.b16 %v3595, %v3592
        %v3641 = vpack.c.b16 %v3599, %v3596
        %v3642 = vpack.c.b16 %v3600, %v3597
        %v3643 = vpack.c.b16 %v3601, %v3598
        %v3644 = vpack.c.b16 %v3605, %v3602
        %v3645 = vpack.c.b16 %v3606, %v3603
        %v3646 = vpack.c.b16 %v3607, %v3604
        %v3647 = vpack.c.b16 %v3611, %v3608
        %v3648 = vpack.c.b16 %v3612, %v3609
        %v3649 = vpack.c.b16 %v3613, %v3610
        %v3650 = vpack.c.b16 %v3617, %v3614
        %v3651 = vpack.c.b16 %v3618, %v3615
        %v3652 = vpack.c.b16 %v3619, %v3616
        %v3653 = vpack.c.b16 %v3623, %v3620
        %v3654 = vpack.c.b16 %v3624, %v3621
        %v3655 = vpack.c.b16 %v3625, %v3622
        %v3656 = vpack.c.b16 %v3629, %v3626
        %v3657 = vpack.c.b16 %v3630, %v3627
        %v3658 = vpack.c.b16 %v3631, %v3628
        %v3659 = vpack.c.b16 %v3635, %v3632
        %v3660 = vpack.c.b16 %v3636, %v3633
        %v3661 = vpack.c.b16 %v3637, %v3634
        %3686 = vmatprep.subr.bf16.mxu0 %v3639
        %3687 = vmatpush1.bf16.msra.mxu0 %v3638
        %3688 = vmatprep.subr.bf16.mxu0 %v3642
        %3689 = vmatpush1.bf16.msra.mxu0 %v3641
        %3690 = vmatprep.subr.bf16.mxu0 %v3645
        %3691 = vmatpush1.bf16.msra.mxu0 %v3644
        %3692 = vmatprep.subr.bf16.mxu0 %v3648
        %3693 = vmatpush1.bf16.msra.mxu0 %v3647
        %3694 = vmatprep.subr.bf16.mxu0 %v3651
        %3695 = vmatpush1.bf16.msra.mxu0 %v3650
        %3696 = vmatprep.subr.bf16.mxu0 %v3654
        %3697 = vmatpush1.bf16.msra.mxu0 %v3653
        %3698 = vmatprep.subr.bf16.mxu0 %v3657
        %3699 = vmatpush1.bf16.msra.mxu0 %v3656
        %3700 = vmatprep.subr.bf16.mxu0 %v3660
        %3701 = vmatpush1.bf16.msra.mxu0 %v3659
        %3702 = vmatprep.subr.bf16.mxu0 0
        %3703 = vmatpush1.bf16.msra.mxu0 0
        %3704 = vmatprep.subr.bf16.mxu0 0
        %3705 = vmatpush1.bf16.msra.mxu0 0
        %3706 = vmatprep.subr.bf16.mxu0 0
        %3707 = vmatpush1.bf16.msra.mxu0 0
        %3708 = vmatprep.subr.bf16.mxu0 0
        %3709 = vmatpush1.bf16.msra.mxu0 0
        %3710 = vmatprep.subr.bf16.mxu0 0
        %3711 = vmatpush1.bf16.msra.mxu0 0
        %3712 = vmatprep.subr.bf16.mxu0 0
        %3713 = vmatpush1.bf16.msra.mxu0 0
        %3714 = vmatprep.subr.bf16.mxu0 0
        %3715 = vmatpush1.bf16.msra.mxu0 0
        %3716 = vmatprep.subr.bf16.mxu0 0
        %3717 = vmatpush1.bf16.msra.mxu0 0
        %3718 = vmatprep.mubr.bf16.mxu0 0
        %3719 = vmatmul.mubr.bf16.gmra.mrb[0].mxu0 %v3508
        %v3720 = vpop.f32.mrb[0].mxu0
        %v3721 = vadd.f32 %v3546, %v3720
        %v3722 = vpop.f32.mrb[0].mxu0
        %v3723 = vadd.f32 %v3550, %v3722
        %v3724 = vpop.f32.mrb[0].mxu0
        %v3725 = vadd.f32 %v3546, %v3724
        %v3726 = vpop.f32.mrb[0].mxu0
        %v3727 = vadd.f32 %v3550, %v3726
        %3728 = vdwg.mxu0
        %3729 = vmatprep.subr.bf16.mxu0 0
        %3730 = vmatpush1.bf16.msra.mxu0 %v3640
        %3731 = vmatprep.subr.bf16.mxu0 0
        %3732 = vmatpush1.bf16.msra.mxu0 %v3643
        %3733 = vmatprep.subr.bf16.mxu0 0
        %3734 = vmatpush1.bf16.msra.mxu0 %v3646
        %3735 = vmatprep.subr.bf16.mxu0 0
        %3736 = vmatpush1.bf16.msra.mxu0 %v3649
        %3737 = vmatprep.subr.bf16.mxu0 0
        %3738 = vmatpush1.bf16.msra.mxu0 %v3652
        %3739 = vmatprep.subr.bf16.mxu0 0
        %3740 = vmatpush1.bf16.msra.mxu0 %v3655
        %3741 = vmatprep.subr.bf16.mxu0 0
        %3742 = vmatpush1.bf16.msra.mxu0 %v3658
        %3743 = vmatprep.subr.bf16.mxu0 0
        %3744 = vmatpush1.bf16.msra.mxu0 %v3661
        %3745 = vmatprep.subr.bf16.mxu0 0
        %3746 = vmatpush1.bf16.msra.mxu0 0
        %3747 = vmatprep.subr.bf16.mxu0 0
        %3748 = vmatpush1.bf16.msra.mxu0 0
        %3749 = vmatprep.subr.bf16.mxu0 0
        %3750 = vmatpush1.bf16.msra.mxu0 0
        %3751 = vmatprep.subr.bf16.mxu0 0
        %3752 = vmatpush1.bf16.msra.mxu0 0
        %3753 = vmatprep.subr.bf16.mxu0 0
        %3754 = vmatpush1.bf16.msra.mxu0 0
        %3755 = vmatprep.subr.bf16.mxu0 0
        %3756 = vmatpush1.bf16.msra.mxu0 0
        %3757 = vmatprep.subr.bf16.mxu0 0
        %3758 = vmatpush1.bf16.msra.mxu0 0
        %3759 = vmatprep.subr.bf16.mxu0 0
        %3760 = vmatpush1.bf16.msra.mxu0 0
        %3761 = vmatprep.mubr.bf16.mxu0 0
        %3762 = vmatmul.mubr.bf16.gmra.mrb[0].mxu0 %v3508
        %v3763 = vpop.f32.mrb[0].mxu0
        %v3764 = vadd.f32 %v3554, %v3763
        %v3765 = vpop.f32.mrb[0].mxu0
        %v3766 = vpop.f32.mrb[0].mxu0
        %v3767 = vadd.f32 %v3554, %v3766
        %v3768 = vpop.f32.mrb[0].mxu0
        %3769 = vdwg.mxu0
        %v3770 = vld [vmem:[#allocation3] sm:$0xff]
        %v3771 = vmul.f32 %v3721, 0.17677669
        %v3772 = vmul.f32 %v3725, 0.17677669
        %vm3773 = vcmask 261120
        %v3775 = vsel %vm3773, %v3771, 0
        %v3778 = vsel %vm3773, %v3723, 0
        %3780 = vmatprep.subr.mxu0 0.0
        %3781 = vmatpush1.xpose.msra.mxu0 %v3778
        %3782 = vmatprep.subr.mxu0 0.0
        %3783 = vmatpush1.xpose.msra.mxu0 0.0
        %3784 = vmatprep.subr.mxu0 0.0
        %3785 = vmatpush1.xpose.msra.mxu0 0.0
        %3786 = vmatprep.subr.mxu0 0.0
        %3787 = vmatpush1.xpose.msra.mxu0 0.0
        %3788 = vmatprep.subr.mxu0 0.0
        %3789 = vmatpush1.xpose.msra.mxu0 0.0
        %3790 = vmatprep.subr.mxu0 0.0
        %3791 = vmatpush1.xpose.msra.mxu0 0.0
        %3792 = vmatprep.subr.mxu0 0.0
        %3793 = vmatpush1.xpose.msra.mxu0 0.0
        %3794 = vmatprep.subr.mxu0 0.0
        %3795 = vmatpush1.xpose.msra.mxu0 0.0
        %3796 = vmatprep.subr.mxu0 0.0
        %3797 = vmatpush1.xpose.msra.mxu0 0.0
        %3798 = vmatprep.subr.mxu0 0.0
        %3799 = vmatpush1.xpose.msra.mxu0 0.0
        %3800 = vmatprep.subr.mxu0 0.0
        %3801 = vmatpush1.xpose.msra.mxu0 0.0
        %3802 = vmatprep.subr.mxu0 0.0
        %3803 = vmatpush1.xpose.msra.mxu0 0.0
        %3804 = vmatprep.subr.mxu0 0.0
        %3805 = vmatpush1.xpose.msra.mxu0 0.0
        %3806 = vmatprep.subr.mxu0 0.0
        %3807 = vmatpush1.xpose.msra.mxu0 0.0
        %3808 = vmatprep.subr.mxu0 0.0
        %3809 = vmatpush1.xpose.msra.mxu0 0.0
        %3810 = vmatprep.subr.mxu0 0.0
        %3811 = vmatpush1.xpose.msra.mxu0 0.0
        %3812 = vmatprep.subr.mxu0 0.0
        %3813 = vmatpush1.xpose.msra.mxu0 0.0
        %3814 = vmatprep.subr.mxu0 0.0
        %3815 = vmatpush1.xpose.msra.mxu0 0.0
        %3816 = vmatprep.subr.mxu0 0.0
        %3817 = vmatpush1.xpose.msra.mxu0 0.0
        %3818 = vmatprep.subr.mxu0 0.0
        %3819 = vmatpush1.xpose.msra.mxu0 0.0
        %3820 = vmatprep.subr.mxu0 0.0
        %3821 = vmatpush1.xpose.msra.mxu0 0.0
        %3822 = vmatprep.subr.mxu0 0.0
        %3823 = vmatpush1.xpose.msra.mxu0 0.0
        %3824 = vmatprep.subr.mxu0 0.0
        %3825 = vmatpush1.xpose.msra.mxu0 0.0
        %3826 = vmatprep.subr.mxu0 0.0
        %3827 = vmatpush1.xpose.msra.mxu0 0.0
        %3828 = vmatprep.subr.mxu0 0.0
        %3829 = vmatpush1.xpose.msra.mxu0 0.0
        %3830 = vmatprep.subr.mxu0 0.0
        %3831 = vmatpush1.xpose.msra.mxu0 0.0
        %3832 = vmatprep.subr.mxu0 0.0
        %3833 = vmatpush1.xpose.msra.mxu0 0.0
        %3834 = vmatprep.subr.mxu0 0.0
        %3835 = vmatpush1.xpose.msra.mxu0 0.0
        %3836 = vmatprep.subr.mxu0 0.0
        %3837 = vmatpush1.xpose.msra.mxu0 0.0
        %3838 = vmatprep.subr.mxu0 0.0
        %3839 = vmatpush1.xpose.msra.mxu0 0.0
        %3840 = vmatprep.subr.mxu0 0.0
        %3841 = vmatpush1.xpose.msra.mxu0 0.0
        %3842 = vmatprep.subr.mxu0 0.0
        %3843 = vmatpush1.xpose.msra.mxu0 0.0
        %3844 = vmatprep.mubr.f32.mxu0 0.0
        %3845 = vmatmul.mubr.f32.gmra.mrb[0].mxu0 %v3775
        %v3846 = vpop.f32.mrb[0].mxu0
        %v3847 = vadd.f32 %v3770, %v3846
        %v3848 = vpop.f32.mrb[0].mxu0
        %3849 = vdwg.mxu0
        %v3851 = vsel %vm3773, %v3772, 0
        %v3854 = vsel %vm3773, %v3727, 0
        %3856 = vmatprep.subr.mxu0 0.0
        %3857 = vmatpush1.xpose.msra.mxu0 %v3854
        %3858 = vmatprep.subr.mxu0 0.0
        %3859 = vmatpush1.xpose.msra.mxu0 0.0
        %3860 = vmatprep.subr.mxu0 0.0
        %3861 = vmatpush1.xpose.msra.mxu0 0.0
        %3862 = vmatprep.subr.mxu0 0.0
        %3863 = vmatpush1.xpose.msra.mxu0 0.0
        %3864 = vmatprep.subr.mxu0 0.0
        %3865 = vmatpush1.xpose.msra.mxu0 0.0
        %3866 = vmatprep.subr.mxu0 0.0
        %3867 = vmatpush1.xpose.msra.mxu0 0.0
        %3868 = vmatprep.subr.mxu0 0.0
        %3869 = vmatpush1.xpose.msra.mxu0 0.0
        %3870 = vmatprep.subr.mxu0 0.0
        %3871 = vmatpush1.xpose.msra.mxu0 0.0
        %3872 = vmatprep.subr.mxu0 0.0
        %3873 = vmatpush1.xpose.msra.mxu0 0.0
        %3874 = vmatprep.subr.mxu0 0.0
        %3875 = vmatpush1.xpose.msra.mxu0 0.0
        %3876 = vmatprep.subr.mxu0 0.0
        %3877 = vmatpush1.xpose.msra.mxu0 0.0
        %3878 = vmatprep.subr.mxu0 0.0
        %3879 = vmatpush1.xpose.msra.mxu0 0.0
        %3880 = vmatprep.subr.mxu0 0.0
        %3881 = vmatpush1.xpose.msra.mxu0 0.0
        %3882 = vmatprep.subr.mxu0 0.0
        %3883 = vmatpush1.xpose.msra.mxu0 0.0
        %3884 = vmatprep.subr.mxu0 0.0
        %3885 = vmatpush1.xpose.msra.mxu0 0.0
        %3886 = vmatprep.subr.mxu0 0.0
        %3887 = vmatpush1.xpose.msra.mxu0 0.0
        %3888 = vmatprep.subr.mxu0 0.0
        %3889 = vmatpush1.xpose.msra.mxu0 0.0
        %3890 = vmatprep.subr.mxu0 0.0
        %3891 = vmatpush1.xpose.msra.mxu0 0.0
        %3892 = vmatprep.subr.mxu0 0.0
        %3893 = vmatpush1.xpose.msra.mxu0 0.0
        %3894 = vmatprep.subr.mxu0 0.0
        %3895 = vmatpush1.xpose.msra.mxu0 0.0
        %3896 = vmatprep.subr.mxu0 0.0
        %3897 = vmatpush1.xpose.msra.mxu0 0.0
        %3898 = vmatprep.subr.mxu0 0.0
        %3899 = vmatpush1.xpose.msra.mxu0 0.0
        %3900 = vmatprep.subr.mxu0 0.0
        %3901 = vmatpush1.xpose.msra.mxu0 0.0
        %3902 = vmatprep.subr.mxu0 0.0
        %3903 = vmatpush1.xpose.msra.mxu0 0.0
        %3904 = vmatprep.subr.mxu0 0.0
        %3905 = vmatpush1.xpose.msra.mxu0 0.0
        %3906 = vmatprep.subr.mxu0 0.0
        %3907 = vmatpush1.xpose.msra.mxu0 0.0
        %3908 = vmatprep.subr.mxu0 0.0
        %3909 = vmatpush1.xpose.msra.mxu0 0.0
        %3910 = vmatprep.subr.mxu0 0.0
        %3911 = vmatpush1.xpose.msra.mxu0 0.0
        %3912 = vmatprep.subr.mxu0 0.0
        %3913 = vmatpush1.xpose.msra.mxu0 0.0
        %3914 = vmatprep.subr.mxu0 0.0
        %3915 = vmatpush1.xpose.msra.mxu0 0.0
        %3916 = vmatprep.subr.mxu0 0.0
        %3917 = vmatpush1.xpose.msra.mxu0 0.0
        %3918 = vmatprep.subr.mxu0 0.0
        %3919 = vmatpush1.xpose.msra.mxu0 0.0
        %3920 = vmatprep.mubr.f32.mxu0 0.0
        %3921 = vmatmul.mubr.f32.gmra.mrb[0].mxu0 %v3851
        %v3922 = vpop.f32.mrb[0].mxu0
        %v3923 = vadd.f32 %v3770, %v3922
        %v3924 = vpop.f32.mrb[0].mxu0
        %3925 = vdwg.mxu0
        %vm3926 = vcmask 64512
        %v3927 = vsel %vm3926, %v3847, -inf
        %3928 = vmax.xlane.f32.xlu0 %v3927
        %v3929 = vpop.xlane.xlu0 %3928
        %v3930 = vsel %vm3926, %v3923, -inf
        %3931 = vmax.xlane.f32.xlu0 %v3930
        %v3932 = vpop.xlane.xlu0 %3931
        %v3933 = vsub.f32 %v3847, %v3929
        %v3934 = vsub.f32 %v3923, %v3932
        %v3935 = vmul.f32 %v3933, 1.442695
        %v3936 = vpow.pop %v3935
        %v3937 = vmul.f32 %v3934, 1.442695
        %v3938 = vpow.pop %v3937
        %v3939 = vsel %vm3926, %v3936, 0.0
        %3940 = vadd.xlane.f32.xlu0 %v3939
        %v3941 = vpop.xlane.xlu0 %3940
        %v3942 = vsel %vm3926, %v3938, 0.0
        %3943 = vadd.xlane.f32.xlu0 %v3942
        %v3944 = vpop.xlane.xlu0 %3943
        %v3945 = vrcp.pop %v3941
        %v3946 = vrcp.pop %v3944
        %v3947 = vmul.f32 %v3936, %v3945
        %v3948 = vmul.f32 %v3938, %v3946
        %v3950 = vsel %vm3926, %v3947, 0
        %3952 = vmatprep.subr.mxu0 0.0
        %3953 = vmatpush1.msra.mxu0 %v3764
        %3954 = vmatprep.subr.mxu0 0.0
        %3955 = vmatpush1.msra.mxu0 0.0
        %3956 = vmatprep.subr.mxu0 0.0
        %3957 = vmatpush1.msra.mxu0 0.0
        %3958 = vmatprep.subr.mxu0 0.0
        %3959 = vmatpush1.msra.mxu0 0.0
        %3960 = vmatprep.subr.mxu0 0.0
        %3961 = vmatpush1.msra.mxu0 0.0
        %3962 = vmatprep.subr.mxu0 0.0
        %3963 = vmatpush1.msra.mxu0 0.0
        %3964 = vmatprep.subr.mxu0 0.0
        %3965 = vmatpush1.msra.mxu0 0.0
        %3966 = vmatprep.subr.mxu0 0.0
        %3967 = vmatpush1.msra.mxu0 0.0
        %3968 = vmatprep.subr.mxu0 0.0
        %3969 = vmatpush1.msra.mxu0 0.0
        %3970 = vmatprep.subr.mxu0 0.0
        %3971 = vmatpush1.msra.mxu0 0.0
        %3972 = vmatprep.subr.mxu0 0.0
        %3973 = vmatpush1.msra.mxu0 0.0
        %3974 = vmatprep.subr.mxu0 0.0
        %3975 = vmatpush1.msra.mxu0 0.0
        %3976 = vmatprep.subr.mxu0 0.0
        %3977 = vmatpush1.msra.mxu0 0.0
        %3978 = vmatprep.subr.mxu0 0.0
        %3979 = vmatpush1.msra.mxu0 0.0
        %3980 = vmatprep.subr.mxu0 0.0
        %3981 = vmatpush1.msra.mxu0 0.0
        %3982 = vmatprep.subr.mxu0 0.0
        %3983 = vmatpush1.msra.mxu0 0.0
        %3984 = vmatprep.subr.mxu0 0.0
        %3985 = vmatpush1.msra.mxu0 0.0
        %3986 = vmatprep.subr.mxu0 0.0
        %3987 = vmatpush1.msra.mxu0 0.0
        %3988 = vmatprep.subr.mxu0 0.0
        %3989 = vmatpush1.msra.mxu0 0.0
        %3990 = vmatprep.subr.mxu0 0.0
        %3991 = vmatpush1.msra.mxu0 0.0
        %3992 = vmatprep.subr.mxu0 0.0
        %3993 = vmatpush1.msra.mxu0 0.0
        %3994 = vmatprep.subr.mxu0 0.0
        %3995 = vmatpush1.msra.mxu0 0.0
        %3996 = vmatprep.subr.mxu0 0.0
        %3997 = vmatpush1.msra.mxu0 0.0
        %3998 = vmatprep.subr.mxu0 0.0
        %3999 = vmatpush1.msra.mxu0 0.0
        %4000 = vmatprep.subr.mxu0 0.0
        %4001 = vmatpush1.msra.mxu0 0.0
        %4002 = vmatprep.subr.mxu0 0.0
        %4003 = vmatpush1.msra.mxu0 0.0
        %4004 = vmatprep.subr.mxu0 0.0
        %4005 = vmatpush1.msra.mxu0 0.0
        %4006 = vmatprep.subr.mxu0 0.0
        %4007 = vmatpush1.msra.mxu0 0.0
        %4008 = vmatprep.subr.mxu0 0.0
        %4009 = vmatpush1.msra.mxu0 0.0
        %4010 = vmatprep.subr.mxu0 0.0
        %4011 = vmatpush1.msra.mxu0 0.0
        %4012 = vmatprep.subr.mxu0 0.0
        %4013 = vmatpush1.msra.mxu0 0.0
        %4014 = vmatprep.subr.mxu0 0.0
        %4015 = vmatpush1.msra.mxu0 0.0
        %4016 = vmatprep.mubr.f32.mxu0 0.0
        %4017 = vmatmul.mubr.f32.gmra.mrb[0].mxu0 %v3950
        %v4018 = vpop.f32.mrb[0].mxu0
        %v4019 = vadd.f32 0.0, %v4018
        %v4020 = vpop.f32.mrb[0].mxu0
        %4021 = vdwg.mxu0
        %v4023 = vsel %vm3926, %v3948, 0
        %4025 = vmatprep.subr.mxu0 0.0
        %4026 = vmatpush1.msra.mxu0 %v3767
        %4027 = vmatprep.subr.mxu0 0.0
        %4028 = vmatpush1.msra.mxu0 0.0
        %4029 = vmatprep.subr.mxu0 0.0
        %4030 = vmatpush1.msra.mxu0 0.0
        %4031 = vmatprep.subr.mxu0 0.0
        %4032 = vmatpush1.msra.mxu0 0.0
        %4033 = vmatprep.subr.mxu0 0.0
        %4034 = vmatpush1.msra.mxu0 0.0
        %4035 = vmatprep.subr.mxu0 0.0
        %4036 = vmatpush1.msra.mxu0 0.0
        %4037 = vmatprep.subr.mxu0 0.0
        %4038 = vmatpush1.msra.mxu0 0.0
        %4039 = vmatprep.subr.mxu0 0.0
        %4040 = vmatpush1.msra.mxu0 0.0
        %4041 = vmatprep.subr.mxu0 0.0
        %4042 = vmatpush1.msra.mxu0 0.0
        %4043 = vmatprep.subr.mxu0 0.0
        %4044 = vmatpush1.msra.mxu0 0.0
        %4045 = vmatprep.subr.mxu0 0.0
        %4046 = vmatpush1.msra.mxu0 0.0
        %4047 = vmatprep.subr.mxu0 0.0
        %4048 = vmatpush1.msra.mxu0 0.0
        %4049 = vmatprep.subr.mxu0 0.0
        %4050 = vmatpush1.msra.mxu0 0.0
        %4051 = vmatprep.subr.mxu0 0.0
        %4052 = vmatpush1.msra.mxu0 0.0
        %4053 = vmatprep.subr.mxu0 0.0
        %4054 = vmatpush1.msra.mxu0 0.0
        %4055 = vmatprep.subr.mxu0 0.0
        %4056 = vmatpush1.msra.mxu0 0.0
        %4057 = vmatprep.subr.mxu0 0.0
        %4058 = vmatpush1.msra.mxu0 0.0
        %4059 = vmatprep.subr.mxu0 0.0
        %4060 = vmatpush1.msra.mxu0 0.0
        %4061 = vmatprep.subr.mxu0 0.0
        %4062 = vmatpush1.msra.mxu0 0.0
        %4063 = vmatprep.subr.mxu0 0.0
        %4064 = vmatpush1.msra.mxu0 0.0
        %4065 = vmatprep.subr.mxu0 0.0
        %4066 = vmatpush1.msra.mxu0 0.0
        %4067 = vmatprep.subr.mxu0 0.0
        %4068 = vmatpush1.msra.mxu0 0.0
        %4069 = vmatprep.subr.mxu0 0.0
        %4070 = vmatpush1.msra.mxu0 0.0
        %4071 = vmatprep.subr.mxu0 0.0
        %4072 = vmatpush1.msra.mxu0 0.0
        %4073 = vmatprep.subr.mxu0 0.0
        %4074 = vmatpush1.msra.mxu0 0.0
        %4075 = vmatprep.subr.mxu0 0.0
        %4076 = vmatpush1.msra.mxu0 0.0
        %4077 = vmatprep.subr.mxu0 0.0
        %4078 = vmatpush1.msra.mxu0 0.0
        %4079 = vmatprep.subr.mxu0 0.0
        %4080 = vmatpush1.msra.mxu0 0.0
        %4081 = vmatprep.subr.mxu0 0.0
        %4082 = vmatpush1.msra.mxu0 0.0
        %4083 = vmatprep.subr.mxu0 0.0
        %4084 = vmatpush1.msra.mxu0 0.0
        %4085 = vmatprep.subr.mxu0 0.0
        %4086 = vmatpush1.msra.mxu0 0.0
        %4087 = vmatprep.subr.mxu0 0.0
        %4088 = vmatpush1.msra.mxu0 0.0
        %4089 = vmatprep.mubr.f32.mxu0 0.0
        %4090 = vmatmul.mubr.f32.gmra.mrb[0].mxu0 %v4023
        %v4091 = vpop.f32.mrb[0].mxu0
        %v4092 = vadd.f32 0.0, %v4091
        %v4093 = vpop.f32.mrb[0].mxu0
        %4094 = vdwg.mxu0
        %4095 = vrot.lane.b32.xlu0 %v3771, 96
        %v4096 = vpop.permute.xlu0 %4095
        %4097 = vrot.lane.b32.xlu0 %v3723, 96
        %v4098 = vpop.permute.xlu0 %4097
        %v4099 = vsel %vm3773, %v4096, 0
        %v4101 = vsel %vm3773, %v4098, 0
        %4103 = vmatprep.subr.mxu0 0.0
        %4104 = vmatpush1.xpose.msra.mxu0 %v4101
        %4105 = vmatprep.subr.mxu0 0.0
        %4106 = vmatpush1.xpose.msra.mxu0 0.0
        %4107 = vmatprep.subr.mxu0 0.0
        %4108 = vmatpush1.xpose.msra.mxu0 0.0
        %4109 = vmatprep.subr.mxu0 0.0
        %4110 = vmatpush1.xpose.msra.mxu0 0.0
        %4111 = vmatprep.subr.mxu0 0.0
        %4112 = vmatpush1.xpose.msra.mxu0 0.0
        %4113 = vmatprep.subr.mxu0 0.0
        %4114 = vmatpush1.xpose.msra.mxu0 0.0
        %4115 = vmatprep.subr.mxu0 0.0
        %4116 = vmatpush1.xpose.msra.mxu0 0.0
        %4117 = vmatprep.subr.mxu0 0.0
        %4118 = vmatpush1.xpose.msra.mxu0 0.0
        %4119 = vmatprep.subr.mxu0 0.0
        %4120 = vmatpush1.xpose.msra.mxu0 0.0
        %4121 = vmatprep.subr.mxu0 0.0
        %4122 = vmatpush1.xpose.msra.mxu0 0.0
        %4123 = vmatprep.subr.mxu0 0.0
        %4124 = vmatpush1.xpose.msra.mxu0 0.0
        %4125 = vmatprep.subr.mxu0 0.0
        %4126 = vmatpush1.xpose.msra.mxu0 0.0
        %4127 = vmatprep.subr.mxu0 0.0
        %4128 = vmatpush1.xpose.msra.mxu0 0.0
        %4129 = vmatprep.subr.mxu0 0.0
        %4130 = vmatpush1.xpose.msra.mxu0 0.0
        %4131 = vmatprep.subr.mxu0 0.0
        %4132 = vmatpush1.xpose.msra.mxu0 0.0
        %4133 = vmatprep.subr.mxu0 0.0
        %4134 = vmatpush1.xpose.msra.mxu0 0.0
        %4135 = vmatprep.subr.mxu0 0.0
        %4136 = vmatpush1.xpose.msra.mxu0 0.0
        %4137 = vmatprep.subr.mxu0 0.0
        %4138 = vmatpush1.xpose.msra.mxu0 0.0
        %4139 = vmatprep.subr.mxu0 0.0
        %4140 = vmatpush1.xpose.msra.mxu0 0.0
        %4141 = vmatprep.subr.mxu0 0.0
        %4142 = vmatpush1.xpose.msra.mxu0 0.0
        %4143 = vmatprep.subr.mxu0 0.0
        %4144 = vmatpush1.xpose.msra.mxu0 0.0
        %4145 = vmatprep.subr.mxu0 0.0
        %4146 = vmatpush1.xpose.msra.mxu0 0.0
        %4147 = vmatprep.subr.mxu0 0.0
        %4148 = vmatpush1.xpose.msra.mxu0 0.0
        %4149 = vmatprep.subr.mxu0 0.0
        %4150 = vmatpush1.xpose.msra.mxu0 0.0
        %4151 = vmatprep.subr.mxu0 0.0
        %4152 = vmatpush1.xpose.msra.mxu0 0.0
        %4153 = vmatprep.subr.mxu0 0.0
        %4154 = vmatpush1.xpose.msra.mxu0 0.0
        %4155 = vmatprep.subr.mxu0 0.0
        %4156 = vmatpush1.xpose.msra.mxu0 0.0
        %4157 = vmatprep.subr.mxu0 0.0
        %4158 = vmatpush1.xpose.msra.mxu0 0.0
        %4159 = vmatprep.subr.mxu0 0.0
        %4160 = vmatpush1.xpose.msra.mxu0 0.0
        %4161 = vmatprep.subr.mxu0 0.0
        %4162 = vmatpush1.xpose.msra.mxu0 0.0
        %4163 = vmatprep.subr.mxu0 0.0
        %4164 = vmatpush1.xpose.msra.mxu0 0.0
        %4165 = vmatprep.subr.mxu0 0.0
        %4166 = vmatpush1.xpose.msra.mxu0 0.0
        %4167 = vmatprep.mubr.f32.mxu0 0.0
        %4168 = vmatmul.mubr.f32.gmra.mrb[0].mxu0 %v4099
        %v4169 = vpop.f32.mrb[0].mxu0
        %v4170 = vadd.f32 %v3770, %v4169
        %v4171 = vpop.f32.mrb[0].mxu0
        %4172 = vdwg.mxu0
        %4173 = vrot.lane.b32.xlu0 %v3772, 96
        %v4174 = vpop.permute.xlu0 %4173
        %4175 = vrot.lane.b32.xlu0 %v3727, 96
        %v4176 = vpop.permute.xlu0 %4175
        %v4177 = vsel %vm3773, %v4174, 0
        %v4179 = vsel %vm3773, %v4176, 0
        %4181 = vmatprep.subr.mxu0 0.0
        %4182 = vmatpush1.xpose.msra.mxu0 %v4179
        %4183 = vmatprep.subr.mxu0 0.0
        %4184 = vmatpush1.xpose.msra.mxu0 0.0
        %4185 = vmatprep.subr.mxu0 0.0
        %4186 = vmatpush1.xpose.msra.mxu0 0.0
        %4187 = vmatprep.subr.mxu0 0.0
        %4188 = vmatpush1.xpose.msra.mxu0 0.0
        %4189 = vmatprep.subr.mxu0 0.0
        %4190 = vmatpush1.xpose.msra.mxu0 0.0
        %4191 = vmatprep.subr.mxu0 0.0
        %4192 = vmatpush1.xpose.msra.mxu0 0.0
        %4193 = vmatprep.subr.mxu0 0.0
        %4194 = vmatpush1.xpose.msra.mxu0 0.0
        %4195 = vmatprep.subr.mxu0 0.0
        %4196 = vmatpush1.xpose.msra.mxu0 0.0
        %4197 = vmatprep.subr.mxu0 0.0
        %4198 = vmatpush1.xpose.msra.mxu0 0.0
        %4199 = vmatprep.subr.mxu0 0.0
        %4200 = vmatpush1.xpose.msra.mxu0 0.0
        %4201 = vmatprep.subr.mxu0 0.0
        %4202 = vmatpush1.xpose.msra.mxu0 0.0
        %4203 = vmatprep.subr.mxu0 0.0
        %4204 = vmatpush1.xpose.msra.mxu0 0.0
        %4205 = vmatprep.subr.mxu0 0.0
        %4206 = vmatpush1.xpose.msra.mxu0 0.0
        %4207 = vmatprep.subr.mxu0 0.0
        %4208 = vmatpush1.xpose.msra.mxu0 0.0
        %4209 = vmatprep.subr.mxu0 0.0
        %4210 = vmatpush1.xpose.msra.mxu0 0.0
        %4211 = vmatprep.subr.mxu0 0.0
        %4212 = vmatpush1.xpose.msra.mxu0 0.0
        %4213 = vmatprep.subr.mxu0 0.0
        %4214 = vmatpush1.xpose.msra.mxu0 0.0
        %4215 = vmatprep.subr.mxu0 0.0
        %4216 = vmatpush1.xpose.msra.mxu0 0.0
        %4217 = vmatprep.subr.mxu0 0.0
        %4218 = vmatpush1.xpose.msra.mxu0 0.0
        %4219 = vmatprep.subr.mxu0 0.0
        %4220 = vmatpush1.xpose.msra.mxu0 0.0
        %4221 = vmatprep.subr.mxu0 0.0
        %4222 = vmatpush1.xpose.msra.mxu0 0.0
        %4223 = vmatprep.subr.mxu0 0.0
        %4224 = vmatpush1.xpose.msra.mxu0 0.0
        %4225 = vmatprep.subr.mxu0 0.0
        %4226 = vmatpush1.xpose.msra.mxu0 0.0
        %4227 = vmatprep.subr.mxu0 0.0
        %4228 = vmatpush1.xpose.msra.mxu0 0.0
        %4229 = vmatprep.subr.mxu0 0.0
        %4230 = vmatpush1.xpose.msra.mxu0 0.0
        %4231 = vmatprep.subr.mxu0 0.0
        %4232 = vmatpush1.xpose.msra.mxu0 0.0
        %4233 = vmatprep.subr.mxu0 0.0
        %4234 = vmatpush1.xpose.msra.mxu0 0.0
        %4235 = vmatprep.subr.mxu0 0.0
        %4236 = vmatpush1.xpose.msra.mxu0 0.0
        %4237 = vmatprep.subr.mxu0 0.0
        %4238 = vmatpush1.xpose.msra.mxu0 0.0
        %4239 = vmatprep.subr.mxu0 0.0
        %4240 = vmatpush1.xpose.msra.mxu0 0.0
        %4241 = vmatprep.subr.mxu0 0.0
        %4242 = vmatpush1.xpose.msra.mxu0 0.0
        %4243 = vmatprep.subr.mxu0 0.0
        %4244 = vmatpush1.xpose.msra.mxu0 0.0
        %4245 = vmatprep.mubr.f32.mxu0 0.0
        %4246 = vmatmul.mubr.f32.gmra.mrb[0].mxu0 %v4177
        %v4247 = vpop.f32.mrb[0].mxu0
        %v4248 = vadd.f32 %v3770, %v4247
        %v4249 = vpop.f32.mrb[0].mxu0
        %4250 = vdwg.mxu0
        %v4251 = vsel %vm3926, %v4170, -inf
        %4252 = vmax.xlane.f32.xlu0 %v4251
        %v4253 = vpop.xlane.xlu0 %4252
        %v4254 = vsel %vm3926, %v4248, -inf
        %4255 = vmax.xlane.f32.xlu0 %v4254
        %v4256 = vpop.xlane.xlu0 %4255
        %v4257 = vsub.f32 %v4170, %v4253
        %v4258 = vsub.f32 %v4248, %v4256
        %v4259 = vmul.f32 %v4257, 1.442695
        %v4260 = vpow.pop %v4259
        %v4261 = vmul.f32 %v4258, 1.442695
        %v4262 = vpow.pop %v4261
        %v4263 = vsel %vm3926, %v4260, 0.0
        %4264 = vadd.xlane.f32.xlu0 %v4263
        %v4265 = vpop.xlane.xlu0 %4264
        %v4266 = vsel %vm3926, %v4262, 0.0
        %4267 = vadd.xlane.f32.xlu0 %v4266
        %v4268 = vpop.xlane.xlu0 %4267
        %v4269 = vrcp.pop %v4265
        %v4270 = vrcp.pop %v4268
        %v4271 = vmul.f32 %v4260, %v4269
        %v4272 = vmul.f32 %v4262, %v4270
        %4274 = vrot.lane.b32.xlu0 %v3764, 96
        %v4275 = vpop.permute.xlu0 %4274
        %v4278 = vsel %vm3926, %v4271, 0
        %4280 = vmatprep.subr.mxu0 0.0
        %4281 = vmatpush1.msra.mxu0 %v4275
        %4282 = vmatprep.subr.mxu0 0.0
        %4283 = vmatpush1.msra.mxu0 0.0
        %4284 = vmatprep.subr.mxu0 0.0
        %4285 = vmatpush1.msra.mxu0 0.0
        %4286 = vmatprep.subr.mxu0 0.0
        %4287 = vmatpush1.msra.mxu0 0.0
        %4288 = vmatprep.subr.mxu0 0.0
        %4289 = vmatpush1.msra.mxu0 0.0
        %4290 = vmatprep.subr.mxu0 0.0
        %4291 = vmatpush1.msra.mxu0 0.0
        %4292 = vmatprep.subr.mxu0 0.0
        %4293 = vmatpush1.msra.mxu0 0.0
        %4294 = vmatprep.subr.mxu0 0.0
        %4295 = vmatpush1.msra.mxu0 0.0
        %4296 = vmatprep.subr.mxu0 0.0
        %4297 = vmatpush1.msra.mxu0 0.0
        %4298 = vmatprep.subr.mxu0 0.0
        %4299 = vmatpush1.msra.mxu0 0.0
        %4300 = vmatprep.subr.mxu0 0.0
        %4301 = vmatpush1.msra.mxu0 0.0
        %4302 = vmatprep.subr.mxu0 0.0
        %4303 = vmatpush1.msra.mxu0 0.0
        %4304 = vmatprep.subr.mxu0 0.0
        %4305 = vmatpush1.msra.mxu0 0.0
        %4306 = vmatprep.subr.mxu0 0.0
        %4307 = vmatpush1.msra.mxu0 0.0
        %4308 = vmatprep.subr.mxu0 0.0
        %4309 = vmatpush1.msra.mxu0 0.0
        %4310 = vmatprep.subr.mxu0 0.0
        %4311 = vmatpush1.msra.mxu0 0.0
        %4312 = vmatprep.subr.mxu0 0.0
        %4313 = vmatpush1.msra.mxu0 0.0
        %4314 = vmatprep.subr.mxu0 0.0
        %4315 = vmatpush1.msra.mxu0 0.0
        %4316 = vmatprep.subr.mxu0 0.0
        %4317 = vmatpush1.msra.mxu0 0.0
        %4318 = vmatprep.subr.mxu0 0.0
        %4319 = vmatpush1.msra.mxu0 0.0
        %4320 = vmatprep.subr.mxu0 0.0
        %4321 = vmatpush1.msra.mxu0 0.0
        %4322 = vmatprep.subr.mxu0 0.0
        %4323 = vmatpush1.msra.mxu0 0.0
        %4324 = vmatprep.subr.mxu0 0.0
        %4325 = vmatpush1.msra.mxu0 0.0
        %4326 = vmatprep.subr.mxu0 0.0
        %4327 = vmatpush1.msra.mxu0 0.0
        %4328 = vmatprep.subr.mxu0 0.0
        %4329 = vmatpush1.msra.mxu0 0.0
        %4330 = vmatprep.subr.mxu0 0.0
        %4331 = vmatpush1.msra.mxu0 0.0
        %4332 = vmatprep.subr.mxu0 0.0
        %4333 = vmatpush1.msra.mxu0 0.0
        %4334 = vmatprep.subr.mxu0 0.0
        %4335 = vmatpush1.msra.mxu0 0.0
        %4336 = vmatprep.subr.mxu0 0.0
        %4337 = vmatpush1.msra.mxu0 0.0
        %4338 = vmatprep.subr.mxu0 0.0
        %4339 = vmatpush1.msra.mxu0 0.0
        %4340 = vmatprep.subr.mxu0 0.0
        %4341 = vmatpush1.msra.mxu0 0.0
        %4342 = vmatprep.subr.mxu0 0.0
        %4343 = vmatpush1.msra.mxu0 0.0
        %4344 = vmatprep.mubr.f32.mxu0 0.0
        %4345 = vmatmul.mubr.f32.gmra.mrb[0].mxu0 %v4278
        %v4346 = vpop.f32.mrb[0].mxu0
        %v4347 = vadd.f32 0.0, %v4346
        %v4348 = vpop.f32.mrb[0].mxu0
        %4349 = vdwg.mxu0
        %4351 = vrot.lane.b32.xlu0 %v3767, 96
        %v4352 = vpop.permute.xlu0 %4351
        %v4355 = vsel %vm3926, %v4272, 0
        %4357 = vmatprep.subr.mxu0 0.0
        %4358 = vmatpush1.msra.mxu0 %v4352
        %4359 = vmatprep.subr.mxu0 0.0
        %4360 = vmatpush1.msra.mxu0 0.0
        %4361 = vmatprep.subr.mxu0 0.0
        %4362 = vmatpush1.msra.mxu0 0.0
        %4363 = vmatprep.subr.mxu0 0.0
        %4364 = vmatpush1.msra.mxu0 0.0
        %4365 = vmatprep.subr.mxu0 0.0
        %4366 = vmatpush1.msra.mxu0 0.0
        %4367 = vmatprep.subr.mxu0 0.0
        %4368 = vmatpush1.msra.mxu0 0.0
        %4369 = vmatprep.subr.mxu0 0.0
        %4370 = vmatpush1.msra.mxu0 0.0
        %4371 = vmatprep.subr.mxu0 0.0
        %4372 = vmatpush1.msra.mxu0 0.0
        %4373 = vmatprep.subr.mxu0 0.0
        %4374 = vmatpush1.msra.mxu0 0.0
        %4375 = vmatprep.subr.mxu0 0.0
        %4376 = vmatpush1.msra.mxu0 0.0
        %4377 = vmatprep.subr.mxu0 0.0
        %4378 = vmatpush1.msra.mxu0 0.0
        %4379 = vmatprep.subr.mxu0 0.0
        %4380 = vmatpush1.msra.mxu0 0.0
        %4381 = vmatprep.subr.mxu0 0.0
        %4382 = vmatpush1.msra.mxu0 0.0
        %4383 = vmatprep.subr.mxu0 0.0
        %4384 = vmatpush1.msra.mxu0 0.0
        %4385 = vmatprep.subr.mxu0 0.0
        %4386 = vmatpush1.msra.mxu0 0.0
        %4387 = vmatprep.subr.mxu0 0.0
        %4388 = vmatpush1.msra.mxu0 0.0
        %4389 = vmatprep.subr.mxu0 0.0
        %4390 = vmatpush1.msra.mxu0 0.0
        %4391 = vmatprep.subr.mxu0 0.0
        %4392 = vmatpush1.msra.mxu0 0.0
        %4393 = vmatprep.subr.mxu0 0.0
        %4394 = vmatpush1.msra.mxu0 0.0
        %4395 = vmatprep.subr.mxu0 0.0
        %4396 = vmatpush1.msra.mxu0 0.0
        %4397 = vmatprep.subr.mxu0 0.0
        %4398 = vmatpush1.msra.mxu0 0.0
        %4399 = vmatprep.subr.mxu0 0.0
        %4400 = vmatpush1.msra.mxu0 0.0
        %4401 = vmatprep.subr.mxu0 0.0
        %4402 = vmatpush1.msra.mxu0 0.0
        %4403 = vmatprep.subr.mxu0 0.0
        %4404 = vmatpush1.msra.mxu0 0.0
        %4405 = vmatprep.subr.mxu0 0.0
        %4406 = vmatpush1.msra.mxu0 0.0
        %4407 = vmatprep.subr.mxu0 0.0
        %4408 = vmatpush1.msra.mxu0 0.0
        %4409 = vmatprep.subr.mxu0 0.0
        %4410 = vmatpush1.msra.mxu0 0.0
        %4411 = vmatprep.subr.mxu0 0.0
        %4412 = vmatpush1.msra.mxu0 0.0
        %4413 = vmatprep.subr.mxu0 0.0
        %4414 = vmatpush1.msra.mxu0 0.0
        %4415 = vmatprep.subr.mxu0 0.0
        %4416 = vmatpush1.msra.mxu0 0.0
        %4417 = vmatprep.subr.mxu0 0.0
        %4418 = vmatpush1.msra.mxu0 0.0
        %4419 = vmatprep.subr.mxu0 0.0
        %4420 = vmatpush1.msra.mxu0 0.0
        %4421 = vmatprep.mubr.f32.mxu0 0.0
        %4422 = vmatmul.mubr.f32.gmra.mrb[0].mxu0 %v4355
        %v4423 = vpop.f32.mrb[0].mxu0
        %v4424 = vadd.f32 0.0, %v4423
        %v4425 = vpop.f32.mrb[0].mxu0
        %4426 = vdwg.mxu0
        %4427 = vrot.lane.b32.xlu0 %v3771, 64
        %v4428 = vpop.permute.xlu0 %4427
        %4429 = vrot.lane.b32.xlu0 %v3723, 64
        %v4430 = vpop.permute.xlu0 %4429
        %v4431 = vsel %vm3773, %v4428, 0
        %v4433 = vsel %vm3773, %v4430, 0
        %4435 = vmatprep.subr.mxu0 0.0
        %4436 = vmatpush1.xpose.msra.mxu0 %v4433
        %4437 = vmatprep.subr.mxu0 0.0
        %4438 = vmatpush1.xpose.msra.mxu0 0.0
        %4439 = vmatprep.subr.mxu0 0.0
        %4440 = vmatpush1.xpose.msra.mxu0 0.0
        %4441 = vmatprep.subr.mxu0 0.0
        %4442 = vmatpush1.xpose.msra.mxu0 0.0
        %4443 = vmatprep.subr.mxu0 0.0
        %4444 = vmatpush1.xpose.msra.mxu0 0.0
        %4445 = vmatprep.subr.mxu0 0.0
        %4446 = vmatpush1.xpose.msra.mxu0 0.0
        %4447 = vmatprep.subr.mxu0 0.0
        %4448 = vmatpush1.xpose.msra.mxu0 0.0
        %4449 = vmatprep.subr.mxu0 0.0
        %4450 = vmatpush1.xpose.msra.mxu0 0.0
        %4451 = vmatprep.subr.mxu0 0.0
        %4452 = vmatpush1.xpose.msra.mxu0 0.0
        %4453 = vmatprep.subr.mxu0 0.0
        %4454 = vmatpush1.xpose.msra.mxu0 0.0
        %4455 = vmatprep.subr.mxu0 0.0
        %4456 = vmatpush1.xpose.msra.mxu0 0.0
        %4457 = vmatprep.subr.mxu0 0.0
        %4458 = vmatpush1.xpose.msra.mxu0 0.0
        %4459 = vmatprep.subr.mxu0 0.0
        %4460 = vmatpush1.xpose.msra.mxu0 0.0
        %4461 = vmatprep.subr.mxu0 0.0
        %4462 = vmatpush1.xpose.msra.mxu0 0.0
        %4463 = vmatprep.subr.mxu0 0.0
        %4464 = vmatpush1.xpose.msra.mxu0 0.0
        %4465 = vmatprep.subr.mxu0 0.0
        %4466 = vmatpush1.xpose.msra.mxu0 0.0
        %4467 = vmatprep.subr.mxu0 0.0
        %4468 = vmatpush1.xpose.msra.mxu0 0.0
        %4469 = vmatprep.subr.mxu0 0.0
        %4470 = vmatpush1.xpose.msra.mxu0 0.0
        %4471 = vmatprep.subr.mxu0 0.0
        %4472 = vmatpush1.xpose.msra.mxu0 0.0
        %4473 = vmatprep.subr.mxu0 0.0
        %4474 = vmatpush1.xpose.msra.mxu0 0.0
        %4475 = vmatprep.subr.mxu0 0.0
        %4476 = vmatpush1.xpose.msra.mxu0 0.0
        %4477 = vmatprep.subr.mxu0 0.0
        %4478 = vmatpush1.xpose.msra.mxu0 0.0
        %4479 = vmatprep.subr.mxu0 0.0
        %4480 = vmatpush1.xpose.msra.mxu0 0.0
        %4481 = vmatprep.subr.mxu0 0.0
        %4482 = vmatpush1.xpose.msra.mxu0 0.0
        %4483 = vmatprep.subr.mxu0 0.0
        %4484 = vmatpush1.xpose.msra.mxu0 0.0
        %4485 = vmatprep.subr.mxu0 0.0
        %4486 = vmatpush1.xpose.msra.mxu0 0.0
        %4487 = vmatprep.subr.mxu0 0.0
        %4488 = vmatpush1.xpose.msra.mxu0 0.0
        %4489 = vmatprep.subr.mxu0 0.0
        %4490 = vmatpush1.xpose.msra.mxu0 0.0
        %4491 = vmatprep.subr.mxu0 0.0
        %4492 = vmatpush1.xpose.msra.mxu0 0.0
        %4493 = vmatprep.subr.mxu0 0.0
        %4494 = vmatpush1.xpose.msra.mxu0 0.0
        %4495 = vmatprep.subr.mxu0 0.0
        %4496 = vmatpush1.xpose.msra.mxu0 0.0
        %4497 = vmatprep.subr.mxu0 0.0
        %4498 = vmatpush1.xpose.msra.mxu0 0.0
        %4499 = vmatprep.mubr.f32.mxu0 0.0
        %4500 = vmatmul.mubr.f32.gmra.mrb[0].mxu0 %v4431
        %v4501 = vpop.f32.mrb[0].mxu0
        %v4502 = vadd.f32 %v3770, %v4501
        %v4503 = vpop.f32.mrb[0].mxu0
        %4504 = vdwg.mxu0
        %4505 = vrot.lane.b32.xlu0 %v3772, 64
        %v4506 = vpop.permute.xlu0 %4505
        %4507 = vrot.lane.b32.xlu0 %v3727, 64
        %v4508 = vpop.permute.xlu0 %4507
        %v4509 = vsel %vm3773, %v4506, 0
        %v4511 = vsel %vm3773, %v4508, 0
        %4513 = vmatprep.subr.mxu0 0.0
        %4514 = vmatpush1.xpose.msra.mxu0 %v4511
        %4515 = vmatprep.subr.mxu0 0.0
        %4516 = vmatpush1.xpose.msra.mxu0 0.0
        %4517 = vmatprep.subr.mxu0 0.0
        %4518 = vmatpush1.xpose.msra.mxu0 0.0
        %4519 = vmatprep.subr.mxu0 0.0
        %4520 = vmatpush1.xpose.msra.mxu0 0.0
        %4521 = vmatprep.subr.mxu0 0.0
        %4522 = vmatpush1.xpose.msra.mxu0 0.0
        %4523 = vmatprep.subr.mxu0 0.0
        %4524 = vmatpush1.xpose.msra.mxu0 0.0
        %4525 = vmatprep.subr.mxu0 0.0
        %4526 = vmatpush1.xpose.msra.mxu0 0.0
        %4527 = vmatprep.subr.mxu0 0.0
        %4528 = vmatpush1.xpose.msra.mxu0 0.0
        %4529 = vmatprep.subr.mxu0 0.0
        %4530 = vmatpush1.xpose.msra.mxu0 0.0
        %4531 = vmatprep.subr.mxu0 0.0
        %4532 = vmatpush1.xpose.msra.mxu0 0.0
        %4533 = vmatprep.subr.mxu0 0.0
        %4534 = vmatpush1.xpose.msra.mxu0 0.0
        %4535 = vmatprep.subr.mxu0 0.0
        %4536 = vmatpush1.xpose.msra.mxu0 0.0
        %4537 = vmatprep.subr.mxu0 0.0
        %4538 = vmatpush1.xpose.msra.mxu0 0.0
        %4539 = vmatprep.subr.mxu0 0.0
        %4540 = vmatpush1.xpose.msra.mxu0 0.0
        %4541 = vmatprep.subr.mxu0 0.0
        %4542 = vmatpush1.xpose.msra.mxu0 0.0
        %4543 = vmatprep.subr.mxu0 0.0
        %4544 = vmatpush1.xpose.msra.mxu0 0.0
        %4545 = vmatprep.subr.mxu0 0.0
        %4546 = vmatpush1.xpose.msra.mxu0 0.0
        %4547 = vmatprep.subr.mxu0 0.0
        %4548 = vmatpush1.xpose.msra.mxu0 0.0
        %4549 = vmatprep.subr.mxu0 0.0
        %4550 = vmatpush1.xpose.msra.mxu0 0.0
        %4551 = vmatprep.subr.mxu0 0.0
        %4552 = vmatpush1.xpose.msra.mxu0 0.0
        %4553 = vmatprep.subr.mxu0 0.0
        %4554 = vmatpush1.xpose.msra.mxu0 0.0
        %4555 = vmatprep.subr.mxu0 0.0
        %4556 = vmatpush1.xpose.msra.mxu0 0.0
        %4557 = vmatprep.subr.mxu0 0.0
        %4558 = vmatpush1.xpose.msra.mxu0 0.0
        %4559 = vmatprep.subr.mxu0 0.0
        %4560 = vmatpush1.xpose.msra.mxu0 0.0
        %4561 = vmatprep.subr.mxu0 0.0
        %4562 = vmatpush1.xpose.msra.mxu0 0.0
        %4563 = vmatprep.subr.mxu0 0.0
        %4564 = vmatpush1.xpose.msra.mxu0 0.0
        %4565 = vmatprep.subr.mxu0 0.0
        %4566 = vmatpush1.xpose.msra.mxu0 0.0
        %4567 = vmatprep.subr.mxu0 0.0
        %4568 = vmatpush1.xpose.msra.mxu0 0.0
        %4569 = vmatprep.subr.mxu0 0.0
        %4570 = vmatpush1.xpose.msra.mxu0 0.0
        %4571 = vmatprep.subr.mxu0 0.0
        %4572 = vmatpush1.xpose.msra.mxu0 0.0
        %4573 = vmatprep.subr.mxu0 0.0
        %4574 = vmatpush1.xpose.msra.mxu0 0.0
        %4575 = vmatprep.subr.mxu0 0.0
        %4576 = vmatpush1.xpose.msra.mxu0 0.0
        %4577 = vmatprep.mubr.f32.mxu0 0.0
        %4578 = vmatmul.mubr.f32.gmra.mrb[0].mxu0 %v4509
        %v4579 = vpop.f32.mrb[0].mxu0
        %v4580 = vadd.f32 %v3770, %v4579
        %v4581 = vpop.f32.mrb[0].mxu0
        %4582 = vdwg.mxu0
        %v4583 = vsel %vm3926, %v4502, -inf
        %4584 = vmax.xlane.f32.xlu0 %v4583
        %v4585 = vpop.xlane.xlu0 %4584
        %v4586 = vsel %vm3926, %v4580, -inf
        %4587 = vmax.xlane.f32.xlu0 %v4586
        %v4588 = vpop.xlane.xlu0 %4587
        %v4589 = vsub.f32 %v4502, %v4585
        %v4590 = vsub.f32 %v4580, %v4588
        %v4591 = vmul.f32 %v4589, 1.442695
        %v4592 = vpow.pop %v4591
        %v4593 = vmul.f32 %v4590, 1.442695
        %v4594 = vpow.pop %v4593
        %v4595 = vsel %vm3926, %v4592, 0.0
        %4596 = vadd.xlane.f32.xlu0 %v4595
        %v4597 = vpop.xlane.xlu0 %4596
        %v4598 = vsel %vm3926, %v4594, 0.0
        %4599 = vadd.xlane.f32.xlu0 %v4598
        %v4600 = vpop.xlane.xlu0 %4599
        %v4601 = vrcp.pop %v4597
        %v4602 = vrcp.pop %v4600
        %v4603 = vmul.f32 %v4592, %v4601
        %v4604 = vmul.f32 %v4594, %v4602
        %4605 = vrot.lane.b32.xlu0 %v3764, 64
        %v4606 = vpop.permute.xlu0 %4605
        %v4609 = vsel %vm3926, %v4603, 0
        %4611 = vmatprep.subr.mxu0 0.0
        %4612 = vmatpush1.msra.mxu0 %v4606
        %4613 = vmatprep.subr.mxu0 0.0
        %4614 = vmatpush1.msra.mxu0 0.0
        %4615 = vmatprep.subr.mxu0 0.0
        %4616 = vmatpush1.msra.mxu0 0.0
        %4617 = vmatprep.subr.mxu0 0.0
        %4618 = vmatpush1.msra.mxu0 0.0
        %4619 = vmatprep.subr.mxu0 0.0
        %4620 = vmatpush1.msra.mxu0 0.0
        %4621 = vmatprep.subr.mxu0 0.0
        %4622 = vmatpush1.msra.mxu0 0.0
        %4623 = vmatprep.subr.mxu0 0.0
        %4624 = vmatpush1.msra.mxu0 0.0
        %4625 = vmatprep.subr.mxu0 0.0
        %4626 = vmatpush1.msra.mxu0 0.0
        %4627 = vmatprep.subr.mxu0 0.0
        %4628 = vmatpush1.msra.mxu0 0.0
        %4629 = vmatprep.subr.mxu0 0.0
        %4630 = vmatpush1.msra.mxu0 0.0
        %4631 = vmatprep.subr.mxu0 0.0
        %4632 = vmatpush1.msra.mxu0 0.0
        %4633 = vmatprep.subr.mxu0 0.0
        %4634 = vmatpush1.msra.mxu0 0.0
        %4635 = vmatprep.subr.mxu0 0.0
        %4636 = vmatpush1.msra.mxu0 0.0
        %4637 = vmatprep.subr.mxu0 0.0
        %4638 = vmatpush1.msra.mxu0 0.0
        %4639 = vmatprep.subr.mxu0 0.0
        %4640 = vmatpush1.msra.mxu0 0.0
        %4641 = vmatprep.subr.mxu0 0.0
        %4642 = vmatpush1.msra.mxu0 0.0
        %4643 = vmatprep.subr.mxu0 0.0
        %4644 = vmatpush1.msra.mxu0 0.0
        %4645 = vmatprep.subr.mxu0 0.0
        %4646 = vmatpush1.msra.mxu0 0.0
        %4647 = vmatprep.subr.mxu0 0.0
        %4648 = vmatpush1.msra.mxu0 0.0
        %4649 = vmatprep.subr.mxu0 0.0
        %4650 = vmatpush1.msra.mxu0 0.0
        %4651 = vmatprep.subr.mxu0 0.0
        %4652 = vmatpush1.msra.mxu0 0.0
        %4653 = vmatprep.subr.mxu0 0.0
        %4654 = vmatpush1.msra.mxu0 0.0
        %4655 = vmatprep.subr.mxu0 0.0
        %4656 = vmatpush1.msra.mxu0 0.0
        %4657 = vmatprep.subr.mxu0 0.0
        %4658 = vmatpush1.msra.mxu0 0.0
        %4659 = vmatprep.subr.mxu0 0.0
        %4660 = vmatpush1.msra.mxu0 0.0
        %4661 = vmatprep.subr.mxu0 0.0
        %4662 = vmatpush1.msra.mxu0 0.0
        %4663 = vmatprep.subr.mxu0 0.0
        %4664 = vmatpush1.msra.mxu0 0.0
        %4665 = vmatprep.subr.mxu0 0.0
        %4666 = vmatpush1.msra.mxu0 0.0
        %4667 = vmatprep.subr.mxu0 0.0
        %4668 = vmatpush1.msra.mxu0 0.0
        %4669 = vmatprep.subr.mxu0 0.0
        %4670 = vmatpush1.msra.mxu0 0.0
        %4671 = vmatprep.subr.mxu0 0.0
        %4672 = vmatpush1.msra.mxu0 0.0
        %4673 = vmatprep.subr.mxu0 0.0
        %4674 = vmatpush1.msra.mxu0 0.0
        %4675 = vmatprep.mubr.f32.mxu0 0.0
        %4676 = vmatmul.mubr.f32.gmra.mrb[0].mxu0 %v4609
        %v4677 = vpop.f32.mrb[0].mxu0
        %v4678 = vadd.f32 0.0, %v4677
        %v4679 = vpop.f32.mrb[0].mxu0
        %4680 = vdwg.mxu0
        %4681 = vrot.lane.b32.xlu0 %v3767, 64
        %v4682 = vpop.permute.xlu0 %4681
        %v4685 = vsel %vm3926, %v4604, 0
        %4687 = vmatprep.subr.mxu0 0.0
        %4688 = vmatpush1.msra.mxu0 %v4682
        %4689 = vmatprep.subr.mxu0 0.0
        %4690 = vmatpush1.msra.mxu0 0.0
        %4691 = vmatprep.subr.mxu0 0.0
        %4692 = vmatpush1.msra.mxu0 0.0
        %4693 = vmatprep.subr.mxu0 0.0
        %4694 = vmatpush1.msra.mxu0 0.0
        %4695 = vmatprep.subr.mxu0 0.0
        %4696 = vmatpush1.msra.mxu0 0.0
        %4697 = vmatprep.subr.mxu0 0.0
        %4698 = vmatpush1.msra.mxu0 0.0
        %4699 = vmatprep.subr.mxu0 0.0
        %4700 = vmatpush1.msra.mxu0 0.0
        %4701 = vmatprep.subr.mxu0 0.0
        %4702 = vmatpush1.msra.mxu0 0.0
        %4703 = vmatprep.subr.mxu0 0.0
        %4704 = vmatpush1.msra.mxu0 0.0
        %4705 = vmatprep.subr.mxu0 0.0
        %4706 = vmatpush1.msra.mxu0 0.0
        %4707 = vmatprep.subr.mxu0 0.0
        %4708 = vmatpush1.msra.mxu0 0.0
        %4709 = vmatprep.subr.mxu0 0.0
        %4710 = vmatpush1.msra.mxu0 0.0
        %4711 = vmatprep.subr.mxu0 0.0
        %4712 = vmatpush1.msra.mxu0 0.0
        %4713 = vmatprep.subr.mxu0 0.0
        %4714 = vmatpush1.msra.mxu0 0.0
        %4715 = vmatprep.subr.mxu0 0.0
        %4716 = vmatpush1.msra.mxu0 0.0
        %4717 = vmatprep.subr.mxu0 0.0
        %4718 = vmatpush1.msra.mxu0 0.0
        %4719 = vmatprep.subr.mxu0 0.0
        %4720 = vmatpush1.msra.mxu0 0.0
        %4721 = vmatprep.subr.mxu0 0.0
        %4722 = vmatpush1.msra.mxu0 0.0
        %4723 = vmatprep.subr.mxu0 0.0
        %4724 = vmatpush1.msra.mxu0 0.0
        %4725 = vmatprep.subr.mxu0 0.0
        %4726 = vmatpush1.msra.mxu0 0.0
        %4727 = vmatprep.subr.mxu0 0.0
        %4728 = vmatpush1.msra.mxu0 0.0
        %4729 = vmatprep.subr.mxu0 0.0
        %4730 = vmatpush1.msra.mxu0 0.0
        %4731 = vmatprep.subr.mxu0 0.0
        %4732 = vmatpush1.msra.mxu0 0.0
        %4733 = vmatprep.subr.mxu0 0.0
        %4734 = vmatpush1.msra.mxu0 0.0
        %4735 = vmatprep.subr.mxu0 0.0
        %4736 = vmatpush1.msra.mxu0 0.0
        %4737 = vmatprep.subr.mxu0 0.0
        %4738 = vmatpush1.msra.mxu0 0.0
        %4739 = vmatprep.subr.mxu0 0.0
        %4740 = vmatpush1.msra.mxu0 0.0
        %4741 = vmatprep.subr.mxu0 0.0
        %4742 = vmatpush1.msra.mxu0 0.0
        %4743 = vmatprep.subr.mxu0 0.0
        %4744 = vmatpush1.msra.mxu0 0.0
        %4745 = vmatprep.subr.mxu0 0.0
        %4746 = vmatpush1.msra.mxu0 0.0
        %4747 = vmatprep.subr.mxu0 0.0
        %4748 = vmatpush1.msra.mxu0 0.0
        %4749 = vmatprep.subr.mxu0 0.0
        %4750 = vmatpush1.msra.mxu0 0.0
        %4751 = vmatprep.mubr.f32.mxu0 0.0
        %4752 = vmatmul.mubr.f32.gmra.mrb[0].mxu0 %v4685
        %v4753 = vpop.f32.mrb[0].mxu0
        %v4754 = vadd.f32 0.0, %v4753
        %v4755 = vpop.f32.mrb[0].mxu0
        %4756 = vdwg.mxu0
        %4757 = vrot.lane.b32.xlu0 %v3771, 32
        %v4758 = vpop.permute.xlu0 %4757
        %4759 = vrot.lane.b32.xlu0 %v3723, 32
        %v4760 = vpop.permute.xlu0 %4759
        %v4761 = vsel %vm3773, %v4758, 0
        %v4763 = vsel %vm3773, %v4760, 0
        %4765 = vmatprep.subr.mxu0 0.0
        %4766 = vmatpush1.xpose.msra.mxu0 %v4763
        %4767 = vmatprep.subr.mxu0 0.0
        %4768 = vmatpush1.xpose.msra.mxu0 0.0
        %4769 = vmatprep.subr.mxu0 0.0
        %4770 = vmatpush1.xpose.msra.mxu0 0.0
        %4771 = vmatprep.subr.mxu0 0.0
        %4772 = vmatpush1.xpose.msra.mxu0 0.0
        %4773 = vmatprep.subr.mxu0 0.0
        %4774 = vmatpush1.xpose.msra.mxu0 0.0
        %4775 = vmatprep.subr.mxu0 0.0
        %4776 = vmatpush1.xpose.msra.mxu0 0.0
        %4777 = vmatprep.subr.mxu0 0.0
        %4778 = vmatpush1.xpose.msra.mxu0 0.0
        %4779 = vmatprep.subr.mxu0 0.0
        %4780 = vmatpush1.xpose.msra.mxu0 0.0
        %4781 = vmatprep.subr.mxu0 0.0
        %4782 = vmatpush1.xpose.msra.mxu0 0.0
        %4783 = vmatprep.subr.mxu0 0.0
        %4784 = vmatpush1.xpose.msra.mxu0 0.0
        %4785 = vmatprep.subr.mxu0 0.0
        %4786 = vmatpush1.xpose.msra.mxu0 0.0
        %4787 = vmatprep.subr.mxu0 0.0
        %4788 = vmatpush1.xpose.msra.mxu0 0.0
        %4789 = vmatprep.subr.mxu0 0.0
        %4790 = vmatpush1.xpose.msra.mxu0 0.0
        %4791 = vmatprep.subr.mxu0 0.0
        %4792 = vmatpush1.xpose.msra.mxu0 0.0
        %4793 = vmatprep.subr.mxu0 0.0
        %4794 = vmatpush1.xpose.msra.mxu0 0.0
        %4795 = vmatprep.subr.mxu0 0.0
        %4796 = vmatpush1.xpose.msra.mxu0 0.0
        %4797 = vmatprep.subr.mxu0 0.0
        %4798 = vmatpush1.xpose.msra.mxu0 0.0
        %4799 = vmatprep.subr.mxu0 0.0
        %4800 = vmatpush1.xpose.msra.mxu0 0.0
        %4801 = vmatprep.subr.mxu0 0.0
        %4802 = vmatpush1.xpose.msra.mxu0 0.0
        %4803 = vmatprep.subr.mxu0 0.0
        %4804 = vmatpush1.xpose.msra.mxu0 0.0
        %4805 = vmatprep.subr.mxu0 0.0
        %4806 = vmatpush1.xpose.msra.mxu0 0.0
        %4807 = vmatprep.subr.mxu0 0.0
        %4808 = vmatpush1.xpose.msra.mxu0 0.0
        %4809 = vmatprep.subr.mxu0 0.0
        %4810 = vmatpush1.xpose.msra.mxu0 0.0
        %4811 = vmatprep.subr.mxu0 0.0
        %4812 = vmatpush1.xpose.msra.mxu0 0.0
        %4813 = vmatprep.subr.mxu0 0.0
        %4814 = vmatpush1.xpose.msra.mxu0 0.0
        %4815 = vmatprep.subr.mxu0 0.0
        %4816 = vmatpush1.xpose.msra.mxu0 0.0
        %4817 = vmatprep.subr.mxu0 0.0
        %4818 = vmatpush1.xpose.msra.mxu0 0.0
        %4819 = vmatprep.subr.mxu0 0.0
        %4820 = vmatpush1.xpose.msra.mxu0 0.0
        %4821 = vmatprep.subr.mxu0 0.0
        %4822 = vmatpush1.xpose.msra.mxu0 0.0
        %4823 = vmatprep.subr.mxu0 0.0
        %4824 = vmatpush1.xpose.msra.mxu0 0.0
        %4825 = vmatprep.subr.mxu0 0.0
        %4826 = vmatpush1.xpose.msra.mxu0 0.0
        %4827 = vmatprep.subr.mxu0 0.0
        %4828 = vmatpush1.xpose.msra.mxu0 0.0
        %4829 = vmatprep.mubr.f32.mxu0 0.0
        %4830 = vmatmul.mubr.f32.gmra.mrb[0].mxu0 %v4761
        %v4831 = vpop.f32.mrb[0].mxu0
        %v4832 = vadd.f32 %v3770, %v4831
        %v4833 = vpop.f32.mrb[0].mxu0
        %4834 = vdwg.mxu0
        %4835 = vrot.lane.b32.xlu0 %v3772, 32
        %v4836 = vpop.permute.xlu0 %4835
        %4837 = vrot.lane.b32.xlu0 %v3727, 32
        %v4838 = vpop.permute.xlu0 %4837
        %v4839 = vsel %vm3773, %v4836, 0
        %v4841 = vsel %vm3773, %v4838, 0
        %4843 = vmatprep.subr.mxu0 0.0
        %4844 = vmatpush1.xpose.msra.mxu0 %v4841
        %4845 = vmatprep.subr.mxu0 0.0
        %4846 = vmatpush1.xpose.msra.mxu0 0.0
        %4847 = vmatprep.subr.mxu0 0.0
        %4848 = vmatpush1.xpose.msra.mxu0 0.0
        %4849 = vmatprep.subr.mxu0 0.0
        %4850 = vmatpush1.xpose.msra.mxu0 0.0
        %4851 = vmatprep.subr.mxu0 0.0
        %4852 = vmatpush1.xpose.msra.mxu0 0.0
        %4853 = vmatprep.subr.mxu0 0.0
        %4854 = vmatpush1.xpose.msra.mxu0 0.0
        %4855 = vmatprep.subr.mxu0 0.0
        %4856 = vmatpush1.xpose.msra.mxu0 0.0
        %4857 = vmatprep.subr.mxu0 0.0
        %4858 = vmatpush1.xpose.msra.mxu0 0.0
        %4859 = vmatprep.subr.mxu0 0.0
        %4860 = vmatpush1.xpose.msra.mxu0 0.0
        %4861 = vmatprep.subr.mxu0 0.0
        %4862 = vmatpush1.xpose.msra.mxu0 0.0
        %4863 = vmatprep.subr.mxu0 0.0
        %4864 = vmatpush1.xpose.msra.mxu0 0.0
        %4865 = vmatprep.subr.mxu0 0.0
        %4866 = vmatpush1.xpose.msra.mxu0 0.0
        %4867 = vmatprep.subr.mxu0 0.0
        %4868 = vmatpush1.xpose.msra.mxu0 0.0
        %4869 = vmatprep.subr.mxu0 0.0
        %4870 = vmatpush1.xpose.msra.mxu0 0.0
        %4871 = vmatprep.subr.mxu0 0.0
        %4872 = vmatpush1.xpose.msra.mxu0 0.0
        %4873 = vmatprep.subr.mxu0 0.0
        %4874 = vmatpush1.xpose.msra.mxu0 0.0
        %4875 = vmatprep.subr.mxu0 0.0
        %4876 = vmatpush1.xpose.msra.mxu0 0.0
        %4877 = vmatprep.subr.mxu0 0.0
        %4878 = vmatpush1.xpose.msra.mxu0 0.0
        %4879 = vmatprep.subr.mxu0 0.0
        %4880 = vmatpush1.xpose.msra.mxu0 0.0
        %4881 = vmatprep.subr.mxu0 0.0
        %4882 = vmatpush1.xpose.msra.mxu0 0.0
        %4883 = vmatprep.subr.mxu0 0.0
        %4884 = vmatpush1.xpose.msra.mxu0 0.0
        %4885 = vmatprep.subr.mxu0 0.0
        %4886 = vmatpush1.xpose.msra.mxu0 0.0
        %4887 = vmatprep.subr.mxu0 0.0
        %4888 = vmatpush1.xpose.msra.mxu0 0.0
        %4889 = vmatprep.subr.mxu0 0.0
        %4890 = vmatpush1.xpose.msra.mxu0 0.0
        %4891 = vmatprep.subr.mxu0 0.0
        %4892 = vmatpush1.xpose.msra.mxu0 0.0
        %4893 = vmatprep.subr.mxu0 0.0
        %4894 = vmatpush1.xpose.msra.mxu0 0.0
        %4895 = vmatprep.subr.mxu0 0.0
        %4896 = vmatpush1.xpose.msra.mxu0 0.0
        %4897 = vmatprep.subr.mxu0 0.0
        %4898 = vmatpush1.xpose.msra.mxu0 0.0
        %4899 = vmatprep.subr.mxu0 0.0
        %4900 = vmatpush1.xpose.msra.mxu0 0.0
        %4901 = vmatprep.subr.mxu0 0.0
        %4902 = vmatpush1.xpose.msra.mxu0 0.0
        %4903 = vmatprep.subr.mxu0 0.0
        %4904 = vmatpush1.xpose.msra.mxu0 0.0
        %4905 = vmatprep.subr.mxu0 0.0
        %4906 = vmatpush1.xpose.msra.mxu0 0.0
        %4907 = vmatprep.mubr.f32.mxu0 0.0
        %4908 = vmatmul.mubr.f32.gmra.mrb[0].mxu0 %v4839
        %v4909 = vpop.f32.mrb[0].mxu0
        %v4910 = vadd.f32 %v3770, %v4909
        %v4911 = vpop.f32.mrb[0].mxu0
        %4912 = vdwg.mxu0
        %v4913 = vsel %vm3926, %v4832, -inf
        %4914 = vmax.xlane.f32.xlu0 %v4913
        %v4915 = vpop.xlane.xlu0 %4914
        %v4916 = vsel %vm3926, %v4910, -inf
        %4917 = vmax.xlane.f32.xlu0 %v4916
        %v4918 = vpop.xlane.xlu0 %4917
        %v4919 = vsub.f32 %v4832, %v4915
        %v4920 = vsub.f32 %v4910, %v4918
        %v4921 = vmul.f32 %v4919, 1.442695
        %v4922 = vpow.pop %v4921
        %v4923 = vmul.f32 %v4920, 1.442695
        %v4924 = vpow.pop %v4923
        %v4925 = vsel %vm3926, %v4922, 0.0
        %4926 = vadd.xlane.f32.xlu0 %v4925
        %v4927 = vpop.xlane.xlu0 %4926
        %v4928 = vsel %vm3926, %v4924, 0.0
        %4929 = vadd.xlane.f32.xlu0 %v4928
        %v4930 = vpop.xlane.xlu0 %4929
        %v4931 = vrcp.pop %v4927
        %v4932 = vrcp.pop %v4930
        %v4933 = vmul.f32 %v4922, %v4931
        %v4934 = vmul.f32 %v4924, %v4932
        %4935 = vrot.lane.b32.xlu0 %v3764, 32
        %v4936 = vpop.permute.xlu0 %4935
        %v4939 = vsel %vm3926, %v4933, 0
        %4941 = vmatprep.subr.mxu0 0.0
        %4942 = vmatpush1.msra.mxu0 %v4936
        %4943 = vmatprep.subr.mxu0 0.0
        %4944 = vmatpush1.msra.mxu0 0.0
        %4945 = vmatprep.subr.mxu0 0.0
        %4946 = vmatpush1.msra.mxu0 0.0
        %4947 = vmatprep.subr.mxu0 0.0
        %4948 = vmatpush1.msra.mxu0 0.0
        %4949 = vmatprep.subr.mxu0 0.0
        %4950 = vmatpush1.msra.mxu0 0.0
        %4951 = vmatprep.subr.mxu0 0.0
        %4952 = vmatpush1.msra.mxu0 0.0
        %4953 = vmatprep.subr.mxu0 0.0
        %4954 = vmatpush1.msra.mxu0 0.0
        %4955 = vmatprep.subr.mxu0 0.0
        %4956 = vmatpush1.msra.mxu0 0.0
        %4957 = vmatprep.subr.mxu0 0.0
        %4958 = vmatpush1.msra.mxu0 0.0
        %4959 = vmatprep.subr.mxu0 0.0
        %4960 = vmatpush1.msra.mxu0 0.0
        %4961 = vmatprep.subr.mxu0 0.0
        %4962 = vmatpush1.msra.mxu0 0.0
        %4963 = vmatprep.subr.mxu0 0.0
        %4964 = vmatpush1.msra.mxu0 0.0
        %4965 = vmatprep.subr.mxu0 0.0
        %4966 = vmatpush1.msra.mxu0 0.0
        %4967 = vmatprep.subr.mxu0 0.0
        %4968 = vmatpush1.msra.mxu0 0.0
        %4969 = vmatprep.subr.mxu0 0.0
        %4970 = vmatpush1.msra.mxu0 0.0
        %4971 = vmatprep.subr.mxu0 0.0
        %4972 = vmatpush1.msra.mxu0 0.0
        %4973 = vmatprep.subr.mxu0 0.0
        %4974 = vmatpush1.msra.mxu0 0.0
        %4975 = vmatprep.subr.mxu0 0.0
        %4976 = vmatpush1.msra.mxu0 0.0
        %4977 = vmatprep.subr.mxu0 0.0
        %4978 = vmatpush1.msra.mxu0 0.0
        %4979 = vmatprep.subr.mxu0 0.0
        %4980 = vmatpush1.msra.mxu0 0.0
        %4981 = vmatprep.subr.mxu0 0.0
        %4982 = vmatpush1.msra.mxu0 0.0
        %4983 = vmatprep.subr.mxu0 0.0
        %4984 = vmatpush1.msra.mxu0 0.0
        %4985 = vmatprep.subr.mxu0 0.0
        %4986 = vmatpush1.msra.mxu0 0.0
        %4987 = vmatprep.subr.mxu0 0.0
        %4988 = vmatpush1.msra.mxu0 0.0
        %4989 = vmatprep.subr.mxu0 0.0
        %4990 = vmatpush1.msra.mxu0 0.0
        %4991 = vmatprep.subr.mxu0 0.0
        %4992 = vmatpush1.msra.mxu0 0.0
        %4993 = vmatprep.subr.mxu0 0.0
        %4994 = vmatpush1.msra.mxu0 0.0
        %4995 = vmatprep.subr.mxu0 0.0
        %4996 = vmatpush1.msra.mxu0 0.0
        %4997 = vmatprep.subr.mxu0 0.0
        %4998 = vmatpush1.msra.mxu0 0.0
        %4999 = vmatprep.subr.mxu0 0.0
        %5000 = vmatpush1.msra.mxu0 0.0
        %5001 = vmatprep.subr.mxu0 0.0
        %5002 = vmatpush1.msra.mxu0 0.0
        %5003 = vmatprep.subr.mxu0 0.0
        %5004 = vmatpush1.msra.mxu0 0.0
        %5005 = vmatprep.mubr.f32.mxu0 0.0
        %5006 = vmatmul.mubr.f32.gmra.mrb[0].mxu0 %v4939
        %v5007 = vpop.f32.mrb[0].mxu0
        %v5008 = vadd.f32 0.0, %v5007
        %v5009 = vpop.f32.mrb[0].mxu0
        %5010 = vdwg.mxu0
        %5011 = vrot.lane.b32.xlu0 %v3767, 32
        %v5012 = vpop.permute.xlu0 %5011
        %v5015 = vsel %vm3926, %v4934, 0
        %5017 = vmatprep.subr.mxu0 0.0
        %5018 = vmatpush1.msra.mxu0 %v5012
        %5019 = vmatprep.subr.mxu0 0.0
        %5020 = vmatpush1.msra.mxu0 0.0
        %5021 = vmatprep.subr.mxu0 0.0
        %5022 = vmatpush1.msra.mxu0 0.0
        %5023 = vmatprep.subr.mxu0 0.0
        %5024 = vmatpush1.msra.mxu0 0.0
        %5025 = vmatprep.subr.mxu0 0.0
        %5026 = vmatpush1.msra.mxu0 0.0
        %5027 = vmatprep.subr.mxu0 0.0
        %5028 = vmatpush1.msra.mxu0 0.0
        %5029 = vmatprep.subr.mxu0 0.0
        %5030 = vmatpush1.msra.mxu0 0.0
        %5031 = vmatprep.subr.mxu0 0.0
        %5032 = vmatpush1.msra.mxu0 0.0
        %5033 = vmatprep.subr.mxu0 0.0
        %5034 = vmatpush1.msra.mxu0 0.0
        %5035 = vmatprep.subr.mxu0 0.0
        %5036 = vmatpush1.msra.mxu0 0.0
        %5037 = vmatprep.subr.mxu0 0.0
        %5038 = vmatpush1.msra.mxu0 0.0
        %5039 = vmatprep.subr.mxu0 0.0
        %5040 = vmatpush1.msra.mxu0 0.0
        %5041 = vmatprep.subr.mxu0 0.0
        %5042 = vmatpush1.msra.mxu0 0.0
        %5043 = vmatprep.subr.mxu0 0.0
        %5044 = vmatpush1.msra.mxu0 0.0
        %5045 = vmatprep.subr.mxu0 0.0
        %5046 = vmatpush1.msra.mxu0 0.0
        %5047 = vmatprep.subr.mxu0 0.0
        %5048 = vmatpush1.msra.mxu0 0.0
        %5049 = vmatprep.subr.mxu0 0.0
        %5050 = vmatpush1.msra.mxu0 0.0
        %5051 = vmatprep.subr.mxu0 0.0
        %5052 = vmatpush1.msra.mxu0 0.0
        %5053 = vmatprep.subr.mxu0 0.0
        %5054 = vmatpush1.msra.mxu0 0.0
        %5055 = vmatprep.subr.mxu0 0.0
        %5056 = vmatpush1.msra.mxu0 0.0
        %5057 = vmatprep.subr.mxu0 0.0
        %5058 = vmatpush1.msra.mxu0 0.0
        %5059 = vmatprep.subr.mxu0 0.0
        %5060 = vmatpush1.msra.mxu0 0.0
        %5061 = vmatprep.subr.mxu0 0.0
        %5062 = vmatpush1.msra.mxu0 0.0
        %5063 = vmatprep.subr.mxu0 0.0
        %5064 = vmatpush1.msra.mxu0 0.0
        %5065 = vmatprep.subr.mxu0 0.0
        %5066 = vmatpush1.msra.mxu0 0.0
        %5067 = vmatprep.subr.mxu0 0.0
        %5068 = vmatpush1.msra.mxu0 0.0
        %5069 = vmatprep.subr.mxu0 0.0
        %5070 = vmatpush1.msra.mxu0 0.0
        %5071 = vmatprep.subr.mxu0 0.0
        %5072 = vmatpush1.msra.mxu0 0.0
        %5073 = vmatprep.subr.mxu0 0.0
        %5074 = vmatpush1.msra.mxu0 0.0
        %5075 = vmatprep.subr.mxu0 0.0
        %5076 = vmatpush1.msra.mxu0 0.0
        %5077 = vmatprep.subr.mxu0 0.0
        %5078 = vmatpush1.msra.mxu0 0.0
        %5079 = vmatprep.subr.mxu0 0.0
        %5080 = vmatpush1.msra.mxu0 0.0
        %5081 = vmatprep.mubr.f32.mxu0 0.0
        %5082 = vmatmul.mubr.f32.gmra.mrb[0].mxu0 %v5015
        %v5083 = vpop.f32.mrb[0].mxu0
        %v5084 = vadd.f32 0.0, %v5083
        %v5085 = vpop.f32.mrb[0].mxu0
        %5086 = vdwg.mxu0
        %5089 = vrot.lane.b32.xlu0 %v4347, 32
        %v5090 = vpop.permute.xlu0 %5089
        %5091 = vrot.lane.b32.xlu0 %v4424, 32
        %v5092 = vpop.permute.xlu0 %5091
        %5097 = vrot.lane.b32.xlu0 %v4678, 64
        %v5098 = vpop.permute.xlu0 %5097
        %5099 = vrot.lane.b32.xlu0 %v4754, 64
        %v5100 = vpop.permute.xlu0 %5099
        %5105 = vrot.lane.b32.xlu0 %v5008, 96
        %v5106 = vpop.permute.xlu0 %5105
        %5107 = vrot.lane.b32.xlu0 %v5084, 96
        %v5108 = vpop.permute.xlu0 %5107
        %v5111 = vsel %vm3773, %v4019, %v5090
        %v5112 = vsel %vm3773, %v4092, %v5092
        %vm5113 = vcmask 523264
        %v5114 = vsel %vm5113, %v5111, %v5098
        %v5115 = vsel %vm5113, %v5112, %v5100
        %vm5116 = vcmask 785408
        %v5117 = vsel %vm5116, %v5114, %v5106
        %v5118 = vsel %vm5116, %v5115, %v5108
        %v5119 = vpack.c.bf16 %v5118, %v5117
        %v5120 = vld [vmem:[%s1084] sm:$0xf]
        %v5121 = vld [vmem:[%s1084 + $0x4] sm:$0xf]
        %v5122 = vld [vmem:[%s1084 + $0x8] sm:$0xf]
        %v5123 = vld [vmem:[%s1084 + $0xc] sm:$0xf]
        %v5124 = vld [vmem:[%s1084 + $0x10] sm:$0xf]
        %v5125 = vld [vmem:[%s1084 + $0x14] sm:$0xf]
        %v5126 = vld [vmem:[%s1084 + $0x18] sm:$0xf]
        %v5127 = vld [vmem:[%s1084 + $0x1c] sm:$0xf]
        %v5128 = vld [vmem:[%s1084 + $0x20] sm:$0xf]
        %v5129 = vld [vmem:[%s1084 + $0x24] sm:$0xf]
        %v5130 = vld [vmem:[%s1084 + $0x28] sm:$0xf]
        %v5131 = vld [vmem:[%s1084 + $0x2c] sm:$0xf]
        %v5132 = vld [vmem:[%s1084 + $0x30] sm:$0xf]
        %v5133 = vld [vmem:[%s1084 + $0x34] sm:$0xf]
        %v5134 = vld [vmem:[%s1084 + $0x38] sm:$0xf]
        %v5135 = vld [vmem:[%s1084 + $0x3c] sm:$0xf]
        %v5136 = vld [vmem:[%s1092] sm:$0x1]
        %v5138 = vlaneseq
        %v5139 = vshrl.u32 %v5138, 7
        %v5140 = vsub.s32 0, %v5139
        %v5141 = vrot.slane %v5136, %v5140
        %v5159 = vunpack.c.l.b16 %v5120
        %v5160 = vunpack.c.l.b16 %v5121
        %v5161 = vunpack.c.l.b16 %v5122
        %v5162 = vunpack.c.l.b16 %v5123
        %v5163 = vunpack.c.l.b16 %v5124
        %v5164 = vunpack.c.l.b16 %v5125
        %v5165 = vunpack.c.l.b16 %v5126
        %v5166 = vunpack.c.l.b16 %v5127
        %v5167 = vunpack.c.l.b16 %v5128
        %v5168 = vunpack.c.l.b16 %v5129
        %v5169 = vunpack.c.l.b16 %v5130
        %v5170 = vunpack.c.l.b16 %v5131
        %v5171 = vunpack.c.l.b16 %v5132
        %v5172 = vunpack.c.l.b16 %v5133
        %v5173 = vunpack.c.l.b16 %v5134
        %v5174 = vunpack.c.l.b16 %v5135
        %v5175 = vpack.c.b16 %v5160, %v5159
        %v5176 = vpack.c.b16 %v5162, %v5161
        %v5177 = vpack.c.b16 %v5164, %v5163
        %v5178 = vpack.c.b16 %v5166, %v5165
        %v5179 = vpack.c.b16 %v5168, %v5167
        %v5180 = vpack.c.b16 %v5170, %v5169
        %v5181 = vpack.c.b16 %v5172, %v5171
        %v5182 = vpack.c.b16 %v5174, %v5173
        %5191 = vmatprep.subr.bf16.mxu0 0
        %5192 = vmatpush1.bf16.msra.mxu0 %v5175
        %5193 = vmatprep.subr.bf16.mxu0 0
        %5194 = vmatpush1.bf16.msra.mxu0 %v5176
        %5195 = vmatprep.subr.bf16.mxu0 0
        %5196 = vmatpush1.bf16.msra.mxu0 %v5177
        %5197 = vmatprep.subr.bf16.mxu0 0
        %5198 = vmatpush1.bf16.msra.mxu0 %v5178
        %5199 = vmatprep.subr.bf16.mxu0 0
        %5200 = vmatpush1.bf16.msra.mxu0 %v5179
        %5201 = vmatprep.subr.bf16.mxu0 0
        %5202 = vmatpush1.bf16.msra.mxu0 %v5180
        %5203 = vmatprep.subr.bf16.mxu0 0
        %5204 = vmatpush1.bf16.msra.mxu0 %v5181
        %5205 = vmatprep.subr.bf16.mxu0 0
        %5206 = vmatpush1.bf16.msra.mxu0 %v5182
        %5207 = vmatprep.subr.bf16.mxu0 0
        %5208 = vmatpush1.bf16.msra.mxu0 0
        %5209 = vmatprep.subr.bf16.mxu0 0
        %5210 = vmatpush1.bf16.msra.mxu0 0
        %5211 = vmatprep.subr.bf16.mxu0 0
        %5212 = vmatpush1.bf16.msra.mxu0 0
        %5213 = vmatprep.subr.bf16.mxu0 0
        %5214 = vmatpush1.bf16.msra.mxu0 0
        %5215 = vmatprep.subr.bf16.mxu0 0
        %5216 = vmatpush1.bf16.msra.mxu0 0
        %5217 = vmatprep.subr.bf16.mxu0 0
        %5218 = vmatpush1.bf16.msra.mxu0 0
        %5219 = vmatprep.subr.bf16.mxu0 0
        %5220 = vmatpush1.bf16.msra.mxu0 0
        %5221 = vmatprep.subr.bf16.mxu0 0
        %5222 = vmatpush1.bf16.msra.mxu0 0
        %5223 = vmatprep.mubr.bf16.mxu0 0
        %5224 = vmatmul.mubr.bf16.gmra.mrb[0].mxu0 %v5119
        %v5225 = vpop.f32.mrb[0].mxu0
        %v5226 = vadd.f32 %v5141, %v5225
        %v5227 = vpop.f32.mrb[0].mxu0
        %v5228 = vpop.f32.mrb[0].mxu0
        %v5229 = vadd.f32 %v5141, %v5228
        %v5230 = vpop.f32.mrb[0].mxu0
        %5231 = vdwg.mxu0
        %v5232 = vadd.f32 %v3465, %v5226
        %v5233 = vadd.f32 %v3466, %v5229
        %v5234 = vld [vmem:[%s1100] sm:$0x1]
        %v5235 = vld [vmem:[%s1108] sm:$0x1]
        %5236 = vadd.xlane.f32.xlu0 %v5232
        %v5237 = vpop.xlane.xlu0 %5236
        %5238 = vadd.xlane.f32.xlu0 %v5233
        %v5239 = vpop.xlane.xlu0 %5238
        %v5240 = vmul.f32 %v5237, %v3473
        %v5241 = vmul.f32 %v5239, %v3473
        %v5242 = vsub.f32 %v5232, %v5240
        %v5243 = vsub.f32 %v5233, %v5241
        %v5244 = vmul.f32 %v5242, %v5242
        %v5245 = vmul.f32 %v5243, %v5243
        %5246 = vadd.xlane.f32.xlu0 %v5244
        %v5247 = vpop.xlane.xlu0 %5246
        %5248 = vadd.xlane.f32.xlu0 %v5245
        %v5249 = vpop.xlane.xlu0 %5248
        %v5250 = vmul.f32 %v5247, %v3473
        %v5251 = vmul.f32 %v5249, %v3473
        %v5252 = vadd.f32 %v5250, 1e-06
        %v5253 = vadd.f32 %v5251, 1e-06
        %v5254 = vrsqrt.pop %v5252
        %v5255 = vrsqrt.pop %v5253
        %v5256 = vmul.f32 %v5242, %v5254
        %v5257 = vmul.f32 %v5243, %v5255
        %v5259 = vlaneseq
        %v5260 = vshrl.u32 %v5259, 7
        %v5261 = vsub.s32 0, %v5260
        %v5262 = vrot.slane %v5234, %v5261
        %v5264 = vmul.f32 %v5256, %v5262
        %v5265 = vmul.f32 %v5257, %v5262
        %v5267 = vlaneseq
        %v5268 = vshrl.u32 %v5267, 7
        %v5269 = vsub.s32 0, %v5268
        %v5270 = vrot.slane %v5235, %v5269
        %v5272 = vadd.f32 %v5264, %v5270
        %v5273 = vadd.f32 %v5265, %v5270
        %v5274 = vpack.c.bf16 %v5273, %v5272
        %v5275 = vld [vmem:[%s1284] sm:$0xff]
        %v5276 = vld [vmem:[%s1284 + $0x8] sm:$0xff]
        %v5277 = vld [vmem:[%s1284 + $0x10] sm:$0xff]
        %v5278 = vld [vmem:[%s1284 + $0x18] sm:$0xff]
        %v5279 = vld [vmem:[%s1284 + $0x20] sm:$0xff]
        %v5280 = vld [vmem:[%s1284 + $0x28] sm:$0xff]
        %v5281 = vld [vmem:[%s1284 + $0x30] sm:$0xff]
        %v5282 = vld [vmem:[%s1284 + $0x38] sm:$0xff]
        %v5283 = vld [vmem:[%s1284 + $0x40] sm:$0xff]
        %v5284 = vld [vmem:[%s1284 + $0x48] sm:$0xff]
        %v5285 = vld [vmem:[%s1284 + $0x50] sm:$0xff]
        %v5286 = vld [vmem:[%s1284 + $0x58] sm:$0xff]
        %v5287 = vld [vmem:[%s1284 + $0x60] sm:$0xff]
        %v5288 = vld [vmem:[%s1284 + $0x68] sm:$0xff]
        %v5289 = vld [vmem:[%s1284 + $0x70] sm:$0xff]
        %v5290 = vld [vmem:[%s1284 + $0x78] sm:$0xff]
        %v5291 = vld [vmem:[%s1117] sm:$0x3]
        %v5293 = vlaneseq
        %v5294 = vshrl.u32 %v5293, 7
        %v5295 = vsub.s32 0, %v5294
        %v5296 = vrot.slane %v5291, %v5295
        %v5297 = vlaneseq
        %v5298 = vshrl.u32 %v5297, 7
        %v5299 = vsub.s32 1, %v5298
        %v5300 = vrot.slane %v5291, %v5299
        %v5319 = vunpack.c.l.b16 %v5275
        %v5320 = vunpack.c.h.b16 %v5275
        %v5321 = vunpack.c.l.b16 %v5276
        %v5322 = vunpack.c.h.b16 %v5276
        %v5323 = vunpack.c.l.b16 %v5277
        %v5324 = vunpack.c.h.b16 %v5277
        %v5325 = vunpack.c.l.b16 %v5278
        %v5326 = vunpack.c.h.b16 %v5278
        %v5327 = vunpack.c.l.b16 %v5279
        %v5328 = vunpack.c.h.b16 %v5279
        %v5329 = vunpack.c.l.b16 %v5280
        %v5330 = vunpack.c.h.b16 %v5280
        %v5331 = vunpack.c.l.b16 %v5281
        %v5332 = vunpack.c.h.b16 %v5281
        %v5333 = vunpack.c.l.b16 %v5282
        %v5334 = vunpack.c.h.b16 %v5282
        %v5335 = vunpack.c.l.b16 %v5283
        %v5336 = vunpack.c.h.b16 %v5283
        %v5337 = vunpack.c.l.b16 %v5284
        %v5338 = vunpack.c.h.b16 %v5284
        %v5339 = vunpack.c.l.b16 %v5285
        %v5340 = vunpack.c.h.b16 %v5285
        %v5341 = vunpack.c.l.b16 %v5286
        %v5342 = vunpack.c.h.b16 %v5286
        %v5343 = vunpack.c.l.b16 %v5287
        %v5344 = vunpack.c.h.b16 %v5287
        %v5345 = vunpack.c.l.b16 %v5288
        %v5346 = vunpack.c.h.b16 %v5288
        %v5347 = vunpack.c.l.b16 %v5289
        %v5348 = vunpack.c.h.b16 %v5289
        %v5349 = vunpack.c.l.b16 %v5290
        %v5350 = vunpack.c.h.b16 %v5290
        %v5351 = vpack.c.b16 %v5321, %v5319
        %v5352 = vpack.c.b16 %v5322, %v5320
        %v5353 = vpack.c.b16 %v5325, %v5323
        %v5354 = vpack.c.b16 %v5326, %v5324
        %v5355 = vpack.c.b16 %v5329, %v5327
        %v5356 = vpack.c.b16 %v5330, %v5328
        %v5357 = vpack.c.b16 %v5333, %v5331
        %v5358 = vpack.c.b16 %v5334, %v5332
        %v5359 = vpack.c.b16 %v5337, %v5335
        %v5360 = vpack.c.b16 %v5338, %v5336
        %v5361 = vpack.c.b16 %v5341, %v5339
        %v5362 = vpack.c.b16 %v5342, %v5340
        %v5363 = vpack.c.b16 %v5345, %v5343
        %v5364 = vpack.c.b16 %v5346, %v5344
        %v5365 = vpack.c.b16 %v5349, %v5347
        %v5366 = vpack.c.b16 %v5350, %v5348
        %5383 = vmatprep.subr.bf16.mxu0 %v5352
        %5384 = vmatpush1.bf16.msra.mxu0 %v5351
        %5385 = vmatprep.subr.bf16.mxu0 %v5354
        %5386 = vmatpush1.bf16.msra.mxu0 %v5353
        %5387 = vmatprep.subr.bf16.mxu0 %v5356
        %5388 = vmatpush1.bf16.msra.mxu0 %v5355
        %5389 = vmatprep.subr.bf16.mxu0 %v5358
        %5390 = vmatpush1.bf16.msra.mxu0 %v5357
        %5391 = vmatprep.subr.bf16.mxu0 %v5360
        %5392 = vmatpush1.bf16.msra.mxu0 %v5359
        %5393 = vmatprep.subr.bf16.mxu0 %v5362
        %5394 = vmatpush1.bf16.msra.mxu0 %v5361
        %5395 = vmatprep.subr.bf16.mxu0 %v5364
        %5396 = vmatpush1.bf16.msra.mxu0 %v5363
        %5397 = vmatprep.subr.bf16.mxu0 %v5366
        %5398 = vmatpush1.bf16.msra.mxu0 %v5365
        %5399 = vmatprep.subr.bf16.mxu0 0
        %5400 = vmatpush1.bf16.msra.mxu0 0
        %5401 = vmatprep.subr.bf16.mxu0 0
        %5402 = vmatpush1.bf16.msra.mxu0 0
        %5403 = vmatprep.subr.bf16.mxu0 0
        %5404 = vmatpush1.bf16.msra.mxu0 0
        %5405 = vmatprep.subr.bf16.mxu0 0
        %5406 = vmatpush1.bf16.msra.mxu0 0
        %5407 = vmatprep.subr.bf16.mxu0 0
        %5408 = vmatpush1.bf16.msra.mxu0 0
        %5409 = vmatprep.subr.bf16.mxu0 0
        %5410 = vmatpush1.bf16.msra.mxu0 0
        %5411 = vmatprep.subr.bf16.mxu0 0
        %5412 = vmatpush1.bf16.msra.mxu0 0
        %5413 = vmatprep.subr.bf16.mxu0 0
        %5414 = vmatpush1.bf16.msra.mxu0 0
        %5415 = vmatprep.mubr.bf16.mxu0 0
        %5416 = vmatmul.mubr.bf16.gmra.mrb[0].mxu0 %v5274
        %v5417 = vpop.f32.mrb[0].mxu0
        %v5418 = vadd.f32 %v5296, %v5417
        %v5419 = vpop.f32.mrb[0].mxu0
        %v5420 = vadd.f32 %v5300, %v5419
        %v5421 = vpop.f32.mrb[0].mxu0
        %v5422 = vadd.f32 %v5296, %v5421
        %v5423 = vpop.f32.mrb[0].mxu0
        %v5424 = vadd.f32 %v5300, %v5423
        %5425 = vdwg.mxu0
        %v5426 = vmul.f32 %v5418, 0.5
        %v5427 = vmul.f32 %v5420, 0.5
        %v5428 = vmul.f32 %v5422, 0.5
        %v5429 = vmul.f32 %v5424, 0.5
        %v5430 = vmul.f32 %v5418, 0.044715
        %v5431 = vmul.f32 %v5420, 0.044715
        %v5432 = vmul.f32 %v5422, 0.044715
        %v5433 = vmul.f32 %v5424, 0.044715
        %v5434 = vmul.f32 %v5430, %v5418
        %v5435 = vmul.f32 %v5431, %v5420
        %v5436 = vmul.f32 %v5432, %v5422
        %v5437 = vmul.f32 %v5433, %v5424
        %v5438 = vmul.f32 %v5434, %v5418
        %v5439 = vmul.f32 %v5435, %v5420
        %v5440 = vmul.f32 %v5436, %v5422
        %v5441 = vmul.f32 %v5437, %v5424
        %v5442 = vadd.f32 %v5418, %v5438
        %v5443 = vadd.f32 %v5420, %v5439
        %v5444 = vadd.f32 %v5422, %v5440
        %v5445 = vadd.f32 %v5424, %v5441
        %v5446 = vmul.f32 %v5442, 0.7978846
        %v5447 = vmul.f32 %v5443, 0.7978846
        %v5448 = vmul.f32 %v5444, 0.7978846
        %v5449 = vmul.f32 %v5445, 0.7978846
        %v5450 = vtanh.pop %v5446
        %v5451 = vtanh.pop %v5447
        %v5452 = vtanh.pop %v5448
        %v5453 = vtanh.pop %v5449
        %v5454 = vadd.f32 %v5450, 1.0
        %v5455 = vadd.f32 %v5451, 1.0
        %v5456 = vadd.f32 %v5452, 1.0
        %v5457 = vadd.f32 %v5453, 1.0
        %v5458 = vmul.f32 %v5426, %v5454
        %v5459 = vmul.f32 %v5427, %v5455
        %v5460 = vmul.f32 %v5428, %v5456
        %v5461 = vmul.f32 %v5429, %v5457
        %v5462 = vpack.c.bf16 %v5460, %v5458
        %v5463 = vpack.c.bf16 %v5461, %v5459
        %v5464 = vld [vmem:[%s1126] sm:$0xf]
        %v5465 = vld [vmem:[%s1126 + $0x4] sm:$0xf]
        %v5466 = vld [vmem:[%s1126 + $0x8] sm:$0xf]
        %v5467 = vld [vmem:[%s1126 + $0xc] sm:$0xf]
        %v5468 = vld [vmem:[%s1126 + $0x10] sm:$0xf]
        %v5469 = vld [vmem:[%s1126 + $0x14] sm:$0xf]
        %v5470 = vld [vmem:[%s1126 + $0x18] sm:$0xf]
        %v5471 = vld [vmem:[%s1126 + $0x1c] sm:$0xf]
        %v5472 = vld [vmem:[%s1126 + $0x20] sm:$0xf]
        %v5473 = vld [vmem:[%s1126 + $0x24] sm:$0xf]
        %v5474 = vld [vmem:[%s1126 + $0x28] sm:$0xf]
        %v5475 = vld [vmem:[%s1126 + $0x2c] sm:$0xf]
        %v5476 = vld [vmem:[%s1126 + $0x30] sm:$0xf]
        %v5477 = vld [vmem:[%s1126 + $0x34] sm:$0xf]
        %v5478 = vld [vmem:[%s1126 + $0x38] sm:$0xf]
        %v5479 = vld [vmem:[%s1126 + $0x3c] sm:$0xf]
        %v5480 = vld [vmem:[%s1126 + $0x40] sm:$0xf]
        %v5481 = vld [vmem:[%s1126 + $0x44] sm:$0xf]
        %v5482 = vld [vmem:[%s1126 + $0x48] sm:$0xf]
        %v5483 = vld [vmem:[%s1126 + $0x4c] sm:$0xf]
        %v5484 = vld [vmem:[%s1126 + $0x50] sm:$0xf]
        %v5485 = vld [vmem:[%s1126 + $0x54] sm:$0xf]
        %v5486 = vld [vmem:[%s1126 + $0x58] sm:$0xf]
        %v5487 = vld [vmem:[%s1126 + $0x5c] sm:$0xf]
        %v5488 = vld [vmem:[%s1126 + $0x60] sm:$0xf]
        %v5489 = vld [vmem:[%s1126 + $0x64] sm:$0xf]
        %v5490 = vld [vmem:[%s1126 + $0x68] sm:$0xf]
        %v5491 = vld [vmem:[%s1126 + $0x6c] sm:$0xf]
        %v5492 = vld [vmem:[%s1126 + $0x70] sm:$0xf]
        %v5493 = vld [vmem:[%s1126 + $0x74] sm:$0xf]
        %v5494 = vld [vmem:[%s1126 + $0x78] sm:$0xf]
        %v5495 = vld [vmem:[%s1126 + $0x7c] sm:$0xf]
        %v5496 = vld [vmem:[%s1134] sm:$0x1]
        %v5498 = vlaneseq
        %v5499 = vshrl.u32 %v5498, 7
        %v5500 = vsub.s32 0, %v5499
        %v5501 = vrot.slane %v5496, %v5500
        %v5535 = vunpack.c.l.b16 %v5464
        %v5536 = vunpack.c.l.b16 %v5465
        %v5537 = vunpack.c.l.b16 %v5466
        %v5538 = vunpack.c.l.b16 %v5467
        %v5539 = vunpack.c.l.b16 %v5468
        %v5540 = vunpack.c.l.b16 %v5469
        %v5541 = vunpack.c.l.b16 %v5470
        %v5542 = vunpack.c.l.b16 %v5471
        %v5543 = vunpack.c.l.b16 %v5472
        %v5544 = vunpack.c.l.b16 %v5473
        %v5545 = vunpack.c.l.b16 %v5474
        %v5546 = vunpack.c.l.b16 %v5475
        %v5547 = vunpack.c.l.b16 %v5476
        %v5548 = vunpack.c.l.b16 %v5477
        %v5549 = vunpack.c.l.b16 %v5478
        %v5550 = vunpack.c.l.b16 %v5479
        %v5551 = vunpack.c.l.b16 %v5480
        %v5552 = vunpack.c.l.b16 %v5481
        %v5553 = vunpack.c.l.b16 %v5482
        %v5554 = vunpack.c.l.b16 %v5483
        %v5555 = vunpack.c.l.b16 %v5484
        %v5556 = vunpack.c.l.b16 %v5485
        %v5557 = vunpack.c.l.b16 %v5486
        %v5558 = vunpack.c.l.b16 %v5487
        %v5559 = vunpack.c.l.b16 %v5488
        %v5560 = vunpack.c.l.b16 %v5489
        %v5561 = vunpack.c.l.b16 %v5490
        %v5562 = vunpack.c.l.b16 %v5491
        %v5563 = vunpack.c.l.b16 %v5492
        %v5564 = vunpack.c.l.b16 %v5493
        %v5565 = vunpack.c.l.b16 %v5494
        %v5566 = vunpack.c.l.b16 %v5495
        %v5567 = vpack.c.b16 %v5536, %v5535
        %v5568 = vpack.c.b16 %v5538, %v5537
        %v5569 = vpack.c.b16 %v5540, %v5539
        %v5570 = vpack.c.b16 %v5542, %v5541
        %v5571 = vpack.c.b16 %v5544, %v5543
        %v5572 = vpack.c.b16 %v5546, %v5545
        %v5573 = vpack.c.b16 %v5548, %v5547
        %v5574 = vpack.c.b16 %v5550, %v5549
        %v5575 = vpack.c.b16 %v5552, %v5551
        %v5576 = vpack.c.b16 %v5554, %v5553
        %v5577 = vpack.c.b16 %v5556, %v5555
        %v5578 = vpack.c.b16 %v5558, %v5557
        %v5579 = vpack.c.b16 %v5560, %v5559
        %v5580 = vpack.c.b16 %v5562, %v5561
        %v5581 = vpack.c.b16 %v5564, %v5563
        %v5582 = vpack.c.b16 %v5566, %v5565
        %5599 = vmatprep.subr.bf16.mxu0 0
        %5600 = vmatpush1.bf16.msra.mxu0 %v5567
        %5601 = vmatprep.subr.bf16.mxu0 0
        %5602 = vmatpush1.bf16.msra.mxu0 %v5568
        %5603 = vmatprep.subr.bf16.mxu0 0
        %5604 = vmatpush1.bf16.msra.mxu0 %v5569
        %5605 = vmatprep.subr.bf16.mxu0 0
        %5606 = vmatpush1.bf16.msra.mxu0 %v5570
        %5607 = vmatprep.subr.bf16.mxu0 0
        %5608 = vmatpush1.bf16.msra.mxu0 %v5571
        %5609 = vmatprep.subr.bf16.mxu0 0
        %5610 = vmatpush1.bf16.msra.mxu0 %v5572
        %5611 = vmatprep.subr.bf16.mxu0 0
        %5612 = vmatpush1.bf16.msra.mxu0 %v5573
        %5613 = vmatprep.subr.bf16.mxu0 0
        %5614 = vmatpush1.bf16.msra.mxu0 %v5574
        %5615 = vmatprep.subr.bf16.mxu0 0
        %5616 = vmatpush1.bf16.msra.mxu0 %v5575
        %5617 = vmatprep.subr.bf16.mxu0 0
        %5618 = vmatpush1.bf16.msra.mxu0 %v5576
        %5619 = vmatprep.subr.bf16.mxu0 0
        %5620 = vmatpush1.bf16.msra.mxu0 %v5577
        %5621 = vmatprep.subr.bf16.mxu0 0
        %5622 = vmatpush1.bf16.msra.mxu0 %v5578
        %5623 = vmatprep.subr.bf16.mxu0 0
        %5624 = vmatpush1.bf16.msra.mxu0 %v5579
        %5625 = vmatprep.subr.bf16.mxu0 0
        %5626 = vmatpush1.bf16.msra.mxu0 %v5580
        %5627 = vmatprep.subr.bf16.mxu0 0
        %5628 = vmatpush1.bf16.msra.mxu0 %v5581
        %5629 = vmatprep.subr.bf16.mxu0 0
        %5630 = vmatpush1.bf16.msra.mxu0 %v5582
        %5631 = vmatprep.mubr.bf16.mxu0 %v5463
        %5632 = vmatmul.mubr.bf16.gmra.mrb[0].mxu0 %v5462
        %v5633 = vpop.f32.mrb[0].mxu0
        %v5634 = vadd.f32 %v5501, %v5633
        %v5635 = vpop.f32.mrb[0].mxu0
        %v5636 = vpop.f32.mrb[0].mxu0
        %v5637 = vadd.f32 %v5501, %v5636
        %v5638 = vpop.f32.mrb[0].mxu0
        %5639 = vdwg.mxu0
        %v5640 = vadd.f32 %v5232, %v5634
        %v5641 = vadd.f32 %v5233, %v5637
        %5642 = vst [vmem:[#allocation2] sm:$0xff] %v5640
        %5643 = vst [vmem:[#allocation2 + $0x8] sm:$0xff] %v5641
        %p5644 = scmp.eq.s32.totalorder %s45, 1
        // Predicated region
        $region209: #{vit_b32_multimodal_forward.1} parent=131 // pred_check
          %p5645 = pneg %p5644
        $region210: #{vit_b32_multimodal_forward.1} parent=131 // pred_check_branch
          %5647 = sbr.rel (%p5645) target = $region212
        $region211: #{vit_b32_multimodal_forward.1} parent=131 // pred_region
          %v5649 = vrot.slane %v5641, 7
          %vm5651 = vcmask 1040384
          %v5652 = vsel %vm5651, %v5640, %v5649
          %v5653 = vld [vmem:[#allocation18] sm:$0x1]
          %v5654 = vld [vmem:[#allocation19] sm:$0x1]
          %vm5655 = vcmask 1041408
          %v5656 = vsel %vm5655, %v5652, 0.0
          %5657 = vadd.xlane.f32.xlu0 %v5656
          %v5658 = vpop.xlane.xlu0 %5657
          %v5659 = vmul.f32 %v5658, %v3473
          %v5660 = vsub.f32 %v5652, %v5659
          %v5661 = vmul.f32 %v5660, %v5660
          %v5662 = vsel %vm5655, %v5661, 0.0
          %5663 = vadd.xlane.f32.xlu0 %v5662
          %v5664 = vpop.xlane.xlu0 %5663
          %v5665 = vmul.f32 %v5664, %v3473
          %v5666 = vadd.f32 %v5665, 1e-06
          %v5667 = vrsqrt.pop %v5666
          %v5668 = vmul.f32 %v5660, %v5667
          %v5670 = vlaneseq
          %v5671 = vshrl.u32 %v5670, 7
          %v5672 = vsub.s32 0, %v5671
          %v5673 = vrot.slane %v5653, %v5672
          %v5675 = vmul.f32 %v5668, %v5673
          %v5677 = vlaneseq
          %v5678 = vshrl.u32 %v5677, 7
          %v5679 = vsub.s32 0, %v5678
          %v5680 = vrot.slane %v5654, %v5679
          %v5682 = vadd.f32 %v5675, %v5680
          %v5683 = vpack.c.bf16 %v5682, %v5682
          %v5684 = vld [vmem:[#allocation21] sm:$0xff]
          %v5685 = vld [vmem:[#allocation21 + $0x8] sm:$0xff]
          %v5686 = vld [vmem:[#allocation21 + $0x10] sm:$0xff]
          %v5687 = vld [vmem:[#allocation21 + $0x18] sm:$0xff]
          %v5688 = vld [vmem:[#allocation21 + $0x20] sm:$0xff]
          %v5689 = vld [vmem:[#allocation21 + $0x28] sm:$0xff]
          %v5690 = vld [vmem:[#allocation21 + $0x30] sm:$0xff]
          %v5691 = vld [vmem:[#allocation21 + $0x38] sm:$0xff]
          %v5692 = vld [vmem:[#allocation21 + $0x40] sm:$0xff]
          %v5693 = vld [vmem:[#allocation21 + $0x48] sm:$0xff]
          %v5694 = vld [vmem:[#allocation21 + $0x50] sm:$0xff]
          %v5695 = vld [vmem:[#allocation21 + $0x58] sm:$0xff]
          %v5696 = vld [vmem:[#allocation21 + $0x60] sm:$0xff]
          %v5697 = vld [vmem:[#allocation21 + $0x68] sm:$0xff]
          %v5698 = vld [vmem:[#allocation21 + $0x70] sm:$0xff]
          %v5699 = vld [vmem:[#allocation21 + $0x78] sm:$0xff]
          %v5700 = vld [vmem:[#allocation21 + $0x80] sm:$0xff]
          %v5701 = vld [vmem:[#allocation21 + $0x88] sm:$0xff]
          %v5702 = vld [vmem:[#allocation21 + $0x90] sm:$0xff]
          %v5703 = vld [vmem:[#allocation21 + $0x98] sm:$0xff]
          %v5704 = vld [vmem:[#allocation21 + $0xa0] sm:$0xff]
          %v5705 = vld [vmem:[#allocation21 + $0xa8] sm:$0xff]
          %v5706 = vld [vmem:[#allocation21 + $0xb0] sm:$0xff]
          %v5707 = vld [vmem:[#allocation21 + $0xb8] sm:$0xff]
          %v5708 = vld [vmem:[#allocation21 + $0xc0] sm:$0xff]
          %v5709 = vld [vmem:[#allocation21 + $0xc8] sm:$0xff]
          %v5710 = vld [vmem:[#allocation21 + $0xd0] sm:$0xff]
          %v5711 = vld [vmem:[#allocation21 + $0xd8] sm:$0xff]
          %v5712 = vld [vmem:[#allocation21 + $0xe0] sm:$0xff]
          %v5713 = vld [vmem:[#allocation21 + $0xe8] sm:$0xff]
          %v5714 = vld [vmem:[#allocation21 + $0xf0] sm:$0xff]
          %v5715 = vld [vmem:[#allocation21 + $0xf8] sm:$0xff]
          %v5716 = vld [vmem:[#allocation6] sm:$0x3]
          %v5717 = vld [vmem:[#allocation22] sm:$0xff]
          %v5718 = vld [vmem:[#allocation22 + $0x8] sm:$0xff]
          %v5721 = vcombine.high %v5717, %v5717
          %v5722 = vcombine.high %v5718, %v5718
          %vm5723 = vcmask 31744
          %v5725 = vsel %vm5723, %v5716, 0
          %vm5727 = vcmask 1043456
          %v5728 = vsel %vm5727, %v5717, 0
          %v5730 = vsel %vm5727, %v5721, 0
          %v5732 = vsel %vm5727, %v5718, 0
          %v5734 = vsel %vm5727, %v5722, 0
          %5736 = vmatprep.subr.mxu0 %v5730
          %5737 = vmatpush1.msra.mxu0 %v5728
          %5738 = vmatprep.subr.mxu0 0.0
          %5739 = vmatpush1.msra.mxu0 0.0
          %5740 = vmatprep.subr.mxu0 0.0
          %5741 = vmatpush1.msra.mxu0 0.0
          %5742 = vmatprep.subr.mxu0 0.0
          %5743 = vmatpush1.msra.mxu0 0.0
          %5744 = vmatprep.subr.mxu0 0.0
          %5745 = vmatpush1.msra.mxu0 0.0
          %5746 = vmatprep.subr.mxu0 0.0
          %5747 = vmatpush1.msra.mxu0 0.0
          %5748 = vmatprep.subr.mxu0 0.0
          %5749 = vmatpush1.msra.mxu0 0.0
          %5750 = vmatprep.subr.mxu0 0.0
          %5751 = vmatpush1.msra.mxu0 0.0
          %5752 = vmatprep.subr.mxu0 0.0
          %5753 = vmatpush1.msra.mxu0 0.0
          %5754 = vmatprep.subr.mxu0 0.0
          %5755 = vmatpush1.msra.mxu0 0.0
          %5756 = vmatprep.subr.mxu0 0.0
          %5757 = vmatpush1.msra.mxu0 0.0
          %5758 = vmatprep.subr.mxu0 0.0
          %5759 = vmatpush1.msra.mxu0 0.0
          %5760 = vmatprep.subr.mxu0 0.0
          %5761 = vmatpush1.msra.mxu0 0.0
          %5762 = vmatprep.subr.mxu0 0.0
          %5763 = vmatpush1.msra.mxu0 0.0
          %5764 = vmatprep.subr.mxu0 0.0
          %5765 = vmatpush1.msra.mxu0 0.0
          %5766 = vmatprep.subr.mxu0 0.0
          %5767 = vmatpush1.msra.mxu0 0.0
          %5768 = vmatprep.subr.mxu0 0.0
          %5769 = vmatpush1.msra.mxu0 0.0
          %5770 = vmatprep.subr.mxu0 0.0
          %5771 = vmatpush1.msra.mxu0 0.0
          %5772 = vmatprep.subr.mxu0 0.0
          %5773 = vmatpush1.msra.mxu0 0.0
          %5774 = vmatprep.subr.mxu0 0.0
          %5775 = vmatpush1.msra.mxu0 0.0
          %5776 = vmatprep.subr.mxu0 0.0
          %5777 = vmatpush1.msra.mxu0 0.0
          %5778 = vmatprep.subr.mxu0 0.0
          %5779 = vmatpush1.msra.mxu0 0.0
          %5780 = vmatprep.subr.mxu0 0.0
          %5781 = vmatpush1.msra.mxu0 0.0
          %5782 = vmatprep.subr.mxu0 0.0
          %5783 = vmatpush1.msra.mxu0 0.0
          %5784 = vmatprep.subr.mxu0 0.0
          %5785 = vmatpush1.msra.mxu0 0.0
          %5786 = vmatprep.subr.mxu0 0.0
          %5787 = vmatpush1.msra.mxu0 0.0
          %5788 = vmatprep.subr.mxu0 0.0
          %5789 = vmatpush1.msra.mxu0 0.0
          %5790 = vmatprep.subr.mxu0 0.0
          %5791 = vmatpush1.msra.mxu0 0.0
          %5792 = vmatprep.subr.mxu0 0.0
          %5793 = vmatpush1.msra.mxu0 0.0
          %5794 = vmatprep.subr.mxu0 0.0
          %5795 = vmatpush1.msra.mxu0 0.0
          %5796 = vmatprep.subr.mxu0 0.0
          %5797 = vmatpush1.msra.mxu0 0.0
          %5798 = vmatprep.subr.mxu0 0.0
          %5799 = vmatpush1.msra.mxu0 0.0
          %5800 = vmatprep.mubr.f32.mxu0 0.0
          %5801 = vmatmul.mubr.f32.gmra.mrb[0].mxu0 %v5725
          %v5802 = vpop.f32.mrb[0].mxu0
          %v5803 = vadd.f32 0.0, %v5802
          %v5804 = vpop.f32.mrb[0].mxu0
          %v5805 = vadd.f32 0.0, %v5804
          %5806 = vdwg.mxu0
          %5807 = vmatprep.subr.mxu0 %v5734
          %5808 = vmatpush1.msra.mxu0 %v5732
          %5809 = vmatprep.subr.mxu0 0.0
          %5810 = vmatpush1.msra.mxu0 0.0
          %5811 = vmatprep.subr.mxu0 0.0
          %5812 = vmatpush1.msra.mxu0 0.0
          %5813 = vmatprep.subr.mxu0 0.0
          %5814 = vmatpush1.msra.mxu0 0.0
          %5815 = vmatprep.subr.mxu0 0.0
          %5816 = vmatpush1.msra.mxu0 0.0
          %5817 = vmatprep.subr.mxu0 0.0
          %5818 = vmatpush1.msra.mxu0 0.0
          %5819 = vmatprep.subr.mxu0 0.0
          %5820 = vmatpush1.msra.mxu0 0.0
          %5821 = vmatprep.subr.mxu0 0.0
          %5822 = vmatpush1.msra.mxu0 0.0
          %5823 = vmatprep.subr.mxu0 0.0
          %5824 = vmatpush1.msra.mxu0 0.0
          %5825 = vmatprep.subr.mxu0 0.0
          %5826 = vmatpush1.msra.mxu0 0.0
          %5827 = vmatprep.subr.mxu0 0.0
          %5828 = vmatpush1.msra.mxu0 0.0
          %5829 = vmatprep.subr.mxu0 0.0
          %5830 = vmatpush1.msra.mxu0 0.0
          %5831 = vmatprep.subr.mxu0 0.0
          %5832 = vmatpush1.msra.mxu0 0.0
          %5833 = vmatprep.subr.mxu0 0.0
          %5834 = vmatpush1.msra.mxu0 0.0
          %5835 = vmatprep.subr.mxu0 0.0
          %5836 = vmatpush1.msra.mxu0 0.0
          %5837 = vmatprep.subr.mxu0 0.0
          %5838 = vmatpush1.msra.mxu0 0.0
          %5839 = vmatprep.subr.mxu0 0.0
          %5840 = vmatpush1.msra.mxu0 0.0
          %5841 = vmatprep.subr.mxu0 0.0
          %5842 = vmatpush1.msra.mxu0 0.0
          %5843 = vmatprep.subr.mxu0 0.0
          %5844 = vmatpush1.msra.mxu0 0.0
          %5845 = vmatprep.subr.mxu0 0.0
          %5846 = vmatpush1.msra.mxu0 0.0
          %5847 = vmatprep.subr.mxu0 0.0
          %5848 = vmatpush1.msra.mxu0 0.0
          %5849 = vmatprep.subr.mxu0 0.0
          %5850 = vmatpush1.msra.mxu0 0.0
          %5851 = vmatprep.subr.mxu0 0.0
          %5852 = vmatpush1.msra.mxu0 0.0
          %5853 = vmatprep.subr.mxu0 0.0
          %5854 = vmatpush1.msra.mxu0 0.0
          %5855 = vmatprep.subr.mxu0 0.0
          %5856 = vmatpush1.msra.mxu0 0.0
          %5857 = vmatprep.subr.mxu0 0.0
          %5858 = vmatpush1.msra.mxu0 0.0
          %5859 = vmatprep.subr.mxu0 0.0
          %5860 = vmatpush1.msra.mxu0 0.0
          %5861 = vmatprep.subr.mxu0 0.0
          %5862 = vmatpush1.msra.mxu0 0.0
          %5863 = vmatprep.subr.mxu0 0.0
          %5864 = vmatpush1.msra.mxu0 0.0
          %5865 = vmatprep.subr.mxu0 0.0
          %5866 = vmatpush1.msra.mxu0 0.0
          %5867 = vmatprep.subr.mxu0 0.0
          %5868 = vmatpush1.msra.mxu0 0.0
          %5869 = vmatprep.subr.mxu0 0.0
          %5870 = vmatpush1.msra.mxu0 0.0
          %5871 = vmatprep.mubr.f32.mxu0 0.0
          %5872 = vmatmul.mubr.f32.gmra.mrb[0].mxu0 %v5725
          %v5873 = vpop.f32.mrb[0].mxu0
          %v5874 = vadd.f32 0.0, %v5873
          %v5875 = vpop.f32.mrb[0].mxu0
          %v5876 = vadd.f32 0.0, %v5875
          %5877 = vdwg.mxu0
          %v5910 = vunpack.c.l.b16 %v5684
          %v5911 = vunpack.c.h.b16 %v5684
          %v5912 = vunpack.c.l.b16 %v5685
          %v5913 = vunpack.c.h.b16 %v5685
          %v5914 = vunpack.c.l.b16 %v5686
          %v5915 = vunpack.c.h.b16 %v5686
          %v5916 = vunpack.c.l.b16 %v5687
          %v5917 = vunpack.c.h.b16 %v5687
          %v5918 = vunpack.c.l.b16 %v5688
          %v5919 = vunpack.c.h.b16 %v5688
          %v5920 = vunpack.c.l.b16 %v5689
          %v5921 = vunpack.c.h.b16 %v5689
          %v5922 = vunpack.c.l.b16 %v5690
          %v5923 = vunpack.c.h.b16 %v5690
          %v5924 = vunpack.c.l.b16 %v5691
          %v5925 = vunpack.c.h.b16 %v5691
          %v5926 = vunpack.c.l.b16 %v5692
          %v5927 = vunpack.c.h.b16 %v5692
          %v5928 = vunpack.c.l.b16 %v5693
          %v5929 = vunpack.c.h.b16 %v5693
          %v5930 = vunpack.c.l.b16 %v5694
          %v5931 = vunpack.c.h.b16 %v5694
          %v5932 = vunpack.c.l.b16 %v5695
          %v5933 = vunpack.c.h.b16 %v5695
          %v5934 = vunpack.c.l.b16 %v5696
          %v5935 = vunpack.c.h.b16 %v5696
          %v5936 = vunpack.c.l.b16 %v5697
          %v5937 = vunpack.c.h.b16 %v5697
          %v5938 = vunpack.c.l.b16 %v5698
          %v5939 = vunpack.c.h.b16 %v5698
          %v5940 = vunpack.c.l.b16 %v5699
          %v5941 = vunpack.c.h.b16 %v5699
          %v5942 = vunpack.c.l.b16 %v5700
          %v5943 = vunpack.c.h.b16 %v5700
          %v5944 = vunpack.c.l.b16 %v5701
          %v5945 = vunpack.c.h.b16 %v5701
          %v5946 = vunpack.c.l.b16 %v5702
          %v5947 = vunpack.c.h.b16 %v5702
          %v5948 = vunpack.c.l.b16 %v5703
          %v5949 = vunpack.c.h.b16 %v5703
          %v5950 = vunpack.c.l.b16 %v5704
          %v5951 = vunpack.c.h.b16 %v5704
          %v5952 = vunpack.c.l.b16 %v5705
          %v5953 = vunpack.c.h.b16 %v5705
          %v5954 = vunpack.c.l.b16 %v5706
          %v5955 = vunpack.c.h.b16 %v5706
          %v5956 = vunpack.c.l.b16 %v5707
          %v5957 = vunpack.c.h.b16 %v5707
          %v5958 = vunpack.c.l.b16 %v5708
          %v5959 = vunpack.c.h.b16 %v5708
          %v5960 = vunpack.c.l.b16 %v5709
          %v5961 = vunpack.c.h.b16 %v5709
          %v5962 = vunpack.c.l.b16 %v5710
          %v5963 = vunpack.c.h.b16 %v5710
          %v5964 = vunpack.c.l.b16 %v5711
          %v5965 = vunpack.c.h.b16 %v5711
          %v5966 = vunpack.c.l.b16 %v5712
          %v5967 = vunpack.c.h.b16 %v5712
          %v5968 = vunpack.c.l.b16 %v5713
          %v5969 = vunpack.c.h.b16 %v5713
          %v5970 = vunpack.c.l.b16 %v5714
          %v5971 = vunpack.c.h.b16 %v5714
          %v5972 = vunpack.c.l.b16 %v5715
          %v5973 = vunpack.c.h.b16 %v5715
          %v5974 = vpack.c.b16 %v5914, %v5910
          %v5975 = vpack.c.b16 %v5915, %v5911
          %v5976 = vpack.c.b16 %v5916, %v5912
          %v5977 = vpack.c.b16 %v5917, %v5913
          %v5978 = vpack.c.b16 %v5922, %v5918
          %v5979 = vpack.c.b16 %v5923, %v5919
          %v5980 = vpack.c.b16 %v5924, %v5920
          %v5981 = vpack.c.b16 %v5925, %v5921
          %v5982 = vpack.c.b16 %v5930, %v5926
          %v5983 = vpack.c.b16 %v5931, %v5927
          %v5984 = vpack.c.b16 %v5932, %v5928
          %v5985 = vpack.c.b16 %v5933, %v5929
          %v5986 = vpack.c.b16 %v5938, %v5934
          %v5987 = vpack.c.b16 %v5939, %v5935
          %v5988 = vpack.c.b16 %v5940, %v5936
          %v5989 = vpack.c.b16 %v5941, %v5937
          %v5990 = vpack.c.b16 %v5946, %v5942
          %v5991 = vpack.c.b16 %v5947, %v5943
          %v5992 = vpack.c.b16 %v5948, %v5944
          %v5993 = vpack.c.b16 %v5949, %v5945
          %v5994 = vpack.c.b16 %v5954, %v5950
          %v5995 = vpack.c.b16 %v5955, %v5951
          %v5996 = vpack.c.b16 %v5956, %v5952
          %v5997 = vpack.c.b16 %v5957, %v5953
          %v5998 = vpack.c.b16 %v5962, %v5958
          %v5999 = vpack.c.b16 %v5963, %v5959
          %v6000 = vpack.c.b16 %v5964, %v5960
          %v6001 = vpack.c.b16 %v5965, %v5961
          %v6002 = vpack.c.b16 %v5970, %v5966
          %v6003 = vpack.c.b16 %v5971, %v5967
          %v6004 = vpack.c.b16 %v5972, %v5968
          %v6005 = vpack.c.b16 %v5973, %v5969
          %6038 = vmatprep.subr.bf16.mxu0 %v5975
          %6039 = vmatpush1.bf16.msra.mxu0 %v5974
          %6040 = vmatprep.subr.bf16.mxu0 %v5979
          %6041 = vmatpush1.bf16.msra.mxu0 %v5978
          %6042 = vmatprep.subr.bf16.mxu0 %v5983
          %6043 = vmatpush1.bf16.msra.mxu0 %v5982
          %6044 = vmatprep.subr.bf16.mxu0 %v5987
          %6045 = vmatpush1.bf16.msra.mxu0 %v5986
          %6046 = vmatprep.subr.bf16.mxu0 %v5991
          %6047 = vmatpush1.bf16.msra.mxu0 %v5990
          %6048 = vmatprep.subr.bf16.mxu0 %v5995
          %6049 = vmatpush1.bf16.msra.mxu0 %v5994
          %6050 = vmatprep.subr.bf16.mxu0 %v5999
          %6051 = vmatpush1.bf16.msra.mxu0 %v5998
          %6052 = vmatprep.subr.bf16.mxu0 %v6003
          %6053 = vmatpush1.bf16.msra.mxu0 %v6002
          %6054 = vmatprep.subr.bf16.mxu0 0
          %6055 = vmatpush1.bf16.msra.mxu0 0
          %6056 = vmatprep.subr.bf16.mxu0 0
          %6057 = vmatpush1.bf16.msra.mxu0 0
          %6058 = vmatprep.subr.bf16.mxu0 0
          %6059 = vmatpush1.bf16.msra.mxu0 0
          %6060 = vmatprep.subr.bf16.mxu0 0
          %6061 = vmatpush1.bf16.msra.mxu0 0
          %6062 = vmatprep.subr.bf16.mxu0 0
          %6063 = vmatpush1.bf16.msra.mxu0 0
          %6064 = vmatprep.subr.bf16.mxu0 0
          %6065 = vmatpush1.bf16.msra.mxu0 0
          %6066 = vmatprep.subr.bf16.mxu0 0
          %6067 = vmatpush1.bf16.msra.mxu0 0
          %6068 = vmatprep.subr.bf16.mxu0 0
          %6069 = vmatpush1.bf16.msra.mxu0 0
          %6070 = vmatprep.mubr.bf16.mxu0 0
          %6071 = vmatmul.mubr.bf16.gmra.mrb[0].mxu0 %v5683
          %v6072 = vpop.f32.mrb[0].mxu0
          %v6073 = vadd.f32 %v5803, %v6072
          %v6074 = vpop.f32.mrb[0].mxu0
          %v6075 = vadd.f32 %v5805, %v6074
          %v6076 = vpop.f32.mrb[0].mxu0
          %v6077 = vpop.f32.mrb[0].mxu0
          %6078 = vdwg.mxu0
          %6079 = vmatprep.subr.bf16.mxu0 %v5977
          %6080 = vmatpush1.bf16.msra.mxu0 %v5976
          %6081 = vmatprep.subr.bf16.mxu0 %v5981
          %6082 = vmatpush1.bf16.msra.mxu0 %v5980
          %6083 = vmatprep.subr.bf16.mxu0 %v5985
          %6084 = vmatpush1.bf16.msra.mxu0 %v5984
          %6085 = vmatprep.subr.bf16.mxu0 %v5989
          %6086 = vmatpush1.bf16.msra.mxu0 %v5988
          %6087 = vmatprep.subr.bf16.mxu0 %v5993
          %6088 = vmatpush1.bf16.msra.mxu0 %v5992
          %6089 = vmatprep.subr.bf16.mxu0 %v5997
          %6090 = vmatpush1.bf16.msra.mxu0 %v5996
          %6091 = vmatprep.subr.bf16.mxu0 %v6001
          %6092 = vmatpush1.bf16.msra.mxu0 %v6000
          %6093 = vmatprep.subr.bf16.mxu0 %v6005
          %6094 = vmatpush1.bf16.msra.mxu0 %v6004
          %6095 = vmatprep.subr.bf16.mxu0 0
          %6096 = vmatpush1.bf16.msra.mxu0 0
          %6097 = vmatprep.subr.bf16.mxu0 0
          %6098 = vmatpush1.bf16.msra.mxu0 0
          %6099 = vmatprep.subr.bf16.mxu0 0
          %6100 = vmatpush1.bf16.msra.mxu0 0
          %6101 = vmatprep.subr.bf16.mxu0 0
          %6102 = vmatpush1.bf16.msra.mxu0 0
          %6103 = vmatprep.subr.bf16.mxu0 0
          %6104 = vmatpush1.bf16.msra.mxu0 0
          %6105 = vmatprep.subr.bf16.mxu0 0
          %6106 = vmatpush1.bf16.msra.mxu0 0
          %6107 = vmatprep.subr.bf16.mxu0 0
          %6108 = vmatpush1.bf16.msra.mxu0 0
          %6109 = vmatprep.subr.bf16.mxu0 0
          %6110 = vmatpush1.bf16.msra.mxu0 0
          %6111 = vmatprep.mubr.bf16.mxu0 0
          %6112 = vmatmul.mubr.bf16.gmra.mrb[0].mxu0 %v5683
          %v6113 = vpop.f32.mrb[0].mxu0
          %v6114 = vadd.f32 %v5874, %v6113
          %v6115 = vpop.f32.mrb[0].mxu0
          %v6116 = vadd.f32 %v5876, %v6115
          %v6117 = vpop.f32.mrb[0].mxu0
          %v6118 = vpop.f32.mrb[0].mxu0
          %6119 = vdwg.mxu0
          %v6120 = vld [vmem:[%s21] sm:$0xf]
          %v6122 = vlaneseq
          %v6123 = vshrl.u32 %v6122, 7
          %v6124 = vsub.s32 0, %v6123
          %v6125 = vrot.slane %v6120, %v6124
          %v6126 = vlaneseq
          %v6127 = vshrl.u32 %v6126, 7
          %v6128 = vsub.s32 1, %v6127
          %v6129 = vrot.slane %v6120, %v6128
          %v6130 = vlaneseq
          %v6131 = vshrl.u32 %v6130, 7
          %v6132 = vsub.s32 2, %v6131
          %v6133 = vrot.slane %v6120, %v6132
          %v6134 = vlaneseq
          %v6135 = vshrl.u32 %v6134, 7
          %v6136 = vsub.s32 3, %v6135
          %v6137 = vrot.slane %v6120, %v6136
          %v6142 = vadd.f32 %v6073, %v6125
          %v6143 = vadd.f32 %v6075, %v6129
          %v6144 = vadd.f32 %v6114, %v6133
          %v6145 = vadd.f32 %v6116, %v6137
          %v6146 = vmax.f32 %v6142, 0.0
          %v6147 = vmax.f32 %v6143, 0.0
          %v6148 = vmax.f32 %v6144, 0.0
          %v6149 = vmax.f32 %v6145, 0.0
          %v6150 = vpack.c.bf16 %v6146, %v6146
          %v6151 = vpack.c.bf16 %v6147, %v6147
          %v6152 = vpack.c.bf16 %v6148, %v6148
          %v6153 = vpack.c.bf16 %v6149, %v6149
          %v6154 = vld [vmem:[%s22] sm:$0xff]
          %v6155 = vld [vmem:[%s22 + $0x8] sm:$0xff]
          %v6156 = vld [vmem:[%s22 + $0x10] sm:$0xff]
          %v6157 = vld [vmem:[%s22 + $0x18] sm:$0xff]
          %v6158 = vld [vmem:[%s22 + $0x20] sm:$0xff]
          %v6159 = vld [vmem:[%s22 + $0x28] sm:$0xff]
          %v6160 = vld [vmem:[%s22 + $0x30] sm:$0xff]
          %v6161 = vld [vmem:[%s22 + $0x38] sm:$0xff]
          %v6162 = vld [vmem:[%s22 + $0x40] sm:$0xff]
          %v6163 = vld [vmem:[%s22 + $0x48] sm:$0xff]
          %v6164 = vld [vmem:[%s22 + $0x50] sm:$0xff]
          %v6165 = vld [vmem:[%s22 + $0x58] sm:$0xff]
          %v6166 = vld [vmem:[%s22 + $0x60] sm:$0xff]
          %v6167 = vld [vmem:[%s22 + $0x68] sm:$0xff]
          %v6168 = vld [vmem:[%s22 + $0x70] sm:$0xff]
          %v6169 = vld [vmem:[%s22 + $0x78] sm:$0xff]
          %v6170 = vld [vmem:[%s22 + $0x80] sm:$0xff]
          %v6171 = vld [vmem:[%s22 + $0x88] sm:$0xff]
          %v6172 = vld [vmem:[%s22 + $0x90] sm:$0xff]
          %v6173 = vld [vmem:[%s22 + $0x98] sm:$0xff]
          %v6174 = vld [vmem:[%s22 + $0xa0] sm:$0xff]
          %v6175 = vld [vmem:[%s22 + $0xa8] sm:$0xff]
          %v6176 = vld [vmem:[%s22 + $0xb0] sm:$0xff]
          %v6177 = vld [vmem:[%s22 + $0xb8] sm:$0xff]
          %v6178 = vld [vmem:[%s22 + $0xc0] sm:$0xff]
          %v6179 = vld [vmem:[%s22 + $0xc8] sm:$0xff]
          %v6180 = vld [vmem:[%s22 + $0xd0] sm:$0xff]
          %v6181 = vld [vmem:[%s22 + $0xd8] sm:$0xff]
          %v6182 = vld [vmem:[%s22 + $0xe0] sm:$0xff]
          %v6183 = vld [vmem:[%s22 + $0xe8] sm:$0xff]
          %v6184 = vld [vmem:[%s22 + $0xf0] sm:$0xff]
          %v6185 = vld [vmem:[%s22 + $0xf8] sm:$0xff]
          %v6186 = vld [vmem:[%s22 + $0x100] sm:$0xff]
          %v6187 = vld [vmem:[%s22 + $0x108] sm:$0xff]
          %v6188 = vld [vmem:[%s22 + $0x110] sm:$0xff]
          %v6189 = vld [vmem:[%s22 + $0x118] sm:$0xff]
          %v6190 = vld [vmem:[%s22 + $0x120] sm:$0xff]
          %v6191 = vld [vmem:[%s22 + $0x128] sm:$0xff]
          %v6192 = vld [vmem:[%s22 + $0x130] sm:$0xff]
          %v6193 = vld [vmem:[%s22 + $0x138] sm:$0xff]
          %v6194 = vld [vmem:[%s22 + $0x140] sm:$0xff]
          %v6195 = vld [vmem:[%s22 + $0x148] sm:$0xff]
          %v6196 = vld [vmem:[%s22 + $0x150] sm:$0xff]
          %v6197 = vld [vmem:[%s22 + $0x158] sm:$0xff]
          %v6198 = vld [vmem:[%s22 + $0x160] sm:$0xff]
          %v6199 = vld [vmem:[%s22 + $0x168] sm:$0xff]
          %v6200 = vld [vmem:[%s22 + $0x170] sm:$0xff]
          %v6201 = vld [vmem:[%s22 + $0x178] sm:$0xff]
          %v6202 = vld [vmem:[%s22 + $0x180] sm:$0xff]
          %v6203 = vld [vmem:[%s22 + $0x188] sm:$0xff]
          %v6204 = vld [vmem:[%s22 + $0x190] sm:$0xff]
          %v6205 = vld [vmem:[%s22 + $0x198] sm:$0xff]
          %v6206 = vld [vmem:[%s22 + $0x1a0] sm:$0xff]
          %v6207 = vld [vmem:[%s22 + $0x1a8] sm:$0xff]
          %v6208 = vld [vmem:[%s22 + $0x1b0] sm:$0xff]
          %v6209 = vld [vmem:[%s22 + $0x1b8] sm:$0xff]
          %v6210 = vld [vmem:[%s22 + $0x1c0] sm:$0xff]
          %v6211 = vld [vmem:[%s22 + $0x1c8] sm:$0xff]
          %v6212 = vld [vmem:[%s22 + $0x1d0] sm:$0xff]
          %v6213 = vld [vmem:[%s22 + $0x1d8] sm:$0xff]
          %v6214 = vld [vmem:[%s22 + $0x1e0] sm:$0xff]
          %v6215 = vld [vmem:[%s22 + $0x1e8] sm:$0xff]
          %v6216 = vld [vmem:[%s22 + $0x1f0] sm:$0xff]
          %v6217 = vld [vmem:[%s22 + $0x1f8] sm:$0xff]
          %v6218 = vld [vmem:[%s23] sm:$0x3]
          %v6220 = vlaneseq
          %v6221 = vshrl.u32 %v6220, 7
          %v6222 = vsub.s32 0, %v6221
          %v6223 = vrot.slane %v6218, %v6222
          %v6224 = vlaneseq
          %v6225 = vshrl.u32 %v6224, 7
          %v6226 = vsub.s32 1, %v6225
          %v6227 = vrot.slane %v6218, %v6226
          %v6294 = vunpack.c.l.b16 %v6154
          %v6295 = vunpack.c.h.b16 %v6154
          %v6296 = vunpack.c.l.b16 %v6155
          %v6297 = vunpack.c.h.b16 %v6155
          %v6298 = vunpack.c.l.b16 %v6156
          %v6299 = vunpack.c.h.b16 %v6156
          %v6300 = vunpack.c.l.b16 %v6157
          %v6301 = vunpack.c.h.b16 %v6157
          %v6302 = vunpack.c.l.b16 %v6158
          %v6303 = vunpack.c.h.b16 %v6158
          %v6304 = vunpack.c.l.b16 %v6159
          %v6305 = vunpack.c.h.b16 %v6159
          %v6306 = vunpack.c.l.b16 %v6160
          %v6307 = vunpack.c.h.b16 %v6160
          %v6308 = vunpack.c.l.b16 %v6161
          %v6309 = vunpack.c.h.b16 %v6161
          %v6310 = vunpack.c.l.b16 %v6162
          %v6311 = vunpack.c.h.b16 %v6162
          %v6312 = vunpack.c.l.b16 %v6163
          %v6313 = vunpack.c.h.b16 %v6163
          %v6314 = vunpack.c.l.b16 %v6164
          %v6315 = vunpack.c.h.b16 %v6164
          %v6316 = vunpack.c.l.b16 %v6165
          %v6317 = vunpack.c.h.b16 %v6165
          %v6318 = vunpack.c.l.b16 %v6166
          %v6319 = vunpack.c.h.b16 %v6166
          %v6320 = vunpack.c.l.b16 %v6167
          %v6321 = vunpack.c.h.b16 %v6167
          %v6322 = vunpack.c.l.b16 %v6168
          %v6323 = vunpack.c.h.b16 %v6168
          %v6324 = vunpack.c.l.b16 %v6169
          %v6325 = vunpack.c.h.b16 %v6169
          %v6326 = vunpack.c.l.b16 %v6170
          %v6327 = vunpack.c.h.b16 %v6170
          %v6328 = vunpack.c.l.b16 %v6171
          %v6329 = vunpack.c.h.b16 %v6171
          %v6330 = vunpack.c.l.b16 %v6172
          %v6331 = vunpack.c.h.b16 %v6172
          %v6332 = vunpack.c.l.b16 %v6173
          %v6333 = vunpack.c.h.b16 %v6173
          %v6334 = vunpack.c.l.b16 %v6174
          %v6335 = vunpack.c.h.b16 %v6174
          %v6336 = vunpack.c.l.b16 %v6175
          %v6337 = vunpack.c.h.b16 %v6175
          %v6338 = vunpack.c.l.b16 %v6176
          %v6339 = vunpack.c.h.b16 %v6176
          %v6340 = vunpack.c.l.b16 %v6177
          %v6341 = vunpack.c.h.b16 %v6177
          %v6342 = vunpack.c.l.b16 %v6178
          %v6343 = vunpack.c.h.b16 %v6178
          %v6344 = vunpack.c.l.b16 %v6179
          %v6345 = vunpack.c.h.b16 %v6179
          %v6346 = vunpack.c.l.b16 %v6180
          %v6347 = vunpack.c.h.b16 %v6180
          %v6348 = vunpack.c.l.b16 %v6181
          %v6349 = vunpack.c.h.b16 %v6181
          %v6350 = vunpack.c.l.b16 %v6182
          %v6351 = vunpack.c.h.b16 %v6182
          %v6352 = vunpack.c.l.b16 %v6183
          %v6353 = vunpack.c.h.b16 %v6183
          %v6354 = vunpack.c.l.b16 %v6184
          %v6355 = vunpack.c.h.b16 %v6184
          %v6356 = vunpack.c.l.b16 %v6185
          %v6357 = vunpack.c.h.b16 %v6185
          %v6358 = vunpack.c.l.b16 %v6186
          %v6359 = vunpack.c.h.b16 %v6186
          %v6360 = vunpack.c.l.b16 %v6187
          %v6361 = vunpack.c.h.b16 %v6187
          %v6362 = vunpack.c.l.b16 %v6188
          %v6363 = vunpack.c.h.b16 %v6188
          %v6364 = vunpack.c.l.b16 %v6189
          %v6365 = vunpack.c.h.b16 %v6189
          %v6366 = vunpack.c.l.b16 %v6190
          %v6367 = vunpack.c.h.b16 %v6190
          %v6368 = vunpack.c.l.b16 %v6191
          %v6369 = vunpack.c.h.b16 %v6191
          %v6370 = vunpack.c.l.b16 %v6192
          %v6371 = vunpack.c.h.b16 %v6192
          %v6372 = vunpack.c.l.b16 %v6193
          %v6373 = vunpack.c.h.b16 %v6193
          %v6374 = vunpack.c.l.b16 %v6194
          %v6375 = vunpack.c.h.b16 %v6194
          %v6376 = vunpack.c.l.b16 %v6195
          %v6377 = vunpack.c.h.b16 %v6195
          %v6378 = vunpack.c.l.b16 %v6196
          %v6379 = vunpack.c.h.b16 %v6196
          %v6380 = vunpack.c.l.b16 %v6197
          %v6381 = vunpack.c.h.b16 %v6197
          %v6382 = vunpack.c.l.b16 %v6198
          %v6383 = vunpack.c.h.b16 %v6198
          %v6384 = vunpack.c.l.b16 %v6199
          %v6385 = vunpack.c.h.b16 %v6199
          %v6386 = vunpack.c.l.b16 %v6200
          %v6387 = vunpack.c.h.b16 %v6200
          %v6388 = vunpack.c.l.b16 %v6201
          %v6389 = vunpack.c.h.b16 %v6201
          %v6390 = vunpack.c.l.b16 %v6202
          %v6391 = vunpack.c.h.b16 %v6202
          %v6392 = vunpack.c.l.b16 %v6203
          %v6393 = vunpack.c.h.b16 %v6203
          %v6394 = vunpack.c.l.b16 %v6204
          %v6395 = vunpack.c.h.b16 %v6204
          %v6396 = vunpack.c.l.b16 %v6205
          %v6397 = vunpack.c.h.b16 %v6205
          %v6398 = vunpack.c.l.b16 %v6206
          %v6399 = vunpack.c.h.b16 %v6206
          %v6400 = vunpack.c.l.b16 %v6207
          %v6401 = vunpack.c.h.b16 %v6207
          %v6402 = vunpack.c.l.b16 %v6208
          %v6403 = vunpack.c.h.b16 %v6208
          %v6404 = vunpack.c.l.b16 %v6209
          %v6405 = vunpack.c.h.b16 %v6209
          %v6406 = vunpack.c.l.b16 %v6210
          %v6407 = vunpack.c.h.b16 %v6210
          %v6408 = vunpack.c.l.b16 %v6211
          %v6409 = vunpack.c.h.b16 %v6211
          %v6410 = vunpack.c.l.b16 %v6212
          %v6411 = vunpack.c.h.b16 %v6212
          %v6412 = vunpack.c.l.b16 %v6213
          %v6413 = vunpack.c.h.b16 %v6213
          %v6414 = vunpack.c.l.b16 %v6214
          %v6415 = vunpack.c.h.b16 %v6214
          %v6416 = vunpack.c.l.b16 %v6215
          %v6417 = vunpack.c.h.b16 %v6215
          %v6418 = vunpack.c.l.b16 %v6216
          %v6419 = vunpack.c.h.b16 %v6216
          %v6420 = vunpack.c.l.b16 %v6217
          %v6421 = vunpack.c.h.b16 %v6217
          %v6422 = vpack.c.b16 %v6296, %v6294
          %v6423 = vpack.c.b16 %v6297, %v6295
          %v6424 = vpack.c.b16 %v6300, %v6298
          %v6425 = vpack.c.b16 %v6301, %v6299
          %v6426 = vpack.c.b16 %v6304, %v6302
          %v6427 = vpack.c.b16 %v6305, %v6303
          %v6428 = vpack.c.b16 %v6308, %v6306
          %v6429 = vpack.c.b16 %v6309, %v6307
          %v6430 = vpack.c.b16 %v6312, %v6310
          %v6431 = vpack.c.b16 %v6313, %v6311
          %v6432 = vpack.c.b16 %v6316, %v6314
          %v6433 = vpack.c.b16 %v6317, %v6315
          %v6434 = vpack.c.b16 %v6320, %v6318
          %v6435 = vpack.c.b16 %v6321, %v6319
          %v6436 = vpack.c.b16 %v6324, %v6322
          %v6437 = vpack.c.b16 %v6325, %v6323
          %v6438 = vpack.c.b16 %v6328, %v6326
          %v6439 = vpack.c.b16 %v6329, %v6327
          %v6440 = vpack.c.b16 %v6332, %v6330
          %v6441 = vpack.c.b16 %v6333, %v6331
          %v6442 = vpack.c.b16 %v6336, %v6334
          %v6443 = vpack.c.b16 %v6337, %v6335
          %v6444 = vpack.c.b16 %v6340, %v6338
          %v6445 = vpack.c.b16 %v6341, %v6339
          %v6446 = vpack.c.b16 %v6344, %v6342
          %v6447 = vpack.c.b16 %v6345, %v6343
          %v6448 = vpack.c.b16 %v6348, %v6346
          %v6449 = vpack.c.b16 %v6349, %v6347
          %v6450 = vpack.c.b16 %v6352, %v6350
          %v6451 = vpack.c.b16 %v6353, %v6351
          %v6452 = vpack.c.b16 %v6356, %v6354
          %v6453 = vpack.c.b16 %v6357, %v6355
          %v6454 = vpack.c.b16 %v6360, %v6358
          %v6455 = vpack.c.b16 %v6361, %v6359
          %v6456 = vpack.c.b16 %v6364, %v6362
          %v6457 = vpack.c.b16 %v6365, %v6363
          %v6458 = vpack.c.b16 %v6368, %v6366
          %v6459 = vpack.c.b16 %v6369, %v6367
          %v6460 = vpack.c.b16 %v6372, %v6370
          %v6461 = vpack.c.b16 %v6373, %v6371
          %v6462 = vpack.c.b16 %v6376, %v6374
          %v6463 = vpack.c.b16 %v6377, %v6375
          %v6464 = vpack.c.b16 %v6380, %v6378
          %v6465 = vpack.c.b16 %v6381, %v6379
          %v6466 = vpack.c.b16 %v6384, %v6382
          %v6467 = vpack.c.b16 %v6385, %v6383
          %v6468 = vpack.c.b16 %v6388, %v6386
          %v6469 = vpack.c.b16 %v6389, %v6387
          %v6470 = vpack.c.b16 %v6392, %v6390
          %v6471 = vpack.c.b16 %v6393, %v6391
          %v6472 = vpack.c.b16 %v6396, %v6394
          %v6473 = vpack.c.b16 %v6397, %v6395
          %v6474 = vpack.c.b16 %v6400, %v6398
          %v6475 = vpack.c.b16 %v6401, %v6399
          %v6476 = vpack.c.b16 %v6404, %v6402
          %v6477 = vpack.c.b16 %v6405, %v6403
          %v6478 = vpack.c.b16 %v6408, %v6406
          %v6479 = vpack.c.b16 %v6409, %v6407
          %v6480 = vpack.c.b16 %v6412, %v6410
          %v6481 = vpack.c.b16 %v6413, %v6411
          %v6482 = vpack.c.b16 %v6416, %v6414
          %v6483 = vpack.c.b16 %v6417, %v6415
          %v6484 = vpack.c.b16 %v6420, %v6418
          %v6485 = vpack.c.b16 %v6421, %v6419
          %6550 = vmatprep.subr.bf16.mxu0 %v6423
          %6551 = vmatpush1.bf16.msra.mxu0 %v6422
          %6552 = vmatprep.subr.bf16.mxu0 %v6425
          %6553 = vmatpush1.bf16.msra.mxu0 %v6424
          %6554 = vmatprep.subr.bf16.mxu0 %v6427
          %6555 = vmatpush1.bf16.msra.mxu0 %v6426
          %6556 = vmatprep.subr.bf16.mxu0 %v6429
          %6557 = vmatpush1.bf16.msra.mxu0 %v6428
          %6558 = vmatprep.subr.bf16.mxu0 %v6431
          %6559 = vmatpush1.bf16.msra.mxu0 %v6430
          %6560 = vmatprep.subr.bf16.mxu0 %v6433
          %6561 = vmatpush1.bf16.msra.mxu0 %v6432
          %6562 = vmatprep.subr.bf16.mxu0 %v6435
          %6563 = vmatpush1.bf16.msra.mxu0 %v6434
          %6564 = vmatprep.subr.bf16.mxu0 %v6437
          %6565 = vmatpush1.bf16.msra.mxu0 %v6436
          %6566 = vmatprep.subr.bf16.mxu0 %v6439
          %6567 = vmatpush1.bf16.msra.mxu0 %v6438
          %6568 = vmatprep.subr.bf16.mxu0 %v6441
          %6569 = vmatpush1.bf16.msra.mxu0 %v6440
          %6570 = vmatprep.subr.bf16.mxu0 %v6443
          %6571 = vmatpush1.bf16.msra.mxu0 %v6442
          %6572 = vmatprep.subr.bf16.mxu0 %v6445
          %6573 = vmatpush1.bf16.msra.mxu0 %v6444
          %6574 = vmatprep.subr.bf16.mxu0 %v6447
          %6575 = vmatpush1.bf16.msra.mxu0 %v6446
          %6576 = vmatprep.subr.bf16.mxu0 %v6449
          %6577 = vmatpush1.bf16.msra.mxu0 %v6448
          %6578 = vmatprep.subr.bf16.mxu0 %v6451
          %6579 = vmatpush1.bf16.msra.mxu0 %v6450
          %6580 = vmatprep.subr.bf16.mxu0 %v6453
          %6581 = vmatpush1.bf16.msra.mxu0 %v6452
          %6582 = vmatprep.mubr.bf16.mxu0 %v6151
          %6583 = vmatmul.mubr.bf16.gmra.mrb[0].mxu0 %v6150
          %v6584 = vpop.f32.mrb[0].mxu0
          %v6585 = vadd.f32 %v6223, %v6584
          %v6586 = vpop.f32.mrb[0].mxu0
          %v6587 = vadd.f32 %v6227, %v6586
          %v6588 = vpop.f32.mrb[0].mxu0
          %v6589 = vpop.f32.mrb[0].mxu0
          %6590 = vdwg.mxu0
          %6591 = vmatprep.subr.bf16.mxu0 %v6455
          %6592 = vmatpush1.bf16.msra.mxu0 %v6454
          %6593 = vmatprep.subr.bf16.mxu0 %v6457
          %6594 = vmatpush1.bf16.msra.mxu0 %v6456
          %6595 = vmatprep.subr.bf16.mxu0 %v6459
          %6596 = vmatpush1.bf16.msra.mxu0 %v6458
          %6597 = vmatprep.subr.bf16.mxu0 %v6461
          %6598 = vmatpush1.bf16.msra.mxu0 %v6460
          %6599 = vmatprep.subr.bf16.mxu0 %v6463
          %6600 = vmatpush1.bf16.msra.mxu0 %v6462
          %6601 = vmatprep.subr.bf16.mxu0 %v6465
          %6602 = vmatpush1.bf16.msra.mxu0 %v6464
          %6603 = vmatprep.subr.bf16.mxu0 %v6467
          %6604 = vmatpush1.bf16.msra.mxu0 %v6466
          %6605 = vmatprep.subr.bf16.mxu0 %v6469
          %6606 = vmatpush1.bf16.msra.mxu0 %v6468
          %6607 = vmatprep.subr.bf16.mxu0 %v6471
          %6608 = vmatpush1.bf16.msra.mxu0 %v6470
          %6609 = vmatprep.subr.bf16.mxu0 %v6473
          %6610 = vmatpush1.bf16.msra.mxu0 %v6472
          %6611 = vmatprep.subr.bf16.mxu0 %v6475
          %6612 = vmatpush1.bf16.msra.mxu0 %v6474
          %6613 = vmatprep.subr.bf16.mxu0 %v6477
          %6614 = vmatpush1.bf16.msra.mxu0 %v6476
          %6615 = vmatprep.subr.bf16.mxu0 %v6479
          %6616 = vmatpush1.bf16.msra.mxu0 %v6478
          %6617 = vmatprep.subr.bf16.mxu0 %v6481
          %6618 = vmatpush1.bf16.msra.mxu0 %v6480
          %6619 = vmatprep.subr.bf16.mxu0 %v6483
          %6620 = vmatpush1.bf16.msra.mxu0 %v6482
          %6621 = vmatprep.subr.bf16.mxu0 %v6485
          %6622 = vmatpush1.bf16.msra.mxu0 %v6484
          %6623 = vmatprep.mubr.bf16.mxu0 %v6153
          %6624 = vmatmul.mubr.bf16.gmra.mrb[0].mxu0 %v6152
          %v6625 = vpop.f32.mrb[0].mxu0
          %v6626 = vadd.f32 %v6585, %v6625
          %v6627 = vpop.f32.mrb[0].mxu0
          %v6628 = vadd.f32 %v6587, %v6627
          %v6629 = vpop.f32.mrb[0].mxu0
          %v6630 = vpop.f32.mrb[0].mxu0
          %6631 = vdwg.mxu0
          %v6632 = vmax.f32 %v6626, 0.0
          %v6633 = vmax.f32 %v6628, 0.0
          %v6634 = vpack.c.bf16 %v6632, %v6632
          %v6635 = vpack.c.bf16 %v6633, %v6633
          %v6636 = vld [vmem:[%s24] sm:$0xf]
          %v6637 = vld [vmem:[%s24 + $0x4] sm:$0xf]
          %v6638 = vld [vmem:[%s24 + $0x8] sm:$0xf]
          %v6639 = vld [vmem:[%s24 + $0xc] sm:$0xf]
          %v6640 = vld [vmem:[%s24 + $0x10] sm:$0xf]
          %v6641 = vld [vmem:[%s24 + $0x14] sm:$0xf]
          %v6642 = vld [vmem:[%s24 + $0x18] sm:$0xf]
          %v6643 = vld [vmem:[%s24 + $0x1c] sm:$0xf]
          %v6644 = vld [vmem:[%s24 + $0x20] sm:$0xf]
          %v6645 = vld [vmem:[%s24 + $0x24] sm:$0xf]
          %v6646 = vld [vmem:[%s24 + $0x28] sm:$0xf]
          %v6647 = vld [vmem:[%s24 + $0x2c] sm:$0xf]
          %v6648 = vld [vmem:[%s24 + $0x30] sm:$0xf]
          %v6649 = vld [vmem:[%s24 + $0x34] sm:$0xf]
          %v6650 = vld [vmem:[%s24 + $0x38] sm:$0xf]
          %v6651 = vld [vmem:[%s24 + $0x3c] sm:$0xf]
          %v6652 = vld [vmem:[%s24 + $0x40] sm:$0xf]
          %v6653 = vld [vmem:[%s24 + $0x44] sm:$0xf]
          %v6654 = vld [vmem:[%s24 + $0x48] sm:$0xf]
          %v6655 = vld [vmem:[%s24 + $0x4c] sm:$0xf]
          %v6656 = vld [vmem:[%s24 + $0x50] sm:$0xf]
          %v6657 = vld [vmem:[%s24 + $0x54] sm:$0xf]
          %v6658 = vld [vmem:[%s24 + $0x58] sm:$0xf]
          %v6659 = vld [vmem:[%s24 + $0x5c] sm:$0xf]
          %v6660 = vld [vmem:[%s24 + $0x60] sm:$0xf]
          %v6661 = vld [vmem:[%s24 + $0x64] sm:$0xf]
          %v6662 = vld [vmem:[%s24 + $0x68] sm:$0xf]
          %v6663 = vld [vmem:[%s24 + $0x6c] sm:$0xf]
          %v6664 = vld [vmem:[%s24 + $0x70] sm:$0xf]
          %v6665 = vld [vmem:[%s24 + $0x74] sm:$0xf]
          %v6666 = vld [vmem:[%s24 + $0x78] sm:$0xf]
          %v6667 = vld [vmem:[%s24 + $0x7c] sm:$0xf]
          %v6668 = vld [vmem:[#allocation24] sm:$0x1]
          %v6670 = vlaneseq
          %v6671 = vshrl.u32 %v6670, 7
          %v6672 = vsub.s32 0, %v6671
          %v6673 = vrot.slane %v6668, %v6672
          %v6707 = vunpack.c.l.b16 %v6636
          %v6708 = vunpack.c.l.b16 %v6637
          %v6709 = vunpack.c.l.b16 %v6638
          %v6710 = vunpack.c.l.b16 %v6639
          %v6711 = vunpack.c.l.b16 %v6640
          %v6712 = vunpack.c.l.b16 %v6641
          %v6713 = vunpack.c.l.b16 %v6642
          %v6714 = vunpack.c.l.b16 %v6643
          %v6715 = vunpack.c.l.b16 %v6644
          %v6716 = vunpack.c.l.b16 %v6645
          %v6717 = vunpack.c.l.b16 %v6646
          %v6718 = vunpack.c.l.b16 %v6647
          %v6719 = vunpack.c.l.b16 %v6648
          %v6720 = vunpack.c.l.b16 %v6649
          %v6721 = vunpack.c.l.b16 %v6650
          %v6722 = vunpack.c.l.b16 %v6651
          %v6723 = vunpack.c.l.b16 %v6652
          %v6724 = vunpack.c.l.b16 %v6653
          %v6725 = vunpack.c.l.b16 %v6654
          %v6726 = vunpack.c.l.b16 %v6655
          %v6727 = vunpack.c.l.b16 %v6656
          %v6728 = vunpack.c.l.b16 %v6657
          %v6729 = vunpack.c.l.b16 %v6658
          %v6730 = vunpack.c.l.b16 %v6659
          %v6731 = vunpack.c.l.b16 %v6660
          %v6732 = vunpack.c.l.b16 %v6661
          %v6733 = vunpack.c.l.b16 %v6662
          %v6734 = vunpack.c.l.b16 %v6663
          %v6735 = vunpack.c.l.b16 %v6664
          %v6736 = vunpack.c.l.b16 %v6665
          %v6737 = vunpack.c.l.b16 %v6666
          %v6738 = vunpack.c.l.b16 %v6667
          %v6739 = vpack.c.b16 %v6708, %v6707
          %v6740 = vpack.c.b16 %v6710, %v6709
          %v6741 = vpack.c.b16 %v6712, %v6711
          %v6742 = vpack.c.b16 %v6714, %v6713
          %v6743 = vpack.c.b16 %v6716, %v6715
          %v6744 = vpack.c.b16 %v6718, %v6717
          %v6745 = vpack.c.b16 %v6720, %v6719
          %v6746 = vpack.c.b16 %v6722, %v6721
          %v6747 = vpack.c.b16 %v6724, %v6723
          %v6748 = vpack.c.b16 %v6726, %v6725
          %v6749 = vpack.c.b16 %v6728, %v6727
          %v6750 = vpack.c.b16 %v6730, %v6729
          %v6751 = vpack.c.b16 %v6732, %v6731
          %v6752 = vpack.c.b16 %v6734, %v6733
          %v6753 = vpack.c.b16 %v6736, %v6735
          %v6754 = vpack.c.b16 %v6738, %v6737
          %6771 = vmatprep.subr.bf16.mxu0 0
          %6772 = vmatpush1.bf16.msra.mxu0 %v6739
          %6773 = vmatprep.subr.bf16.mxu0 0
          %6774 = vmatpush1.bf16.msra.mxu0 %v6740
          %6775 = vmatprep.subr.bf16.mxu0 0
          %6776 = vmatpush1.bf16.msra.mxu0 %v6741
          %6777 = vmatprep.subr.bf16.mxu0 0
          %6778 = vmatpush1.bf16.msra.mxu0 %v6742
          %6779 = vmatprep.subr.bf16.mxu0 0
          %6780 = vmatpush1.bf16.msra.mxu0 %v6743
          %6781 = vmatprep.subr.bf16.mxu0 0
          %6782 = vmatpush1.bf16.msra.mxu0 %v6744
          %6783 = vmatprep.subr.bf16.mxu0 0
          %6784 = vmatpush1.bf16.msra.mxu0 %v6745
          %6785 = vmatprep.subr.bf16.mxu0 0
          %6786 = vmatpush1.bf16.msra.mxu0 %v6746
          %6787 = vmatprep.subr.bf16.mxu0 0
          %6788 = vmatpush1.bf16.msra.mxu0 %v6747
          %6789 = vmatprep.subr.bf16.mxu0 0
          %6790 = vmatpush1.bf16.msra.mxu0 %v6748
          %6791 = vmatprep.subr.bf16.mxu0 0
          %6792 = vmatpush1.bf16.msra.mxu0 %v6749
          %6793 = vmatprep.subr.bf16.mxu0 0
          %6794 = vmatpush1.bf16.msra.mxu0 %v6750
          %6795 = vmatprep.subr.bf16.mxu0 0
          %6796 = vmatpush1.bf16.msra.mxu0 %v6751
          %6797 = vmatprep.subr.bf16.mxu0 0
          %6798 = vmatpush1.bf16.msra.mxu0 %v6752
          %6799 = vmatprep.subr.bf16.mxu0 0
          %6800 = vmatpush1.bf16.msra.mxu0 %v6753
          %6801 = vmatprep.subr.bf16.mxu0 0
          %6802 = vmatpush1.bf16.msra.mxu0 %v6754
          %6803 = vmatprep.mubr.bf16.mxu0 %v6635
          %6804 = vmatmul.mubr.bf16.gmra.mrb[0].mxu0 %v6634
          %v6805 = vpop.f32.mrb[0].mxu0
          %v6806 = vadd.f32 %v6673, %v6805
          %v6807 = vpop.f32.mrb[0].mxu0
          %v6808 = vpop.f32.mrb[0].mxu0
          %v6809 = vpop.f32.mrb[0].mxu0
          %6810 = vdwg.mxu0
          %v6811 = vmax.f32 %v6806, 0.0
          %v6812 = vpack.c.bf16 %v6811, %v6811
          %v6813 = vld [vmem:[%s26] sm:$0xf]
          %v6814 = vld [vmem:[%s26 + $0x4] sm:$0xf]
          %v6815 = vld [vmem:[%s26 + $0x8] sm:$0xf]
          %v6816 = vld [vmem:[%s26 + $0xc] sm:$0xf]
          %v6817 = vld [vmem:[%s26 + $0x10] sm:$0xf]
          %v6818 = vld [vmem:[%s26 + $0x14] sm:$0xf]
          %v6819 = vld [vmem:[%s26 + $0x18] sm:$0xf]
          %v6820 = vld [vmem:[%s26 + $0x1c] sm:$0xf]
          %v6821 = vld [vmem:[%s26 + $0x20] sm:$0xf]
          %v6822 = vld [vmem:[%s26 + $0x24] sm:$0xf]
          %v6823 = vld [vmem:[%s26 + $0x28] sm:$0xf]
          %v6824 = vld [vmem:[%s26 + $0x2c] sm:$0xf]
          %v6825 = vld [vmem:[%s26 + $0x30] sm:$0xf]
          %v6826 = vld [vmem:[%s26 + $0x34] sm:$0xf]
          %v6827 = vld [vmem:[%s26 + $0x38] sm:$0xf]
          %v6828 = vld [vmem:[%s26 + $0x3c] sm:$0xf]
          %v6829 = vld [vmem:[#allocation25] sm:$0x1]
          %v6831 = vlaneseq
          %v6832 = vshrl.u32 %v6831, 7
          %v6833 = vsub.s32 0, %v6832
          %v6834 = vrot.slane %v6829, %v6833
          %v6852 = vunpack.c.l.b16 %v6813
          %v6853 = vunpack.c.l.b16 %v6814
          %v6854 = vunpack.c.l.b16 %v6815
          %v6855 = vunpack.c.l.b16 %v6816
          %v6856 = vunpack.c.l.b16 %v6817
          %v6857 = vunpack.c.l.b16 %v6818
          %v6858 = vunpack.c.l.b16 %v6819
          %v6859 = vunpack.c.l.b16 %v6820
          %v6860 = vunpack.c.l.b16 %v6821
          %v6861 = vunpack.c.l.b16 %v6822
          %v6862 = vunpack.c.l.b16 %v6823
          %v6863 = vunpack.c.l.b16 %v6824
          %v6864 = vunpack.c.l.b16 %v6825
          %v6865 = vunpack.c.l.b16 %v6826
          %v6866 = vunpack.c.l.b16 %v6827
          %v6867 = vunpack.c.l.b16 %v6828
          %v6868 = vpack.c.b16 %v6853, %v6852
          %v6869 = vpack.c.b16 %v6855, %v6854
          %v6870 = vpack.c.b16 %v6857, %v6856
          %v6871 = vpack.c.b16 %v6859, %v6858
          %v6872 = vpack.c.b16 %v6861, %v6860
          %v6873 = vpack.c.b16 %v6863, %v6862
          %v6874 = vpack.c.b16 %v6865, %v6864
          %v6875 = vpack.c.b16 %v6867, %v6866
          %6884 = vmatprep.subr.bf16.mxu0 0
          %6885 = vmatpush1.bf16.msra.mxu0 %v6868
          %6886 = vmatprep.subr.bf16.mxu0 0
          %6887 = vmatpush1.bf16.msra.mxu0 %v6869
          %6888 = vmatprep.subr.bf16.mxu0 0
          %6889 = vmatpush1.bf16.msra.mxu0 %v6870
          %6890 = vmatprep.subr.bf16.mxu0 0
          %6891 = vmatpush1.bf16.msra.mxu0 %v6871
          %6892 = vmatprep.subr.bf16.mxu0 0
          %6893 = vmatpush1.bf16.msra.mxu0 %v6872
          %6894 = vmatprep.subr.bf16.mxu0 0
          %6895 = vmatpush1.bf16.msra.mxu0 %v6873
          %6896 = vmatprep.subr.bf16.mxu0 0
          %6897 = vmatpush1.bf16.msra.mxu0 %v6874
          %6898 = vmatprep.subr.bf16.mxu0 0
          %6899 = vmatpush1.bf16.msra.mxu0 %v6875
          %6900 = vmatprep.subr.bf16.mxu0 0
          %6901 = vmatpush1.bf16.msra.mxu0 0
          %6902 = vmatprep.subr.bf16.mxu0 0
          %6903 = vmatpush1.bf16.msra.mxu0 0
          %6904 = vmatprep.subr.bf16.mxu0 0
          %6905 = vmatpush1.bf16.msra.mxu0 0
          %6906 = vmatprep.subr.bf16.mxu0 0
          %6907 = vmatpush1.bf16.msra.mxu0 0
          %6908 = vmatprep.subr.bf16.mxu0 0
          %6909 = vmatpush1.bf16.msra.mxu0 0
          %6910 = vmatprep.subr.bf16.mxu0 0
          %6911 = vmatpush1.bf16.msra.mxu0 0
          %6912 = vmatprep.subr.bf16.mxu0 0
          %6913 = vmatpush1.bf16.msra.mxu0 0
          %6914 = vmatprep.subr.bf16.mxu0 0
          %6915 = vmatpush1.bf16.msra.mxu0 0
          %6916 = vmatprep.mubr.bf16.mxu0 0
          %6917 = vmatmul.mubr.bf16.gmra.mrb[0].mxu0 %v6812
          %v6918 = vpop.f32.mrb[0].mxu0
          %v6919 = vadd.f32 %v6834, %v6918
          %v6920 = vpop.f32.mrb[0].mxu0
          %v6921 = vpop.f32.mrb[0].mxu0
          %v6922 = vpop.f32.mrb[0].mxu0
          %6923 = vdwg.mxu0
          %vm6924 = vcmask 115712
          %6925 = vst.msk [vmem:[#allocation27] sm:$0x3] %vm6924, %v6919
        $region212: #{vit_b32_multimodal_forward.1} parent=131 // pred_fallthru
          _
        // Predicated region
        $region213: #{vit_b32_multimodal_forward.1} parent=131 // pred_check
          %p6926 = pneg %p706
        $region214: #{vit_b32_multimodal_forward.1} parent=131 // pred_check_branch
          %6928 = sbr.rel (%p6926) target = $region216
        $region215: #{vit_b32_multimodal_forward.1} parent=131 // pred_region
          %s6930 = ssub.s32 32, 32
          %6931 = vsyncadd [#allocation5], %s6930
          %s6933 = sshll.u32 [#allocation27], 4
          %s6934 = int_to_ptr.vmem [resolvable:$true] %s6933
          %6936 = dma.vmem_to_hbm [thread:$0]  %s6934, 32, %s28, [#allocation5]
        $region216: #{vit_b32_multimodal_forward.1} parent=131 // pred_fallthru
          _
        // Predicated region
        $region217: #{vit_b32_multimodal_forward.1} parent=131 // pred_check
          %p6937 = pneg %p706
        $region218: #{vit_b32_multimodal_forward.1} parent=131 // pred_check_branch
          %6939 = sbr.rel (%p6937) target = $region220
        $region219: #{vit_b32_multimodal_forward.1} parent=131 // pred_region
          %6940 = dma.done [#allocation5], 32
        $region220: #{vit_b32_multimodal_forward.1} parent=131 // pred_fallthru
          _
      $region132: #{vit_b32_multimodal_forward.1} parent=5 // pred_fallthru
        _
      %p6941 = scmp.le.s32.totalorder 2, %s40
      // Predicated region
      $region221: #{vit_b32_multimodal_forward.1} parent=5 // pred_check
        %p6942 = pneg %p6941
      $region222: #{vit_b32_multimodal_forward.1} parent=5 // pred_check_branch
        %6944 = sbr.rel (%p6942) target = $region224
      $region223: #{vit_b32_multimodal_forward.1} parent=5 // pred_region
        %s6945 = ssub.s32 %s40, 2
      $region224: #{vit_b32_multimodal_forward.1} parent=5 // pred_fallthru
        _
    $region6: #{vit_b32_multimodal_forward.1} parent=1 // loop_footer
      %s44 = sadd.s32 1, %s40
    $region7: #{vit_b32_multimodal_forward.1} parent=1 // loop_footer_branch
      %39 = sbr.rel target = $region3
    $region8: #{vit_b32_multimodal_forward.1} parent=1 // loop_exit
      _
    %6946 = vsyncpa [#allocation4], 1
    %s6947 = scalar_lea.sflag [#allocation4], 1
    %6948 = vsyncpa %s6947, 1
    %6949 = vsyncpa [#allocation7], 1
    %6950 = vsyncpa [#allocation20], 1
    %6951 = vsyncpa [#allocation23], 1
    %6952 = vsyncpa [#allocation26], 1
    %6953 = vsyncpa [#allocation5], 1
    %s6954 = scalar_lea.sflag [#allocation5], 1
    %6955 = vsyncpa %s6954, 1

</llo_original>
